<compile_context>
chip_gen: v6e
topology: v6e:2x2x1
jax: 0.10.0
libtpu: 0.0.40
codegen_flags: <defaults>
</compile_context>

<pallas_src>
import math

import jax
import jax.numpy as jnp
from jax.experimental import pallas as pl
from jax.experimental.pallas import tpu as pltpu

# Small, module-consistent config.
BATCH = 2
SEQ = 8
HIDDEN = 32
NUM_HEADS = 4
HEAD_SIZE = HIDDEN // NUM_HEADS  # 8


def _self_attention_kernel(x_ref, wqkv_ref, bqkv_ref, o_ref):
    """Single grid step over the whole (B, S, H) problem.

    x_ref    : (B, S, H)   hidden_states
    wqkv_ref : (H, 3H)     fused [Wq*scale | Wk | Wv], laid out (in, out)
    bqkv_ref : (1, 3H)     fused [bq*scale | bk | bv]
    o_ref    : (B, S, H)   context_layer
    """
    B, S, H = x_ref.shape
    NH, D = NUM_HEADS, HEAD_SIZE
    P = jax.lax.Precision.HIGHEST

    # One fused QKV projection for the entire batch: (B*S, H) @ (H, 3H).
    x2 = x_ref[...].reshape(B * S, H)
    qkv = jnp.dot(x2, wqkv_ref[...], precision=P,
                  preferred_element_type=jnp.float32)
    qkv = (qkv + bqkv_ref[...]).reshape(B, S, 3 * H)          # (B, S, 3H)

    # Gather per-(batch, head) (S, D) slabs into one fused batch axis
    # -> (B*NH, S, D). Static lane slices; at production D >= 128 these land on
    # 128-lane boundaries and need no lane rotates.
    def head_stack(col0):
        return jnp.stack(
            [qkv[b, :, col0 + h * D: col0 + (h + 1) * D]
             for b in range(B) for h in range(NH)], axis=0)

    qh = head_stack(0)          # query already pre-scaled by 1/sqrt(D)
    kh = head_stack(H)
    vh = head_stack(2 * H)

    # Attention scores for all (batch, head) pairs in one batched MXU call.
    s = jnp.einsum("hqd,hkd->hqk", qh, kh, precision=P,
                   preferred_element_type=jnp.float32)         # (B*NH, S, S)

    # Numerically-stabilized softmax, exact denominator (no approx reciprocal).
    s = s - jnp.max(s, axis=-1, keepdims=True)
    e = jnp.exp(s)
    p = e / jnp.sum(e, axis=-1, keepdims=True)

    # context = P @ V for all heads; reassemble heads along the lane axis and
    # write the whole (B, S, H) output with one store.
    ctx = jnp.einsum("hqk,hkd->hqd", p, vh, precision=P,
                     preferred_element_type=jnp.float32)       # (B*NH, S, D)
    out = jnp.stack(
        [jnp.concatenate([ctx[b * NH + h] for h in range(NH)], axis=-1)
         for b in range(B)], axis=0)                           # (B, S, H)
    o_ref[...] = out.astype(o_ref.dtype)


def prepare_fused_qkv(wq, wk, wv, bq, bk, bv):
    """ONE-TIME parameter prep (kept out of the per-call jit path).

    Folds the 1/sqrt(head_size) attention scale into the query projection and
    fuses the three (H, H) projections into a single (H, 3H) weight / (1, 3H)
    bias so the kernel does one MXU pass and no per-call concatenation.
    """
    scale = 1.0 / math.sqrt(HEAD_SIZE)
    wqkv = jnp.concatenate([wq * scale, wk, wv], axis=1)   # (H, 3H), (in, out)
    bqkv = jnp.concatenate([bq * scale, bk, bv], axis=1)   # (1, 3H)
    return wqkv, bqkv


@jax.jit
def bert_self_attention(hidden_states, wqkv, bqkv):
    B, S, H = hidden_states.shape
    return pl.pallas_call(
        _self_attention_kernel,
        out_shape=jax.ShapeDtypeStruct((B, S, H), hidden_states.dtype),
        # No grid: whole problem in one step, all operands resident in VMEM.
        in_specs=[
            pl.BlockSpec(memory_space=pltpu.MemorySpace.VMEM),   # hidden_states
            pl.BlockSpec(memory_space=pltpu.MemorySpace.VMEM),   # fused Wqkv
            pl.BlockSpec(memory_space=pltpu.MemorySpace.VMEM),   # fused bqkv
        ],
        out_specs=pl.BlockSpec(memory_space=pltpu.MemorySpace.VMEM),
    )(hidden_states, wqkv, bqkv)


def _reference(hidden_states, wq, wk, wv, bq, bk, bv):
    """Plain-JAX reference mirroring the PyTorch forward (eval, no mask)."""
    P = jax.lax.Precision.HIGHEST
    B, S, H = hidden_states.shape
    q = jnp.einsum("bsh,hd->bsd", hidden_states, wq, precision=P) + bq
    k = jnp.einsum("bsh,hd->bsd", hidden_states, wk, precision=P) + bk
    v = jnp.einsum("bsh,hd->bsd", hidden_states, wv, precision=P) + bv

    def split(x):  # (B,S,H) -> (B,nh,S,hd)
        return x.reshape(B, S, NUM_HEADS, HEAD_SIZE).transpose(0, 2, 1, 3)

    qh, kh, vh = split(q), split(k), split(v)
    scores = jnp.einsum("bhqd,bhkd->bhqk", qh, kh,
                        precision=P) / math.sqrt(HEAD_SIZE)
    probs = jax.nn.softmax(scores, axis=-1)
    ctx = jnp.einsum("bhqk,bhkd->bhqd", probs, vh, precision=P)
    return ctx.transpose(0, 2, 1, 3).reshape(B, S, H)


if __name__ == "__main__":
    key = jax.random.PRNGKey(0)
    ks = jax.random.split(key, 7)

    # Deterministic synthetic parameters (shapes follow nn.Linear(H, H)).
    # PyTorch Linear stores weight as (out, in); generate (out, in) and
    # transpose to (in, out) for the kernel's x @ W layout.
    bound = 1.0 / math.sqrt(HIDDEN)
    wq_t = jax.random.uniform(ks[0], (HIDDEN, HIDDEN), jnp.float32, -bound, bound)
    wk_t = jax.random.uniform(ks[1], (HIDDEN, HIDDEN), jnp.float32, -bound, bound)
    wv_t = jax.random.uniform(ks[2], (HIDDEN, HIDDEN), jnp.float32, -bound, bound)
    bq = jax.random.uniform(ks[3], (1, HIDDEN), jnp.float32, -bound, bound)
    bk = jax.random.uniform(ks[4], (1, HIDDEN), jnp.float32, -bound, bound)
    bv = jax.random.uniform(ks[5], (1, HIDDEN), jnp.float32, -bound, bound)
    wq, wk, wv = wq_t.T, wk_t.T, wv_t.T  # (in, out)

    hidden_states = jax.random.normal(ks[6], (BATCH, SEQ, HIDDEN), jnp.float32)

    # One-time weight prep, outside the per-call jit path.
    wqkv, bqkv = prepare_fused_qkv(wq, wk, wv, bq, bk, bv)
    wqkv, bqkv = jax.block_until_ready(wqkv), jax.block_until_ready(bqkv)

    out = bert_self_attention(hidden_states, wqkv, bqkv)
    out = jax.block_until_ready(out)

    ref = _reference(hidden_states, wq, wk, wv, bq, bk, bv)
    assert out.shape == (BATCH, SEQ, HIDDEN)
    # Exact softmax + full-precision f32 matmuls on both sides: back in the
    # ~1e-5 accuracy class (tightened from 5e-3).
    assert jnp.allclose(out, ref, atol=2e-5, rtol=2e-5), "mismatch vs reference"

    print("KERNEL_OK")
</pallas_src>

<mosaic_0001>
module attributes {stable_mosaic.version = 11 : i64} {
  func.func @_self_attention_kernel(%arg0: memref<2x8x32xf32, #tpu.memory_space<vmem>>, %arg1: memref<32x96xf32, #tpu.memory_space<vmem>>, %arg2: memref<1x96xf32, #tpu.memory_space<vmem>>, %arg3: memref<2x8x32xf32, #tpu.memory_space<vmem>>) attributes {dimension_semantics = [], scalar_prefetch = 0 : i64, scratch_operands = 0 : i64, tpu.core_type = #tpu.core_type<tc>} {
    %c0 = arith.constant 0 : index
    %c0_0 = arith.constant 0 : index
    %c0_1 = arith.constant 0 : index
    %0 = vector.load %arg0[%c0, %c0_0, %c0_1] : memref<2x8x32xf32, #tpu.memory_space<vmem>>, vector<2x8x32xf32>
    %1 = vector.shape_cast %0 : vector<2x8x32xf32> to vector<16x32xf32>
    %c0_2 = arith.constant 0 : index
    %c0_3 = arith.constant 0 : index
    %2 = vector.load %arg1[%c0_2, %c0_3] : memref<32x96xf32, #tpu.memory_space<vmem>>, vector<32x96xf32>
    %cst = arith.constant dense<0.000000e+00> : vector<16x96xf32>
    %3 = tpu.matmul %1, %2, %cst {dimension_numbers = #tpu.dot_dimension_numbers<[1], [0], [0], [1], [0, 0, 1, 1], [], []>, precision = #tpu.contract_precision<fp32>} : vector<16x32xf32>, vector<32x96xf32>, vector<16x96xf32> -> vector<16x96xf32>
    %c0_4 = arith.constant 0 : index
    %c0_5 = arith.constant 0 : index
    %4 = vector.load %arg2[%c0_4, %c0_5] : memref<1x96xf32, #tpu.memory_space<vmem>>, vector<1x96xf32>
    %5 = vector.broadcast %4 : vector<1x96xf32> to vector<16x96xf32>
    %6 = arith.addf %3, %5 : vector<16x96xf32>
    %7 = vector.shape_cast %6 : vector<16x96xf32> to vector<2x8x96xf32>
    %8 = vector.extract_strided_slice %7 {offsets = [0, 0, 0], sizes = [1, 8, 8], strides = [1, 1, 1]} : vector<2x8x96xf32> to vector<1x8x8xf32>
    %9 = vector.shape_cast %8 : vector<1x8x8xf32> to vector<8x8xf32>
    %10 = vector.extract_strided_slice %7 {offsets = [0, 0, 8], sizes = [1, 8, 8], strides = [1, 1, 1]} : vector<2x8x96xf32> to vector<1x8x8xf32>
    %11 = vector.shape_cast %10 : vector<1x8x8xf32> to vector<8x8xf32>
    %12 = vector.extract_strided_slice %7 {offsets = [0, 0, 16], sizes = [1, 8, 8], strides = [1, 1, 1]} : vector<2x8x96xf32> to vector<1x8x8xf32>
    %13 = vector.shape_cast %12 : vector<1x8x8xf32> to vector<8x8xf32>
    %14 = vector.extract_strided_slice %7 {offsets = [0, 0, 24], sizes = [1, 8, 8], strides = [1, 1, 1]} : vector<2x8x96xf32> to vector<1x8x8xf32>
    %15 = vector.shape_cast %14 : vector<1x8x8xf32> to vector<8x8xf32>
    %16 = vector.extract_strided_slice %7 {offsets = [1, 0, 0], sizes = [1, 8, 8], strides = [1, 1, 1]} : vector<2x8x96xf32> to vector<1x8x8xf32>
    %17 = vector.shape_cast %16 : vector<1x8x8xf32> to vector<8x8xf32>
    %18 = vector.extract_strided_slice %7 {offsets = [1, 0, 8], sizes = [1, 8, 8], strides = [1, 1, 1]} : vector<2x8x96xf32> to vector<1x8x8xf32>
    %19 = vector.shape_cast %18 : vector<1x8x8xf32> to vector<8x8xf32>
    %20 = vector.extract_strided_slice %7 {offsets = [1, 0, 16], sizes = [1, 8, 8], strides = [1, 1, 1]} : vector<2x8x96xf32> to vector<1x8x8xf32>
    %21 = vector.shape_cast %20 : vector<1x8x8xf32> to vector<8x8xf32>
    %22 = vector.extract_strided_slice %7 {offsets = [1, 0, 24], sizes = [1, 8, 8], strides = [1, 1, 1]} : vector<2x8x96xf32> to vector<1x8x8xf32>
    %23 = vector.shape_cast %22 : vector<1x8x8xf32> to vector<8x8xf32>
    %24 = vector.shape_cast %9 : vector<8x8xf32> to vector<1x8x8xf32>
    %25 = vector.shape_cast %11 : vector<8x8xf32> to vector<1x8x8xf32>
    %26 = vector.shape_cast %13 : vector<8x8xf32> to vector<1x8x8xf32>
    %27 = vector.shape_cast %15 : vector<8x8xf32> to vector<1x8x8xf32>
    %28 = vector.shape_cast %17 : vector<8x8xf32> to vector<1x8x8xf32>
    %29 = vector.shape_cast %19 : vector<8x8xf32> to vector<1x8x8xf32>
    %30 = vector.shape_cast %21 : vector<8x8xf32> to vector<1x8x8xf32>
    %31 = vector.shape_cast %23 : vector<8x8xf32> to vector<1x8x8xf32>
    %32 = tpu.concatenate %24, %25, %26, %27, %28, %29, %30, %31 in 0 : vector<1x8x8xf32>, vector<1x8x8xf32>, vector<1x8x8xf32>, vector<1x8x8xf32>, vector<1x8x8xf32>, vector<1x8x8xf32>, vector<1x8x8xf32>, vector<1x8x8xf32> -> vector<8x8x8xf32>
    %33 = vector.extract_strided_slice %7 {offsets = [0, 0, 32], sizes = [1, 8, 8], strides = [1, 1, 1]} : vector<2x8x96xf32> to vector<1x8x8xf32>
    %34 = vector.shape_cast %33 : vector<1x8x8xf32> to vector<8x8xf32>
    %35 = vector.extract_strided_slice %7 {offsets = [0, 0, 40], sizes = [1, 8, 8], strides = [1, 1, 1]} : vector<2x8x96xf32> to vector<1x8x8xf32>
    %36 = vector.shape_cast %35 : vector<1x8x8xf32> to vector<8x8xf32>
    %37 = vector.extract_strided_slice %7 {offsets = [0, 0, 48], sizes = [1, 8, 8], strides = [1, 1, 1]} : vector<2x8x96xf32> to vector<1x8x8xf32>
    %38 = vector.shape_cast %37 : vector<1x8x8xf32> to vector<8x8xf32>
    %39 = vector.extract_strided_slice %7 {offsets = [0, 0, 56], sizes = [1, 8, 8], strides = [1, 1, 1]} : vector<2x8x96xf32> to vector<1x8x8xf32>
    %40 = vector.shape_cast %39 : vector<1x8x8xf32> to vector<8x8xf32>
    %41 = vector.extract_strided_slice %7 {offsets = [1, 0, 32], sizes = [1, 8, 8], strides = [1, 1, 1]} : vector<2x8x96xf32> to vector<1x8x8xf32>
    %42 = vector.shape_cast %41 : vector<1x8x8xf32> to vector<8x8xf32>
    %43 = vector.extract_strided_slice %7 {offsets = [1, 0, 40], sizes = [1, 8, 8], strides = [1, 1, 1]} : vector<2x8x96xf32> to vector<1x8x8xf32>
    %44 = vector.shape_cast %43 : vector<1x8x8xf32> to vector<8x8xf32>
    %45 = vector.extract_strided_slice %7 {offsets = [1, 0, 48], sizes = [1, 8, 8], strides = [1, 1, 1]} : vector<2x8x96xf32> to vector<1x8x8xf32>
    %46 = vector.shape_cast %45 : vector<1x8x8xf32> to vector<8x8xf32>
    %47 = vector.extract_strided_slice %7 {offsets = [1, 0, 56], sizes = [1, 8, 8], strides = [1, 1, 1]} : vector<2x8x96xf32> to vector<1x8x8xf32>
    %48 = vector.shape_cast %47 : vector<1x8x8xf32> to vector<8x8xf32>
    %49 = vector.shape_cast %34 : vector<8x8xf32> to vector<1x8x8xf32>
    %50 = vector.shape_cast %36 : vector<8x8xf32> to vector<1x8x8xf32>
    %51 = vector.shape_cast %38 : vector<8x8xf32> to vector<1x8x8xf32>
    %52 = vector.shape_cast %40 : vector<8x8xf32> to vector<1x8x8xf32>
    %53 = vector.shape_cast %42 : vector<8x8xf32> to vector<1x8x8xf32>
    %54 = vector.shape_cast %44 : vector<8x8xf32> to vector<1x8x8xf32>
    %55 = vector.shape_cast %46 : vector<8x8xf32> to vector<1x8x8xf32>
    %56 = vector.shape_cast %48 : vector<8x8xf32> to vector<1x8x8xf32>
    %57 = tpu.concatenate %49, %50, %51, %52, %53, %54, %55, %56 in 0 : vector<1x8x8xf32>, vector<1x8x8xf32>, vector<1x8x8xf32>, vector<1x8x8xf32>, vector<1x8x8xf32>, vector<1x8x8xf32>, vector<1x8x8xf32>, vector<1x8x8xf32> -> vector<8x8x8xf32>
    %58 = vector.extract_strided_slice %7 {offsets = [0, 0, 64], sizes = [1, 8, 8], strides = [1, 1, 1]} : vector<2x8x96xf32> to vector<1x8x8xf32>
    %59 = vector.shape_cast %58 : vector<1x8x8xf32> to vector<8x8xf32>
    %60 = vector.extract_strided_slice %7 {offsets = [0, 0, 72], sizes = [1, 8, 8], strides = [1, 1, 1]} : vector<2x8x96xf32> to vector<1x8x8xf32>
    %61 = vector.shape_cast %60 : vector<1x8x8xf32> to vector<8x8xf32>
    %62 = vector.extract_strided_slice %7 {offsets = [0, 0, 80], sizes = [1, 8, 8], strides = [1, 1, 1]} : vector<2x8x96xf32> to vector<1x8x8xf32>
    %63 = vector.shape_cast %62 : vector<1x8x8xf32> to vector<8x8xf32>
    %64 = vector.extract_strided_slice %7 {offsets = [0, 0, 88], sizes = [1, 8, 8], strides = [1, 1, 1]} : vector<2x8x96xf32> to vector<1x8x8xf32>
    %65 = vector.shape_cast %64 : vector<1x8x8xf32> to vector<8x8xf32>
    %66 = vector.extract_strided_slice %7 {offsets = [1, 0, 64], sizes = [1, 8, 8], strides = [1, 1, 1]} : vector<2x8x96xf32> to vector<1x8x8xf32>
    %67 = vector.shape_cast %66 : vector<1x8x8xf32> to vector<8x8xf32>
    %68 = vector.extract_strided_slice %7 {offsets = [1, 0, 72], sizes = [1, 8, 8], strides = [1, 1, 1]} : vector<2x8x96xf32> to vector<1x8x8xf32>
    %69 = vector.shape_cast %68 : vector<1x8x8xf32> to vector<8x8xf32>
    %70 = vector.extract_strided_slice %7 {offsets = [1, 0, 80], sizes = [1, 8, 8], strides = [1, 1, 1]} : vector<2x8x96xf32> to vector<1x8x8xf32>
    %71 = vector.shape_cast %70 : vector<1x8x8xf32> to vector<8x8xf32>
    %72 = vector.extract_strided_slice %7 {offsets = [1, 0, 88], sizes = [1, 8, 8], strides = [1, 1, 1]} : vector<2x8x96xf32> to vector<1x8x8xf32>
    %73 = vector.shape_cast %72 : vector<1x8x8xf32> to vector<8x8xf32>
    %74 = vector.shape_cast %59 : vector<8x8xf32> to vector<1x8x8xf32>
    %75 = vector.shape_cast %61 : vector<8x8xf32> to vector<1x8x8xf32>
    %76 = vector.shape_cast %63 : vector<8x8xf32> to vector<1x8x8xf32>
    %77 = vector.shape_cast %65 : vector<8x8xf32> to vector<1x8x8xf32>
    %78 = vector.shape_cast %67 : vector<8x8xf32> to vector<1x8x8xf32>
    %79 = vector.shape_cast %69 : vector<8x8xf32> to vector<1x8x8xf32>
    %80 = vector.shape_cast %71 : vector<8x8xf32> to vector<1x8x8xf32>
    %81 = vector.shape_cast %73 : vector<8x8xf32> to vector<1x8x8xf32>
    %82 = tpu.concatenate %74, %75, %76, %77, %78, %79, %80, %81 in 0 : vector<1x8x8xf32>, vector<1x8x8xf32>, vector<1x8x8xf32>, vector<1x8x8xf32>, vector<1x8x8xf32>, vector<1x8x8xf32>, vector<1x8x8xf32>, vector<1x8x8xf32> -> vector<8x8x8xf32>
    "tpu.trace_start"() <{level = 10 : i32, message = "hqd,hkd->hqk"}> : () -> ()
    %cst_6 = arith.constant dense<0.000000e+00> : vector<8x8x8xf32>
    %83 = tpu.matmul %32, %57, %cst_6 {dimension_numbers = #tpu.dot_dimension_numbers<[2], [2], [1], [1], [0, 0, 0, 1, 1, 1], [0], [0]>, precision = #tpu.contract_precision<fp32>} : vector<8x8x8xf32>, vector<8x8x8xf32>, vector<8x8x8xf32> -> vector<8x8x8xf32>
    "tpu.trace_stop"() : () -> ()
    %cst_7 = arith.constant dense<0xFF800000> : vector<8x8xf32>
    %84 = vector.multi_reduction <maximumf>, %83, %cst_7 [2] : vector<8x8x8xf32> to vector<8x8xf32>
    %85 = vector.shape_cast %84 : vector<8x8xf32> to vector<8x8x1xf32>
    %86 = vector.broadcast %85 : vector<8x8x1xf32> to vector<8x8x8xf32>
    %87 = arith.subf %83, %86 : vector<8x8x8xf32>
    %88 = math.exp %87 : vector<8x8x8xf32>
    %cst_8 = arith.constant dense<0.000000e+00> : vector<8x8xf32>
    %89 = vector.multi_reduction <add>, %88, %cst_8 [2] : vector<8x8x8xf32> to vector<8x8xf32>
    %90 = vector.shape_cast %89 : vector<8x8xf32> to vector<8x8x1xf32>
    %91 = vector.broadcast %90 : vector<8x8x1xf32> to vector<8x8x8xf32>
    %92 = arith.divf %88, %91 : vector<8x8x8xf32>
    "tpu.trace_start"() <{level = 10 : i32, message = "hqk,hkd->hqd"}> : () -> ()
    %cst_9 = arith.constant dense<0.000000e+00> : vector<8x8x8xf32>
    %93 = tpu.matmul %92, %82, %cst_9 {dimension_numbers = #tpu.dot_dimension_numbers<[2], [1], [1], [2], [0, 0, 0, 1, 1, 2], [0], [0]>, precision = #tpu.contract_precision<fp32>} : vector<8x8x8xf32>, vector<8x8x8xf32>, vector<8x8x8xf32> -> vector<8x8x8xf32>
    "tpu.trace_stop"() : () -> ()
    %94 = vector.extract_strided_slice %93 {offsets = [0, 0, 0], sizes = [1, 8, 8], strides = [1, 1, 1]} : vector<8x8x8xf32> to vector<1x8x8xf32>
    %95 = vector.shape_cast %94 : vector<1x8x8xf32> to vector<8x8xf32>
    %96 = vector.extract_strided_slice %93 {offsets = [1, 0, 0], sizes = [1, 8, 8], strides = [1, 1, 1]} : vector<8x8x8xf32> to vector<1x8x8xf32>
    %97 = vector.shape_cast %96 : vector<1x8x8xf32> to vector<8x8xf32>
    %98 = vector.extract_strided_slice %93 {offsets = [2, 0, 0], sizes = [1, 8, 8], strides = [1, 1, 1]} : vector<8x8x8xf32> to vector<1x8x8xf32>
    %99 = vector.shape_cast %98 : vector<1x8x8xf32> to vector<8x8xf32>
    %100 = vector.extract_strided_slice %93 {offsets = [3, 0, 0], sizes = [1, 8, 8], strides = [1, 1, 1]} : vector<8x8x8xf32> to vector<1x8x8xf32>
    %101 = vector.shape_cast %100 : vector<1x8x8xf32> to vector<8x8xf32>
    %102 = tpu.concatenate %95, %97, %99, %101 in 1 : vector<8x8xf32>, vector<8x8xf32>, vector<8x8xf32>, vector<8x8xf32> -> vector<8x32xf32>
    %103 = vector.extract_strided_slice %93 {offsets = [4, 0, 0], sizes = [1, 8, 8], strides = [1, 1, 1]} : vector<8x8x8xf32> to vector<1x8x8xf32>
    %104 = vector.shape_cast %103 : vector<1x8x8xf32> to vector<8x8xf32>
    %105 = vector.extract_strided_slice %93 {offsets = [5, 0, 0], sizes = [1, 8, 8], strides = [1, 1, 1]} : vector<8x8x8xf32> to vector<1x8x8xf32>
    %106 = vector.shape_cast %105 : vector<1x8x8xf32> to vector<8x8xf32>
    %107 = vector.extract_strided_slice %93 {offsets = [6, 0, 0], sizes = [1, 8, 8], strides = [1, 1, 1]} : vector<8x8x8xf32> to vector<1x8x8xf32>
    %108 = vector.shape_cast %107 : vector<1x8x8xf32> to vector<8x8xf32>
    %109 = vector.extract_strided_slice %93 {offsets = [7, 0, 0], sizes = [1, 8, 8], strides = [1, 1, 1]} : vector<8x8x8xf32> to vector<1x8x8xf32>
    %110 = vector.shape_cast %109 : vector<1x8x8xf32> to vector<8x8xf32>
    %111 = tpu.concatenate %104, %106, %108, %110 in 1 : vector<8x8xf32>, vector<8x8xf32>, vector<8x8xf32>, vector<8x8xf32> -> vector<8x32xf32>
    %112 = vector.shape_cast %102 : vector<8x32xf32> to vector<1x8x32xf32>
    %113 = vector.shape_cast %111 : vector<8x32xf32> to vector<1x8x32xf32>
    %114 = tpu.concatenate %112, %113 in 0 : vector<1x8x32xf32>, vector<1x8x32xf32> -> vector<2x8x32xf32>
    %c0_10 = arith.constant 0 : index
    %c0_11 = arith.constant 0 : index
    %c0_12 = arith.constant 0 : index
    %115 = vector.load %arg3[%c0_10, %c0_11, %c0_12] : memref<2x8x32xf32, #tpu.memory_space<vmem>>, vector<2x8x32xf32>
    tpu.vector_store %arg3[%c0_10, %c0_11, %c0_12], %114 {strides = array<i32>} : memref<2x8x32xf32, #tpu.memory_space<vmem>>, vector<2x8x32xf32>,
    return
  }
}

</mosaic_0001>

<llo_original>
// kernel: bert_self_attention.1
$region0: #{bert_self_attention.1}
  #allocation0 [shape = 'u32[]', space=smem, size = 0x4, offset = 0x4, fixed_abs, tag = 'smem constant byte address 0x4 - core index']
  #allocation1 [shape = 'u32[144,128]{1,0:T(1,128)}', space=vmem, size = 0x12000, scoped, tag = 'internal scratch']
  %s0 = inlined_call_operand.hbm [shape: f32[2,8,32], index: 0, kind: input, shape index: {}]
  %s1 = inlined_call_operand.hbm [shape: f32[32,96], index: 1, kind: input, shape index: {}]
  %s2 = inlined_call_operand.vmem [shape: f32[1,96], index: 2, kind: input, shape index: {}]
  %s3 = inlined_call_operand.hbm [shape: f32[2,8,32], index: 3, kind: output, shape index: {}]
  %s4 = sld [smem:[#allocation0]]
  $region30: #{bert_self_attention.1} parent=0
    _
  %s6 = ssub.s32 1, %s4
  %s7 = scalar_select 0, %s6, %s4
  $region1: #{bert_self_attention.1} parent=0
    #allocation2 [shape = 'u8[8192]{0}', space=vmem, size = 0x2000, scoped, tag = 'input window, operand 0, single buffered']
    #allocation3 [shape = 's32[1]{0}', space=sflag, size = 0x4, scoped, tag = 'scoped memory for bert_self_attention.1']
    #allocation4 [shape = 's32[1]{0}', space=sflag, size = 0x4, scoped, tag = 'scoped memory for bert_self_attention.1']
    #allocation5 [shape = 'u8[16384]{0}', space=vmem, size = 0x4000, scoped, tag = 'input window, operand 1, single buffered']
    #allocation6 [shape = 's32[1]{0}', space=sflag, size = 0x4, scoped, tag = 'scoped memory for bert_self_attention.1']
    #allocation7 [shape = 'u8[8192]{0}', space=vmem, size = 0x2000, scoped, tag = 'output window, operand 0, single buffered']
    %8 = vsyncpa [#allocation3], 0
    %9 = vsyncpa [#allocation6], 0
    %10 = vsyncpa [#allocation4], 0
    // Predicated region
    $region2: #{bert_self_attention.1} parent=1 // pred_check
      _
    $region3: #{bert_self_attention.1} parent=1 // pred_check_branch
      %12 = sbr.rel (0) target = $region5
    $region4: #{bert_self_attention.1} parent=1 // pred_region
      %s14 = ssub.s32 256, 256
      %15 = vsyncadd [#allocation3], %s14
      %s16 = sshll.u32 [#allocation2], 4
      %s17 = int_to_ptr.vmem [resolvable:$true] %s16
      %22 = dma.hbm_to_vmem [thread:$0]  %s0, 256, %s17, [#allocation3], 128, 128, 8
    $region5: #{bert_self_attention.1} parent=1 // pred_fallthru
      _
    // Predicated region
    $region6: #{bert_self_attention.1} parent=1 // pred_check
      _
    $region7: #{bert_self_attention.1} parent=1 // pred_check_branch
      %24 = sbr.rel (0) target = $region9
    $region8: #{bert_self_attention.1} parent=1 // pred_region
      %s26 = ssub.s32 512, 512
      %27 = vsyncadd [#allocation6], %s26
      %s28 = sshll.u32 [#allocation5], 4
      %s29 = int_to_ptr.vmem [resolvable:$true] %s28
      %34 = dma.hbm_to_vmem [thread:$0]  %s1, 512, %s29, [#allocation6], 128, 128, 8
    $region9: #{bert_self_attention.1} parent=1 // pred_fallthru
      _
    // Predicated region
    $region10: #{bert_self_attention.1} parent=1 // pred_check
      _
    $region11: #{bert_self_attention.1} parent=1 // pred_check_branch
      %36 = sbr.rel (0) target = $region13
    $region12: #{bert_self_attention.1} parent=1 // pred_region
      _
    $region13: #{bert_self_attention.1} parent=1 // pred_fallthru
      _
    // Predicated region
    $region14: #{bert_self_attention.1} parent=1 // pred_check
      _
    $region15: #{bert_self_attention.1} parent=1 // pred_check_branch
      %38 = sbr.rel (0) target = $region17
    $region16: #{bert_self_attention.1} parent=1 // pred_region
      %39 = dma.done [#allocation3], 256
    $region17: #{bert_self_attention.1} parent=1 // pred_fallthru
      _
    // Predicated region
    $region18: #{bert_self_attention.1} parent=1 // pred_check
      _
    $region19: #{bert_self_attention.1} parent=1 // pred_check_branch
      %41 = sbr.rel (0) target = $region21
    $region20: #{bert_self_attention.1} parent=1 // pred_region
      %42 = dma.done [#allocation6], 512
    $region21: #{bert_self_attention.1} parent=1 // pred_fallthru
      _
    %v43 = vld [vmem:[#allocation2] sm:$0xff]
    %v44 = vld [vmem:[#allocation2 + $0x8] sm:$0xff]
    %v45 = vld [vmem:[#allocation5] sm:$0xff]
    %v46 = vld [vmem:[#allocation5 + $0x8] sm:$0xff]
    %v47 = vld [vmem:[#allocation5 + $0x10] sm:$0xff]
    %v48 = vld [vmem:[#allocation5 + $0x18] sm:$0xff]
    %v49 = vld [vmem:[%s2] sm:$0x1]
    %v51 = vlaneseq
    %v52 = vshrl.u32 %v51, 7
    %v53 = vsub.s32 0, %v52
    %v54 = vrot.slane %v49, %v53
    %vm56 = vcmask 261120
    %v58 = vsel %vm56, %v43, 0
    %v61 = vsel %vm56, %v44, 0
    %63 = vmatprep.subr.mxu0 0.0
    %64 = vmatpush1.msra.mxu0 0.0
    %65 = vmatprep.subr.mxu0 0.0
    %66 = vmatpush1.msra.mxu0 0.0
    %67 = vmatprep.subr.mxu0 0.0
    %68 = vmatpush1.msra.mxu0 0.0
    %69 = vmatprep.subr.mxu0 0.0
    %70 = vmatpush1.msra.mxu0 0.0
    %71 = vmatprep.subr.mxu0 0.0
    %72 = vmatpush1.msra.mxu0 0.0
    %73 = vmatprep.subr.mxu0 0.0
    %74 = vmatpush1.msra.mxu0 0.0
    %75 = vmatprep.subr.mxu0 0.0
    %76 = vmatpush1.msra.mxu0 0.0
    %77 = vmatprep.subr.mxu0 0.0
    %78 = vmatpush1.msra.mxu0 0.0
    %79 = vmatprep.subr.mxu0 0.0
    %80 = vmatpush1.msra.mxu0 0.0
    %81 = vmatprep.subr.mxu0 0.0
    %82 = vmatpush1.msra.mxu0 0.0
    %83 = vmatprep.subr.mxu0 0.0
    %84 = vmatpush1.msra.mxu0 0.0
    %85 = vmatprep.subr.mxu0 0.0
    %86 = vmatpush1.msra.mxu0 0.0
    %87 = vmatprep.subr.mxu0 0.0
    %v88 = vand.u32 %v48, 4294901760
    %89 = vmatpush1.msra.mxu0 %v88
    %90 = vmatprep.subr.mxu0 0.0
    %v91 = vand.u32 %v47, 4294901760
    %92 = vmatpush1.msra.mxu0 %v91
    %93 = vmatprep.subr.mxu0 0.0
    %v94 = vand.u32 %v46, 4294901760
    %95 = vmatpush1.msra.mxu0 %v94
    %96 = vmatprep.subr.mxu0 0.0
    %v97 = vand.u32 %v45, 4294901760
    %98 = vmatpush1.msra.mxu0 %v97
    %99 = vmatprep.subr.mxu0 0.0
    %100 = vmatpush2.msra.mxu0 0.0
    %101 = vmatprep.subr.mxu0 0.0
    %102 = vmatpush2.msra.mxu0 0.0
    %103 = vmatprep.subr.mxu0 0.0
    %104 = vmatpush2.msra.mxu0 0.0
    %105 = vmatprep.subr.mxu0 0.0
    %106 = vmatpush2.msra.mxu0 0.0
    %107 = vmatprep.subr.mxu0 0.0
    %108 = vmatpush2.msra.mxu0 0.0
    %109 = vmatprep.subr.mxu0 0.0
    %110 = vmatpush2.msra.mxu0 0.0
    %111 = vmatprep.subr.mxu0 0.0
    %112 = vmatpush2.msra.mxu0 0.0
    %113 = vmatprep.subr.mxu0 0.0
    %114 = vmatpush2.msra.mxu0 0.0
    %115 = vmatprep.subr.mxu0 0.0
    %116 = vmatpush2.msra.mxu0 0.0
    %117 = vmatprep.subr.mxu0 0.0
    %118 = vmatpush2.msra.mxu0 0.0
    %119 = vmatprep.subr.mxu0 0.0
    %120 = vmatpush2.msra.mxu0 0.0
    %121 = vmatprep.subr.mxu0 0.0
    %122 = vmatpush2.msra.mxu0 0.0
    %123 = vmatprep.subr.mxu0 0.0
    %124 = vmatpush2.msra.mxu0 0.0
    %125 = vmatprep.subr.mxu0 0.0
    %126 = vmatpush2.msra.mxu0 0.0
    %127 = vmatprep.subr.mxu0 0.0
    %128 = vmatpush2.msra.mxu0 0.0
    %129 = vmatprep.subr.mxu0 0.0
    %130 = vmatpush2.msra.mxu0 0.0
    %131 = vmatprep.mubr.f32.mxu0 0.0
    %v132 = vand.u32 %v58, 4294901760
    %v133 = vsub.f32 %v58, %v132
    %v134 = vand.u32 %v133, 4294901760
    %v135 = vsub.f32 %v133, %v134
    %v136 = vand.u32 %v135, 4294901760
    %137 = vmatmul.mubr.f32.gmra.mxu0 %v136
    %v138 = vpop.f32.mrf.mxu0
    %v139 = vadd.f32 %v54, %v138
    %v140 = vpop.f32.mrf.mxu0
    %141 = vmatprep.mubr.f32.mxu0 0.0
    %v142 = vand.u32 %v61, 4294901760
    %v143 = vsub.f32 %v61, %v142
    %v144 = vand.u32 %v143, 4294901760
    %v145 = vsub.f32 %v143, %v144
    %v146 = vand.u32 %v145, 4294901760
    %147 = vmatmul.mubr.f32.gmra.mxu0 %v146
    %v148 = vpop.f32.mrf.mxu0
    %v149 = vadd.f32 %v54, %v148
    %v150 = vpop.f32.mrf.mxu0
    %151 = vdwg.mxu0
    %152 = vmatprep.subr.mxu0 0.0
    %153 = vmatpush1.msra.mxu0 0.0
    %154 = vmatprep.subr.mxu0 0.0
    %155 = vmatpush1.msra.mxu0 0.0
    %156 = vmatprep.subr.mxu0 0.0
    %157 = vmatpush1.msra.mxu0 0.0
    %158 = vmatprep.subr.mxu0 0.0
    %159 = vmatpush1.msra.mxu0 0.0
    %160 = vmatprep.subr.mxu0 0.0
    %161 = vmatpush1.msra.mxu0 0.0
    %162 = vmatprep.subr.mxu0 0.0
    %163 = vmatpush1.msra.mxu0 0.0
    %164 = vmatprep.subr.mxu0 0.0
    %165 = vmatpush1.msra.mxu0 0.0
    %166 = vmatprep.subr.mxu0 0.0
    %167 = vmatpush1.msra.mxu0 0.0
    %168 = vmatprep.subr.mxu0 0.0
    %169 = vmatpush1.msra.mxu0 0.0
    %170 = vmatprep.subr.mxu0 0.0
    %171 = vmatpush1.msra.mxu0 0.0
    %172 = vmatprep.subr.mxu0 0.0
    %173 = vmatpush1.msra.mxu0 0.0
    %174 = vmatprep.subr.mxu0 0.0
    %175 = vmatpush1.msra.mxu0 0.0
    %176 = vmatprep.subr.mxu0 0.0
    %v177 = vand.u32 %v48, 4294901760
    %v178 = vsub.f32 %v48, %v177
    %v179 = vand.u32 %v178, 4294901760
    %v180 = vsub.f32 %v178, %v179
    %v181 = vand.u32 %v180, 4294901760
    %182 = vmatpush1.msra.mxu0 %v181
    %183 = vmatprep.subr.mxu0 0.0
    %v184 = vand.u32 %v47, 4294901760
    %v185 = vsub.f32 %v47, %v184
    %v186 = vand.u32 %v185, 4294901760
    %v187 = vsub.f32 %v185, %v186
    %v188 = vand.u32 %v187, 4294901760
    %189 = vmatpush1.msra.mxu0 %v188
    %190 = vmatprep.subr.mxu0 0.0
    %v191 = vand.u32 %v46, 4294901760
    %v192 = vsub.f32 %v46, %v191
    %v193 = vand.u32 %v192, 4294901760
    %v194 = vsub.f32 %v192, %v193
    %v195 = vand.u32 %v194, 4294901760
    %196 = vmatpush1.msra.mxu0 %v195
    %197 = vmatprep.subr.mxu0 0.0
    %v198 = vand.u32 %v45, 4294901760
    %v199 = vsub.f32 %v45, %v198
    %v200 = vand.u32 %v199, 4294901760
    %v201 = vsub.f32 %v199, %v200
    %v202 = vand.u32 %v201, 4294901760
    %203 = vmatpush1.msra.mxu0 %v202
    %204 = vmatprep.subr.mxu0 0.0
    %205 = vmatpush2.msra.mxu0 0.0
    %206 = vmatprep.subr.mxu0 0.0
    %207 = vmatpush2.msra.mxu0 0.0
    %208 = vmatprep.subr.mxu0 0.0
    %209 = vmatpush2.msra.mxu0 0.0
    %210 = vmatprep.subr.mxu0 0.0
    %211 = vmatpush2.msra.mxu0 0.0
    %212 = vmatprep.subr.mxu0 0.0
    %213 = vmatpush2.msra.mxu0 0.0
    %214 = vmatprep.subr.mxu0 0.0
    %215 = vmatpush2.msra.mxu0 0.0
    %216 = vmatprep.subr.mxu0 0.0
    %217 = vmatpush2.msra.mxu0 0.0
    %218 = vmatprep.subr.mxu0 0.0
    %219 = vmatpush2.msra.mxu0 0.0
    %220 = vmatprep.subr.mxu0 0.0
    %221 = vmatpush2.msra.mxu0 0.0
    %222 = vmatprep.subr.mxu0 0.0
    %223 = vmatpush2.msra.mxu0 0.0
    %224 = vmatprep.subr.mxu0 0.0
    %225 = vmatpush2.msra.mxu0 0.0
    %226 = vmatprep.subr.mxu0 0.0
    %227 = vmatpush2.msra.mxu0 0.0
    %228 = vmatprep.subr.mxu0 0.0
    %229 = vmatpush2.msra.mxu0 0.0
    %230 = vmatprep.subr.mxu0 0.0
    %231 = vmatpush2.msra.mxu0 0.0
    %232 = vmatprep.subr.mxu0 0.0
    %233 = vmatpush2.msra.mxu0 0.0
    %234 = vmatprep.subr.mxu0 0.0
    %235 = vmatpush2.msra.mxu0 0.0
    %236 = vmatprep.mubr.f32.mxu0 0.0
    %v237 = vand.u32 %v58, 4294901760
    %238 = vmatmul.mubr.f32.gmra.mxu0 %v237
    %v239 = vpop.f32.mrf.mxu0
    %v240 = vadd.f32 %v139, %v239
    %v241 = vpop.f32.mrf.mxu0
    %242 = vmatprep.mubr.f32.mxu0 0.0
    %v243 = vand.u32 %v61, 4294901760
    %244 = vmatmul.mubr.f32.gmra.mxu0 %v243
    %v245 = vpop.f32.mrf.mxu0
    %v246 = vadd.f32 %v149, %v245
    %v247 = vpop.f32.mrf.mxu0
    %248 = vdwg.mxu0
    %249 = vmatprep.subr.mxu0 0.0
    %250 = vmatpush1.msra.mxu0 0.0
    %251 = vmatprep.subr.mxu0 0.0
    %252 = vmatpush1.msra.mxu0 0.0
    %253 = vmatprep.subr.mxu0 0.0
    %254 = vmatpush1.msra.mxu0 0.0
    %255 = vmatprep.subr.mxu0 0.0
    %256 = vmatpush1.msra.mxu0 0.0
    %257 = vmatprep.subr.mxu0 0.0
    %258 = vmatpush1.msra.mxu0 0.0
    %259 = vmatprep.subr.mxu0 0.0
    %260 = vmatpush1.msra.mxu0 0.0
    %261 = vmatprep.subr.mxu0 0.0
    %262 = vmatpush1.msra.mxu0 0.0
    %263 = vmatprep.subr.mxu0 0.0
    %264 = vmatpush1.msra.mxu0 0.0
    %265 = vmatprep.subr.mxu0 0.0
    %266 = vmatpush1.msra.mxu0 0.0
    %267 = vmatprep.subr.mxu0 0.0
    %268 = vmatpush1.msra.mxu0 0.0
    %269 = vmatprep.subr.mxu0 0.0
    %270 = vmatpush1.msra.mxu0 0.0
    %271 = vmatprep.subr.mxu0 0.0
    %272 = vmatpush1.msra.mxu0 0.0
    %273 = vmatprep.subr.mxu0 0.0
    %v274 = vand.u32 %v48, 4294901760
    %v275 = vsub.f32 %v48, %v274
    %276 = vmatpush1.msra.mxu0 %v275
    %277 = vmatprep.subr.mxu0 0.0
    %v278 = vand.u32 %v47, 4294901760
    %v279 = vsub.f32 %v47, %v278
    %280 = vmatpush1.msra.mxu0 %v279
    %281 = vmatprep.subr.mxu0 0.0
    %v282 = vand.u32 %v46, 4294901760
    %v283 = vsub.f32 %v46, %v282
    %284 = vmatpush1.msra.mxu0 %v283
    %285 = vmatprep.subr.mxu0 0.0
    %v286 = vand.u32 %v45, 4294901760
    %v287 = vsub.f32 %v45, %v286
    %288 = vmatpush1.msra.mxu0 %v287
    %289 = vmatprep.subr.mxu0 0.0
    %290 = vmatpush2.msra.mxu0 0.0
    %291 = vmatprep.subr.mxu0 0.0
    %292 = vmatpush2.msra.mxu0 0.0
    %293 = vmatprep.subr.mxu0 0.0
    %294 = vmatpush2.msra.mxu0 0.0
    %295 = vmatprep.subr.mxu0 0.0
    %296 = vmatpush2.msra.mxu0 0.0
    %297 = vmatprep.subr.mxu0 0.0
    %298 = vmatpush2.msra.mxu0 0.0
    %299 = vmatprep.subr.mxu0 0.0
    %300 = vmatpush2.msra.mxu0 0.0
    %301 = vmatprep.subr.mxu0 0.0
    %302 = vmatpush2.msra.mxu0 0.0
    %303 = vmatprep.subr.mxu0 0.0
    %304 = vmatpush2.msra.mxu0 0.0
    %305 = vmatprep.subr.mxu0 0.0
    %306 = vmatpush2.msra.mxu0 0.0
    %307 = vmatprep.subr.mxu0 0.0
    %308 = vmatpush2.msra.mxu0 0.0
    %309 = vmatprep.subr.mxu0 0.0
    %310 = vmatpush2.msra.mxu0 0.0
    %311 = vmatprep.subr.mxu0 0.0
    %312 = vmatpush2.msra.mxu0 0.0
    %313 = vmatprep.subr.mxu0 0.0
    %314 = vmatpush2.msra.mxu0 0.0
    %315 = vmatprep.subr.mxu0 0.0
    %316 = vmatpush2.msra.mxu0 0.0
    %317 = vmatprep.subr.mxu0 0.0
    %318 = vmatpush2.msra.mxu0 0.0
    %319 = vmatprep.subr.mxu0 0.0
    %320 = vmatpush2.msra.mxu0 0.0
    %321 = vmatprep.mubr.f32.mxu0 0.0
    %v322 = vand.u32 %v58, 4294901760
    %v323 = vsub.f32 %v58, %v322
    %324 = vmatmul.mubr.f32.gmra.mxu0 %v323
    %v325 = vpop.f32.mrf.mxu0
    %v326 = vadd.f32 %v240, %v325
    %v327 = vpop.f32.mrf.mxu0
    %328 = vmatprep.mubr.f32.mxu0 0.0
    %v329 = vand.u32 %v61, 4294901760
    %v330 = vsub.f32 %v61, %v329
    %331 = vmatmul.mubr.f32.gmra.mxu0 %v330
    %v332 = vpop.f32.mrf.mxu0
    %v333 = vadd.f32 %v246, %v332
    %v334 = vpop.f32.mrf.mxu0
    %335 = vdwg.mxu0
    %336 = vmatprep.subr.mxu0 0.0
    %337 = vmatpush1.msra.mxu0 0.0
    %338 = vmatprep.subr.mxu0 0.0
    %339 = vmatpush1.msra.mxu0 0.0
    %340 = vmatprep.subr.mxu0 0.0
    %341 = vmatpush1.msra.mxu0 0.0
    %342 = vmatprep.subr.mxu0 0.0
    %343 = vmatpush1.msra.mxu0 0.0
    %344 = vmatprep.subr.mxu0 0.0
    %345 = vmatpush1.msra.mxu0 0.0
    %346 = vmatprep.subr.mxu0 0.0
    %347 = vmatpush1.msra.mxu0 0.0
    %348 = vmatprep.subr.mxu0 0.0
    %349 = vmatpush1.msra.mxu0 0.0
    %350 = vmatprep.subr.mxu0 0.0
    %351 = vmatpush1.msra.mxu0 0.0
    %352 = vmatprep.subr.mxu0 0.0
    %353 = vmatpush1.msra.mxu0 0.0
    %354 = vmatprep.subr.mxu0 0.0
    %355 = vmatpush1.msra.mxu0 0.0
    %356 = vmatprep.subr.mxu0 0.0
    %357 = vmatpush1.msra.mxu0 0.0
    %358 = vmatprep.subr.mxu0 0.0
    %359 = vmatpush1.msra.mxu0 0.0
    %360 = vmatprep.subr.mxu0 0.0
    %v361 = vand.u32 %v48, 4294901760
    %362 = vmatpush1.msra.mxu0 %v361
    %363 = vmatprep.subr.mxu0 0.0
    %v364 = vand.u32 %v47, 4294901760
    %365 = vmatpush1.msra.mxu0 %v364
    %366 = vmatprep.subr.mxu0 0.0
    %v367 = vand.u32 %v46, 4294901760
    %368 = vmatpush1.msra.mxu0 %v367
    %369 = vmatprep.subr.mxu0 0.0
    %v370 = vand.u32 %v45, 4294901760
    %371 = vmatpush1.msra.mxu0 %v370
    %372 = vmatprep.subr.mxu0 0.0
    %373 = vmatpush2.msra.mxu0 0.0
    %374 = vmatprep.subr.mxu0 0.0
    %375 = vmatpush2.msra.mxu0 0.0
    %376 = vmatprep.subr.mxu0 0.0
    %377 = vmatpush2.msra.mxu0 0.0
    %378 = vmatprep.subr.mxu0 0.0
    %379 = vmatpush2.msra.mxu0 0.0
    %380 = vmatprep.subr.mxu0 0.0
    %381 = vmatpush2.msra.mxu0 0.0
    %382 = vmatprep.subr.mxu0 0.0
    %383 = vmatpush2.msra.mxu0 0.0
    %384 = vmatprep.subr.mxu0 0.0
    %385 = vmatpush2.msra.mxu0 0.0
    %386 = vmatprep.subr.mxu0 0.0
    %387 = vmatpush2.msra.mxu0 0.0
    %388 = vmatprep.subr.mxu0 0.0
    %389 = vmatpush2.msra.mxu0 0.0
    %390 = vmatprep.subr.mxu0 0.0
    %391 = vmatpush2.msra.mxu0 0.0
    %392 = vmatprep.subr.mxu0 0.0
    %393 = vmatpush2.msra.mxu0 0.0
    %394 = vmatprep.subr.mxu0 0.0
    %395 = vmatpush2.msra.mxu0 0.0
    %396 = vmatprep.subr.mxu0 0.0
    %397 = vmatpush2.msra.mxu0 0.0
    %398 = vmatprep.subr.mxu0 0.0
    %399 = vmatpush2.msra.mxu0 0.0
    %400 = vmatprep.subr.mxu0 0.0
    %401 = vmatpush2.msra.mxu0 0.0
    %402 = vmatprep.subr.mxu0 0.0
    %403 = vmatpush2.msra.mxu0 0.0
    %404 = vmatprep.mubr.f32.mxu0 0.0
    %v405 = vand.u32 %v58, 4294901760
    %v406 = vsub.f32 %v58, %v405
    %v407 = vand.u32 %v406, 4294901760
    %408 = vmatmul.mubr.f32.gmra.mxu0 %v407
    %v409 = vpop.f32.mrf.mxu0
    %v410 = vadd.f32 %v326, %v409
    %v411 = vpop.f32.mrf.mxu0
    %412 = vmatprep.mubr.f32.mxu0 0.0
    %v413 = vand.u32 %v61, 4294901760
    %v414 = vsub.f32 %v61, %v413
    %v415 = vand.u32 %v414, 4294901760
    %416 = vmatmul.mubr.f32.gmra.mxu0 %v415
    %v417 = vpop.f32.mrf.mxu0
    %v418 = vadd.f32 %v333, %v417
    %v419 = vpop.f32.mrf.mxu0
    %420 = vdwg.mxu0
    %421 = vmatprep.subr.mxu0 0.0
    %422 = vmatpush1.msra.mxu0 0.0
    %423 = vmatprep.subr.mxu0 0.0
    %424 = vmatpush1.msra.mxu0 0.0
    %425 = vmatprep.subr.mxu0 0.0
    %426 = vmatpush1.msra.mxu0 0.0
    %427 = vmatprep.subr.mxu0 0.0
    %428 = vmatpush1.msra.mxu0 0.0
    %429 = vmatprep.subr.mxu0 0.0
    %430 = vmatpush1.msra.mxu0 0.0
    %431 = vmatprep.subr.mxu0 0.0
    %432 = vmatpush1.msra.mxu0 0.0
    %433 = vmatprep.subr.mxu0 0.0
    %434 = vmatpush1.msra.mxu0 0.0
    %435 = vmatprep.subr.mxu0 0.0
    %436 = vmatpush1.msra.mxu0 0.0
    %437 = vmatprep.subr.mxu0 0.0
    %438 = vmatpush1.msra.mxu0 0.0
    %439 = vmatprep.subr.mxu0 0.0
    %440 = vmatpush1.msra.mxu0 0.0
    %441 = vmatprep.subr.mxu0 0.0
    %442 = vmatpush1.msra.mxu0 0.0
    %443 = vmatprep.subr.mxu0 0.0
    %444 = vmatpush1.msra.mxu0 0.0
    %445 = vmatprep.subr.mxu0 0.0
    %v446 = vand.u32 %v48, 4294901760
    %v447 = vsub.f32 %v48, %v446
    %v448 = vand.u32 %v447, 4294901760
    %449 = vmatpush1.msra.mxu0 %v448
    %450 = vmatprep.subr.mxu0 0.0
    %v451 = vand.u32 %v47, 4294901760
    %v452 = vsub.f32 %v47, %v451
    %v453 = vand.u32 %v452, 4294901760
    %454 = vmatpush1.msra.mxu0 %v453
    %455 = vmatprep.subr.mxu0 0.0
    %v456 = vand.u32 %v46, 4294901760
    %v457 = vsub.f32 %v46, %v456
    %v458 = vand.u32 %v457, 4294901760
    %459 = vmatpush1.msra.mxu0 %v458
    %460 = vmatprep.subr.mxu0 0.0
    %v461 = vand.u32 %v45, 4294901760
    %v462 = vsub.f32 %v45, %v461
    %v463 = vand.u32 %v462, 4294901760
    %464 = vmatpush1.msra.mxu0 %v463
    %465 = vmatprep.subr.mxu0 0.0
    %466 = vmatpush2.msra.mxu0 0.0
    %467 = vmatprep.subr.mxu0 0.0
    %468 = vmatpush2.msra.mxu0 0.0
    %469 = vmatprep.subr.mxu0 0.0
    %470 = vmatpush2.msra.mxu0 0.0
    %471 = vmatprep.subr.mxu0 0.0
    %472 = vmatpush2.msra.mxu0 0.0
    %473 = vmatprep.subr.mxu0 0.0
    %474 = vmatpush2.msra.mxu0 0.0
    %475 = vmatprep.subr.mxu0 0.0
    %476 = vmatpush2.msra.mxu0 0.0
    %477 = vmatprep.subr.mxu0 0.0
    %478 = vmatpush2.msra.mxu0 0.0
    %479 = vmatprep.subr.mxu0 0.0
    %480 = vmatpush2.msra.mxu0 0.0
    %481 = vmatprep.subr.mxu0 0.0
    %482 = vmatpush2.msra.mxu0 0.0
    %483 = vmatprep.subr.mxu0 0.0
    %484 = vmatpush2.msra.mxu0 0.0
    %485 = vmatprep.subr.mxu0 0.0
    %486 = vmatpush2.msra.mxu0 0.0
    %487 = vmatprep.subr.mxu0 0.0
    %488 = vmatpush2.msra.mxu0 0.0
    %489 = vmatprep.subr.mxu0 0.0
    %490 = vmatpush2.msra.mxu0 0.0
    %491 = vmatprep.subr.mxu0 0.0
    %492 = vmatpush2.msra.mxu0 0.0
    %493 = vmatprep.subr.mxu0 0.0
    %494 = vmatpush2.msra.mxu0 0.0
    %495 = vmatprep.subr.mxu0 0.0
    %496 = vmatpush2.msra.mxu0 0.0
    %497 = vmatprep.mubr.f32.mxu0 0.0
    %v498 = vand.u32 %v58, 4294901760
    %499 = vmatmul.mubr.f32.gmra.mxu0 %v498
    %v500 = vpop.f32.mrf.mxu0
    %v501 = vadd.f32 %v410, %v500
    %v502 = vpop.f32.mrf.mxu0
    %503 = vmatprep.mubr.f32.mxu0 0.0
    %v504 = vand.u32 %v61, 4294901760
    %505 = vmatmul.mubr.f32.gmra.mxu0 %v504
    %v506 = vpop.f32.mrf.mxu0
    %v507 = vadd.f32 %v418, %v506
    %v508 = vpop.f32.mrf.mxu0
    %509 = vdwg.mxu0
    %510 = vmatprep.subr.mxu0 0.0
    %511 = vmatpush1.msra.mxu0 0.0
    %512 = vmatprep.subr.mxu0 0.0
    %513 = vmatpush1.msra.mxu0 0.0
    %514 = vmatprep.subr.mxu0 0.0
    %515 = vmatpush1.msra.mxu0 0.0
    %516 = vmatprep.subr.mxu0 0.0
    %517 = vmatpush1.msra.mxu0 0.0
    %518 = vmatprep.subr.mxu0 0.0
    %519 = vmatpush1.msra.mxu0 0.0
    %520 = vmatprep.subr.mxu0 0.0
    %521 = vmatpush1.msra.mxu0 0.0
    %522 = vmatprep.subr.mxu0 0.0
    %523 = vmatpush1.msra.mxu0 0.0
    %524 = vmatprep.subr.mxu0 0.0
    %525 = vmatpush1.msra.mxu0 0.0
    %526 = vmatprep.subr.mxu0 0.0
    %527 = vmatpush1.msra.mxu0 0.0
    %528 = vmatprep.subr.mxu0 0.0
    %529 = vmatpush1.msra.mxu0 0.0
    %530 = vmatprep.subr.mxu0 0.0
    %531 = vmatpush1.msra.mxu0 0.0
    %532 = vmatprep.subr.mxu0 0.0
    %533 = vmatpush1.msra.mxu0 0.0
    %534 = vmatprep.subr.mxu0 0.0
    %v535 = vand.u32 %v48, 4294901760
    %536 = vmatpush1.msra.mxu0 %v535
    %537 = vmatprep.subr.mxu0 0.0
    %v538 = vand.u32 %v47, 4294901760
    %539 = vmatpush1.msra.mxu0 %v538
    %540 = vmatprep.subr.mxu0 0.0
    %v541 = vand.u32 %v46, 4294901760
    %542 = vmatpush1.msra.mxu0 %v541
    %543 = vmatprep.subr.mxu0 0.0
    %v544 = vand.u32 %v45, 4294901760
    %545 = vmatpush1.msra.mxu0 %v544
    %546 = vmatprep.subr.mxu0 0.0
    %547 = vmatpush2.msra.mxu0 0.0
    %548 = vmatprep.subr.mxu0 0.0
    %549 = vmatpush2.msra.mxu0 0.0
    %550 = vmatprep.subr.mxu0 0.0
    %551 = vmatpush2.msra.mxu0 0.0
    %552 = vmatprep.subr.mxu0 0.0
    %553 = vmatpush2.msra.mxu0 0.0
    %554 = vmatprep.subr.mxu0 0.0
    %555 = vmatpush2.msra.mxu0 0.0
    %556 = vmatprep.subr.mxu0 0.0
    %557 = vmatpush2.msra.mxu0 0.0
    %558 = vmatprep.subr.mxu0 0.0
    %559 = vmatpush2.msra.mxu0 0.0
    %560 = vmatprep.subr.mxu0 0.0
    %561 = vmatpush2.msra.mxu0 0.0
    %562 = vmatprep.subr.mxu0 0.0
    %563 = vmatpush2.msra.mxu0 0.0
    %564 = vmatprep.subr.mxu0 0.0
    %565 = vmatpush2.msra.mxu0 0.0
    %566 = vmatprep.subr.mxu0 0.0
    %567 = vmatpush2.msra.mxu0 0.0
    %568 = vmatprep.subr.mxu0 0.0
    %569 = vmatpush2.msra.mxu0 0.0
    %570 = vmatprep.subr.mxu0 0.0
    %571 = vmatpush2.msra.mxu0 0.0
    %572 = vmatprep.subr.mxu0 0.0
    %573 = vmatpush2.msra.mxu0 0.0
    %574 = vmatprep.subr.mxu0 0.0
    %575 = vmatpush2.msra.mxu0 0.0
    %576 = vmatprep.subr.mxu0 0.0
    %577 = vmatpush2.msra.mxu0 0.0
    %578 = vmatprep.mubr.f32.mxu0 0.0
    %v579 = vand.u32 %v58, 4294901760
    %580 = vmatmul.mubr.f32.gmra.mxu0 %v579
    %v581 = vpop.f32.mrf.mxu0
    %v582 = vadd.f32 %v501, %v581
    %v583 = vpop.f32.mrf.mxu0
    %584 = vmatprep.mubr.f32.mxu0 0.0
    %v585 = vand.u32 %v61, 4294901760
    %586 = vmatmul.mubr.f32.gmra.mxu0 %v585
    %v587 = vpop.f32.mrf.mxu0
    %v588 = vadd.f32 %v507, %v587
    %v589 = vpop.f32.mrf.mxu0
    %590 = vdwg.mxu0
    %592 = vrot.lane.b32.xlu0 %v582, 120
    %v593 = vpop.permute.xlu0 %592
    %594 = vrot.lane.b32.xlu0 %v582, 112
    %v595 = vpop.permute.xlu0 %594
    %596 = vrot.lane.b32.xlu0 %v582, 104
    %v597 = vpop.permute.xlu0 %596
    %599 = vrot.lane.b32.xlu0 %v588, 120
    %v600 = vpop.permute.xlu0 %599
    %601 = vrot.lane.b32.xlu0 %v588, 112
    %v602 = vpop.permute.xlu0 %601
    %603 = vrot.lane.b32.xlu0 %v588, 104
    %v604 = vpop.permute.xlu0 %603
    %605 = vrot.lane.b32.xlu0 %v582, 96
    %v606 = vpop.permute.xlu0 %605
    %vm607 = vcmask 64512
    %v608 = vsel %vm607, %v582, 0
    %v610 = vsel %vm607, %v606, 0
    %612 = vmatprep.subr.mxu0 0.0
    %613 = vmatpush1.xpose.msra.mxu0 0.0
    %614 = vmatprep.subr.mxu0 0.0
    %615 = vmatpush1.xpose.msra.mxu0 0.0
    %616 = vmatprep.subr.mxu0 0.0
    %617 = vmatpush1.xpose.msra.mxu0 0.0
    %618 = vmatprep.subr.mxu0 0.0
    %619 = vmatpush1.xpose.msra.mxu0 0.0
    %620 = vmatprep.subr.mxu0 0.0
    %621 = vmatpush1.xpose.msra.mxu0 0.0
    %622 = vmatprep.subr.mxu0 0.0
    %623 = vmatpush1.xpose.msra.mxu0 0.0
    %624 = vmatprep.subr.mxu0 0.0
    %625 = vmatpush1.xpose.msra.mxu0 0.0
    %626 = vmatprep.subr.mxu0 0.0
    %627 = vmatpush1.xpose.msra.mxu0 0.0
    %628 = vmatprep.subr.mxu0 0.0
    %629 = vmatpush1.xpose.msra.mxu0 0.0
    %630 = vmatprep.subr.mxu0 0.0
    %631 = vmatpush1.xpose.msra.mxu0 0.0
    %632 = vmatprep.subr.mxu0 0.0
    %633 = vmatpush1.xpose.msra.mxu0 0.0
    %634 = vmatprep.subr.mxu0 0.0
    %635 = vmatpush1.xpose.msra.mxu0 0.0
    %636 = vmatprep.subr.mxu0 0.0
    %637 = vmatpush1.xpose.msra.mxu0 0.0
    %638 = vmatprep.subr.mxu0 0.0
    %639 = vmatpush1.xpose.msra.mxu0 0.0
    %640 = vmatprep.subr.mxu0 0.0
    %641 = vmatpush1.xpose.msra.mxu0 0.0
    %642 = vmatprep.subr.mxu0 0.0
    %v643 = vand.u32 %v610, 4294901760
    %644 = vmatpush1.xpose.msra.mxu0 %v643
    %645 = vmatprep.subr.mxu0 0.0
    %646 = vmatpush2.xpose.msra.mxu0 0.0
    %647 = vmatprep.subr.mxu0 0.0
    %648 = vmatpush2.xpose.msra.mxu0 0.0
    %649 = vmatprep.subr.mxu0 0.0
    %650 = vmatpush2.xpose.msra.mxu0 0.0
    %651 = vmatprep.subr.mxu0 0.0
    %652 = vmatpush2.xpose.msra.mxu0 0.0
    %653 = vmatprep.subr.mxu0 0.0
    %654 = vmatpush2.xpose.msra.mxu0 0.0
    %655 = vmatprep.subr.mxu0 0.0
    %656 = vmatpush2.xpose.msra.mxu0 0.0
    %657 = vmatprep.subr.mxu0 0.0
    %658 = vmatpush2.xpose.msra.mxu0 0.0
    %659 = vmatprep.subr.mxu0 0.0
    %660 = vmatpush2.xpose.msra.mxu0 0.0
    %661 = vmatprep.subr.mxu0 0.0
    %662 = vmatpush2.xpose.msra.mxu0 0.0
    %663 = vmatprep.subr.mxu0 0.0
    %664 = vmatpush2.xpose.msra.mxu0 0.0
    %665 = vmatprep.subr.mxu0 0.0
    %666 = vmatpush2.xpose.msra.mxu0 0.0
    %667 = vmatprep.subr.mxu0 0.0
    %668 = vmatpush2.xpose.msra.mxu0 0.0
    %669 = vmatprep.subr.mxu0 0.0
    %670 = vmatpush2.xpose.msra.mxu0 0.0
    %671 = vmatprep.subr.mxu0 0.0
    %672 = vmatpush2.xpose.msra.mxu0 0.0
    %673 = vmatprep.subr.mxu0 0.0
    %674 = vmatpush2.xpose.msra.mxu0 0.0
    %675 = vmatprep.subr.mxu0 0.0
    %676 = vmatpush2.xpose.msra.mxu0 0.0
    %677 = vmatprep.mubr.f32.mxu0 0.0
    %v678 = vand.u32 %v608, 4294901760
    %v679 = vsub.f32 %v608, %v678
    %v680 = vand.u32 %v679, 4294901760
    %v681 = vsub.f32 %v679, %v680
    %v682 = vand.u32 %v681, 4294901760
    %683 = vmatmul.mubr.f32.gmra.mxu0 %v682
    %v684 = vpop.f32.mrf.mxu0
    %v685 = vadd.f32 0.0, %v684
    %v686 = vpop.f32.mrf.mxu0
    %687 = vdwg.mxu0
    %688 = vmatprep.subr.mxu0 0.0
    %689 = vmatpush1.xpose.msra.mxu0 0.0
    %690 = vmatprep.subr.mxu0 0.0
    %691 = vmatpush1.xpose.msra.mxu0 0.0
    %692 = vmatprep.subr.mxu0 0.0
    %693 = vmatpush1.xpose.msra.mxu0 0.0
    %694 = vmatprep.subr.mxu0 0.0
    %695 = vmatpush1.xpose.msra.mxu0 0.0
    %696 = vmatprep.subr.mxu0 0.0
    %697 = vmatpush1.xpose.msra.mxu0 0.0
    %698 = vmatprep.subr.mxu0 0.0
    %699 = vmatpush1.xpose.msra.mxu0 0.0
    %700 = vmatprep.subr.mxu0 0.0
    %701 = vmatpush1.xpose.msra.mxu0 0.0
    %702 = vmatprep.subr.mxu0 0.0
    %703 = vmatpush1.xpose.msra.mxu0 0.0
    %704 = vmatprep.subr.mxu0 0.0
    %705 = vmatpush1.xpose.msra.mxu0 0.0
    %706 = vmatprep.subr.mxu0 0.0
    %707 = vmatpush1.xpose.msra.mxu0 0.0
    %708 = vmatprep.subr.mxu0 0.0
    %709 = vmatpush1.xpose.msra.mxu0 0.0
    %710 = vmatprep.subr.mxu0 0.0
    %711 = vmatpush1.xpose.msra.mxu0 0.0
    %712 = vmatprep.subr.mxu0 0.0
    %713 = vmatpush1.xpose.msra.mxu0 0.0
    %714 = vmatprep.subr.mxu0 0.0
    %715 = vmatpush1.xpose.msra.mxu0 0.0
    %716 = vmatprep.subr.mxu0 0.0
    %717 = vmatpush1.xpose.msra.mxu0 0.0
    %718 = vmatprep.subr.mxu0 0.0
    %v719 = vand.u32 %v610, 4294901760
    %v720 = vsub.f32 %v610, %v719
    %v721 = vand.u32 %v720, 4294901760
    %v722 = vsub.f32 %v720, %v721
    %v723 = vand.u32 %v722, 4294901760
    %724 = vmatpush1.xpose.msra.mxu0 %v723
    %725 = vmatprep.subr.mxu0 0.0
    %726 = vmatpush2.xpose.msra.mxu0 0.0
    %727 = vmatprep.subr.mxu0 0.0
    %728 = vmatpush2.xpose.msra.mxu0 0.0
    %729 = vmatprep.subr.mxu0 0.0
    %730 = vmatpush2.xpose.msra.mxu0 0.0
    %731 = vmatprep.subr.mxu0 0.0
    %732 = vmatpush2.xpose.msra.mxu0 0.0
    %733 = vmatprep.subr.mxu0 0.0
    %734 = vmatpush2.xpose.msra.mxu0 0.0
    %735 = vmatprep.subr.mxu0 0.0
    %736 = vmatpush2.xpose.msra.mxu0 0.0
    %737 = vmatprep.subr.mxu0 0.0
    %738 = vmatpush2.xpose.msra.mxu0 0.0
    %739 = vmatprep.subr.mxu0 0.0
    %740 = vmatpush2.xpose.msra.mxu0 0.0
    %741 = vmatprep.subr.mxu0 0.0
    %742 = vmatpush2.xpose.msra.mxu0 0.0
    %743 = vmatprep.subr.mxu0 0.0
    %744 = vmatpush2.xpose.msra.mxu0 0.0
    %745 = vmatprep.subr.mxu0 0.0
    %746 = vmatpush2.xpose.msra.mxu0 0.0
    %747 = vmatprep.subr.mxu0 0.0
    %748 = vmatpush2.xpose.msra.mxu0 0.0
    %749 = vmatprep.subr.mxu0 0.0
    %750 = vmatpush2.xpose.msra.mxu0 0.0
    %751 = vmatprep.subr.mxu0 0.0
    %752 = vmatpush2.xpose.msra.mxu0 0.0
    %753 = vmatprep.subr.mxu0 0.0
    %754 = vmatpush2.xpose.msra.mxu0 0.0
    %755 = vmatprep.subr.mxu0 0.0
    %756 = vmatpush2.xpose.msra.mxu0 0.0
    %757 = vmatprep.mubr.f32.mxu0 0.0
    %v758 = vand.u32 %v608, 4294901760
    %759 = vmatmul.mubr.f32.gmra.mxu0 %v758
    %v760 = vpop.f32.mrf.mxu0
    %v761 = vadd.f32 %v685, %v760
    %v762 = vpop.f32.mrf.mxu0
    %763 = vdwg.mxu0
    %764 = vmatprep.subr.mxu0 0.0
    %765 = vmatpush1.xpose.msra.mxu0 0.0
    %766 = vmatprep.subr.mxu0 0.0
    %767 = vmatpush1.xpose.msra.mxu0 0.0
    %768 = vmatprep.subr.mxu0 0.0
    %769 = vmatpush1.xpose.msra.mxu0 0.0
    %770 = vmatprep.subr.mxu0 0.0
    %771 = vmatpush1.xpose.msra.mxu0 0.0
    %772 = vmatprep.subr.mxu0 0.0
    %773 = vmatpush1.xpose.msra.mxu0 0.0
    %774 = vmatprep.subr.mxu0 0.0
    %775 = vmatpush1.xpose.msra.mxu0 0.0
    %776 = vmatprep.subr.mxu0 0.0
    %777 = vmatpush1.xpose.msra.mxu0 0.0
    %778 = vmatprep.subr.mxu0 0.0
    %779 = vmatpush1.xpose.msra.mxu0 0.0
    %780 = vmatprep.subr.mxu0 0.0
    %781 = vmatpush1.xpose.msra.mxu0 0.0
    %782 = vmatprep.subr.mxu0 0.0
    %783 = vmatpush1.xpose.msra.mxu0 0.0
    %784 = vmatprep.subr.mxu0 0.0
    %785 = vmatpush1.xpose.msra.mxu0 0.0
    %786 = vmatprep.subr.mxu0 0.0
    %787 = vmatpush1.xpose.msra.mxu0 0.0
    %788 = vmatprep.subr.mxu0 0.0
    %789 = vmatpush1.xpose.msra.mxu0 0.0
    %790 = vmatprep.subr.mxu0 0.0
    %791 = vmatpush1.xpose.msra.mxu0 0.0
    %792 = vmatprep.subr.mxu0 0.0
    %793 = vmatpush1.xpose.msra.mxu0 0.0
    %794 = vmatprep.subr.mxu0 0.0
    %v795 = vand.u32 %v610, 4294901760
    %v796 = vsub.f32 %v610, %v795
    %797 = vmatpush1.xpose.msra.mxu0 %v796
    %798 = vmatprep.subr.mxu0 0.0
    %799 = vmatpush2.xpose.msra.mxu0 0.0
    %800 = vmatprep.subr.mxu0 0.0
    %801 = vmatpush2.xpose.msra.mxu0 0.0
    %802 = vmatprep.subr.mxu0 0.0
    %803 = vmatpush2.xpose.msra.mxu0 0.0
    %804 = vmatprep.subr.mxu0 0.0
    %805 = vmatpush2.xpose.msra.mxu0 0.0
    %806 = vmatprep.subr.mxu0 0.0
    %807 = vmatpush2.xpose.msra.mxu0 0.0
    %808 = vmatprep.subr.mxu0 0.0
    %809 = vmatpush2.xpose.msra.mxu0 0.0
    %810 = vmatprep.subr.mxu0 0.0
    %811 = vmatpush2.xpose.msra.mxu0 0.0
    %812 = vmatprep.subr.mxu0 0.0
    %813 = vmatpush2.xpose.msra.mxu0 0.0
    %814 = vmatprep.subr.mxu0 0.0
    %815 = vmatpush2.xpose.msra.mxu0 0.0
    %816 = vmatprep.subr.mxu0 0.0
    %817 = vmatpush2.xpose.msra.mxu0 0.0
    %818 = vmatprep.subr.mxu0 0.0
    %819 = vmatpush2.xpose.msra.mxu0 0.0
    %820 = vmatprep.subr.mxu0 0.0
    %821 = vmatpush2.xpose.msra.mxu0 0.0
    %822 = vmatprep.subr.mxu0 0.0
    %823 = vmatpush2.xpose.msra.mxu0 0.0
    %824 = vmatprep.subr.mxu0 0.0
    %825 = vmatpush2.xpose.msra.mxu0 0.0
    %826 = vmatprep.subr.mxu0 0.0
    %827 = vmatpush2.xpose.msra.mxu0 0.0
    %828 = vmatprep.subr.mxu0 0.0
    %829 = vmatpush2.xpose.msra.mxu0 0.0
    %830 = vmatprep.mubr.f32.mxu0 0.0
    %v831 = vand.u32 %v608, 4294901760
    %v832 = vsub.f32 %v608, %v831
    %833 = vmatmul.mubr.f32.gmra.mxu0 %v832
    %v834 = vpop.f32.mrf.mxu0
    %v835 = vadd.f32 %v761, %v834
    %v836 = vpop.f32.mrf.mxu0
    %837 = vdwg.mxu0
    %838 = vmatprep.subr.mxu0 0.0
    %839 = vmatpush1.xpose.msra.mxu0 0.0
    %840 = vmatprep.subr.mxu0 0.0
    %841 = vmatpush1.xpose.msra.mxu0 0.0
    %842 = vmatprep.subr.mxu0 0.0
    %843 = vmatpush1.xpose.msra.mxu0 0.0
    %844 = vmatprep.subr.mxu0 0.0
    %845 = vmatpush1.xpose.msra.mxu0 0.0
    %846 = vmatprep.subr.mxu0 0.0
    %847 = vmatpush1.xpose.msra.mxu0 0.0
    %848 = vmatprep.subr.mxu0 0.0
    %849 = vmatpush1.xpose.msra.mxu0 0.0
    %850 = vmatprep.subr.mxu0 0.0
    %851 = vmatpush1.xpose.msra.mxu0 0.0
    %852 = vmatprep.subr.mxu0 0.0
    %853 = vmatpush1.xpose.msra.mxu0 0.0
    %854 = vmatprep.subr.mxu0 0.0
    %855 = vmatpush1.xpose.msra.mxu0 0.0
    %856 = vmatprep.subr.mxu0 0.0
    %857 = vmatpush1.xpose.msra.mxu0 0.0
    %858 = vmatprep.subr.mxu0 0.0
    %859 = vmatpush1.xpose.msra.mxu0 0.0
    %860 = vmatprep.subr.mxu0 0.0
    %861 = vmatpush1.xpose.msra.mxu0 0.0
    %862 = vmatprep.subr.mxu0 0.0
    %863 = vmatpush1.xpose.msra.mxu0 0.0
    %864 = vmatprep.subr.mxu0 0.0
    %865 = vmatpush1.xpose.msra.mxu0 0.0
    %866 = vmatprep.subr.mxu0 0.0
    %867 = vmatpush1.xpose.msra.mxu0 0.0
    %868 = vmatprep.subr.mxu0 0.0
    %v869 = vand.u32 %v610, 4294901760
    %870 = vmatpush1.xpose.msra.mxu0 %v869
    %871 = vmatprep.subr.mxu0 0.0
    %872 = vmatpush2.xpose.msra.mxu0 0.0
    %873 = vmatprep.subr.mxu0 0.0
    %874 = vmatpush2.xpose.msra.mxu0 0.0
    %875 = vmatprep.subr.mxu0 0.0
    %876 = vmatpush2.xpose.msra.mxu0 0.0
    %877 = vmatprep.subr.mxu0 0.0
    %878 = vmatpush2.xpose.msra.mxu0 0.0
    %879 = vmatprep.subr.mxu0 0.0
    %880 = vmatpush2.xpose.msra.mxu0 0.0
    %881 = vmatprep.subr.mxu0 0.0
    %882 = vmatpush2.xpose.msra.mxu0 0.0
    %883 = vmatprep.subr.mxu0 0.0
    %884 = vmatpush2.xpose.msra.mxu0 0.0
    %885 = vmatprep.subr.mxu0 0.0
    %886 = vmatpush2.xpose.msra.mxu0 0.0
    %887 = vmatprep.subr.mxu0 0.0
    %888 = vmatpush2.xpose.msra.mxu0 0.0
    %889 = vmatprep.subr.mxu0 0.0
    %890 = vmatpush2.xpose.msra.mxu0 0.0
    %891 = vmatprep.subr.mxu0 0.0
    %892 = vmatpush2.xpose.msra.mxu0 0.0
    %893 = vmatprep.subr.mxu0 0.0
    %894 = vmatpush2.xpose.msra.mxu0 0.0
    %895 = vmatprep.subr.mxu0 0.0
    %896 = vmatpush2.xpose.msra.mxu0 0.0
    %897 = vmatprep.subr.mxu0 0.0
    %898 = vmatpush2.xpose.msra.mxu0 0.0
    %899 = vmatprep.subr.mxu0 0.0
    %900 = vmatpush2.xpose.msra.mxu0 0.0
    %901 = vmatprep.subr.mxu0 0.0
    %902 = vmatpush2.xpose.msra.mxu0 0.0
    %903 = vmatprep.mubr.f32.mxu0 0.0
    %v904 = vand.u32 %v608, 4294901760
    %v905 = vsub.f32 %v608, %v904
    %v906 = vand.u32 %v905, 4294901760
    %907 = vmatmul.mubr.f32.gmra.mxu0 %v906
    %v908 = vpop.f32.mrf.mxu0
    %v909 = vadd.f32 %v835, %v908
    %v910 = vpop.f32.mrf.mxu0
    %911 = vdwg.mxu0
    %912 = vmatprep.subr.mxu0 0.0
    %913 = vmatpush1.xpose.msra.mxu0 0.0
    %914 = vmatprep.subr.mxu0 0.0
    %915 = vmatpush1.xpose.msra.mxu0 0.0
    %916 = vmatprep.subr.mxu0 0.0
    %917 = vmatpush1.xpose.msra.mxu0 0.0
    %918 = vmatprep.subr.mxu0 0.0
    %919 = vmatpush1.xpose.msra.mxu0 0.0
    %920 = vmatprep.subr.mxu0 0.0
    %921 = vmatpush1.xpose.msra.mxu0 0.0
    %922 = vmatprep.subr.mxu0 0.0
    %923 = vmatpush1.xpose.msra.mxu0 0.0
    %924 = vmatprep.subr.mxu0 0.0
    %925 = vmatpush1.xpose.msra.mxu0 0.0
    %926 = vmatprep.subr.mxu0 0.0
    %927 = vmatpush1.xpose.msra.mxu0 0.0
    %928 = vmatprep.subr.mxu0 0.0
    %929 = vmatpush1.xpose.msra.mxu0 0.0
    %930 = vmatprep.subr.mxu0 0.0
    %931 = vmatpush1.xpose.msra.mxu0 0.0
    %932 = vmatprep.subr.mxu0 0.0
    %933 = vmatpush1.xpose.msra.mxu0 0.0
    %934 = vmatprep.subr.mxu0 0.0
    %935 = vmatpush1.xpose.msra.mxu0 0.0
    %936 = vmatprep.subr.mxu0 0.0
    %937 = vmatpush1.xpose.msra.mxu0 0.0
    %938 = vmatprep.subr.mxu0 0.0
    %939 = vmatpush1.xpose.msra.mxu0 0.0
    %940 = vmatprep.subr.mxu0 0.0
    %941 = vmatpush1.xpose.msra.mxu0 0.0
    %942 = vmatprep.subr.mxu0 0.0
    %v943 = vand.u32 %v610, 4294901760
    %v944 = vsub.f32 %v610, %v943
    %v945 = vand.u32 %v944, 4294901760
    %946 = vmatpush1.xpose.msra.mxu0 %v945
    %947 = vmatprep.subr.mxu0 0.0
    %948 = vmatpush2.xpose.msra.mxu0 0.0
    %949 = vmatprep.subr.mxu0 0.0
    %950 = vmatpush2.xpose.msra.mxu0 0.0
    %951 = vmatprep.subr.mxu0 0.0
    %952 = vmatpush2.xpose.msra.mxu0 0.0
    %953 = vmatprep.subr.mxu0 0.0
    %954 = vmatpush2.xpose.msra.mxu0 0.0
    %955 = vmatprep.subr.mxu0 0.0
    %956 = vmatpush2.xpose.msra.mxu0 0.0
    %957 = vmatprep.subr.mxu0 0.0
    %958 = vmatpush2.xpose.msra.mxu0 0.0
    %959 = vmatprep.subr.mxu0 0.0
    %960 = vmatpush2.xpose.msra.mxu0 0.0
    %961 = vmatprep.subr.mxu0 0.0
    %962 = vmatpush2.xpose.msra.mxu0 0.0
    %963 = vmatprep.subr.mxu0 0.0
    %964 = vmatpush2.xpose.msra.mxu0 0.0
    %965 = vmatprep.subr.mxu0 0.0
    %966 = vmatpush2.xpose.msra.mxu0 0.0
    %967 = vmatprep.subr.mxu0 0.0
    %968 = vmatpush2.xpose.msra.mxu0 0.0
    %969 = vmatprep.subr.mxu0 0.0
    %970 = vmatpush2.xpose.msra.mxu0 0.0
    %971 = vmatprep.subr.mxu0 0.0
    %972 = vmatpush2.xpose.msra.mxu0 0.0
    %973 = vmatprep.subr.mxu0 0.0
    %974 = vmatpush2.xpose.msra.mxu0 0.0
    %975 = vmatprep.subr.mxu0 0.0
    %976 = vmatpush2.xpose.msra.mxu0 0.0
    %977 = vmatprep.subr.mxu0 0.0
    %978 = vmatpush2.xpose.msra.mxu0 0.0
    %979 = vmatprep.mubr.f32.mxu0 0.0
    %v980 = vand.u32 %v608, 4294901760
    %981 = vmatmul.mubr.f32.gmra.mxu0 %v980
    %v982 = vpop.f32.mrf.mxu0
    %v983 = vadd.f32 %v909, %v982
    %v984 = vpop.f32.mrf.mxu0
    %985 = vdwg.mxu0
    %986 = vmatprep.subr.mxu0 0.0
    %987 = vmatpush1.xpose.msra.mxu0 0.0
    %988 = vmatprep.subr.mxu0 0.0
    %989 = vmatpush1.xpose.msra.mxu0 0.0
    %990 = vmatprep.subr.mxu0 0.0
    %991 = vmatpush1.xpose.msra.mxu0 0.0
    %992 = vmatprep.subr.mxu0 0.0
    %993 = vmatpush1.xpose.msra.mxu0 0.0
    %994 = vmatprep.subr.mxu0 0.0
    %995 = vmatpush1.xpose.msra.mxu0 0.0
    %996 = vmatprep.subr.mxu0 0.0
    %997 = vmatpush1.xpose.msra.mxu0 0.0
    %998 = vmatprep.subr.mxu0 0.0
    %999 = vmatpush1.xpose.msra.mxu0 0.0
    %1000 = vmatprep.subr.mxu0 0.0
    %1001 = vmatpush1.xpose.msra.mxu0 0.0
    %1002 = vmatprep.subr.mxu0 0.0
    %1003 = vmatpush1.xpose.msra.mxu0 0.0
    %1004 = vmatprep.subr.mxu0 0.0
    %1005 = vmatpush1.xpose.msra.mxu0 0.0
    %1006 = vmatprep.subr.mxu0 0.0
    %1007 = vmatpush1.xpose.msra.mxu0 0.0
    %1008 = vmatprep.subr.mxu0 0.0
    %1009 = vmatpush1.xpose.msra.mxu0 0.0
    %1010 = vmatprep.subr.mxu0 0.0
    %1011 = vmatpush1.xpose.msra.mxu0 0.0
    %1012 = vmatprep.subr.mxu0 0.0
    %1013 = vmatpush1.xpose.msra.mxu0 0.0
    %1014 = vmatprep.subr.mxu0 0.0
    %1015 = vmatpush1.xpose.msra.mxu0 0.0
    %1016 = vmatprep.subr.mxu0 0.0
    %v1017 = vand.u32 %v610, 4294901760
    %1018 = vmatpush1.xpose.msra.mxu0 %v1017
    %1019 = vmatprep.subr.mxu0 0.0
    %1020 = vmatpush2.xpose.msra.mxu0 0.0
    %1021 = vmatprep.subr.mxu0 0.0
    %1022 = vmatpush2.xpose.msra.mxu0 0.0
    %1023 = vmatprep.subr.mxu0 0.0
    %1024 = vmatpush2.xpose.msra.mxu0 0.0
    %1025 = vmatprep.subr.mxu0 0.0
    %1026 = vmatpush2.xpose.msra.mxu0 0.0
    %1027 = vmatprep.subr.mxu0 0.0
    %1028 = vmatpush2.xpose.msra.mxu0 0.0
    %1029 = vmatprep.subr.mxu0 0.0
    %1030 = vmatpush2.xpose.msra.mxu0 0.0
    %1031 = vmatprep.subr.mxu0 0.0
    %1032 = vmatpush2.xpose.msra.mxu0 0.0
    %1033 = vmatprep.subr.mxu0 0.0
    %1034 = vmatpush2.xpose.msra.mxu0 0.0
    %1035 = vmatprep.subr.mxu0 0.0
    %1036 = vmatpush2.xpose.msra.mxu0 0.0
    %1037 = vmatprep.subr.mxu0 0.0
    %1038 = vmatpush2.xpose.msra.mxu0 0.0
    %1039 = vmatprep.subr.mxu0 0.0
    %1040 = vmatpush2.xpose.msra.mxu0 0.0
    %1041 = vmatprep.subr.mxu0 0.0
    %1042 = vmatpush2.xpose.msra.mxu0 0.0
    %1043 = vmatprep.subr.mxu0 0.0
    %1044 = vmatpush2.xpose.msra.mxu0 0.0
    %1045 = vmatprep.subr.mxu0 0.0
    %1046 = vmatpush2.xpose.msra.mxu0 0.0
    %1047 = vmatprep.subr.mxu0 0.0
    %1048 = vmatpush2.xpose.msra.mxu0 0.0
    %1049 = vmatprep.subr.mxu0 0.0
    %1050 = vmatpush2.xpose.msra.mxu0 0.0
    %1051 = vmatprep.mubr.f32.mxu0 0.0
    %v1052 = vand.u32 %v608, 4294901760
    %1053 = vmatmul.mubr.f32.gmra.mxu0 %v1052
    %v1054 = vpop.f32.mrf.mxu0
    %v1055 = vadd.f32 %v983, %v1054
    %v1056 = vpop.f32.mrf.mxu0
    %1057 = vdwg.mxu0
    %1058 = vrot.lane.b32.xlu0 %v593, 96
    %v1059 = vpop.permute.xlu0 %1058
    %v1060 = vsel %vm607, %v593, 0
    %v1062 = vsel %vm607, %v1059, 0
    %1064 = vmatprep.subr.mxu0 0.0
    %1065 = vmatpush1.xpose.msra.mxu0 0.0
    %1066 = vmatprep.subr.mxu0 0.0
    %1067 = vmatpush1.xpose.msra.mxu0 0.0
    %1068 = vmatprep.subr.mxu0 0.0
    %1069 = vmatpush1.xpose.msra.mxu0 0.0
    %1070 = vmatprep.subr.mxu0 0.0
    %1071 = vmatpush1.xpose.msra.mxu0 0.0
    %1072 = vmatprep.subr.mxu0 0.0
    %1073 = vmatpush1.xpose.msra.mxu0 0.0
    %1074 = vmatprep.subr.mxu0 0.0
    %1075 = vmatpush1.xpose.msra.mxu0 0.0
    %1076 = vmatprep.subr.mxu0 0.0
    %1077 = vmatpush1.xpose.msra.mxu0 0.0
    %1078 = vmatprep.subr.mxu0 0.0
    %1079 = vmatpush1.xpose.msra.mxu0 0.0
    %1080 = vmatprep.subr.mxu0 0.0
    %1081 = vmatpush1.xpose.msra.mxu0 0.0
    %1082 = vmatprep.subr.mxu0 0.0
    %1083 = vmatpush1.xpose.msra.mxu0 0.0
    %1084 = vmatprep.subr.mxu0 0.0
    %1085 = vmatpush1.xpose.msra.mxu0 0.0
    %1086 = vmatprep.subr.mxu0 0.0
    %1087 = vmatpush1.xpose.msra.mxu0 0.0
    %1088 = vmatprep.subr.mxu0 0.0
    %1089 = vmatpush1.xpose.msra.mxu0 0.0
    %1090 = vmatprep.subr.mxu0 0.0
    %1091 = vmatpush1.xpose.msra.mxu0 0.0
    %1092 = vmatprep.subr.mxu0 0.0
    %1093 = vmatpush1.xpose.msra.mxu0 0.0
    %1094 = vmatprep.subr.mxu0 0.0
    %v1095 = vand.u32 %v1062, 4294901760
    %1096 = vmatpush1.xpose.msra.mxu0 %v1095
    %1097 = vmatprep.subr.mxu0 0.0
    %1098 = vmatpush2.xpose.msra.mxu0 0.0
    %1099 = vmatprep.subr.mxu0 0.0
    %1100 = vmatpush2.xpose.msra.mxu0 0.0
    %1101 = vmatprep.subr.mxu0 0.0
    %1102 = vmatpush2.xpose.msra.mxu0 0.0
    %1103 = vmatprep.subr.mxu0 0.0
    %1104 = vmatpush2.xpose.msra.mxu0 0.0
    %1105 = vmatprep.subr.mxu0 0.0
    %1106 = vmatpush2.xpose.msra.mxu0 0.0
    %1107 = vmatprep.subr.mxu0 0.0
    %1108 = vmatpush2.xpose.msra.mxu0 0.0
    %1109 = vmatprep.subr.mxu0 0.0
    %1110 = vmatpush2.xpose.msra.mxu0 0.0
    %1111 = vmatprep.subr.mxu0 0.0
    %1112 = vmatpush2.xpose.msra.mxu0 0.0
    %1113 = vmatprep.subr.mxu0 0.0
    %1114 = vmatpush2.xpose.msra.mxu0 0.0
    %1115 = vmatprep.subr.mxu0 0.0
    %1116 = vmatpush2.xpose.msra.mxu0 0.0
    %1117 = vmatprep.subr.mxu0 0.0
    %1118 = vmatpush2.xpose.msra.mxu0 0.0
    %1119 = vmatprep.subr.mxu0 0.0
    %1120 = vmatpush2.xpose.msra.mxu0 0.0
    %1121 = vmatprep.subr.mxu0 0.0
    %1122 = vmatpush2.xpose.msra.mxu0 0.0
    %1123 = vmatprep.subr.mxu0 0.0
    %1124 = vmatpush2.xpose.msra.mxu0 0.0
    %1125 = vmatprep.subr.mxu0 0.0
    %1126 = vmatpush2.xpose.msra.mxu0 0.0
    %1127 = vmatprep.subr.mxu0 0.0
    %1128 = vmatpush2.xpose.msra.mxu0 0.0
    %1129 = vmatprep.mubr.f32.mxu0 0.0
    %v1130 = vand.u32 %v1060, 4294901760
    %v1131 = vsub.f32 %v1060, %v1130
    %v1132 = vand.u32 %v1131, 4294901760
    %v1133 = vsub.f32 %v1131, %v1132
    %v1134 = vand.u32 %v1133, 4294901760
    %1135 = vmatmul.mubr.f32.gmra.mxu0 %v1134
    %v1136 = vpop.f32.mrf.mxu0
    %v1137 = vadd.f32 0.0, %v1136
    %v1138 = vpop.f32.mrf.mxu0
    %1139 = vdwg.mxu0
    %1140 = vmatprep.subr.mxu0 0.0
    %1141 = vmatpush1.xpose.msra.mxu0 0.0
    %1142 = vmatprep.subr.mxu0 0.0
    %1143 = vmatpush1.xpose.msra.mxu0 0.0
    %1144 = vmatprep.subr.mxu0 0.0
    %1145 = vmatpush1.xpose.msra.mxu0 0.0
    %1146 = vmatprep.subr.mxu0 0.0
    %1147 = vmatpush1.xpose.msra.mxu0 0.0
    %1148 = vmatprep.subr.mxu0 0.0
    %1149 = vmatpush1.xpose.msra.mxu0 0.0
    %1150 = vmatprep.subr.mxu0 0.0
    %1151 = vmatpush1.xpose.msra.mxu0 0.0
    %1152 = vmatprep.subr.mxu0 0.0
    %1153 = vmatpush1.xpose.msra.mxu0 0.0
    %1154 = vmatprep.subr.mxu0 0.0
    %1155 = vmatpush1.xpose.msra.mxu0 0.0
    %1156 = vmatprep.subr.mxu0 0.0
    %1157 = vmatpush1.xpose.msra.mxu0 0.0
    %1158 = vmatprep.subr.mxu0 0.0
    %1159 = vmatpush1.xpose.msra.mxu0 0.0
    %1160 = vmatprep.subr.mxu0 0.0
    %1161 = vmatpush1.xpose.msra.mxu0 0.0
    %1162 = vmatprep.subr.mxu0 0.0
    %1163 = vmatpush1.xpose.msra.mxu0 0.0
    %1164 = vmatprep.subr.mxu0 0.0
    %1165 = vmatpush1.xpose.msra.mxu0 0.0
    %1166 = vmatprep.subr.mxu0 0.0
    %1167 = vmatpush1.xpose.msra.mxu0 0.0
    %1168 = vmatprep.subr.mxu0 0.0
    %1169 = vmatpush1.xpose.msra.mxu0 0.0
    %1170 = vmatprep.subr.mxu0 0.0
    %v1171 = vand.u32 %v1062, 4294901760
    %v1172 = vsub.f32 %v1062, %v1171
    %v1173 = vand.u32 %v1172, 4294901760
    %v1174 = vsub.f32 %v1172, %v1173
    %v1175 = vand.u32 %v1174, 4294901760
    %1176 = vmatpush1.xpose.msra.mxu0 %v1175
    %1177 = vmatprep.subr.mxu0 0.0
    %1178 = vmatpush2.xpose.msra.mxu0 0.0
    %1179 = vmatprep.subr.mxu0 0.0
    %1180 = vmatpush2.xpose.msra.mxu0 0.0
    %1181 = vmatprep.subr.mxu0 0.0
    %1182 = vmatpush2.xpose.msra.mxu0 0.0
    %1183 = vmatprep.subr.mxu0 0.0
    %1184 = vmatpush2.xpose.msra.mxu0 0.0
    %1185 = vmatprep.subr.mxu0 0.0
    %1186 = vmatpush2.xpose.msra.mxu0 0.0
    %1187 = vmatprep.subr.mxu0 0.0
    %1188 = vmatpush2.xpose.msra.mxu0 0.0
    %1189 = vmatprep.subr.mxu0 0.0
    %1190 = vmatpush2.xpose.msra.mxu0 0.0
    %1191 = vmatprep.subr.mxu0 0.0
    %1192 = vmatpush2.xpose.msra.mxu0 0.0
    %1193 = vmatprep.subr.mxu0 0.0
    %1194 = vmatpush2.xpose.msra.mxu0 0.0
    %1195 = vmatprep.subr.mxu0 0.0
    %1196 = vmatpush2.xpose.msra.mxu0 0.0
    %1197 = vmatprep.subr.mxu0 0.0
    %1198 = vmatpush2.xpose.msra.mxu0 0.0
    %1199 = vmatprep.subr.mxu0 0.0
    %1200 = vmatpush2.xpose.msra.mxu0 0.0
    %1201 = vmatprep.subr.mxu0 0.0
    %1202 = vmatpush2.xpose.msra.mxu0 0.0
    %1203 = vmatprep.subr.mxu0 0.0
    %1204 = vmatpush2.xpose.msra.mxu0 0.0
    %1205 = vmatprep.subr.mxu0 0.0
    %1206 = vmatpush2.xpose.msra.mxu0 0.0
    %1207 = vmatprep.subr.mxu0 0.0
    %1208 = vmatpush2.xpose.msra.mxu0 0.0
    %1209 = vmatprep.mubr.f32.mxu0 0.0
    %v1210 = vand.u32 %v1060, 4294901760
    %1211 = vmatmul.mubr.f32.gmra.mxu0 %v1210
    %v1212 = vpop.f32.mrf.mxu0
    %v1213 = vadd.f32 %v1137, %v1212
    %v1214 = vpop.f32.mrf.mxu0
    %1215 = vdwg.mxu0
    %1216 = vmatprep.subr.mxu0 0.0
    %1217 = vmatpush1.xpose.msra.mxu0 0.0
    %1218 = vmatprep.subr.mxu0 0.0
    %1219 = vmatpush1.xpose.msra.mxu0 0.0
    %1220 = vmatprep.subr.mxu0 0.0
    %1221 = vmatpush1.xpose.msra.mxu0 0.0
    %1222 = vmatprep.subr.mxu0 0.0
    %1223 = vmatpush1.xpose.msra.mxu0 0.0
    %1224 = vmatprep.subr.mxu0 0.0
    %1225 = vmatpush1.xpose.msra.mxu0 0.0
    %1226 = vmatprep.subr.mxu0 0.0
    %1227 = vmatpush1.xpose.msra.mxu0 0.0
    %1228 = vmatprep.subr.mxu0 0.0
    %1229 = vmatpush1.xpose.msra.mxu0 0.0
    %1230 = vmatprep.subr.mxu0 0.0
    %1231 = vmatpush1.xpose.msra.mxu0 0.0
    %1232 = vmatprep.subr.mxu0 0.0
    %1233 = vmatpush1.xpose.msra.mxu0 0.0
    %1234 = vmatprep.subr.mxu0 0.0
    %1235 = vmatpush1.xpose.msra.mxu0 0.0
    %1236 = vmatprep.subr.mxu0 0.0
    %1237 = vmatpush1.xpose.msra.mxu0 0.0
    %1238 = vmatprep.subr.mxu0 0.0
    %1239 = vmatpush1.xpose.msra.mxu0 0.0
    %1240 = vmatprep.subr.mxu0 0.0
    %1241 = vmatpush1.xpose.msra.mxu0 0.0
    %1242 = vmatprep.subr.mxu0 0.0
    %1243 = vmatpush1.xpose.msra.mxu0 0.0
    %1244 = vmatprep.subr.mxu0 0.0
    %1245 = vmatpush1.xpose.msra.mxu0 0.0
    %1246 = vmatprep.subr.mxu0 0.0
    %v1247 = vand.u32 %v1062, 4294901760
    %v1248 = vsub.f32 %v1062, %v1247
    %1249 = vmatpush1.xpose.msra.mxu0 %v1248
    %1250 = vmatprep.subr.mxu0 0.0
    %1251 = vmatpush2.xpose.msra.mxu0 0.0
    %1252 = vmatprep.subr.mxu0 0.0
    %1253 = vmatpush2.xpose.msra.mxu0 0.0
    %1254 = vmatprep.subr.mxu0 0.0
    %1255 = vmatpush2.xpose.msra.mxu0 0.0
    %1256 = vmatprep.subr.mxu0 0.0
    %1257 = vmatpush2.xpose.msra.mxu0 0.0
    %1258 = vmatprep.subr.mxu0 0.0
    %1259 = vmatpush2.xpose.msra.mxu0 0.0
    %1260 = vmatprep.subr.mxu0 0.0
    %1261 = vmatpush2.xpose.msra.mxu0 0.0
    %1262 = vmatprep.subr.mxu0 0.0
    %1263 = vmatpush2.xpose.msra.mxu0 0.0
    %1264 = vmatprep.subr.mxu0 0.0
    %1265 = vmatpush2.xpose.msra.mxu0 0.0
    %1266 = vmatprep.subr.mxu0 0.0
    %1267 = vmatpush2.xpose.msra.mxu0 0.0
    %1268 = vmatprep.subr.mxu0 0.0
    %1269 = vmatpush2.xpose.msra.mxu0 0.0
    %1270 = vmatprep.subr.mxu0 0.0
    %1271 = vmatpush2.xpose.msra.mxu0 0.0
    %1272 = vmatprep.subr.mxu0 0.0
    %1273 = vmatpush2.xpose.msra.mxu0 0.0
    %1274 = vmatprep.subr.mxu0 0.0
    %1275 = vmatpush2.xpose.msra.mxu0 0.0
    %1276 = vmatprep.subr.mxu0 0.0
    %1277 = vmatpush2.xpose.msra.mxu0 0.0
    %1278 = vmatprep.subr.mxu0 0.0
    %1279 = vmatpush2.xpose.msra.mxu0 0.0
    %1280 = vmatprep.subr.mxu0 0.0
    %1281 = vmatpush2.xpose.msra.mxu0 0.0
    %1282 = vmatprep.mubr.f32.mxu0 0.0
    %v1283 = vand.u32 %v1060, 4294901760
    %v1284 = vsub.f32 %v1060, %v1283
    %1285 = vmatmul.mubr.f32.gmra.mxu0 %v1284
    %v1286 = vpop.f32.mrf.mxu0
    %v1287 = vadd.f32 %v1213, %v1286
    %v1288 = vpop.f32.mrf.mxu0
    %1289 = vdwg.mxu0
    %1290 = vmatprep.subr.mxu0 0.0
    %1291 = vmatpush1.xpose.msra.mxu0 0.0
    %1292 = vmatprep.subr.mxu0 0.0
    %1293 = vmatpush1.xpose.msra.mxu0 0.0
    %1294 = vmatprep.subr.mxu0 0.0
    %1295 = vmatpush1.xpose.msra.mxu0 0.0
    %1296 = vmatprep.subr.mxu0 0.0
    %1297 = vmatpush1.xpose.msra.mxu0 0.0
    %1298 = vmatprep.subr.mxu0 0.0
    %1299 = vmatpush1.xpose.msra.mxu0 0.0
    %1300 = vmatprep.subr.mxu0 0.0
    %1301 = vmatpush1.xpose.msra.mxu0 0.0
    %1302 = vmatprep.subr.mxu0 0.0
    %1303 = vmatpush1.xpose.msra.mxu0 0.0
    %1304 = vmatprep.subr.mxu0 0.0
    %1305 = vmatpush1.xpose.msra.mxu0 0.0
    %1306 = vmatprep.subr.mxu0 0.0
    %1307 = vmatpush1.xpose.msra.mxu0 0.0
    %1308 = vmatprep.subr.mxu0 0.0
    %1309 = vmatpush1.xpose.msra.mxu0 0.0
    %1310 = vmatprep.subr.mxu0 0.0
    %1311 = vmatpush1.xpose.msra.mxu0 0.0
    %1312 = vmatprep.subr.mxu0 0.0
    %1313 = vmatpush1.xpose.msra.mxu0 0.0
    %1314 = vmatprep.subr.mxu0 0.0
    %1315 = vmatpush1.xpose.msra.mxu0 0.0
    %1316 = vmatprep.subr.mxu0 0.0
    %1317 = vmatpush1.xpose.msra.mxu0 0.0
    %1318 = vmatprep.subr.mxu0 0.0
    %1319 = vmatpush1.xpose.msra.mxu0 0.0
    %1320 = vmatprep.subr.mxu0 0.0
    %v1321 = vand.u32 %v1062, 4294901760
    %1322 = vmatpush1.xpose.msra.mxu0 %v1321
    %1323 = vmatprep.subr.mxu0 0.0
    %1324 = vmatpush2.xpose.msra.mxu0 0.0
    %1325 = vmatprep.subr.mxu0 0.0
    %1326 = vmatpush2.xpose.msra.mxu0 0.0
    %1327 = vmatprep.subr.mxu0 0.0
    %1328 = vmatpush2.xpose.msra.mxu0 0.0
    %1329 = vmatprep.subr.mxu0 0.0
    %1330 = vmatpush2.xpose.msra.mxu0 0.0
    %1331 = vmatprep.subr.mxu0 0.0
    %1332 = vmatpush2.xpose.msra.mxu0 0.0
    %1333 = vmatprep.subr.mxu0 0.0
    %1334 = vmatpush2.xpose.msra.mxu0 0.0
    %1335 = vmatprep.subr.mxu0 0.0
    %1336 = vmatpush2.xpose.msra.mxu0 0.0
    %1337 = vmatprep.subr.mxu0 0.0
    %1338 = vmatpush2.xpose.msra.mxu0 0.0
    %1339 = vmatprep.subr.mxu0 0.0
    %1340 = vmatpush2.xpose.msra.mxu0 0.0
    %1341 = vmatprep.subr.mxu0 0.0
    %1342 = vmatpush2.xpose.msra.mxu0 0.0
    %1343 = vmatprep.subr.mxu0 0.0
    %1344 = vmatpush2.xpose.msra.mxu0 0.0
    %1345 = vmatprep.subr.mxu0 0.0
    %1346 = vmatpush2.xpose.msra.mxu0 0.0
    %1347 = vmatprep.subr.mxu0 0.0
    %1348 = vmatpush2.xpose.msra.mxu0 0.0
    %1349 = vmatprep.subr.mxu0 0.0
    %1350 = vmatpush2.xpose.msra.mxu0 0.0
    %1351 = vmatprep.subr.mxu0 0.0
    %1352 = vmatpush2.xpose.msra.mxu0 0.0
    %1353 = vmatprep.subr.mxu0 0.0
    %1354 = vmatpush2.xpose.msra.mxu0 0.0
    %1355 = vmatprep.mubr.f32.mxu0 0.0
    %v1356 = vand.u32 %v1060, 4294901760
    %v1357 = vsub.f32 %v1060, %v1356
    %v1358 = vand.u32 %v1357, 4294901760
    %1359 = vmatmul.mubr.f32.gmra.mxu0 %v1358
    %v1360 = vpop.f32.mrf.mxu0
    %v1361 = vadd.f32 %v1287, %v1360
    %v1362 = vpop.f32.mrf.mxu0
    %1363 = vdwg.mxu0
    %1364 = vmatprep.subr.mxu0 0.0
    %1365 = vmatpush1.xpose.msra.mxu0 0.0
    %1366 = vmatprep.subr.mxu0 0.0
    %1367 = vmatpush1.xpose.msra.mxu0 0.0
    %1368 = vmatprep.subr.mxu0 0.0
    %1369 = vmatpush1.xpose.msra.mxu0 0.0
    %1370 = vmatprep.subr.mxu0 0.0
    %1371 = vmatpush1.xpose.msra.mxu0 0.0
    %1372 = vmatprep.subr.mxu0 0.0
    %1373 = vmatpush1.xpose.msra.mxu0 0.0
    %1374 = vmatprep.subr.mxu0 0.0
    %1375 = vmatpush1.xpose.msra.mxu0 0.0
    %1376 = vmatprep.subr.mxu0 0.0
    %1377 = vmatpush1.xpose.msra.mxu0 0.0
    %1378 = vmatprep.subr.mxu0 0.0
    %1379 = vmatpush1.xpose.msra.mxu0 0.0
    %1380 = vmatprep.subr.mxu0 0.0
    %1381 = vmatpush1.xpose.msra.mxu0 0.0
    %1382 = vmatprep.subr.mxu0 0.0
    %1383 = vmatpush1.xpose.msra.mxu0 0.0
    %1384 = vmatprep.subr.mxu0 0.0
    %1385 = vmatpush1.xpose.msra.mxu0 0.0
    %1386 = vmatprep.subr.mxu0 0.0
    %1387 = vmatpush1.xpose.msra.mxu0 0.0
    %1388 = vmatprep.subr.mxu0 0.0
    %1389 = vmatpush1.xpose.msra.mxu0 0.0
    %1390 = vmatprep.subr.mxu0 0.0
    %1391 = vmatpush1.xpose.msra.mxu0 0.0
    %1392 = vmatprep.subr.mxu0 0.0
    %1393 = vmatpush1.xpose.msra.mxu0 0.0
    %1394 = vmatprep.subr.mxu0 0.0
    %v1395 = vand.u32 %v1062, 4294901760
    %v1396 = vsub.f32 %v1062, %v1395
    %v1397 = vand.u32 %v1396, 4294901760
    %1398 = vmatpush1.xpose.msra.mxu0 %v1397
    %1399 = vmatprep.subr.mxu0 0.0
    %1400 = vmatpush2.xpose.msra.mxu0 0.0
    %1401 = vmatprep.subr.mxu0 0.0
    %1402 = vmatpush2.xpose.msra.mxu0 0.0
    %1403 = vmatprep.subr.mxu0 0.0
    %1404 = vmatpush2.xpose.msra.mxu0 0.0
    %1405 = vmatprep.subr.mxu0 0.0
    %1406 = vmatpush2.xpose.msra.mxu0 0.0
    %1407 = vmatprep.subr.mxu0 0.0
    %1408 = vmatpush2.xpose.msra.mxu0 0.0
    %1409 = vmatprep.subr.mxu0 0.0
    %1410 = vmatpush2.xpose.msra.mxu0 0.0
    %1411 = vmatprep.subr.mxu0 0.0
    %1412 = vmatpush2.xpose.msra.mxu0 0.0
    %1413 = vmatprep.subr.mxu0 0.0
    %1414 = vmatpush2.xpose.msra.mxu0 0.0
    %1415 = vmatprep.subr.mxu0 0.0
    %1416 = vmatpush2.xpose.msra.mxu0 0.0
    %1417 = vmatprep.subr.mxu0 0.0
    %1418 = vmatpush2.xpose.msra.mxu0 0.0
    %1419 = vmatprep.subr.mxu0 0.0
    %1420 = vmatpush2.xpose.msra.mxu0 0.0
    %1421 = vmatprep.subr.mxu0 0.0
    %1422 = vmatpush2.xpose.msra.mxu0 0.0
    %1423 = vmatprep.subr.mxu0 0.0
    %1424 = vmatpush2.xpose.msra.mxu0 0.0
    %1425 = vmatprep.subr.mxu0 0.0
    %1426 = vmatpush2.xpose.msra.mxu0 0.0
    %1427 = vmatprep.subr.mxu0 0.0
    %1428 = vmatpush2.xpose.msra.mxu0 0.0
    %1429 = vmatprep.subr.mxu0 0.0
    %1430 = vmatpush2.xpose.msra.mxu0 0.0
    %1431 = vmatprep.mubr.f32.mxu0 0.0
    %v1432 = vand.u32 %v1060, 4294901760
    %1433 = vmatmul.mubr.f32.gmra.mxu0 %v1432
    %v1434 = vpop.f32.mrf.mxu0
    %v1435 = vadd.f32 %v1361, %v1434
    %v1436 = vpop.f32.mrf.mxu0
    %1437 = vdwg.mxu0
    %1438 = vmatprep.subr.mxu0 0.0
    %1439 = vmatpush1.xpose.msra.mxu0 0.0
    %1440 = vmatprep.subr.mxu0 0.0
    %1441 = vmatpush1.xpose.msra.mxu0 0.0
    %1442 = vmatprep.subr.mxu0 0.0
    %1443 = vmatpush1.xpose.msra.mxu0 0.0
    %1444 = vmatprep.subr.mxu0 0.0
    %1445 = vmatpush1.xpose.msra.mxu0 0.0
    %1446 = vmatprep.subr.mxu0 0.0
    %1447 = vmatpush1.xpose.msra.mxu0 0.0
    %1448 = vmatprep.subr.mxu0 0.0
    %1449 = vmatpush1.xpose.msra.mxu0 0.0
    %1450 = vmatprep.subr.mxu0 0.0
    %1451 = vmatpush1.xpose.msra.mxu0 0.0
    %1452 = vmatprep.subr.mxu0 0.0
    %1453 = vmatpush1.xpose.msra.mxu0 0.0
    %1454 = vmatprep.subr.mxu0 0.0
    %1455 = vmatpush1.xpose.msra.mxu0 0.0
    %1456 = vmatprep.subr.mxu0 0.0
    %1457 = vmatpush1.xpose.msra.mxu0 0.0
    %1458 = vmatprep.subr.mxu0 0.0
    %1459 = vmatpush1.xpose.msra.mxu0 0.0
    %1460 = vmatprep.subr.mxu0 0.0
    %1461 = vmatpush1.xpose.msra.mxu0 0.0
    %1462 = vmatprep.subr.mxu0 0.0
    %1463 = vmatpush1.xpose.msra.mxu0 0.0
    %1464 = vmatprep.subr.mxu0 0.0
    %1465 = vmatpush1.xpose.msra.mxu0 0.0
    %1466 = vmatprep.subr.mxu0 0.0
    %1467 = vmatpush1.xpose.msra.mxu0 0.0
    %1468 = vmatprep.subr.mxu0 0.0
    %v1469 = vand.u32 %v1062, 4294901760
    %1470 = vmatpush1.xpose.msra.mxu0 %v1469
    %1471 = vmatprep.subr.mxu0 0.0
    %1472 = vmatpush2.xpose.msra.mxu0 0.0
    %1473 = vmatprep.subr.mxu0 0.0
    %1474 = vmatpush2.xpose.msra.mxu0 0.0
    %1475 = vmatprep.subr.mxu0 0.0
    %1476 = vmatpush2.xpose.msra.mxu0 0.0
    %1477 = vmatprep.subr.mxu0 0.0
    %1478 = vmatpush2.xpose.msra.mxu0 0.0
    %1479 = vmatprep.subr.mxu0 0.0
    %1480 = vmatpush2.xpose.msra.mxu0 0.0
    %1481 = vmatprep.subr.mxu0 0.0
    %1482 = vmatpush2.xpose.msra.mxu0 0.0
    %1483 = vmatprep.subr.mxu0 0.0
    %1484 = vmatpush2.xpose.msra.mxu0 0.0
    %1485 = vmatprep.subr.mxu0 0.0
    %1486 = vmatpush2.xpose.msra.mxu0 0.0
    %1487 = vmatprep.subr.mxu0 0.0
    %1488 = vmatpush2.xpose.msra.mxu0 0.0
    %1489 = vmatprep.subr.mxu0 0.0
    %1490 = vmatpush2.xpose.msra.mxu0 0.0
    %1491 = vmatprep.subr.mxu0 0.0
    %1492 = vmatpush2.xpose.msra.mxu0 0.0
    %1493 = vmatprep.subr.mxu0 0.0
    %1494 = vmatpush2.xpose.msra.mxu0 0.0
    %1495 = vmatprep.subr.mxu0 0.0
    %1496 = vmatpush2.xpose.msra.mxu0 0.0
    %1497 = vmatprep.subr.mxu0 0.0
    %1498 = vmatpush2.xpose.msra.mxu0 0.0
    %1499 = vmatprep.subr.mxu0 0.0
    %1500 = vmatpush2.xpose.msra.mxu0 0.0
    %1501 = vmatprep.subr.mxu0 0.0
    %1502 = vmatpush2.xpose.msra.mxu0 0.0
    %1503 = vmatprep.mubr.f32.mxu0 0.0
    %v1504 = vand.u32 %v1060, 4294901760
    %1505 = vmatmul.mubr.f32.gmra.mxu0 %v1504
    %v1506 = vpop.f32.mrf.mxu0
    %v1507 = vadd.f32 %v1435, %v1506
    %v1508 = vpop.f32.mrf.mxu0
    %1509 = vdwg.mxu0
    %1510 = vrot.lane.b32.xlu0 %v595, 96
    %v1511 = vpop.permute.xlu0 %1510
    %v1512 = vsel %vm607, %v595, 0
    %v1514 = vsel %vm607, %v1511, 0
    %1516 = vmatprep.subr.mxu0 0.0
    %1517 = vmatpush1.xpose.msra.mxu0 0.0
    %1518 = vmatprep.subr.mxu0 0.0
    %1519 = vmatpush1.xpose.msra.mxu0 0.0
    %1520 = vmatprep.subr.mxu0 0.0
    %1521 = vmatpush1.xpose.msra.mxu0 0.0
    %1522 = vmatprep.subr.mxu0 0.0
    %1523 = vmatpush1.xpose.msra.mxu0 0.0
    %1524 = vmatprep.subr.mxu0 0.0
    %1525 = vmatpush1.xpose.msra.mxu0 0.0
    %1526 = vmatprep.subr.mxu0 0.0
    %1527 = vmatpush1.xpose.msra.mxu0 0.0
    %1528 = vmatprep.subr.mxu0 0.0
    %1529 = vmatpush1.xpose.msra.mxu0 0.0
    %1530 = vmatprep.subr.mxu0 0.0
    %1531 = vmatpush1.xpose.msra.mxu0 0.0
    %1532 = vmatprep.subr.mxu0 0.0
    %1533 = vmatpush1.xpose.msra.mxu0 0.0
    %1534 = vmatprep.subr.mxu0 0.0
    %1535 = vmatpush1.xpose.msra.mxu0 0.0
    %1536 = vmatprep.subr.mxu0 0.0
    %1537 = vmatpush1.xpose.msra.mxu0 0.0
    %1538 = vmatprep.subr.mxu0 0.0
    %1539 = vmatpush1.xpose.msra.mxu0 0.0
    %1540 = vmatprep.subr.mxu0 0.0
    %1541 = vmatpush1.xpose.msra.mxu0 0.0
    %1542 = vmatprep.subr.mxu0 0.0
    %1543 = vmatpush1.xpose.msra.mxu0 0.0
    %1544 = vmatprep.subr.mxu0 0.0
    %1545 = vmatpush1.xpose.msra.mxu0 0.0
    %1546 = vmatprep.subr.mxu0 0.0
    %v1547 = vand.u32 %v1514, 4294901760
    %1548 = vmatpush1.xpose.msra.mxu0 %v1547
    %1549 = vmatprep.subr.mxu0 0.0
    %1550 = vmatpush2.xpose.msra.mxu0 0.0
    %1551 = vmatprep.subr.mxu0 0.0
    %1552 = vmatpush2.xpose.msra.mxu0 0.0
    %1553 = vmatprep.subr.mxu0 0.0
    %1554 = vmatpush2.xpose.msra.mxu0 0.0
    %1555 = vmatprep.subr.mxu0 0.0
    %1556 = vmatpush2.xpose.msra.mxu0 0.0
    %1557 = vmatprep.subr.mxu0 0.0
    %1558 = vmatpush2.xpose.msra.mxu0 0.0
    %1559 = vmatprep.subr.mxu0 0.0
    %1560 = vmatpush2.xpose.msra.mxu0 0.0
    %1561 = vmatprep.subr.mxu0 0.0
    %1562 = vmatpush2.xpose.msra.mxu0 0.0
    %1563 = vmatprep.subr.mxu0 0.0
    %1564 = vmatpush2.xpose.msra.mxu0 0.0
    %1565 = vmatprep.subr.mxu0 0.0
    %1566 = vmatpush2.xpose.msra.mxu0 0.0
    %1567 = vmatprep.subr.mxu0 0.0
    %1568 = vmatpush2.xpose.msra.mxu0 0.0
    %1569 = vmatprep.subr.mxu0 0.0
    %1570 = vmatpush2.xpose.msra.mxu0 0.0
    %1571 = vmatprep.subr.mxu0 0.0
    %1572 = vmatpush2.xpose.msra.mxu0 0.0
    %1573 = vmatprep.subr.mxu0 0.0
    %1574 = vmatpush2.xpose.msra.mxu0 0.0
    %1575 = vmatprep.subr.mxu0 0.0
    %1576 = vmatpush2.xpose.msra.mxu0 0.0
    %1577 = vmatprep.subr.mxu0 0.0
    %1578 = vmatpush2.xpose.msra.mxu0 0.0
    %1579 = vmatprep.subr.mxu0 0.0
    %1580 = vmatpush2.xpose.msra.mxu0 0.0
    %1581 = vmatprep.mubr.f32.mxu0 0.0
    %v1582 = vand.u32 %v1512, 4294901760
    %v1583 = vsub.f32 %v1512, %v1582
    %v1584 = vand.u32 %v1583, 4294901760
    %v1585 = vsub.f32 %v1583, %v1584
    %v1586 = vand.u32 %v1585, 4294901760
    %1587 = vmatmul.mubr.f32.gmra.mxu0 %v1586
    %v1588 = vpop.f32.mrf.mxu0
    %v1589 = vadd.f32 0.0, %v1588
    %v1590 = vpop.f32.mrf.mxu0
    %1591 = vdwg.mxu0
    %1592 = vmatprep.subr.mxu0 0.0
    %1593 = vmatpush1.xpose.msra.mxu0 0.0
    %1594 = vmatprep.subr.mxu0 0.0
    %1595 = vmatpush1.xpose.msra.mxu0 0.0
    %1596 = vmatprep.subr.mxu0 0.0
    %1597 = vmatpush1.xpose.msra.mxu0 0.0
    %1598 = vmatprep.subr.mxu0 0.0
    %1599 = vmatpush1.xpose.msra.mxu0 0.0
    %1600 = vmatprep.subr.mxu0 0.0
    %1601 = vmatpush1.xpose.msra.mxu0 0.0
    %1602 = vmatprep.subr.mxu0 0.0
    %1603 = vmatpush1.xpose.msra.mxu0 0.0
    %1604 = vmatprep.subr.mxu0 0.0
    %1605 = vmatpush1.xpose.msra.mxu0 0.0
    %1606 = vmatprep.subr.mxu0 0.0
    %1607 = vmatpush1.xpose.msra.mxu0 0.0
    %1608 = vmatprep.subr.mxu0 0.0
    %1609 = vmatpush1.xpose.msra.mxu0 0.0
    %1610 = vmatprep.subr.mxu0 0.0
    %1611 = vmatpush1.xpose.msra.mxu0 0.0
    %1612 = vmatprep.subr.mxu0 0.0
    %1613 = vmatpush1.xpose.msra.mxu0 0.0
    %1614 = vmatprep.subr.mxu0 0.0
    %1615 = vmatpush1.xpose.msra.mxu0 0.0
    %1616 = vmatprep.subr.mxu0 0.0
    %1617 = vmatpush1.xpose.msra.mxu0 0.0
    %1618 = vmatprep.subr.mxu0 0.0
    %1619 = vmatpush1.xpose.msra.mxu0 0.0
    %1620 = vmatprep.subr.mxu0 0.0
    %1621 = vmatpush1.xpose.msra.mxu0 0.0
    %1622 = vmatprep.subr.mxu0 0.0
    %v1623 = vand.u32 %v1514, 4294901760
    %v1624 = vsub.f32 %v1514, %v1623
    %v1625 = vand.u32 %v1624, 4294901760
    %v1626 = vsub.f32 %v1624, %v1625
    %v1627 = vand.u32 %v1626, 4294901760
    %1628 = vmatpush1.xpose.msra.mxu0 %v1627
    %1629 = vmatprep.subr.mxu0 0.0
    %1630 = vmatpush2.xpose.msra.mxu0 0.0
    %1631 = vmatprep.subr.mxu0 0.0
    %1632 = vmatpush2.xpose.msra.mxu0 0.0
    %1633 = vmatprep.subr.mxu0 0.0
    %1634 = vmatpush2.xpose.msra.mxu0 0.0
    %1635 = vmatprep.subr.mxu0 0.0
    %1636 = vmatpush2.xpose.msra.mxu0 0.0
    %1637 = vmatprep.subr.mxu0 0.0
    %1638 = vmatpush2.xpose.msra.mxu0 0.0
    %1639 = vmatprep.subr.mxu0 0.0
    %1640 = vmatpush2.xpose.msra.mxu0 0.0
    %1641 = vmatprep.subr.mxu0 0.0
    %1642 = vmatpush2.xpose.msra.mxu0 0.0
    %1643 = vmatprep.subr.mxu0 0.0
    %1644 = vmatpush2.xpose.msra.mxu0 0.0
    %1645 = vmatprep.subr.mxu0 0.0
    %1646 = vmatpush2.xpose.msra.mxu0 0.0
    %1647 = vmatprep.subr.mxu0 0.0
    %1648 = vmatpush2.xpose.msra.mxu0 0.0
    %1649 = vmatprep.subr.mxu0 0.0
    %1650 = vmatpush2.xpose.msra.mxu0 0.0
    %1651 = vmatprep.subr.mxu0 0.0
    %1652 = vmatpush2.xpose.msra.mxu0 0.0
    %1653 = vmatprep.subr.mxu0 0.0
    %1654 = vmatpush2.xpose.msra.mxu0 0.0
    %1655 = vmatprep.subr.mxu0 0.0
    %1656 = vmatpush2.xpose.msra.mxu0 0.0
    %1657 = vmatprep.subr.mxu0 0.0
    %1658 = vmatpush2.xpose.msra.mxu0 0.0
    %1659 = vmatprep.subr.mxu0 0.0
    %1660 = vmatpush2.xpose.msra.mxu0 0.0
    %1661 = vmatprep.mubr.f32.mxu0 0.0
    %v1662 = vand.u32 %v1512, 4294901760
    %1663 = vmatmul.mubr.f32.gmra.mxu0 %v1662
    %v1664 = vpop.f32.mrf.mxu0
    %v1665 = vadd.f32 %v1589, %v1664
    %v1666 = vpop.f32.mrf.mxu0
    %1667 = vdwg.mxu0
    %1668 = vmatprep.subr.mxu0 0.0
    %1669 = vmatpush1.xpose.msra.mxu0 0.0
    %1670 = vmatprep.subr.mxu0 0.0
    %1671 = vmatpush1.xpose.msra.mxu0 0.0
    %1672 = vmatprep.subr.mxu0 0.0
    %1673 = vmatpush1.xpose.msra.mxu0 0.0
    %1674 = vmatprep.subr.mxu0 0.0
    %1675 = vmatpush1.xpose.msra.mxu0 0.0
    %1676 = vmatprep.subr.mxu0 0.0
    %1677 = vmatpush1.xpose.msra.mxu0 0.0
    %1678 = vmatprep.subr.mxu0 0.0
    %1679 = vmatpush1.xpose.msra.mxu0 0.0
    %1680 = vmatprep.subr.mxu0 0.0
    %1681 = vmatpush1.xpose.msra.mxu0 0.0
    %1682 = vmatprep.subr.mxu0 0.0
    %1683 = vmatpush1.xpose.msra.mxu0 0.0
    %1684 = vmatprep.subr.mxu0 0.0
    %1685 = vmatpush1.xpose.msra.mxu0 0.0
    %1686 = vmatprep.subr.mxu0 0.0
    %1687 = vmatpush1.xpose.msra.mxu0 0.0
    %1688 = vmatprep.subr.mxu0 0.0
    %1689 = vmatpush1.xpose.msra.mxu0 0.0
    %1690 = vmatprep.subr.mxu0 0.0
    %1691 = vmatpush1.xpose.msra.mxu0 0.0
    %1692 = vmatprep.subr.mxu0 0.0
    %1693 = vmatpush1.xpose.msra.mxu0 0.0
    %1694 = vmatprep.subr.mxu0 0.0
    %1695 = vmatpush1.xpose.msra.mxu0 0.0
    %1696 = vmatprep.subr.mxu0 0.0
    %1697 = vmatpush1.xpose.msra.mxu0 0.0
    %1698 = vmatprep.subr.mxu0 0.0
    %v1699 = vand.u32 %v1514, 4294901760
    %v1700 = vsub.f32 %v1514, %v1699
    %1701 = vmatpush1.xpose.msra.mxu0 %v1700
    %1702 = vmatprep.subr.mxu0 0.0
    %1703 = vmatpush2.xpose.msra.mxu0 0.0
    %1704 = vmatprep.subr.mxu0 0.0
    %1705 = vmatpush2.xpose.msra.mxu0 0.0
    %1706 = vmatprep.subr.mxu0 0.0
    %1707 = vmatpush2.xpose.msra.mxu0 0.0
    %1708 = vmatprep.subr.mxu0 0.0
    %1709 = vmatpush2.xpose.msra.mxu0 0.0
    %1710 = vmatprep.subr.mxu0 0.0
    %1711 = vmatpush2.xpose.msra.mxu0 0.0
    %1712 = vmatprep.subr.mxu0 0.0
    %1713 = vmatpush2.xpose.msra.mxu0 0.0
    %1714 = vmatprep.subr.mxu0 0.0
    %1715 = vmatpush2.xpose.msra.mxu0 0.0
    %1716 = vmatprep.subr.mxu0 0.0
    %1717 = vmatpush2.xpose.msra.mxu0 0.0
    %1718 = vmatprep.subr.mxu0 0.0
    %1719 = vmatpush2.xpose.msra.mxu0 0.0
    %1720 = vmatprep.subr.mxu0 0.0
    %1721 = vmatpush2.xpose.msra.mxu0 0.0
    %1722 = vmatprep.subr.mxu0 0.0
    %1723 = vmatpush2.xpose.msra.mxu0 0.0
    %1724 = vmatprep.subr.mxu0 0.0
    %1725 = vmatpush2.xpose.msra.mxu0 0.0
    %1726 = vmatprep.subr.mxu0 0.0
    %1727 = vmatpush2.xpose.msra.mxu0 0.0
    %1728 = vmatprep.subr.mxu0 0.0
    %1729 = vmatpush2.xpose.msra.mxu0 0.0
    %1730 = vmatprep.subr.mxu0 0.0
    %1731 = vmatpush2.xpose.msra.mxu0 0.0
    %1732 = vmatprep.subr.mxu0 0.0
    %1733 = vmatpush2.xpose.msra.mxu0 0.0
    %1734 = vmatprep.mubr.f32.mxu0 0.0
    %v1735 = vand.u32 %v1512, 4294901760
    %v1736 = vsub.f32 %v1512, %v1735
    %1737 = vmatmul.mubr.f32.gmra.mxu0 %v1736
    %v1738 = vpop.f32.mrf.mxu0
    %v1739 = vadd.f32 %v1665, %v1738
    %v1740 = vpop.f32.mrf.mxu0
    %1741 = vdwg.mxu0
    %1742 = vmatprep.subr.mxu0 0.0
    %1743 = vmatpush1.xpose.msra.mxu0 0.0
    %1744 = vmatprep.subr.mxu0 0.0
    %1745 = vmatpush1.xpose.msra.mxu0 0.0
    %1746 = vmatprep.subr.mxu0 0.0
    %1747 = vmatpush1.xpose.msra.mxu0 0.0
    %1748 = vmatprep.subr.mxu0 0.0
    %1749 = vmatpush1.xpose.msra.mxu0 0.0
    %1750 = vmatprep.subr.mxu0 0.0
    %1751 = vmatpush1.xpose.msra.mxu0 0.0
    %1752 = vmatprep.subr.mxu0 0.0
    %1753 = vmatpush1.xpose.msra.mxu0 0.0
    %1754 = vmatprep.subr.mxu0 0.0
    %1755 = vmatpush1.xpose.msra.mxu0 0.0
    %1756 = vmatprep.subr.mxu0 0.0
    %1757 = vmatpush1.xpose.msra.mxu0 0.0
    %1758 = vmatprep.subr.mxu0 0.0
    %1759 = vmatpush1.xpose.msra.mxu0 0.0
    %1760 = vmatprep.subr.mxu0 0.0
    %1761 = vmatpush1.xpose.msra.mxu0 0.0
    %1762 = vmatprep.subr.mxu0 0.0
    %1763 = vmatpush1.xpose.msra.mxu0 0.0
    %1764 = vmatprep.subr.mxu0 0.0
    %1765 = vmatpush1.xpose.msra.mxu0 0.0
    %1766 = vmatprep.subr.mxu0 0.0
    %1767 = vmatpush1.xpose.msra.mxu0 0.0
    %1768 = vmatprep.subr.mxu0 0.0
    %1769 = vmatpush1.xpose.msra.mxu0 0.0
    %1770 = vmatprep.subr.mxu0 0.0
    %1771 = vmatpush1.xpose.msra.mxu0 0.0
    %1772 = vmatprep.subr.mxu0 0.0
    %v1773 = vand.u32 %v1514, 4294901760
    %1774 = vmatpush1.xpose.msra.mxu0 %v1773
    %1775 = vmatprep.subr.mxu0 0.0
    %1776 = vmatpush2.xpose.msra.mxu0 0.0
    %1777 = vmatprep.subr.mxu0 0.0
    %1778 = vmatpush2.xpose.msra.mxu0 0.0
    %1779 = vmatprep.subr.mxu0 0.0
    %1780 = vmatpush2.xpose.msra.mxu0 0.0
    %1781 = vmatprep.subr.mxu0 0.0
    %1782 = vmatpush2.xpose.msra.mxu0 0.0
    %1783 = vmatprep.subr.mxu0 0.0
    %1784 = vmatpush2.xpose.msra.mxu0 0.0
    %1785 = vmatprep.subr.mxu0 0.0
    %1786 = vmatpush2.xpose.msra.mxu0 0.0
    %1787 = vmatprep.subr.mxu0 0.0
    %1788 = vmatpush2.xpose.msra.mxu0 0.0
    %1789 = vmatprep.subr.mxu0 0.0
    %1790 = vmatpush2.xpose.msra.mxu0 0.0
    %1791 = vmatprep.subr.mxu0 0.0
    %1792 = vmatpush2.xpose.msra.mxu0 0.0
    %1793 = vmatprep.subr.mxu0 0.0
    %1794 = vmatpush2.xpose.msra.mxu0 0.0
    %1795 = vmatprep.subr.mxu0 0.0
    %1796 = vmatpush2.xpose.msra.mxu0 0.0
    %1797 = vmatprep.subr.mxu0 0.0
    %1798 = vmatpush2.xpose.msra.mxu0 0.0
    %1799 = vmatprep.subr.mxu0 0.0
    %1800 = vmatpush2.xpose.msra.mxu0 0.0
    %1801 = vmatprep.subr.mxu0 0.0
    %1802 = vmatpush2.xpose.msra.mxu0 0.0
    %1803 = vmatprep.subr.mxu0 0.0
    %1804 = vmatpush2.xpose.msra.mxu0 0.0
    %1805 = vmatprep.subr.mxu0 0.0
    %1806 = vmatpush2.xpose.msra.mxu0 0.0
    %1807 = vmatprep.mubr.f32.mxu0 0.0
    %v1808 = vand.u32 %v1512, 4294901760
    %v1809 = vsub.f32 %v1512, %v1808
    %v1810 = vand.u32 %v1809, 4294901760
    %1811 = vmatmul.mubr.f32.gmra.mxu0 %v1810
    %v1812 = vpop.f32.mrf.mxu0
    %v1813 = vadd.f32 %v1739, %v1812
    %v1814 = vpop.f32.mrf.mxu0
    %1815 = vdwg.mxu0
    %1816 = vmatprep.subr.mxu0 0.0
    %1817 = vmatpush1.xpose.msra.mxu0 0.0
    %1818 = vmatprep.subr.mxu0 0.0
    %1819 = vmatpush1.xpose.msra.mxu0 0.0
    %1820 = vmatprep.subr.mxu0 0.0
    %1821 = vmatpush1.xpose.msra.mxu0 0.0
    %1822 = vmatprep.subr.mxu0 0.0
    %1823 = vmatpush1.xpose.msra.mxu0 0.0
    %1824 = vmatprep.subr.mxu0 0.0
    %1825 = vmatpush1.xpose.msra.mxu0 0.0
    %1826 = vmatprep.subr.mxu0 0.0
    %1827 = vmatpush1.xpose.msra.mxu0 0.0
    %1828 = vmatprep.subr.mxu0 0.0
    %1829 = vmatpush1.xpose.msra.mxu0 0.0
    %1830 = vmatprep.subr.mxu0 0.0
    %1831 = vmatpush1.xpose.msra.mxu0 0.0
    %1832 = vmatprep.subr.mxu0 0.0
    %1833 = vmatpush1.xpose.msra.mxu0 0.0
    %1834 = vmatprep.subr.mxu0 0.0
    %1835 = vmatpush1.xpose.msra.mxu0 0.0
    %1836 = vmatprep.subr.mxu0 0.0
    %1837 = vmatpush1.xpose.msra.mxu0 0.0
    %1838 = vmatprep.subr.mxu0 0.0
    %1839 = vmatpush1.xpose.msra.mxu0 0.0
    %1840 = vmatprep.subr.mxu0 0.0
    %1841 = vmatpush1.xpose.msra.mxu0 0.0
    %1842 = vmatprep.subr.mxu0 0.0
    %1843 = vmatpush1.xpose.msra.mxu0 0.0
    %1844 = vmatprep.subr.mxu0 0.0
    %1845 = vmatpush1.xpose.msra.mxu0 0.0
    %1846 = vmatprep.subr.mxu0 0.0
    %v1847 = vand.u32 %v1514, 4294901760
    %v1848 = vsub.f32 %v1514, %v1847
    %v1849 = vand.u32 %v1848, 4294901760
    %1850 = vmatpush1.xpose.msra.mxu0 %v1849
    %1851 = vmatprep.subr.mxu0 0.0
    %1852 = vmatpush2.xpose.msra.mxu0 0.0
    %1853 = vmatprep.subr.mxu0 0.0
    %1854 = vmatpush2.xpose.msra.mxu0 0.0
    %1855 = vmatprep.subr.mxu0 0.0
    %1856 = vmatpush2.xpose.msra.mxu0 0.0
    %1857 = vmatprep.subr.mxu0 0.0
    %1858 = vmatpush2.xpose.msra.mxu0 0.0
    %1859 = vmatprep.subr.mxu0 0.0
    %1860 = vmatpush2.xpose.msra.mxu0 0.0
    %1861 = vmatprep.subr.mxu0 0.0
    %1862 = vmatpush2.xpose.msra.mxu0 0.0
    %1863 = vmatprep.subr.mxu0 0.0
    %1864 = vmatpush2.xpose.msra.mxu0 0.0
    %1865 = vmatprep.subr.mxu0 0.0
    %1866 = vmatpush2.xpose.msra.mxu0 0.0
    %1867 = vmatprep.subr.mxu0 0.0
    %1868 = vmatpush2.xpose.msra.mxu0 0.0
    %1869 = vmatprep.subr.mxu0 0.0
    %1870 = vmatpush2.xpose.msra.mxu0 0.0
    %1871 = vmatprep.subr.mxu0 0.0
    %1872 = vmatpush2.xpose.msra.mxu0 0.0
    %1873 = vmatprep.subr.mxu0 0.0
    %1874 = vmatpush2.xpose.msra.mxu0 0.0
    %1875 = vmatprep.subr.mxu0 0.0
    %1876 = vmatpush2.xpose.msra.mxu0 0.0
    %1877 = vmatprep.subr.mxu0 0.0
    %1878 = vmatpush2.xpose.msra.mxu0 0.0
    %1879 = vmatprep.subr.mxu0 0.0
    %1880 = vmatpush2.xpose.msra.mxu0 0.0
    %1881 = vmatprep.subr.mxu0 0.0
    %1882 = vmatpush2.xpose.msra.mxu0 0.0
    %1883 = vmatprep.mubr.f32.mxu0 0.0
    %v1884 = vand.u32 %v1512, 4294901760
    %1885 = vmatmul.mubr.f32.gmra.mxu0 %v1884
    %v1886 = vpop.f32.mrf.mxu0
    %v1887 = vadd.f32 %v1813, %v1886
    %v1888 = vpop.f32.mrf.mxu0
    %1889 = vdwg.mxu0
    %1890 = vmatprep.subr.mxu0 0.0
    %1891 = vmatpush1.xpose.msra.mxu0 0.0
    %1892 = vmatprep.subr.mxu0 0.0
    %1893 = vmatpush1.xpose.msra.mxu0 0.0
    %1894 = vmatprep.subr.mxu0 0.0
    %1895 = vmatpush1.xpose.msra.mxu0 0.0
    %1896 = vmatprep.subr.mxu0 0.0
    %1897 = vmatpush1.xpose.msra.mxu0 0.0
    %1898 = vmatprep.subr.mxu0 0.0
    %1899 = vmatpush1.xpose.msra.mxu0 0.0
    %1900 = vmatprep.subr.mxu0 0.0
    %1901 = vmatpush1.xpose.msra.mxu0 0.0
    %1902 = vmatprep.subr.mxu0 0.0
    %1903 = vmatpush1.xpose.msra.mxu0 0.0
    %1904 = vmatprep.subr.mxu0 0.0
    %1905 = vmatpush1.xpose.msra.mxu0 0.0
    %1906 = vmatprep.subr.mxu0 0.0
    %1907 = vmatpush1.xpose.msra.mxu0 0.0
    %1908 = vmatprep.subr.mxu0 0.0
    %1909 = vmatpush1.xpose.msra.mxu0 0.0
    %1910 = vmatprep.subr.mxu0 0.0
    %1911 = vmatpush1.xpose.msra.mxu0 0.0
    %1912 = vmatprep.subr.mxu0 0.0
    %1913 = vmatpush1.xpose.msra.mxu0 0.0
    %1914 = vmatprep.subr.mxu0 0.0
    %1915 = vmatpush1.xpose.msra.mxu0 0.0
    %1916 = vmatprep.subr.mxu0 0.0
    %1917 = vmatpush1.xpose.msra.mxu0 0.0
    %1918 = vmatprep.subr.mxu0 0.0
    %1919 = vmatpush1.xpose.msra.mxu0 0.0
    %1920 = vmatprep.subr.mxu0 0.0
    %v1921 = vand.u32 %v1514, 4294901760
    %1922 = vmatpush1.xpose.msra.mxu0 %v1921
    %1923 = vmatprep.subr.mxu0 0.0
    %1924 = vmatpush2.xpose.msra.mxu0 0.0
    %1925 = vmatprep.subr.mxu0 0.0
    %1926 = vmatpush2.xpose.msra.mxu0 0.0
    %1927 = vmatprep.subr.mxu0 0.0
    %1928 = vmatpush2.xpose.msra.mxu0 0.0
    %1929 = vmatprep.subr.mxu0 0.0
    %1930 = vmatpush2.xpose.msra.mxu0 0.0
    %1931 = vmatprep.subr.mxu0 0.0
    %1932 = vmatpush2.xpose.msra.mxu0 0.0
    %1933 = vmatprep.subr.mxu0 0.0
    %1934 = vmatpush2.xpose.msra.mxu0 0.0
    %1935 = vmatprep.subr.mxu0 0.0
    %1936 = vmatpush2.xpose.msra.mxu0 0.0
    %1937 = vmatprep.subr.mxu0 0.0
    %1938 = vmatpush2.xpose.msra.mxu0 0.0
    %1939 = vmatprep.subr.mxu0 0.0
    %1940 = vmatpush2.xpose.msra.mxu0 0.0
    %1941 = vmatprep.subr.mxu0 0.0
    %1942 = vmatpush2.xpose.msra.mxu0 0.0
    %1943 = vmatprep.subr.mxu0 0.0
    %1944 = vmatpush2.xpose.msra.mxu0 0.0
    %1945 = vmatprep.subr.mxu0 0.0
    %1946 = vmatpush2.xpose.msra.mxu0 0.0
    %1947 = vmatprep.subr.mxu0 0.0
    %1948 = vmatpush2.xpose.msra.mxu0 0.0
    %1949 = vmatprep.subr.mxu0 0.0
    %1950 = vmatpush2.xpose.msra.mxu0 0.0
    %1951 = vmatprep.subr.mxu0 0.0
    %1952 = vmatpush2.xpose.msra.mxu0 0.0
    %1953 = vmatprep.subr.mxu0 0.0
    %1954 = vmatpush2.xpose.msra.mxu0 0.0
    %1955 = vmatprep.mubr.f32.mxu0 0.0
    %v1956 = vand.u32 %v1512, 4294901760
    %1957 = vmatmul.mubr.f32.gmra.mxu0 %v1956
    %v1958 = vpop.f32.mrf.mxu0
    %v1959 = vadd.f32 %v1887, %v1958
    %v1960 = vpop.f32.mrf.mxu0
    %1961 = vdwg.mxu0
    %1962 = vrot.lane.b32.xlu0 %v597, 96
    %v1963 = vpop.permute.xlu0 %1962
    %v1964 = vsel %vm607, %v597, 0
    %v1966 = vsel %vm607, %v1963, 0
    %1968 = vmatprep.subr.mxu0 0.0
    %1969 = vmatpush1.xpose.msra.mxu0 0.0
    %1970 = vmatprep.subr.mxu0 0.0
    %1971 = vmatpush1.xpose.msra.mxu0 0.0
    %1972 = vmatprep.subr.mxu0 0.0
    %1973 = vmatpush1.xpose.msra.mxu0 0.0
    %1974 = vmatprep.subr.mxu0 0.0
    %1975 = vmatpush1.xpose.msra.mxu0 0.0
    %1976 = vmatprep.subr.mxu0 0.0
    %1977 = vmatpush1.xpose.msra.mxu0 0.0
    %1978 = vmatprep.subr.mxu0 0.0
    %1979 = vmatpush1.xpose.msra.mxu0 0.0
    %1980 = vmatprep.subr.mxu0 0.0
    %1981 = vmatpush1.xpose.msra.mxu0 0.0
    %1982 = vmatprep.subr.mxu0 0.0
    %1983 = vmatpush1.xpose.msra.mxu0 0.0
    %1984 = vmatprep.subr.mxu0 0.0
    %1985 = vmatpush1.xpose.msra.mxu0 0.0
    %1986 = vmatprep.subr.mxu0 0.0
    %1987 = vmatpush1.xpose.msra.mxu0 0.0
    %1988 = vmatprep.subr.mxu0 0.0
    %1989 = vmatpush1.xpose.msra.mxu0 0.0
    %1990 = vmatprep.subr.mxu0 0.0
    %1991 = vmatpush1.xpose.msra.mxu0 0.0
    %1992 = vmatprep.subr.mxu0 0.0
    %1993 = vmatpush1.xpose.msra.mxu0 0.0
    %1994 = vmatprep.subr.mxu0 0.0
    %1995 = vmatpush1.xpose.msra.mxu0 0.0
    %1996 = vmatprep.subr.mxu0 0.0
    %1997 = vmatpush1.xpose.msra.mxu0 0.0
    %1998 = vmatprep.subr.mxu0 0.0
    %v1999 = vand.u32 %v1966, 4294901760
    %2000 = vmatpush1.xpose.msra.mxu0 %v1999
    %2001 = vmatprep.subr.mxu0 0.0
    %2002 = vmatpush2.xpose.msra.mxu0 0.0
    %2003 = vmatprep.subr.mxu0 0.0
    %2004 = vmatpush2.xpose.msra.mxu0 0.0
    %2005 = vmatprep.subr.mxu0 0.0
    %2006 = vmatpush2.xpose.msra.mxu0 0.0
    %2007 = vmatprep.subr.mxu0 0.0
    %2008 = vmatpush2.xpose.msra.mxu0 0.0
    %2009 = vmatprep.subr.mxu0 0.0
    %2010 = vmatpush2.xpose.msra.mxu0 0.0
    %2011 = vmatprep.subr.mxu0 0.0
    %2012 = vmatpush2.xpose.msra.mxu0 0.0
    %2013 = vmatprep.subr.mxu0 0.0
    %2014 = vmatpush2.xpose.msra.mxu0 0.0
    %2015 = vmatprep.subr.mxu0 0.0
    %2016 = vmatpush2.xpose.msra.mxu0 0.0
    %2017 = vmatprep.subr.mxu0 0.0
    %2018 = vmatpush2.xpose.msra.mxu0 0.0
    %2019 = vmatprep.subr.mxu0 0.0
    %2020 = vmatpush2.xpose.msra.mxu0 0.0
    %2021 = vmatprep.subr.mxu0 0.0
    %2022 = vmatpush2.xpose.msra.mxu0 0.0
    %2023 = vmatprep.subr.mxu0 0.0
    %2024 = vmatpush2.xpose.msra.mxu0 0.0
    %2025 = vmatprep.subr.mxu0 0.0
    %2026 = vmatpush2.xpose.msra.mxu0 0.0
    %2027 = vmatprep.subr.mxu0 0.0
    %2028 = vmatpush2.xpose.msra.mxu0 0.0
    %2029 = vmatprep.subr.mxu0 0.0
    %2030 = vmatpush2.xpose.msra.mxu0 0.0
    %2031 = vmatprep.subr.mxu0 0.0
    %2032 = vmatpush2.xpose.msra.mxu0 0.0
    %2033 = vmatprep.mubr.f32.mxu0 0.0
    %v2034 = vand.u32 %v1964, 4294901760
    %v2035 = vsub.f32 %v1964, %v2034
    %v2036 = vand.u32 %v2035, 4294901760
    %v2037 = vsub.f32 %v2035, %v2036
    %v2038 = vand.u32 %v2037, 4294901760
    %2039 = vmatmul.mubr.f32.gmra.mxu0 %v2038
    %v2040 = vpop.f32.mrf.mxu0
    %v2041 = vadd.f32 0.0, %v2040
    %v2042 = vpop.f32.mrf.mxu0
    %2043 = vdwg.mxu0
    %2044 = vmatprep.subr.mxu0 0.0
    %2045 = vmatpush1.xpose.msra.mxu0 0.0
    %2046 = vmatprep.subr.mxu0 0.0
    %2047 = vmatpush1.xpose.msra.mxu0 0.0
    %2048 = vmatprep.subr.mxu0 0.0
    %2049 = vmatpush1.xpose.msra.mxu0 0.0
    %2050 = vmatprep.subr.mxu0 0.0
    %2051 = vmatpush1.xpose.msra.mxu0 0.0
    %2052 = vmatprep.subr.mxu0 0.0
    %2053 = vmatpush1.xpose.msra.mxu0 0.0
    %2054 = vmatprep.subr.mxu0 0.0
    %2055 = vmatpush1.xpose.msra.mxu0 0.0
    %2056 = vmatprep.subr.mxu0 0.0
    %2057 = vmatpush1.xpose.msra.mxu0 0.0
    %2058 = vmatprep.subr.mxu0 0.0
    %2059 = vmatpush1.xpose.msra.mxu0 0.0
    %2060 = vmatprep.subr.mxu0 0.0
    %2061 = vmatpush1.xpose.msra.mxu0 0.0
    %2062 = vmatprep.subr.mxu0 0.0
    %2063 = vmatpush1.xpose.msra.mxu0 0.0
    %2064 = vmatprep.subr.mxu0 0.0
    %2065 = vmatpush1.xpose.msra.mxu0 0.0
    %2066 = vmatprep.subr.mxu0 0.0
    %2067 = vmatpush1.xpose.msra.mxu0 0.0
    %2068 = vmatprep.subr.mxu0 0.0
    %2069 = vmatpush1.xpose.msra.mxu0 0.0
    %2070 = vmatprep.subr.mxu0 0.0
    %2071 = vmatpush1.xpose.msra.mxu0 0.0
    %2072 = vmatprep.subr.mxu0 0.0
    %2073 = vmatpush1.xpose.msra.mxu0 0.0
    %2074 = vmatprep.subr.mxu0 0.0
    %v2075 = vand.u32 %v1966, 4294901760
    %v2076 = vsub.f32 %v1966, %v2075
    %v2077 = vand.u32 %v2076, 4294901760
    %v2078 = vsub.f32 %v2076, %v2077
    %v2079 = vand.u32 %v2078, 4294901760
    %2080 = vmatpush1.xpose.msra.mxu0 %v2079
    %2081 = vmatprep.subr.mxu0 0.0
    %2082 = vmatpush2.xpose.msra.mxu0 0.0
    %2083 = vmatprep.subr.mxu0 0.0
    %2084 = vmatpush2.xpose.msra.mxu0 0.0
    %2085 = vmatprep.subr.mxu0 0.0
    %2086 = vmatpush2.xpose.msra.mxu0 0.0
    %2087 = vmatprep.subr.mxu0 0.0
    %2088 = vmatpush2.xpose.msra.mxu0 0.0
    %2089 = vmatprep.subr.mxu0 0.0
    %2090 = vmatpush2.xpose.msra.mxu0 0.0
    %2091 = vmatprep.subr.mxu0 0.0
    %2092 = vmatpush2.xpose.msra.mxu0 0.0
    %2093 = vmatprep.subr.mxu0 0.0
    %2094 = vmatpush2.xpose.msra.mxu0 0.0
    %2095 = vmatprep.subr.mxu0 0.0
    %2096 = vmatpush2.xpose.msra.mxu0 0.0
    %2097 = vmatprep.subr.mxu0 0.0
    %2098 = vmatpush2.xpose.msra.mxu0 0.0
    %2099 = vmatprep.subr.mxu0 0.0
    %2100 = vmatpush2.xpose.msra.mxu0 0.0
    %2101 = vmatprep.subr.mxu0 0.0
    %2102 = vmatpush2.xpose.msra.mxu0 0.0
    %2103 = vmatprep.subr.mxu0 0.0
    %2104 = vmatpush2.xpose.msra.mxu0 0.0
    %2105 = vmatprep.subr.mxu0 0.0
    %2106 = vmatpush2.xpose.msra.mxu0 0.0
    %2107 = vmatprep.subr.mxu0 0.0
    %2108 = vmatpush2.xpose.msra.mxu0 0.0
    %2109 = vmatprep.subr.mxu0 0.0
    %2110 = vmatpush2.xpose.msra.mxu0 0.0
    %2111 = vmatprep.subr.mxu0 0.0
    %2112 = vmatpush2.xpose.msra.mxu0 0.0
    %2113 = vmatprep.mubr.f32.mxu0 0.0
    %v2114 = vand.u32 %v1964, 4294901760
    %2115 = vmatmul.mubr.f32.gmra.mxu0 %v2114
    %v2116 = vpop.f32.mrf.mxu0
    %v2117 = vadd.f32 %v2041, %v2116
    %v2118 = vpop.f32.mrf.mxu0
    %2119 = vdwg.mxu0
    %2120 = vmatprep.subr.mxu0 0.0
    %2121 = vmatpush1.xpose.msra.mxu0 0.0
    %2122 = vmatprep.subr.mxu0 0.0
    %2123 = vmatpush1.xpose.msra.mxu0 0.0
    %2124 = vmatprep.subr.mxu0 0.0
    %2125 = vmatpush1.xpose.msra.mxu0 0.0
    %2126 = vmatprep.subr.mxu0 0.0
    %2127 = vmatpush1.xpose.msra.mxu0 0.0
    %2128 = vmatprep.subr.mxu0 0.0
    %2129 = vmatpush1.xpose.msra.mxu0 0.0
    %2130 = vmatprep.subr.mxu0 0.0
    %2131 = vmatpush1.xpose.msra.mxu0 0.0
    %2132 = vmatprep.subr.mxu0 0.0
    %2133 = vmatpush1.xpose.msra.mxu0 0.0
    %2134 = vmatprep.subr.mxu0 0.0
    %2135 = vmatpush1.xpose.msra.mxu0 0.0
    %2136 = vmatprep.subr.mxu0 0.0
    %2137 = vmatpush1.xpose.msra.mxu0 0.0
    %2138 = vmatprep.subr.mxu0 0.0
    %2139 = vmatpush1.xpose.msra.mxu0 0.0
    %2140 = vmatprep.subr.mxu0 0.0
    %2141 = vmatpush1.xpose.msra.mxu0 0.0
    %2142 = vmatprep.subr.mxu0 0.0
    %2143 = vmatpush1.xpose.msra.mxu0 0.0
    %2144 = vmatprep.subr.mxu0 0.0
    %2145 = vmatpush1.xpose.msra.mxu0 0.0
    %2146 = vmatprep.subr.mxu0 0.0
    %2147 = vmatpush1.xpose.msra.mxu0 0.0
    %2148 = vmatprep.subr.mxu0 0.0
    %2149 = vmatpush1.xpose.msra.mxu0 0.0
    %2150 = vmatprep.subr.mxu0 0.0
    %v2151 = vand.u32 %v1966, 4294901760
    %v2152 = vsub.f32 %v1966, %v2151
    %2153 = vmatpush1.xpose.msra.mxu0 %v2152
    %2154 = vmatprep.subr.mxu0 0.0
    %2155 = vmatpush2.xpose.msra.mxu0 0.0
    %2156 = vmatprep.subr.mxu0 0.0
    %2157 = vmatpush2.xpose.msra.mxu0 0.0
    %2158 = vmatprep.subr.mxu0 0.0
    %2159 = vmatpush2.xpose.msra.mxu0 0.0
    %2160 = vmatprep.subr.mxu0 0.0
    %2161 = vmatpush2.xpose.msra.mxu0 0.0
    %2162 = vmatprep.subr.mxu0 0.0
    %2163 = vmatpush2.xpose.msra.mxu0 0.0
    %2164 = vmatprep.subr.mxu0 0.0
    %2165 = vmatpush2.xpose.msra.mxu0 0.0
    %2166 = vmatprep.subr.mxu0 0.0
    %2167 = vmatpush2.xpose.msra.mxu0 0.0
    %2168 = vmatprep.subr.mxu0 0.0
    %2169 = vmatpush2.xpose.msra.mxu0 0.0
    %2170 = vmatprep.subr.mxu0 0.0
    %2171 = vmatpush2.xpose.msra.mxu0 0.0
    %2172 = vmatprep.subr.mxu0 0.0
    %2173 = vmatpush2.xpose.msra.mxu0 0.0
    %2174 = vmatprep.subr.mxu0 0.0
    %2175 = vmatpush2.xpose.msra.mxu0 0.0
    %2176 = vmatprep.subr.mxu0 0.0
    %2177 = vmatpush2.xpose.msra.mxu0 0.0
    %2178 = vmatprep.subr.mxu0 0.0
    %2179 = vmatpush2.xpose.msra.mxu0 0.0
    %2180 = vmatprep.subr.mxu0 0.0
    %2181 = vmatpush2.xpose.msra.mxu0 0.0
    %2182 = vmatprep.subr.mxu0 0.0
    %2183 = vmatpush2.xpose.msra.mxu0 0.0
    %2184 = vmatprep.subr.mxu0 0.0
    %2185 = vmatpush2.xpose.msra.mxu0 0.0
    %2186 = vmatprep.mubr.f32.mxu0 0.0
    %v2187 = vand.u32 %v1964, 4294901760
    %v2188 = vsub.f32 %v1964, %v2187
    %2189 = vmatmul.mubr.f32.gmra.mxu0 %v2188
    %v2190 = vpop.f32.mrf.mxu0
    %v2191 = vadd.f32 %v2117, %v2190
    %v2192 = vpop.f32.mrf.mxu0
    %2193 = vdwg.mxu0
    %2194 = vmatprep.subr.mxu0 0.0
    %2195 = vmatpush1.xpose.msra.mxu0 0.0
    %2196 = vmatprep.subr.mxu0 0.0
    %2197 = vmatpush1.xpose.msra.mxu0 0.0
    %2198 = vmatprep.subr.mxu0 0.0
    %2199 = vmatpush1.xpose.msra.mxu0 0.0
    %2200 = vmatprep.subr.mxu0 0.0
    %2201 = vmatpush1.xpose.msra.mxu0 0.0
    %2202 = vmatprep.subr.mxu0 0.0
    %2203 = vmatpush1.xpose.msra.mxu0 0.0
    %2204 = vmatprep.subr.mxu0 0.0
    %2205 = vmatpush1.xpose.msra.mxu0 0.0
    %2206 = vmatprep.subr.mxu0 0.0
    %2207 = vmatpush1.xpose.msra.mxu0 0.0
    %2208 = vmatprep.subr.mxu0 0.0
    %2209 = vmatpush1.xpose.msra.mxu0 0.0
    %2210 = vmatprep.subr.mxu0 0.0
    %2211 = vmatpush1.xpose.msra.mxu0 0.0
    %2212 = vmatprep.subr.mxu0 0.0
    %2213 = vmatpush1.xpose.msra.mxu0 0.0
    %2214 = vmatprep.subr.mxu0 0.0
    %2215 = vmatpush1.xpose.msra.mxu0 0.0
    %2216 = vmatprep.subr.mxu0 0.0
    %2217 = vmatpush1.xpose.msra.mxu0 0.0
    %2218 = vmatprep.subr.mxu0 0.0
    %2219 = vmatpush1.xpose.msra.mxu0 0.0
    %2220 = vmatprep.subr.mxu0 0.0
    %2221 = vmatpush1.xpose.msra.mxu0 0.0
    %2222 = vmatprep.subr.mxu0 0.0
    %2223 = vmatpush1.xpose.msra.mxu0 0.0
    %2224 = vmatprep.subr.mxu0 0.0
    %v2225 = vand.u32 %v1966, 4294901760
    %2226 = vmatpush1.xpose.msra.mxu0 %v2225
    %2227 = vmatprep.subr.mxu0 0.0
    %2228 = vmatpush2.xpose.msra.mxu0 0.0
    %2229 = vmatprep.subr.mxu0 0.0
    %2230 = vmatpush2.xpose.msra.mxu0 0.0
    %2231 = vmatprep.subr.mxu0 0.0
    %2232 = vmatpush2.xpose.msra.mxu0 0.0
    %2233 = vmatprep.subr.mxu0 0.0
    %2234 = vmatpush2.xpose.msra.mxu0 0.0
    %2235 = vmatprep.subr.mxu0 0.0
    %2236 = vmatpush2.xpose.msra.mxu0 0.0
    %2237 = vmatprep.subr.mxu0 0.0
    %2238 = vmatpush2.xpose.msra.mxu0 0.0
    %2239 = vmatprep.subr.mxu0 0.0
    %2240 = vmatpush2.xpose.msra.mxu0 0.0
    %2241 = vmatprep.subr.mxu0 0.0
    %2242 = vmatpush2.xpose.msra.mxu0 0.0
    %2243 = vmatprep.subr.mxu0 0.0
    %2244 = vmatpush2.xpose.msra.mxu0 0.0
    %2245 = vmatprep.subr.mxu0 0.0
    %2246 = vmatpush2.xpose.msra.mxu0 0.0
    %2247 = vmatprep.subr.mxu0 0.0
    %2248 = vmatpush2.xpose.msra.mxu0 0.0
    %2249 = vmatprep.subr.mxu0 0.0
    %2250 = vmatpush2.xpose.msra.mxu0 0.0
    %2251 = vmatprep.subr.mxu0 0.0
    %2252 = vmatpush2.xpose.msra.mxu0 0.0
    %2253 = vmatprep.subr.mxu0 0.0
    %2254 = vmatpush2.xpose.msra.mxu0 0.0
    %2255 = vmatprep.subr.mxu0 0.0
    %2256 = vmatpush2.xpose.msra.mxu0 0.0
    %2257 = vmatprep.subr.mxu0 0.0
    %2258 = vmatpush2.xpose.msra.mxu0 0.0
    %2259 = vmatprep.mubr.f32.mxu0 0.0
    %v2260 = vand.u32 %v1964, 4294901760
    %v2261 = vsub.f32 %v1964, %v2260
    %v2262 = vand.u32 %v2261, 4294901760
    %2263 = vmatmul.mubr.f32.gmra.mxu0 %v2262
    %v2264 = vpop.f32.mrf.mxu0
    %v2265 = vadd.f32 %v2191, %v2264
    %v2266 = vpop.f32.mrf.mxu0
    %2267 = vdwg.mxu0
    %2268 = vmatprep.subr.mxu0 0.0
    %2269 = vmatpush1.xpose.msra.mxu0 0.0
    %2270 = vmatprep.subr.mxu0 0.0
    %2271 = vmatpush1.xpose.msra.mxu0 0.0
    %2272 = vmatprep.subr.mxu0 0.0
    %2273 = vmatpush1.xpose.msra.mxu0 0.0
    %2274 = vmatprep.subr.mxu0 0.0
    %2275 = vmatpush1.xpose.msra.mxu0 0.0
    %2276 = vmatprep.subr.mxu0 0.0
    %2277 = vmatpush1.xpose.msra.mxu0 0.0
    %2278 = vmatprep.subr.mxu0 0.0
    %2279 = vmatpush1.xpose.msra.mxu0 0.0
    %2280 = vmatprep.subr.mxu0 0.0
    %2281 = vmatpush1.xpose.msra.mxu0 0.0
    %2282 = vmatprep.subr.mxu0 0.0
    %2283 = vmatpush1.xpose.msra.mxu0 0.0
    %2284 = vmatprep.subr.mxu0 0.0
    %2285 = vmatpush1.xpose.msra.mxu0 0.0
    %2286 = vmatprep.subr.mxu0 0.0
    %2287 = vmatpush1.xpose.msra.mxu0 0.0
    %2288 = vmatprep.subr.mxu0 0.0
    %2289 = vmatpush1.xpose.msra.mxu0 0.0
    %2290 = vmatprep.subr.mxu0 0.0
    %2291 = vmatpush1.xpose.msra.mxu0 0.0
    %2292 = vmatprep.subr.mxu0 0.0
    %2293 = vmatpush1.xpose.msra.mxu0 0.0
    %2294 = vmatprep.subr.mxu0 0.0
    %2295 = vmatpush1.xpose.msra.mxu0 0.0
    %2296 = vmatprep.subr.mxu0 0.0
    %2297 = vmatpush1.xpose.msra.mxu0 0.0
    %2298 = vmatprep.subr.mxu0 0.0
    %v2299 = vand.u32 %v1966, 4294901760
    %v2300 = vsub.f32 %v1966, %v2299
    %v2301 = vand.u32 %v2300, 4294901760
    %2302 = vmatpush1.xpose.msra.mxu0 %v2301
    %2303 = vmatprep.subr.mxu0 0.0
    %2304 = vmatpush2.xpose.msra.mxu0 0.0
    %2305 = vmatprep.subr.mxu0 0.0
    %2306 = vmatpush2.xpose.msra.mxu0 0.0
    %2307 = vmatprep.subr.mxu0 0.0
    %2308 = vmatpush2.xpose.msra.mxu0 0.0
    %2309 = vmatprep.subr.mxu0 0.0
    %2310 = vmatpush2.xpose.msra.mxu0 0.0
    %2311 = vmatprep.subr.mxu0 0.0
    %2312 = vmatpush2.xpose.msra.mxu0 0.0
    %2313 = vmatprep.subr.mxu0 0.0
    %2314 = vmatpush2.xpose.msra.mxu0 0.0
    %2315 = vmatprep.subr.mxu0 0.0
    %2316 = vmatpush2.xpose.msra.mxu0 0.0
    %2317 = vmatprep.subr.mxu0 0.0
    %2318 = vmatpush2.xpose.msra.mxu0 0.0
    %2319 = vmatprep.subr.mxu0 0.0
    %2320 = vmatpush2.xpose.msra.mxu0 0.0
    %2321 = vmatprep.subr.mxu0 0.0
    %2322 = vmatpush2.xpose.msra.mxu0 0.0
    %2323 = vmatprep.subr.mxu0 0.0
    %2324 = vmatpush2.xpose.msra.mxu0 0.0
    %2325 = vmatprep.subr.mxu0 0.0
    %2326 = vmatpush2.xpose.msra.mxu0 0.0
    %2327 = vmatprep.subr.mxu0 0.0
    %2328 = vmatpush2.xpose.msra.mxu0 0.0
    %2329 = vmatprep.subr.mxu0 0.0
    %2330 = vmatpush2.xpose.msra.mxu0 0.0
    %2331 = vmatprep.subr.mxu0 0.0
    %2332 = vmatpush2.xpose.msra.mxu0 0.0
    %2333 = vmatprep.subr.mxu0 0.0
    %2334 = vmatpush2.xpose.msra.mxu0 0.0
    %2335 = vmatprep.mubr.f32.mxu0 0.0
    %v2336 = vand.u32 %v1964, 4294901760
    %2337 = vmatmul.mubr.f32.gmra.mxu0 %v2336
    %v2338 = vpop.f32.mrf.mxu0
    %v2339 = vadd.f32 %v2265, %v2338
    %v2340 = vpop.f32.mrf.mxu0
    %2341 = vdwg.mxu0
    %2342 = vmatprep.subr.mxu0 0.0
    %2343 = vmatpush1.xpose.msra.mxu0 0.0
    %2344 = vmatprep.subr.mxu0 0.0
    %2345 = vmatpush1.xpose.msra.mxu0 0.0
    %2346 = vmatprep.subr.mxu0 0.0
    %2347 = vmatpush1.xpose.msra.mxu0 0.0
    %2348 = vmatprep.subr.mxu0 0.0
    %2349 = vmatpush1.xpose.msra.mxu0 0.0
    %2350 = vmatprep.subr.mxu0 0.0
    %2351 = vmatpush1.xpose.msra.mxu0 0.0
    %2352 = vmatprep.subr.mxu0 0.0
    %2353 = vmatpush1.xpose.msra.mxu0 0.0
    %2354 = vmatprep.subr.mxu0 0.0
    %2355 = vmatpush1.xpose.msra.mxu0 0.0
    %2356 = vmatprep.subr.mxu0 0.0
    %2357 = vmatpush1.xpose.msra.mxu0 0.0
    %2358 = vmatprep.subr.mxu0 0.0
    %2359 = vmatpush1.xpose.msra.mxu0 0.0
    %2360 = vmatprep.subr.mxu0 0.0
    %2361 = vmatpush1.xpose.msra.mxu0 0.0
    %2362 = vmatprep.subr.mxu0 0.0
    %2363 = vmatpush1.xpose.msra.mxu0 0.0
    %2364 = vmatprep.subr.mxu0 0.0
    %2365 = vmatpush1.xpose.msra.mxu0 0.0
    %2366 = vmatprep.subr.mxu0 0.0
    %2367 = vmatpush1.xpose.msra.mxu0 0.0
    %2368 = vmatprep.subr.mxu0 0.0
    %2369 = vmatpush1.xpose.msra.mxu0 0.0
    %2370 = vmatprep.subr.mxu0 0.0
    %2371 = vmatpush1.xpose.msra.mxu0 0.0
    %2372 = vmatprep.subr.mxu0 0.0
    %v2373 = vand.u32 %v1966, 4294901760
    %2374 = vmatpush1.xpose.msra.mxu0 %v2373
    %2375 = vmatprep.subr.mxu0 0.0
    %2376 = vmatpush2.xpose.msra.mxu0 0.0
    %2377 = vmatprep.subr.mxu0 0.0
    %2378 = vmatpush2.xpose.msra.mxu0 0.0
    %2379 = vmatprep.subr.mxu0 0.0
    %2380 = vmatpush2.xpose.msra.mxu0 0.0
    %2381 = vmatprep.subr.mxu0 0.0
    %2382 = vmatpush2.xpose.msra.mxu0 0.0
    %2383 = vmatprep.subr.mxu0 0.0
    %2384 = vmatpush2.xpose.msra.mxu0 0.0
    %2385 = vmatprep.subr.mxu0 0.0
    %2386 = vmatpush2.xpose.msra.mxu0 0.0
    %2387 = vmatprep.subr.mxu0 0.0
    %2388 = vmatpush2.xpose.msra.mxu0 0.0
    %2389 = vmatprep.subr.mxu0 0.0
    %2390 = vmatpush2.xpose.msra.mxu0 0.0
    %2391 = vmatprep.subr.mxu0 0.0
    %2392 = vmatpush2.xpose.msra.mxu0 0.0
    %2393 = vmatprep.subr.mxu0 0.0
    %2394 = vmatpush2.xpose.msra.mxu0 0.0
    %2395 = vmatprep.subr.mxu0 0.0
    %2396 = vmatpush2.xpose.msra.mxu0 0.0
    %2397 = vmatprep.subr.mxu0 0.0
    %2398 = vmatpush2.xpose.msra.mxu0 0.0
    %2399 = vmatprep.subr.mxu0 0.0
    %2400 = vmatpush2.xpose.msra.mxu0 0.0
    %2401 = vmatprep.subr.mxu0 0.0
    %2402 = vmatpush2.xpose.msra.mxu0 0.0
    %2403 = vmatprep.subr.mxu0 0.0
    %2404 = vmatpush2.xpose.msra.mxu0 0.0
    %2405 = vmatprep.subr.mxu0 0.0
    %2406 = vmatpush2.xpose.msra.mxu0 0.0
    %2407 = vmatprep.mubr.f32.mxu0 0.0
    %v2408 = vand.u32 %v1964, 4294901760
    %2409 = vmatmul.mubr.f32.gmra.mxu0 %v2408
    %v2410 = vpop.f32.mrf.mxu0
    %v2411 = vadd.f32 %v2339, %v2410
    %v2412 = vpop.f32.mrf.mxu0
    %2413 = vdwg.mxu0
    %2414 = vrot.lane.b32.xlu0 %v588, 96
    %v2415 = vpop.permute.xlu0 %2414
    %v2416 = vsel %vm607, %v588, 0
    %v2418 = vsel %vm607, %v2415, 0
    %2420 = vmatprep.subr.mxu0 0.0
    %2421 = vmatpush1.xpose.msra.mxu0 0.0
    %2422 = vmatprep.subr.mxu0 0.0
    %2423 = vmatpush1.xpose.msra.mxu0 0.0
    %2424 = vmatprep.subr.mxu0 0.0
    %2425 = vmatpush1.xpose.msra.mxu0 0.0
    %2426 = vmatprep.subr.mxu0 0.0
    %2427 = vmatpush1.xpose.msra.mxu0 0.0
    %2428 = vmatprep.subr.mxu0 0.0
    %2429 = vmatpush1.xpose.msra.mxu0 0.0
    %2430 = vmatprep.subr.mxu0 0.0
    %2431 = vmatpush1.xpose.msra.mxu0 0.0
    %2432 = vmatprep.subr.mxu0 0.0
    %2433 = vmatpush1.xpose.msra.mxu0 0.0
    %2434 = vmatprep.subr.mxu0 0.0
    %2435 = vmatpush1.xpose.msra.mxu0 0.0
    %2436 = vmatprep.subr.mxu0 0.0
    %2437 = vmatpush1.xpose.msra.mxu0 0.0
    %2438 = vmatprep.subr.mxu0 0.0
    %2439 = vmatpush1.xpose.msra.mxu0 0.0
    %2440 = vmatprep.subr.mxu0 0.0
    %2441 = vmatpush1.xpose.msra.mxu0 0.0
    %2442 = vmatprep.subr.mxu0 0.0
    %2443 = vmatpush1.xpose.msra.mxu0 0.0
    %2444 = vmatprep.subr.mxu0 0.0
    %2445 = vmatpush1.xpose.msra.mxu0 0.0
    %2446 = vmatprep.subr.mxu0 0.0
    %2447 = vmatpush1.xpose.msra.mxu0 0.0
    %2448 = vmatprep.subr.mxu0 0.0
    %2449 = vmatpush1.xpose.msra.mxu0 0.0
    %2450 = vmatprep.subr.mxu0 0.0
    %v2451 = vand.u32 %v2418, 4294901760
    %2452 = vmatpush1.xpose.msra.mxu0 %v2451
    %2453 = vmatprep.subr.mxu0 0.0
    %2454 = vmatpush2.xpose.msra.mxu0 0.0
    %2455 = vmatprep.subr.mxu0 0.0
    %2456 = vmatpush2.xpose.msra.mxu0 0.0
    %2457 = vmatprep.subr.mxu0 0.0
    %2458 = vmatpush2.xpose.msra.mxu0 0.0
    %2459 = vmatprep.subr.mxu0 0.0
    %2460 = vmatpush2.xpose.msra.mxu0 0.0
    %2461 = vmatprep.subr.mxu0 0.0
    %2462 = vmatpush2.xpose.msra.mxu0 0.0
    %2463 = vmatprep.subr.mxu0 0.0
    %2464 = vmatpush2.xpose.msra.mxu0 0.0
    %2465 = vmatprep.subr.mxu0 0.0
    %2466 = vmatpush2.xpose.msra.mxu0 0.0
    %2467 = vmatprep.subr.mxu0 0.0
    %2468 = vmatpush2.xpose.msra.mxu0 0.0
    %2469 = vmatprep.subr.mxu0 0.0
    %2470 = vmatpush2.xpose.msra.mxu0 0.0
    %2471 = vmatprep.subr.mxu0 0.0
    %2472 = vmatpush2.xpose.msra.mxu0 0.0
    %2473 = vmatprep.subr.mxu0 0.0
    %2474 = vmatpush2.xpose.msra.mxu0 0.0
    %2475 = vmatprep.subr.mxu0 0.0
    %2476 = vmatpush2.xpose.msra.mxu0 0.0
    %2477 = vmatprep.subr.mxu0 0.0
    %2478 = vmatpush2.xpose.msra.mxu0 0.0
    %2479 = vmatprep.subr.mxu0 0.0
    %2480 = vmatpush2.xpose.msra.mxu0 0.0
    %2481 = vmatprep.subr.mxu0 0.0
    %2482 = vmatpush2.xpose.msra.mxu0 0.0
    %2483 = vmatprep.subr.mxu0 0.0
    %2484 = vmatpush2.xpose.msra.mxu0 0.0
    %2485 = vmatprep.mubr.f32.mxu0 0.0
    %v2486 = vand.u32 %v2416, 4294901760
    %v2487 = vsub.f32 %v2416, %v2486
    %v2488 = vand.u32 %v2487, 4294901760
    %v2489 = vsub.f32 %v2487, %v2488
    %v2490 = vand.u32 %v2489, 4294901760
    %2491 = vmatmul.mubr.f32.gmra.mxu0 %v2490
    %v2492 = vpop.f32.mrf.mxu0
    %v2493 = vadd.f32 0.0, %v2492
    %v2494 = vpop.f32.mrf.mxu0
    %2495 = vdwg.mxu0
    %2496 = vmatprep.subr.mxu0 0.0
    %2497 = vmatpush1.xpose.msra.mxu0 0.0
    %2498 = vmatprep.subr.mxu0 0.0
    %2499 = vmatpush1.xpose.msra.mxu0 0.0
    %2500 = vmatprep.subr.mxu0 0.0
    %2501 = vmatpush1.xpose.msra.mxu0 0.0
    %2502 = vmatprep.subr.mxu0 0.0
    %2503 = vmatpush1.xpose.msra.mxu0 0.0
    %2504 = vmatprep.subr.mxu0 0.0
    %2505 = vmatpush1.xpose.msra.mxu0 0.0
    %2506 = vmatprep.subr.mxu0 0.0
    %2507 = vmatpush1.xpose.msra.mxu0 0.0
    %2508 = vmatprep.subr.mxu0 0.0
    %2509 = vmatpush1.xpose.msra.mxu0 0.0
    %2510 = vmatprep.subr.mxu0 0.0
    %2511 = vmatpush1.xpose.msra.mxu0 0.0
    %2512 = vmatprep.subr.mxu0 0.0
    %2513 = vmatpush1.xpose.msra.mxu0 0.0
    %2514 = vmatprep.subr.mxu0 0.0
    %2515 = vmatpush1.xpose.msra.mxu0 0.0
    %2516 = vmatprep.subr.mxu0 0.0
    %2517 = vmatpush1.xpose.msra.mxu0 0.0
    %2518 = vmatprep.subr.mxu0 0.0
    %2519 = vmatpush1.xpose.msra.mxu0 0.0
    %2520 = vmatprep.subr.mxu0 0.0
    %2521 = vmatpush1.xpose.msra.mxu0 0.0
    %2522 = vmatprep.subr.mxu0 0.0
    %2523 = vmatpush1.xpose.msra.mxu0 0.0
    %2524 = vmatprep.subr.mxu0 0.0
    %2525 = vmatpush1.xpose.msra.mxu0 0.0
    %2526 = vmatprep.subr.mxu0 0.0
    %v2527 = vand.u32 %v2418, 4294901760
    %v2528 = vsub.f32 %v2418, %v2527
    %v2529 = vand.u32 %v2528, 4294901760
    %v2530 = vsub.f32 %v2528, %v2529
    %v2531 = vand.u32 %v2530, 4294901760
    %2532 = vmatpush1.xpose.msra.mxu0 %v2531
    %2533 = vmatprep.subr.mxu0 0.0
    %2534 = vmatpush2.xpose.msra.mxu0 0.0
    %2535 = vmatprep.subr.mxu0 0.0
    %2536 = vmatpush2.xpose.msra.mxu0 0.0
    %2537 = vmatprep.subr.mxu0 0.0
    %2538 = vmatpush2.xpose.msra.mxu0 0.0
    %2539 = vmatprep.subr.mxu0 0.0
    %2540 = vmatpush2.xpose.msra.mxu0 0.0
    %2541 = vmatprep.subr.mxu0 0.0
    %2542 = vmatpush2.xpose.msra.mxu0 0.0
    %2543 = vmatprep.subr.mxu0 0.0
    %2544 = vmatpush2.xpose.msra.mxu0 0.0
    %2545 = vmatprep.subr.mxu0 0.0
    %2546 = vmatpush2.xpose.msra.mxu0 0.0
    %2547 = vmatprep.subr.mxu0 0.0
    %2548 = vmatpush2.xpose.msra.mxu0 0.0
    %2549 = vmatprep.subr.mxu0 0.0
    %2550 = vmatpush2.xpose.msra.mxu0 0.0
    %2551 = vmatprep.subr.mxu0 0.0
    %2552 = vmatpush2.xpose.msra.mxu0 0.0
    %2553 = vmatprep.subr.mxu0 0.0
    %2554 = vmatpush2.xpose.msra.mxu0 0.0
    %2555 = vmatprep.subr.mxu0 0.0
    %2556 = vmatpush2.xpose.msra.mxu0 0.0
    %2557 = vmatprep.subr.mxu0 0.0
    %2558 = vmatpush2.xpose.msra.mxu0 0.0
    %2559 = vmatprep.subr.mxu0 0.0
    %2560 = vmatpush2.xpose.msra.mxu0 0.0
    %2561 = vmatprep.subr.mxu0 0.0
    %2562 = vmatpush2.xpose.msra.mxu0 0.0
    %2563 = vmatprep.subr.mxu0 0.0
    %2564 = vmatpush2.xpose.msra.mxu0 0.0
    %2565 = vmatprep.mubr.f32.mxu0 0.0
    %v2566 = vand.u32 %v2416, 4294901760
    %2567 = vmatmul.mubr.f32.gmra.mxu0 %v2566
    %v2568 = vpop.f32.mrf.mxu0
    %v2569 = vadd.f32 %v2493, %v2568
    %v2570 = vpop.f32.mrf.mxu0
    %2571 = vdwg.mxu0
    %2572 = vmatprep.subr.mxu0 0.0
    %2573 = vmatpush1.xpose.msra.mxu0 0.0
    %2574 = vmatprep.subr.mxu0 0.0
    %2575 = vmatpush1.xpose.msra.mxu0 0.0
    %2576 = vmatprep.subr.mxu0 0.0
    %2577 = vmatpush1.xpose.msra.mxu0 0.0
    %2578 = vmatprep.subr.mxu0 0.0
    %2579 = vmatpush1.xpose.msra.mxu0 0.0
    %2580 = vmatprep.subr.mxu0 0.0
    %2581 = vmatpush1.xpose.msra.mxu0 0.0
    %2582 = vmatprep.subr.mxu0 0.0
    %2583 = vmatpush1.xpose.msra.mxu0 0.0
    %2584 = vmatprep.subr.mxu0 0.0
    %2585 = vmatpush1.xpose.msra.mxu0 0.0
    %2586 = vmatprep.subr.mxu0 0.0
    %2587 = vmatpush1.xpose.msra.mxu0 0.0
    %2588 = vmatprep.subr.mxu0 0.0
    %2589 = vmatpush1.xpose.msra.mxu0 0.0
    %2590 = vmatprep.subr.mxu0 0.0
    %2591 = vmatpush1.xpose.msra.mxu0 0.0
    %2592 = vmatprep.subr.mxu0 0.0
    %2593 = vmatpush1.xpose.msra.mxu0 0.0
    %2594 = vmatprep.subr.mxu0 0.0
    %2595 = vmatpush1.xpose.msra.mxu0 0.0
    %2596 = vmatprep.subr.mxu0 0.0
    %2597 = vmatpush1.xpose.msra.mxu0 0.0
    %2598 = vmatprep.subr.mxu0 0.0
    %2599 = vmatpush1.xpose.msra.mxu0 0.0
    %2600 = vmatprep.subr.mxu0 0.0
    %2601 = vmatpush1.xpose.msra.mxu0 0.0
    %2602 = vmatprep.subr.mxu0 0.0
    %v2603 = vand.u32 %v2418, 4294901760
    %v2604 = vsub.f32 %v2418, %v2603
    %2605 = vmatpush1.xpose.msra.mxu0 %v2604
    %2606 = vmatprep.subr.mxu0 0.0
    %2607 = vmatpush2.xpose.msra.mxu0 0.0
    %2608 = vmatprep.subr.mxu0 0.0
    %2609 = vmatpush2.xpose.msra.mxu0 0.0
    %2610 = vmatprep.subr.mxu0 0.0
    %2611 = vmatpush2.xpose.msra.mxu0 0.0
    %2612 = vmatprep.subr.mxu0 0.0
    %2613 = vmatpush2.xpose.msra.mxu0 0.0
    %2614 = vmatprep.subr.mxu0 0.0
    %2615 = vmatpush2.xpose.msra.mxu0 0.0
    %2616 = vmatprep.subr.mxu0 0.0
    %2617 = vmatpush2.xpose.msra.mxu0 0.0
    %2618 = vmatprep.subr.mxu0 0.0
    %2619 = vmatpush2.xpose.msra.mxu0 0.0
    %2620 = vmatprep.subr.mxu0 0.0
    %2621 = vmatpush2.xpose.msra.mxu0 0.0
    %2622 = vmatprep.subr.mxu0 0.0
    %2623 = vmatpush2.xpose.msra.mxu0 0.0
    %2624 = vmatprep.subr.mxu0 0.0
    %2625 = vmatpush2.xpose.msra.mxu0 0.0
    %2626 = vmatprep.subr.mxu0 0.0
    %2627 = vmatpush2.xpose.msra.mxu0 0.0
    %2628 = vmatprep.subr.mxu0 0.0
    %2629 = vmatpush2.xpose.msra.mxu0 0.0
    %2630 = vmatprep.subr.mxu0 0.0
    %2631 = vmatpush2.xpose.msra.mxu0 0.0
    %2632 = vmatprep.subr.mxu0 0.0
    %2633 = vmatpush2.xpose.msra.mxu0 0.0
    %2634 = vmatprep.subr.mxu0 0.0
    %2635 = vmatpush2.xpose.msra.mxu0 0.0
    %2636 = vmatprep.subr.mxu0 0.0
    %2637 = vmatpush2.xpose.msra.mxu0 0.0
    %2638 = vmatprep.mubr.f32.mxu0 0.0
    %v2639 = vand.u32 %v2416, 4294901760
    %v2640 = vsub.f32 %v2416, %v2639
    %2641 = vmatmul.mubr.f32.gmra.mxu0 %v2640
    %v2642 = vpop.f32.mrf.mxu0
    %v2643 = vadd.f32 %v2569, %v2642
    %v2644 = vpop.f32.mrf.mxu0
    %2645 = vdwg.mxu0
    %2646 = vmatprep.subr.mxu0 0.0
    %2647 = vmatpush1.xpose.msra.mxu0 0.0
    %2648 = vmatprep.subr.mxu0 0.0
    %2649 = vmatpush1.xpose.msra.mxu0 0.0
    %2650 = vmatprep.subr.mxu0 0.0
    %2651 = vmatpush1.xpose.msra.mxu0 0.0
    %2652 = vmatprep.subr.mxu0 0.0
    %2653 = vmatpush1.xpose.msra.mxu0 0.0
    %2654 = vmatprep.subr.mxu0 0.0
    %2655 = vmatpush1.xpose.msra.mxu0 0.0
    %2656 = vmatprep.subr.mxu0 0.0
    %2657 = vmatpush1.xpose.msra.mxu0 0.0
    %2658 = vmatprep.subr.mxu0 0.0
    %2659 = vmatpush1.xpose.msra.mxu0 0.0
    %2660 = vmatprep.subr.mxu0 0.0
    %2661 = vmatpush1.xpose.msra.mxu0 0.0
    %2662 = vmatprep.subr.mxu0 0.0
    %2663 = vmatpush1.xpose.msra.mxu0 0.0
    %2664 = vmatprep.subr.mxu0 0.0
    %2665 = vmatpush1.xpose.msra.mxu0 0.0
    %2666 = vmatprep.subr.mxu0 0.0
    %2667 = vmatpush1.xpose.msra.mxu0 0.0
    %2668 = vmatprep.subr.mxu0 0.0
    %2669 = vmatpush1.xpose.msra.mxu0 0.0
    %2670 = vmatprep.subr.mxu0 0.0
    %2671 = vmatpush1.xpose.msra.mxu0 0.0
    %2672 = vmatprep.subr.mxu0 0.0
    %2673 = vmatpush1.xpose.msra.mxu0 0.0
    %2674 = vmatprep.subr.mxu0 0.0
    %2675 = vmatpush1.xpose.msra.mxu0 0.0
    %2676 = vmatprep.subr.mxu0 0.0
    %v2677 = vand.u32 %v2418, 4294901760
    %2678 = vmatpush1.xpose.msra.mxu0 %v2677
    %2679 = vmatprep.subr.mxu0 0.0
    %2680 = vmatpush2.xpose.msra.mxu0 0.0
    %2681 = vmatprep.subr.mxu0 0.0
    %2682 = vmatpush2.xpose.msra.mxu0 0.0
    %2683 = vmatprep.subr.mxu0 0.0
    %2684 = vmatpush2.xpose.msra.mxu0 0.0
    %2685 = vmatprep.subr.mxu0 0.0
    %2686 = vmatpush2.xpose.msra.mxu0 0.0
    %2687 = vmatprep.subr.mxu0 0.0
    %2688 = vmatpush2.xpose.msra.mxu0 0.0
    %2689 = vmatprep.subr.mxu0 0.0
    %2690 = vmatpush2.xpose.msra.mxu0 0.0
    %2691 = vmatprep.subr.mxu0 0.0
    %2692 = vmatpush2.xpose.msra.mxu0 0.0
    %2693 = vmatprep.subr.mxu0 0.0
    %2694 = vmatpush2.xpose.msra.mxu0 0.0
    %2695 = vmatprep.subr.mxu0 0.0
    %2696 = vmatpush2.xpose.msra.mxu0 0.0
    %2697 = vmatprep.subr.mxu0 0.0
    %2698 = vmatpush2.xpose.msra.mxu0 0.0
    %2699 = vmatprep.subr.mxu0 0.0
    %2700 = vmatpush2.xpose.msra.mxu0 0.0
    %2701 = vmatprep.subr.mxu0 0.0
    %2702 = vmatpush2.xpose.msra.mxu0 0.0
    %2703 = vmatprep.subr.mxu0 0.0
    %2704 = vmatpush2.xpose.msra.mxu0 0.0
    %2705 = vmatprep.subr.mxu0 0.0
    %2706 = vmatpush2.xpose.msra.mxu0 0.0
    %2707 = vmatprep.subr.mxu0 0.0
    %2708 = vmatpush2.xpose.msra.mxu0 0.0
    %2709 = vmatprep.subr.mxu0 0.0
    %2710 = vmatpush2.xpose.msra.mxu0 0.0
    %2711 = vmatprep.mubr.f32.mxu0 0.0
    %v2712 = vand.u32 %v2416, 4294901760
    %v2713 = vsub.f32 %v2416, %v2712
    %v2714 = vand.u32 %v2713, 4294901760
    %2715 = vmatmul.mubr.f32.gmra.mxu0 %v2714
    %v2716 = vpop.f32.mrf.mxu0
    %v2717 = vadd.f32 %v2643, %v2716
    %v2718 = vpop.f32.mrf.mxu0
    %2719 = vdwg.mxu0
    %2720 = vmatprep.subr.mxu0 0.0
    %2721 = vmatpush1.xpose.msra.mxu0 0.0
    %2722 = vmatprep.subr.mxu0 0.0
    %2723 = vmatpush1.xpose.msra.mxu0 0.0
    %2724 = vmatprep.subr.mxu0 0.0
    %2725 = vmatpush1.xpose.msra.mxu0 0.0
    %2726 = vmatprep.subr.mxu0 0.0
    %2727 = vmatpush1.xpose.msra.mxu0 0.0
    %2728 = vmatprep.subr.mxu0 0.0
    %2729 = vmatpush1.xpose.msra.mxu0 0.0
    %2730 = vmatprep.subr.mxu0 0.0
    %2731 = vmatpush1.xpose.msra.mxu0 0.0
    %2732 = vmatprep.subr.mxu0 0.0
    %2733 = vmatpush1.xpose.msra.mxu0 0.0
    %2734 = vmatprep.subr.mxu0 0.0
    %2735 = vmatpush1.xpose.msra.mxu0 0.0
    %2736 = vmatprep.subr.mxu0 0.0
    %2737 = vmatpush1.xpose.msra.mxu0 0.0
    %2738 = vmatprep.subr.mxu0 0.0
    %2739 = vmatpush1.xpose.msra.mxu0 0.0
    %2740 = vmatprep.subr.mxu0 0.0
    %2741 = vmatpush1.xpose.msra.mxu0 0.0
    %2742 = vmatprep.subr.mxu0 0.0
    %2743 = vmatpush1.xpose.msra.mxu0 0.0
    %2744 = vmatprep.subr.mxu0 0.0
    %2745 = vmatpush1.xpose.msra.mxu0 0.0
    %2746 = vmatprep.subr.mxu0 0.0
    %2747 = vmatpush1.xpose.msra.mxu0 0.0
    %2748 = vmatprep.subr.mxu0 0.0
    %2749 = vmatpush1.xpose.msra.mxu0 0.0
    %2750 = vmatprep.subr.mxu0 0.0
    %v2751 = vand.u32 %v2418, 4294901760
    %v2752 = vsub.f32 %v2418, %v2751
    %v2753 = vand.u32 %v2752, 4294901760
    %2754 = vmatpush1.xpose.msra.mxu0 %v2753
    %2755 = vmatprep.subr.mxu0 0.0
    %2756 = vmatpush2.xpose.msra.mxu0 0.0
    %2757 = vmatprep.subr.mxu0 0.0
    %2758 = vmatpush2.xpose.msra.mxu0 0.0
    %2759 = vmatprep.subr.mxu0 0.0
    %2760 = vmatpush2.xpose.msra.mxu0 0.0
    %2761 = vmatprep.subr.mxu0 0.0
    %2762 = vmatpush2.xpose.msra.mxu0 0.0
    %2763 = vmatprep.subr.mxu0 0.0
    %2764 = vmatpush2.xpose.msra.mxu0 0.0
    %2765 = vmatprep.subr.mxu0 0.0
    %2766 = vmatpush2.xpose.msra.mxu0 0.0
    %2767 = vmatprep.subr.mxu0 0.0
    %2768 = vmatpush2.xpose.msra.mxu0 0.0
    %2769 = vmatprep.subr.mxu0 0.0
    %2770 = vmatpush2.xpose.msra.mxu0 0.0
    %2771 = vmatprep.subr.mxu0 0.0
    %2772 = vmatpush2.xpose.msra.mxu0 0.0
    %2773 = vmatprep.subr.mxu0 0.0
    %2774 = vmatpush2.xpose.msra.mxu0 0.0
    %2775 = vmatprep.subr.mxu0 0.0
    %2776 = vmatpush2.xpose.msra.mxu0 0.0
    %2777 = vmatprep.subr.mxu0 0.0
    %2778 = vmatpush2.xpose.msra.mxu0 0.0
    %2779 = vmatprep.subr.mxu0 0.0
    %2780 = vmatpush2.xpose.msra.mxu0 0.0
    %2781 = vmatprep.subr.mxu0 0.0
    %2782 = vmatpush2.xpose.msra.mxu0 0.0
    %2783 = vmatprep.subr.mxu0 0.0
    %2784 = vmatpush2.xpose.msra.mxu0 0.0
    %2785 = vmatprep.subr.mxu0 0.0
    %2786 = vmatpush2.xpose.msra.mxu0 0.0
    %2787 = vmatprep.mubr.f32.mxu0 0.0
    %v2788 = vand.u32 %v2416, 4294901760
    %2789 = vmatmul.mubr.f32.gmra.mxu0 %v2788
    %v2790 = vpop.f32.mrf.mxu0
    %v2791 = vadd.f32 %v2717, %v2790
    %v2792 = vpop.f32.mrf.mxu0
    %2793 = vdwg.mxu0
    %2794 = vmatprep.subr.mxu0 0.0
    %2795 = vmatpush1.xpose.msra.mxu0 0.0
    %2796 = vmatprep.subr.mxu0 0.0
    %2797 = vmatpush1.xpose.msra.mxu0 0.0
    %2798 = vmatprep.subr.mxu0 0.0
    %2799 = vmatpush1.xpose.msra.mxu0 0.0
    %2800 = vmatprep.subr.mxu0 0.0
    %2801 = vmatpush1.xpose.msra.mxu0 0.0
    %2802 = vmatprep.subr.mxu0 0.0
    %2803 = vmatpush1.xpose.msra.mxu0 0.0
    %2804 = vmatprep.subr.mxu0 0.0
    %2805 = vmatpush1.xpose.msra.mxu0 0.0
    %2806 = vmatprep.subr.mxu0 0.0
    %2807 = vmatpush1.xpose.msra.mxu0 0.0
    %2808 = vmatprep.subr.mxu0 0.0
    %2809 = vmatpush1.xpose.msra.mxu0 0.0
    %2810 = vmatprep.subr.mxu0 0.0
    %2811 = vmatpush1.xpose.msra.mxu0 0.0
    %2812 = vmatprep.subr.mxu0 0.0
    %2813 = vmatpush1.xpose.msra.mxu0 0.0
    %2814 = vmatprep.subr.mxu0 0.0
    %2815 = vmatpush1.xpose.msra.mxu0 0.0
    %2816 = vmatprep.subr.mxu0 0.0
    %2817 = vmatpush1.xpose.msra.mxu0 0.0
    %2818 = vmatprep.subr.mxu0 0.0
    %2819 = vmatpush1.xpose.msra.mxu0 0.0
    %2820 = vmatprep.subr.mxu0 0.0
    %2821 = vmatpush1.xpose.msra.mxu0 0.0
    %2822 = vmatprep.subr.mxu0 0.0
    %2823 = vmatpush1.xpose.msra.mxu0 0.0
    %2824 = vmatprep.subr.mxu0 0.0
    %v2825 = vand.u32 %v2418, 4294901760
    %2826 = vmatpush1.xpose.msra.mxu0 %v2825
    %2827 = vmatprep.subr.mxu0 0.0
    %2828 = vmatpush2.xpose.msra.mxu0 0.0
    %2829 = vmatprep.subr.mxu0 0.0
    %2830 = vmatpush2.xpose.msra.mxu0 0.0
    %2831 = vmatprep.subr.mxu0 0.0
    %2832 = vmatpush2.xpose.msra.mxu0 0.0
    %2833 = vmatprep.subr.mxu0 0.0
    %2834 = vmatpush2.xpose.msra.mxu0 0.0
    %2835 = vmatprep.subr.mxu0 0.0
    %2836 = vmatpush2.xpose.msra.mxu0 0.0
    %2837 = vmatprep.subr.mxu0 0.0
    %2838 = vmatpush2.xpose.msra.mxu0 0.0
    %2839 = vmatprep.subr.mxu0 0.0
    %2840 = vmatpush2.xpose.msra.mxu0 0.0
    %2841 = vmatprep.subr.mxu0 0.0
    %2842 = vmatpush2.xpose.msra.mxu0 0.0
    %2843 = vmatprep.subr.mxu0 0.0
    %2844 = vmatpush2.xpose.msra.mxu0 0.0
    %2845 = vmatprep.subr.mxu0 0.0
    %2846 = vmatpush2.xpose.msra.mxu0 0.0
    %2847 = vmatprep.subr.mxu0 0.0
    %2848 = vmatpush2.xpose.msra.mxu0 0.0
    %2849 = vmatprep.subr.mxu0 0.0
    %2850 = vmatpush2.xpose.msra.mxu0 0.0
    %2851 = vmatprep.subr.mxu0 0.0
    %2852 = vmatpush2.xpose.msra.mxu0 0.0
    %2853 = vmatprep.subr.mxu0 0.0
    %2854 = vmatpush2.xpose.msra.mxu0 0.0
    %2855 = vmatprep.subr.mxu0 0.0
    %2856 = vmatpush2.xpose.msra.mxu0 0.0
    %2857 = vmatprep.subr.mxu0 0.0
    %2858 = vmatpush2.xpose.msra.mxu0 0.0
    %2859 = vmatprep.mubr.f32.mxu0 0.0
    %v2860 = vand.u32 %v2416, 4294901760
    %2861 = vmatmul.mubr.f32.gmra.mxu0 %v2860
    %v2862 = vpop.f32.mrf.mxu0
    %v2863 = vadd.f32 %v2791, %v2862
    %v2864 = vpop.f32.mrf.mxu0
    %2865 = vdwg.mxu0
    %2866 = vrot.lane.b32.xlu0 %v600, 96
    %v2867 = vpop.permute.xlu0 %2866
    %v2868 = vsel %vm607, %v600, 0
    %v2870 = vsel %vm607, %v2867, 0
    %2872 = vmatprep.subr.mxu0 0.0
    %2873 = vmatpush1.xpose.msra.mxu0 0.0
    %2874 = vmatprep.subr.mxu0 0.0
    %2875 = vmatpush1.xpose.msra.mxu0 0.0
    %2876 = vmatprep.subr.mxu0 0.0
    %2877 = vmatpush1.xpose.msra.mxu0 0.0
    %2878 = vmatprep.subr.mxu0 0.0
    %2879 = vmatpush1.xpose.msra.mxu0 0.0
    %2880 = vmatprep.subr.mxu0 0.0
    %2881 = vmatpush1.xpose.msra.mxu0 0.0
    %2882 = vmatprep.subr.mxu0 0.0
    %2883 = vmatpush1.xpose.msra.mxu0 0.0
    %2884 = vmatprep.subr.mxu0 0.0
    %2885 = vmatpush1.xpose.msra.mxu0 0.0
    %2886 = vmatprep.subr.mxu0 0.0
    %2887 = vmatpush1.xpose.msra.mxu0 0.0
    %2888 = vmatprep.subr.mxu0 0.0
    %2889 = vmatpush1.xpose.msra.mxu0 0.0
    %2890 = vmatprep.subr.mxu0 0.0
    %2891 = vmatpush1.xpose.msra.mxu0 0.0
    %2892 = vmatprep.subr.mxu0 0.0
    %2893 = vmatpush1.xpose.msra.mxu0 0.0
    %2894 = vmatprep.subr.mxu0 0.0
    %2895 = vmatpush1.xpose.msra.mxu0 0.0
    %2896 = vmatprep.subr.mxu0 0.0
    %2897 = vmatpush1.xpose.msra.mxu0 0.0
    %2898 = vmatprep.subr.mxu0 0.0
    %2899 = vmatpush1.xpose.msra.mxu0 0.0
    %2900 = vmatprep.subr.mxu0 0.0
    %2901 = vmatpush1.xpose.msra.mxu0 0.0
    %2902 = vmatprep.subr.mxu0 0.0
    %v2903 = vand.u32 %v2870, 4294901760
    %2904 = vmatpush1.xpose.msra.mxu0 %v2903
    %2905 = vmatprep.subr.mxu0 0.0
    %2906 = vmatpush2.xpose.msra.mxu0 0.0
    %2907 = vmatprep.subr.mxu0 0.0
    %2908 = vmatpush2.xpose.msra.mxu0 0.0
    %2909 = vmatprep.subr.mxu0 0.0
    %2910 = vmatpush2.xpose.msra.mxu0 0.0
    %2911 = vmatprep.subr.mxu0 0.0
    %2912 = vmatpush2.xpose.msra.mxu0 0.0
    %2913 = vmatprep.subr.mxu0 0.0
    %2914 = vmatpush2.xpose.msra.mxu0 0.0
    %2915 = vmatprep.subr.mxu0 0.0
    %2916 = vmatpush2.xpose.msra.mxu0 0.0
    %2917 = vmatprep.subr.mxu0 0.0
    %2918 = vmatpush2.xpose.msra.mxu0 0.0
    %2919 = vmatprep.subr.mxu0 0.0
    %2920 = vmatpush2.xpose.msra.mxu0 0.0
    %2921 = vmatprep.subr.mxu0 0.0
    %2922 = vmatpush2.xpose.msra.mxu0 0.0
    %2923 = vmatprep.subr.mxu0 0.0
    %2924 = vmatpush2.xpose.msra.mxu0 0.0
    %2925 = vmatprep.subr.mxu0 0.0
    %2926 = vmatpush2.xpose.msra.mxu0 0.0
    %2927 = vmatprep.subr.mxu0 0.0
    %2928 = vmatpush2.xpose.msra.mxu0 0.0
    %2929 = vmatprep.subr.mxu0 0.0
    %2930 = vmatpush2.xpose.msra.mxu0 0.0
    %2931 = vmatprep.subr.mxu0 0.0
    %2932 = vmatpush2.xpose.msra.mxu0 0.0
    %2933 = vmatprep.subr.mxu0 0.0
    %2934 = vmatpush2.xpose.msra.mxu0 0.0
    %2935 = vmatprep.subr.mxu0 0.0
    %2936 = vmatpush2.xpose.msra.mxu0 0.0
    %2937 = vmatprep.mubr.f32.mxu0 0.0
    %v2938 = vand.u32 %v2868, 4294901760
    %v2939 = vsub.f32 %v2868, %v2938
    %v2940 = vand.u32 %v2939, 4294901760
    %v2941 = vsub.f32 %v2939, %v2940
    %v2942 = vand.u32 %v2941, 4294901760
    %2943 = vmatmul.mubr.f32.gmra.mxu0 %v2942
    %v2944 = vpop.f32.mrf.mxu0
    %v2945 = vadd.f32 0.0, %v2944
    %v2946 = vpop.f32.mrf.mxu0
    %2947 = vdwg.mxu0
    %2948 = vmatprep.subr.mxu0 0.0
    %2949 = vmatpush1.xpose.msra.mxu0 0.0
    %2950 = vmatprep.subr.mxu0 0.0
    %2951 = vmatpush1.xpose.msra.mxu0 0.0
    %2952 = vmatprep.subr.mxu0 0.0
    %2953 = vmatpush1.xpose.msra.mxu0 0.0
    %2954 = vmatprep.subr.mxu0 0.0
    %2955 = vmatpush1.xpose.msra.mxu0 0.0
    %2956 = vmatprep.subr.mxu0 0.0
    %2957 = vmatpush1.xpose.msra.mxu0 0.0
    %2958 = vmatprep.subr.mxu0 0.0
    %2959 = vmatpush1.xpose.msra.mxu0 0.0
    %2960 = vmatprep.subr.mxu0 0.0
    %2961 = vmatpush1.xpose.msra.mxu0 0.0
    %2962 = vmatprep.subr.mxu0 0.0
    %2963 = vmatpush1.xpose.msra.mxu0 0.0
    %2964 = vmatprep.subr.mxu0 0.0
    %2965 = vmatpush1.xpose.msra.mxu0 0.0
    %2966 = vmatprep.subr.mxu0 0.0
    %2967 = vmatpush1.xpose.msra.mxu0 0.0
    %2968 = vmatprep.subr.mxu0 0.0
    %2969 = vmatpush1.xpose.msra.mxu0 0.0
    %2970 = vmatprep.subr.mxu0 0.0
    %2971 = vmatpush1.xpose.msra.mxu0 0.0
    %2972 = vmatprep.subr.mxu0 0.0
    %2973 = vmatpush1.xpose.msra.mxu0 0.0
    %2974 = vmatprep.subr.mxu0 0.0
    %2975 = vmatpush1.xpose.msra.mxu0 0.0
    %2976 = vmatprep.subr.mxu0 0.0
    %2977 = vmatpush1.xpose.msra.mxu0 0.0
    %2978 = vmatprep.subr.mxu0 0.0
    %v2979 = vand.u32 %v2870, 4294901760
    %v2980 = vsub.f32 %v2870, %v2979
    %v2981 = vand.u32 %v2980, 4294901760
    %v2982 = vsub.f32 %v2980, %v2981
    %v2983 = vand.u32 %v2982, 4294901760
    %2984 = vmatpush1.xpose.msra.mxu0 %v2983
    %2985 = vmatprep.subr.mxu0 0.0
    %2986 = vmatpush2.xpose.msra.mxu0 0.0
    %2987 = vmatprep.subr.mxu0 0.0
    %2988 = vmatpush2.xpose.msra.mxu0 0.0
    %2989 = vmatprep.subr.mxu0 0.0
    %2990 = vmatpush2.xpose.msra.mxu0 0.0
    %2991 = vmatprep.subr.mxu0 0.0
    %2992 = vmatpush2.xpose.msra.mxu0 0.0
    %2993 = vmatprep.subr.mxu0 0.0
    %2994 = vmatpush2.xpose.msra.mxu0 0.0
    %2995 = vmatprep.subr.mxu0 0.0
    %2996 = vmatpush2.xpose.msra.mxu0 0.0
    %2997 = vmatprep.subr.mxu0 0.0
    %2998 = vmatpush2.xpose.msra.mxu0 0.0
    %2999 = vmatprep.subr.mxu0 0.0
    %3000 = vmatpush2.xpose.msra.mxu0 0.0
    %3001 = vmatprep.subr.mxu0 0.0
    %3002 = vmatpush2.xpose.msra.mxu0 0.0
    %3003 = vmatprep.subr.mxu0 0.0
    %3004 = vmatpush2.xpose.msra.mxu0 0.0
    %3005 = vmatprep.subr.mxu0 0.0
    %3006 = vmatpush2.xpose.msra.mxu0 0.0
    %3007 = vmatprep.subr.mxu0 0.0
    %3008 = vmatpush2.xpose.msra.mxu0 0.0
    %3009 = vmatprep.subr.mxu0 0.0
    %3010 = vmatpush2.xpose.msra.mxu0 0.0
    %3011 = vmatprep.subr.mxu0 0.0
    %3012 = vmatpush2.xpose.msra.mxu0 0.0
    %3013 = vmatprep.subr.mxu0 0.0
    %3014 = vmatpush2.xpose.msra.mxu0 0.0
    %3015 = vmatprep.subr.mxu0 0.0
    %3016 = vmatpush2.xpose.msra.mxu0 0.0
    %3017 = vmatprep.mubr.f32.mxu0 0.0
    %v3018 = vand.u32 %v2868, 4294901760
    %3019 = vmatmul.mubr.f32.gmra.mxu0 %v3018
    %v3020 = vpop.f32.mrf.mxu0
    %v3021 = vadd.f32 %v2945, %v3020
    %v3022 = vpop.f32.mrf.mxu0
    %3023 = vdwg.mxu0
    %3024 = vmatprep.subr.mxu0 0.0
    %3025 = vmatpush1.xpose.msra.mxu0 0.0
    %3026 = vmatprep.subr.mxu0 0.0
    %3027 = vmatpush1.xpose.msra.mxu0 0.0
    %3028 = vmatprep.subr.mxu0 0.0
    %3029 = vmatpush1.xpose.msra.mxu0 0.0
    %3030 = vmatprep.subr.mxu0 0.0
    %3031 = vmatpush1.xpose.msra.mxu0 0.0
    %3032 = vmatprep.subr.mxu0 0.0
    %3033 = vmatpush1.xpose.msra.mxu0 0.0
    %3034 = vmatprep.subr.mxu0 0.0
    %3035 = vmatpush1.xpose.msra.mxu0 0.0
    %3036 = vmatprep.subr.mxu0 0.0
    %3037 = vmatpush1.xpose.msra.mxu0 0.0
    %3038 = vmatprep.subr.mxu0 0.0
    %3039 = vmatpush1.xpose.msra.mxu0 0.0
    %3040 = vmatprep.subr.mxu0 0.0
    %3041 = vmatpush1.xpose.msra.mxu0 0.0
    %3042 = vmatprep.subr.mxu0 0.0
    %3043 = vmatpush1.xpose.msra.mxu0 0.0
    %3044 = vmatprep.subr.mxu0 0.0
    %3045 = vmatpush1.xpose.msra.mxu0 0.0
    %3046 = vmatprep.subr.mxu0 0.0
    %3047 = vmatpush1.xpose.msra.mxu0 0.0
    %3048 = vmatprep.subr.mxu0 0.0
    %3049 = vmatpush1.xpose.msra.mxu0 0.0
    %3050 = vmatprep.subr.mxu0 0.0
    %3051 = vmatpush1.xpose.msra.mxu0 0.0
    %3052 = vmatprep.subr.mxu0 0.0
    %3053 = vmatpush1.xpose.msra.mxu0 0.0
    %3054 = vmatprep.subr.mxu0 0.0
    %v3055 = vand.u32 %v2870, 4294901760
    %v3056 = vsub.f32 %v2870, %v3055
    %3057 = vmatpush1.xpose.msra.mxu0 %v3056
    %3058 = vmatprep.subr.mxu0 0.0
    %3059 = vmatpush2.xpose.msra.mxu0 0.0
    %3060 = vmatprep.subr.mxu0 0.0
    %3061 = vmatpush2.xpose.msra.mxu0 0.0
    %3062 = vmatprep.subr.mxu0 0.0
    %3063 = vmatpush2.xpose.msra.mxu0 0.0
    %3064 = vmatprep.subr.mxu0 0.0
    %3065 = vmatpush2.xpose.msra.mxu0 0.0
    %3066 = vmatprep.subr.mxu0 0.0
    %3067 = vmatpush2.xpose.msra.mxu0 0.0
    %3068 = vmatprep.subr.mxu0 0.0
    %3069 = vmatpush2.xpose.msra.mxu0 0.0
    %3070 = vmatprep.subr.mxu0 0.0
    %3071 = vmatpush2.xpose.msra.mxu0 0.0
    %3072 = vmatprep.subr.mxu0 0.0
    %3073 = vmatpush2.xpose.msra.mxu0 0.0
    %3074 = vmatprep.subr.mxu0 0.0
    %3075 = vmatpush2.xpose.msra.mxu0 0.0
    %3076 = vmatprep.subr.mxu0 0.0
    %3077 = vmatpush2.xpose.msra.mxu0 0.0
    %3078 = vmatprep.subr.mxu0 0.0
    %3079 = vmatpush2.xpose.msra.mxu0 0.0
    %3080 = vmatprep.subr.mxu0 0.0
    %3081 = vmatpush2.xpose.msra.mxu0 0.0
    %3082 = vmatprep.subr.mxu0 0.0
    %3083 = vmatpush2.xpose.msra.mxu0 0.0
    %3084 = vmatprep.subr.mxu0 0.0
    %3085 = vmatpush2.xpose.msra.mxu0 0.0
    %3086 = vmatprep.subr.mxu0 0.0
    %3087 = vmatpush2.xpose.msra.mxu0 0.0
    %3088 = vmatprep.subr.mxu0 0.0
    %3089 = vmatpush2.xpose.msra.mxu0 0.0
    %3090 = vmatprep.mubr.f32.mxu0 0.0
    %v3091 = vand.u32 %v2868, 4294901760
    %v3092 = vsub.f32 %v2868, %v3091
    %3093 = vmatmul.mubr.f32.gmra.mxu0 %v3092
    %v3094 = vpop.f32.mrf.mxu0
    %v3095 = vadd.f32 %v3021, %v3094
    %v3096 = vpop.f32.mrf.mxu0
    %3097 = vdwg.mxu0
    %3098 = vmatprep.subr.mxu0 0.0
    %3099 = vmatpush1.xpose.msra.mxu0 0.0
    %3100 = vmatprep.subr.mxu0 0.0
    %3101 = vmatpush1.xpose.msra.mxu0 0.0
    %3102 = vmatprep.subr.mxu0 0.0
    %3103 = vmatpush1.xpose.msra.mxu0 0.0
    %3104 = vmatprep.subr.mxu0 0.0
    %3105 = vmatpush1.xpose.msra.mxu0 0.0
    %3106 = vmatprep.subr.mxu0 0.0
    %3107 = vmatpush1.xpose.msra.mxu0 0.0
    %3108 = vmatprep.subr.mxu0 0.0
    %3109 = vmatpush1.xpose.msra.mxu0 0.0
    %3110 = vmatprep.subr.mxu0 0.0
    %3111 = vmatpush1.xpose.msra.mxu0 0.0
    %3112 = vmatprep.subr.mxu0 0.0
    %3113 = vmatpush1.xpose.msra.mxu0 0.0
    %3114 = vmatprep.subr.mxu0 0.0
    %3115 = vmatpush1.xpose.msra.mxu0 0.0
    %3116 = vmatprep.subr.mxu0 0.0
    %3117 = vmatpush1.xpose.msra.mxu0 0.0
    %3118 = vmatprep.subr.mxu0 0.0
    %3119 = vmatpush1.xpose.msra.mxu0 0.0
    %3120 = vmatprep.subr.mxu0 0.0
    %3121 = vmatpush1.xpose.msra.mxu0 0.0
    %3122 = vmatprep.subr.mxu0 0.0
    %3123 = vmatpush1.xpose.msra.mxu0 0.0
    %3124 = vmatprep.subr.mxu0 0.0
    %3125 = vmatpush1.xpose.msra.mxu0 0.0
    %3126 = vmatprep.subr.mxu0 0.0
    %3127 = vmatpush1.xpose.msra.mxu0 0.0
    %3128 = vmatprep.subr.mxu0 0.0
    %v3129 = vand.u32 %v2870, 4294901760
    %3130 = vmatpush1.xpose.msra.mxu0 %v3129
    %3131 = vmatprep.subr.mxu0 0.0
    %3132 = vmatpush2.xpose.msra.mxu0 0.0
    %3133 = vmatprep.subr.mxu0 0.0
    %3134 = vmatpush2.xpose.msra.mxu0 0.0
    %3135 = vmatprep.subr.mxu0 0.0
    %3136 = vmatpush2.xpose.msra.mxu0 0.0
    %3137 = vmatprep.subr.mxu0 0.0
    %3138 = vmatpush2.xpose.msra.mxu0 0.0
    %3139 = vmatprep.subr.mxu0 0.0
    %3140 = vmatpush2.xpose.msra.mxu0 0.0
    %3141 = vmatprep.subr.mxu0 0.0
    %3142 = vmatpush2.xpose.msra.mxu0 0.0
    %3143 = vmatprep.subr.mxu0 0.0
    %3144 = vmatpush2.xpose.msra.mxu0 0.0
    %3145 = vmatprep.subr.mxu0 0.0
    %3146 = vmatpush2.xpose.msra.mxu0 0.0
    %3147 = vmatprep.subr.mxu0 0.0
    %3148 = vmatpush2.xpose.msra.mxu0 0.0
    %3149 = vmatprep.subr.mxu0 0.0
    %3150 = vmatpush2.xpose.msra.mxu0 0.0
    %3151 = vmatprep.subr.mxu0 0.0
    %3152 = vmatpush2.xpose.msra.mxu0 0.0
    %3153 = vmatprep.subr.mxu0 0.0
    %3154 = vmatpush2.xpose.msra.mxu0 0.0
    %3155 = vmatprep.subr.mxu0 0.0
    %3156 = vmatpush2.xpose.msra.mxu0 0.0
    %3157 = vmatprep.subr.mxu0 0.0
    %3158 = vmatpush2.xpose.msra.mxu0 0.0
    %3159 = vmatprep.subr.mxu0 0.0
    %3160 = vmatpush2.xpose.msra.mxu0 0.0
    %3161 = vmatprep.subr.mxu0 0.0
    %3162 = vmatpush2.xpose.msra.mxu0 0.0
    %3163 = vmatprep.mubr.f32.mxu0 0.0
    %v3164 = vand.u32 %v2868, 4294901760
    %v3165 = vsub.f32 %v2868, %v3164
    %v3166 = vand.u32 %v3165, 4294901760
    %3167 = vmatmul.mubr.f32.gmra.mxu0 %v3166
    %v3168 = vpop.f32.mrf.mxu0
    %v3169 = vadd.f32 %v3095, %v3168
    %v3170 = vpop.f32.mrf.mxu0
    %3171 = vdwg.mxu0
    %3172 = vmatprep.subr.mxu0 0.0
    %3173 = vmatpush1.xpose.msra.mxu0 0.0
    %3174 = vmatprep.subr.mxu0 0.0
    %3175 = vmatpush1.xpose.msra.mxu0 0.0
    %3176 = vmatprep.subr.mxu0 0.0
    %3177 = vmatpush1.xpose.msra.mxu0 0.0
    %3178 = vmatprep.subr.mxu0 0.0
    %3179 = vmatpush1.xpose.msra.mxu0 0.0
    %3180 = vmatprep.subr.mxu0 0.0
    %3181 = vmatpush1.xpose.msra.mxu0 0.0
    %3182 = vmatprep.subr.mxu0 0.0
    %3183 = vmatpush1.xpose.msra.mxu0 0.0
    %3184 = vmatprep.subr.mxu0 0.0
    %3185 = vmatpush1.xpose.msra.mxu0 0.0
    %3186 = vmatprep.subr.mxu0 0.0
    %3187 = vmatpush1.xpose.msra.mxu0 0.0
    %3188 = vmatprep.subr.mxu0 0.0
    %3189 = vmatpush1.xpose.msra.mxu0 0.0
    %3190 = vmatprep.subr.mxu0 0.0
    %3191 = vmatpush1.xpose.msra.mxu0 0.0
    %3192 = vmatprep.subr.mxu0 0.0
    %3193 = vmatpush1.xpose.msra.mxu0 0.0
    %3194 = vmatprep.subr.mxu0 0.0
    %3195 = vmatpush1.xpose.msra.mxu0 0.0
    %3196 = vmatprep.subr.mxu0 0.0
    %3197 = vmatpush1.xpose.msra.mxu0 0.0
    %3198 = vmatprep.subr.mxu0 0.0
    %3199 = vmatpush1.xpose.msra.mxu0 0.0
    %3200 = vmatprep.subr.mxu0 0.0
    %3201 = vmatpush1.xpose.msra.mxu0 0.0
    %3202 = vmatprep.subr.mxu0 0.0
    %v3203 = vand.u32 %v2870, 4294901760
    %v3204 = vsub.f32 %v2870, %v3203
    %v3205 = vand.u32 %v3204, 4294901760
    %3206 = vmatpush1.xpose.msra.mxu0 %v3205
    %3207 = vmatprep.subr.mxu0 0.0
    %3208 = vmatpush2.xpose.msra.mxu0 0.0
    %3209 = vmatprep.subr.mxu0 0.0
    %3210 = vmatpush2.xpose.msra.mxu0 0.0
    %3211 = vmatprep.subr.mxu0 0.0
    %3212 = vmatpush2.xpose.msra.mxu0 0.0
    %3213 = vmatprep.subr.mxu0 0.0
    %3214 = vmatpush2.xpose.msra.mxu0 0.0
    %3215 = vmatprep.subr.mxu0 0.0
    %3216 = vmatpush2.xpose.msra.mxu0 0.0
    %3217 = vmatprep.subr.mxu0 0.0
    %3218 = vmatpush2.xpose.msra.mxu0 0.0
    %3219 = vmatprep.subr.mxu0 0.0
    %3220 = vmatpush2.xpose.msra.mxu0 0.0
    %3221 = vmatprep.subr.mxu0 0.0
    %3222 = vmatpush2.xpose.msra.mxu0 0.0
    %3223 = vmatprep.subr.mxu0 0.0
    %3224 = vmatpush2.xpose.msra.mxu0 0.0
    %3225 = vmatprep.subr.mxu0 0.0
    %3226 = vmatpush2.xpose.msra.mxu0 0.0
    %3227 = vmatprep.subr.mxu0 0.0
    %3228 = vmatpush2.xpose.msra.mxu0 0.0
    %3229 = vmatprep.subr.mxu0 0.0
    %3230 = vmatpush2.xpose.msra.mxu0 0.0
    %3231 = vmatprep.subr.mxu0 0.0
    %3232 = vmatpush2.xpose.msra.mxu0 0.0
    %3233 = vmatprep.subr.mxu0 0.0
    %3234 = vmatpush2.xpose.msra.mxu0 0.0
    %3235 = vmatprep.subr.mxu0 0.0
    %3236 = vmatpush2.xpose.msra.mxu0 0.0
    %3237 = vmatprep.subr.mxu0 0.0
    %3238 = vmatpush2.xpose.msra.mxu0 0.0
    %3239 = vmatprep.mubr.f32.mxu0 0.0
    %v3240 = vand.u32 %v2868, 4294901760
    %3241 = vmatmul.mubr.f32.gmra.mxu0 %v3240
    %v3242 = vpop.f32.mrf.mxu0
    %v3243 = vadd.f32 %v3169, %v3242
    %v3244 = vpop.f32.mrf.mxu0
    %3245 = vdwg.mxu0
    %3246 = vmatprep.subr.mxu0 0.0
    %3247 = vmatpush1.xpose.msra.mxu0 0.0
    %3248 = vmatprep.subr.mxu0 0.0
    %3249 = vmatpush1.xpose.msra.mxu0 0.0
    %3250 = vmatprep.subr.mxu0 0.0
    %3251 = vmatpush1.xpose.msra.mxu0 0.0
    %3252 = vmatprep.subr.mxu0 0.0
    %3253 = vmatpush1.xpose.msra.mxu0 0.0
    %3254 = vmatprep.subr.mxu0 0.0
    %3255 = vmatpush1.xpose.msra.mxu0 0.0
    %3256 = vmatprep.subr.mxu0 0.0
    %3257 = vmatpush1.xpose.msra.mxu0 0.0
    %3258 = vmatprep.subr.mxu0 0.0
    %3259 = vmatpush1.xpose.msra.mxu0 0.0
    %3260 = vmatprep.subr.mxu0 0.0
    %3261 = vmatpush1.xpose.msra.mxu0 0.0
    %3262 = vmatprep.subr.mxu0 0.0
    %3263 = vmatpush1.xpose.msra.mxu0 0.0
    %3264 = vmatprep.subr.mxu0 0.0
    %3265 = vmatpush1.xpose.msra.mxu0 0.0
    %3266 = vmatprep.subr.mxu0 0.0
    %3267 = vmatpush1.xpose.msra.mxu0 0.0
    %3268 = vmatprep.subr.mxu0 0.0
    %3269 = vmatpush1.xpose.msra.mxu0 0.0
    %3270 = vmatprep.subr.mxu0 0.0
    %3271 = vmatpush1.xpose.msra.mxu0 0.0
    %3272 = vmatprep.subr.mxu0 0.0
    %3273 = vmatpush1.xpose.msra.mxu0 0.0
    %3274 = vmatprep.subr.mxu0 0.0
    %3275 = vmatpush1.xpose.msra.mxu0 0.0
    %3276 = vmatprep.subr.mxu0 0.0
    %v3277 = vand.u32 %v2870, 4294901760
    %3278 = vmatpush1.xpose.msra.mxu0 %v3277
    %3279 = vmatprep.subr.mxu0 0.0
    %3280 = vmatpush2.xpose.msra.mxu0 0.0
    %3281 = vmatprep.subr.mxu0 0.0
    %3282 = vmatpush2.xpose.msra.mxu0 0.0
    %3283 = vmatprep.subr.mxu0 0.0
    %3284 = vmatpush2.xpose.msra.mxu0 0.0
    %3285 = vmatprep.subr.mxu0 0.0
    %3286 = vmatpush2.xpose.msra.mxu0 0.0
    %3287 = vmatprep.subr.mxu0 0.0
    %3288 = vmatpush2.xpose.msra.mxu0 0.0
    %3289 = vmatprep.subr.mxu0 0.0
    %3290 = vmatpush2.xpose.msra.mxu0 0.0
    %3291 = vmatprep.subr.mxu0 0.0
    %3292 = vmatpush2.xpose.msra.mxu0 0.0
    %3293 = vmatprep.subr.mxu0 0.0
    %3294 = vmatpush2.xpose.msra.mxu0 0.0
    %3295 = vmatprep.subr.mxu0 0.0
    %3296 = vmatpush2.xpose.msra.mxu0 0.0
    %3297 = vmatprep.subr.mxu0 0.0
    %3298 = vmatpush2.xpose.msra.mxu0 0.0
    %3299 = vmatprep.subr.mxu0 0.0
    %3300 = vmatpush2.xpose.msra.mxu0 0.0
    %3301 = vmatprep.subr.mxu0 0.0
    %3302 = vmatpush2.xpose.msra.mxu0 0.0
    %3303 = vmatprep.subr.mxu0 0.0
    %3304 = vmatpush2.xpose.msra.mxu0 0.0
    %3305 = vmatprep.subr.mxu0 0.0
    %3306 = vmatpush2.xpose.msra.mxu0 0.0
    %3307 = vmatprep.subr.mxu0 0.0
    %3308 = vmatpush2.xpose.msra.mxu0 0.0
    %3309 = vmatprep.subr.mxu0 0.0
    %3310 = vmatpush2.xpose.msra.mxu0 0.0
    %3311 = vmatprep.mubr.f32.mxu0 0.0
    %v3312 = vand.u32 %v2868, 4294901760
    %3313 = vmatmul.mubr.f32.gmra.mxu0 %v3312
    %v3314 = vpop.f32.mrf.mxu0
    %v3315 = vadd.f32 %v3243, %v3314
    %v3316 = vpop.f32.mrf.mxu0
    %3317 = vdwg.mxu0
    %3318 = vrot.lane.b32.xlu0 %v602, 96
    %v3319 = vpop.permute.xlu0 %3318
    %v3320 = vsel %vm607, %v602, 0
    %v3322 = vsel %vm607, %v3319, 0
    %3324 = vmatprep.subr.mxu0 0.0
    %3325 = vmatpush1.xpose.msra.mxu0 0.0
    %3326 = vmatprep.subr.mxu0 0.0
    %3327 = vmatpush1.xpose.msra.mxu0 0.0
    %3328 = vmatprep.subr.mxu0 0.0
    %3329 = vmatpush1.xpose.msra.mxu0 0.0
    %3330 = vmatprep.subr.mxu0 0.0
    %3331 = vmatpush1.xpose.msra.mxu0 0.0
    %3332 = vmatprep.subr.mxu0 0.0
    %3333 = vmatpush1.xpose.msra.mxu0 0.0
    %3334 = vmatprep.subr.mxu0 0.0
    %3335 = vmatpush1.xpose.msra.mxu0 0.0
    %3336 = vmatprep.subr.mxu0 0.0
    %3337 = vmatpush1.xpose.msra.mxu0 0.0
    %3338 = vmatprep.subr.mxu0 0.0
    %3339 = vmatpush1.xpose.msra.mxu0 0.0
    %3340 = vmatprep.subr.mxu0 0.0
    %3341 = vmatpush1.xpose.msra.mxu0 0.0
    %3342 = vmatprep.subr.mxu0 0.0
    %3343 = vmatpush1.xpose.msra.mxu0 0.0
    %3344 = vmatprep.subr.mxu0 0.0
    %3345 = vmatpush1.xpose.msra.mxu0 0.0
    %3346 = vmatprep.subr.mxu0 0.0
    %3347 = vmatpush1.xpose.msra.mxu0 0.0
    %3348 = vmatprep.subr.mxu0 0.0
    %3349 = vmatpush1.xpose.msra.mxu0 0.0
    %3350 = vmatprep.subr.mxu0 0.0
    %3351 = vmatpush1.xpose.msra.mxu0 0.0
    %3352 = vmatprep.subr.mxu0 0.0
    %3353 = vmatpush1.xpose.msra.mxu0 0.0
    %3354 = vmatprep.subr.mxu0 0.0
    %v3355 = vand.u32 %v3322, 4294901760
    %3356 = vmatpush1.xpose.msra.mxu0 %v3355
    %3357 = vmatprep.subr.mxu0 0.0
    %3358 = vmatpush2.xpose.msra.mxu0 0.0
    %3359 = vmatprep.subr.mxu0 0.0
    %3360 = vmatpush2.xpose.msra.mxu0 0.0
    %3361 = vmatprep.subr.mxu0 0.0
    %3362 = vmatpush2.xpose.msra.mxu0 0.0
    %3363 = vmatprep.subr.mxu0 0.0
    %3364 = vmatpush2.xpose.msra.mxu0 0.0
    %3365 = vmatprep.subr.mxu0 0.0
    %3366 = vmatpush2.xpose.msra.mxu0 0.0
    %3367 = vmatprep.subr.mxu0 0.0
    %3368 = vmatpush2.xpose.msra.mxu0 0.0
    %3369 = vmatprep.subr.mxu0 0.0
    %3370 = vmatpush2.xpose.msra.mxu0 0.0
    %3371 = vmatprep.subr.mxu0 0.0
    %3372 = vmatpush2.xpose.msra.mxu0 0.0
    %3373 = vmatprep.subr.mxu0 0.0
    %3374 = vmatpush2.xpose.msra.mxu0 0.0
    %3375 = vmatprep.subr.mxu0 0.0
    %3376 = vmatpush2.xpose.msra.mxu0 0.0
    %3377 = vmatprep.subr.mxu0 0.0
    %3378 = vmatpush2.xpose.msra.mxu0 0.0
    %3379 = vmatprep.subr.mxu0 0.0
    %3380 = vmatpush2.xpose.msra.mxu0 0.0
    %3381 = vmatprep.subr.mxu0 0.0
    %3382 = vmatpush2.xpose.msra.mxu0 0.0
    %3383 = vmatprep.subr.mxu0 0.0
    %3384 = vmatpush2.xpose.msra.mxu0 0.0
    %3385 = vmatprep.subr.mxu0 0.0
    %3386 = vmatpush2.xpose.msra.mxu0 0.0
    %3387 = vmatprep.subr.mxu0 0.0
    %3388 = vmatpush2.xpose.msra.mxu0 0.0
    %3389 = vmatprep.mubr.f32.mxu0 0.0
    %v3390 = vand.u32 %v3320, 4294901760
    %v3391 = vsub.f32 %v3320, %v3390
    %v3392 = vand.u32 %v3391, 4294901760
    %v3393 = vsub.f32 %v3391, %v3392
    %v3394 = vand.u32 %v3393, 4294901760
    %3395 = vmatmul.mubr.f32.gmra.mxu0 %v3394
    %v3396 = vpop.f32.mrf.mxu0
    %v3397 = vadd.f32 0.0, %v3396
    %v3398 = vpop.f32.mrf.mxu0
    %3399 = vdwg.mxu0
    %3400 = vmatprep.subr.mxu0 0.0
    %3401 = vmatpush1.xpose.msra.mxu0 0.0
    %3402 = vmatprep.subr.mxu0 0.0
    %3403 = vmatpush1.xpose.msra.mxu0 0.0
    %3404 = vmatprep.subr.mxu0 0.0
    %3405 = vmatpush1.xpose.msra.mxu0 0.0
    %3406 = vmatprep.subr.mxu0 0.0
    %3407 = vmatpush1.xpose.msra.mxu0 0.0
    %3408 = vmatprep.subr.mxu0 0.0
    %3409 = vmatpush1.xpose.msra.mxu0 0.0
    %3410 = vmatprep.subr.mxu0 0.0
    %3411 = vmatpush1.xpose.msra.mxu0 0.0
    %3412 = vmatprep.subr.mxu0 0.0
    %3413 = vmatpush1.xpose.msra.mxu0 0.0
    %3414 = vmatprep.subr.mxu0 0.0
    %3415 = vmatpush1.xpose.msra.mxu0 0.0
    %3416 = vmatprep.subr.mxu0 0.0
    %3417 = vmatpush1.xpose.msra.mxu0 0.0
    %3418 = vmatprep.subr.mxu0 0.0
    %3419 = vmatpush1.xpose.msra.mxu0 0.0
    %3420 = vmatprep.subr.mxu0 0.0
    %3421 = vmatpush1.xpose.msra.mxu0 0.0
    %3422 = vmatprep.subr.mxu0 0.0
    %3423 = vmatpush1.xpose.msra.mxu0 0.0
    %3424 = vmatprep.subr.mxu0 0.0
    %3425 = vmatpush1.xpose.msra.mxu0 0.0
    %3426 = vmatprep.subr.mxu0 0.0
    %3427 = vmatpush1.xpose.msra.mxu0 0.0
    %3428 = vmatprep.subr.mxu0 0.0
    %3429 = vmatpush1.xpose.msra.mxu0 0.0
    %3430 = vmatprep.subr.mxu0 0.0
    %v3431 = vand.u32 %v3322, 4294901760
    %v3432 = vsub.f32 %v3322, %v3431
    %v3433 = vand.u32 %v3432, 4294901760
    %v3434 = vsub.f32 %v3432, %v3433
    %v3435 = vand.u32 %v3434, 4294901760
    %3436 = vmatpush1.xpose.msra.mxu0 %v3435
    %3437 = vmatprep.subr.mxu0 0.0
    %3438 = vmatpush2.xpose.msra.mxu0 0.0
    %3439 = vmatprep.subr.mxu0 0.0
    %3440 = vmatpush2.xpose.msra.mxu0 0.0
    %3441 = vmatprep.subr.mxu0 0.0
    %3442 = vmatpush2.xpose.msra.mxu0 0.0
    %3443 = vmatprep.subr.mxu0 0.0
    %3444 = vmatpush2.xpose.msra.mxu0 0.0
    %3445 = vmatprep.subr.mxu0 0.0
    %3446 = vmatpush2.xpose.msra.mxu0 0.0
    %3447 = vmatprep.subr.mxu0 0.0
    %3448 = vmatpush2.xpose.msra.mxu0 0.0
    %3449 = vmatprep.subr.mxu0 0.0
    %3450 = vmatpush2.xpose.msra.mxu0 0.0
    %3451 = vmatprep.subr.mxu0 0.0
    %3452 = vmatpush2.xpose.msra.mxu0 0.0
    %3453 = vmatprep.subr.mxu0 0.0
    %3454 = vmatpush2.xpose.msra.mxu0 0.0
    %3455 = vmatprep.subr.mxu0 0.0
    %3456 = vmatpush2.xpose.msra.mxu0 0.0
    %3457 = vmatprep.subr.mxu0 0.0
    %3458 = vmatpush2.xpose.msra.mxu0 0.0
    %3459 = vmatprep.subr.mxu0 0.0
    %3460 = vmatpush2.xpose.msra.mxu0 0.0
    %3461 = vmatprep.subr.mxu0 0.0
    %3462 = vmatpush2.xpose.msra.mxu0 0.0
    %3463 = vmatprep.subr.mxu0 0.0
    %3464 = vmatpush2.xpose.msra.mxu0 0.0
    %3465 = vmatprep.subr.mxu0 0.0
    %3466 = vmatpush2.xpose.msra.mxu0 0.0
    %3467 = vmatprep.subr.mxu0 0.0
    %3468 = vmatpush2.xpose.msra.mxu0 0.0
    %3469 = vmatprep.mubr.f32.mxu0 0.0
    %v3470 = vand.u32 %v3320, 4294901760
    %3471 = vmatmul.mubr.f32.gmra.mxu0 %v3470
    %v3472 = vpop.f32.mrf.mxu0
    %v3473 = vadd.f32 %v3397, %v3472
    %v3474 = vpop.f32.mrf.mxu0
    %3475 = vdwg.mxu0
    %3476 = vmatprep.subr.mxu0 0.0
    %3477 = vmatpush1.xpose.msra.mxu0 0.0
    %3478 = vmatprep.subr.mxu0 0.0
    %3479 = vmatpush1.xpose.msra.mxu0 0.0
    %3480 = vmatprep.subr.mxu0 0.0
    %3481 = vmatpush1.xpose.msra.mxu0 0.0
    %3482 = vmatprep.subr.mxu0 0.0
    %3483 = vmatpush1.xpose.msra.mxu0 0.0
    %3484 = vmatprep.subr.mxu0 0.0
    %3485 = vmatpush1.xpose.msra.mxu0 0.0
    %3486 = vmatprep.subr.mxu0 0.0
    %3487 = vmatpush1.xpose.msra.mxu0 0.0
    %3488 = vmatprep.subr.mxu0 0.0
    %3489 = vmatpush1.xpose.msra.mxu0 0.0
    %3490 = vmatprep.subr.mxu0 0.0
    %3491 = vmatpush1.xpose.msra.mxu0 0.0
    %3492 = vmatprep.subr.mxu0 0.0
    %3493 = vmatpush1.xpose.msra.mxu0 0.0
    %3494 = vmatprep.subr.mxu0 0.0
    %3495 = vmatpush1.xpose.msra.mxu0 0.0
    %3496 = vmatprep.subr.mxu0 0.0
    %3497 = vmatpush1.xpose.msra.mxu0 0.0
    %3498 = vmatprep.subr.mxu0 0.0
    %3499 = vmatpush1.xpose.msra.mxu0 0.0
    %3500 = vmatprep.subr.mxu0 0.0
    %3501 = vmatpush1.xpose.msra.mxu0 0.0
    %3502 = vmatprep.subr.mxu0 0.0
    %3503 = vmatpush1.xpose.msra.mxu0 0.0
    %3504 = vmatprep.subr.mxu0 0.0
    %3505 = vmatpush1.xpose.msra.mxu0 0.0
    %3506 = vmatprep.subr.mxu0 0.0
    %v3507 = vand.u32 %v3322, 4294901760
    %v3508 = vsub.f32 %v3322, %v3507
    %3509 = vmatpush1.xpose.msra.mxu0 %v3508
    %3510 = vmatprep.subr.mxu0 0.0
    %3511 = vmatpush2.xpose.msra.mxu0 0.0
    %3512 = vmatprep.subr.mxu0 0.0
    %3513 = vmatpush2.xpose.msra.mxu0 0.0
    %3514 = vmatprep.subr.mxu0 0.0
    %3515 = vmatpush2.xpose.msra.mxu0 0.0
    %3516 = vmatprep.subr.mxu0 0.0
    %3517 = vmatpush2.xpose.msra.mxu0 0.0
    %3518 = vmatprep.subr.mxu0 0.0
    %3519 = vmatpush2.xpose.msra.mxu0 0.0
    %3520 = vmatprep.subr.mxu0 0.0
    %3521 = vmatpush2.xpose.msra.mxu0 0.0
    %3522 = vmatprep.subr.mxu0 0.0
    %3523 = vmatpush2.xpose.msra.mxu0 0.0
    %3524 = vmatprep.subr.mxu0 0.0
    %3525 = vmatpush2.xpose.msra.mxu0 0.0
    %3526 = vmatprep.subr.mxu0 0.0
    %3527 = vmatpush2.xpose.msra.mxu0 0.0
    %3528 = vmatprep.subr.mxu0 0.0
    %3529 = vmatpush2.xpose.msra.mxu0 0.0
    %3530 = vmatprep.subr.mxu0 0.0
    %3531 = vmatpush2.xpose.msra.mxu0 0.0
    %3532 = vmatprep.subr.mxu0 0.0
    %3533 = vmatpush2.xpose.msra.mxu0 0.0
    %3534 = vmatprep.subr.mxu0 0.0
    %3535 = vmatpush2.xpose.msra.mxu0 0.0
    %3536 = vmatprep.subr.mxu0 0.0
    %3537 = vmatpush2.xpose.msra.mxu0 0.0
    %3538 = vmatprep.subr.mxu0 0.0
    %3539 = vmatpush2.xpose.msra.mxu0 0.0
    %3540 = vmatprep.subr.mxu0 0.0
    %3541 = vmatpush2.xpose.msra.mxu0 0.0
    %3542 = vmatprep.mubr.f32.mxu0 0.0
    %v3543 = vand.u32 %v3320, 4294901760
    %v3544 = vsub.f32 %v3320, %v3543
    %3545 = vmatmul.mubr.f32.gmra.mxu0 %v3544
    %v3546 = vpop.f32.mrf.mxu0
    %v3547 = vadd.f32 %v3473, %v3546
    %v3548 = vpop.f32.mrf.mxu0
    %3549 = vdwg.mxu0
    %3550 = vmatprep.subr.mxu0 0.0
    %3551 = vmatpush1.xpose.msra.mxu0 0.0
    %3552 = vmatprep.subr.mxu0 0.0
    %3553 = vmatpush1.xpose.msra.mxu0 0.0
    %3554 = vmatprep.subr.mxu0 0.0
    %3555 = vmatpush1.xpose.msra.mxu0 0.0
    %3556 = vmatprep.subr.mxu0 0.0
    %3557 = vmatpush1.xpose.msra.mxu0 0.0
    %3558 = vmatprep.subr.mxu0 0.0
    %3559 = vmatpush1.xpose.msra.mxu0 0.0
    %3560 = vmatprep.subr.mxu0 0.0
    %3561 = vmatpush1.xpose.msra.mxu0 0.0
    %3562 = vmatprep.subr.mxu0 0.0
    %3563 = vmatpush1.xpose.msra.mxu0 0.0
    %3564 = vmatprep.subr.mxu0 0.0
    %3565 = vmatpush1.xpose.msra.mxu0 0.0
    %3566 = vmatprep.subr.mxu0 0.0
    %3567 = vmatpush1.xpose.msra.mxu0 0.0
    %3568 = vmatprep.subr.mxu0 0.0
    %3569 = vmatpush1.xpose.msra.mxu0 0.0
    %3570 = vmatprep.subr.mxu0 0.0
    %3571 = vmatpush1.xpose.msra.mxu0 0.0
    %3572 = vmatprep.subr.mxu0 0.0
    %3573 = vmatpush1.xpose.msra.mxu0 0.0
    %3574 = vmatprep.subr.mxu0 0.0
    %3575 = vmatpush1.xpose.msra.mxu0 0.0
    %3576 = vmatprep.subr.mxu0 0.0
    %3577 = vmatpush1.xpose.msra.mxu0 0.0
    %3578 = vmatprep.subr.mxu0 0.0
    %3579 = vmatpush1.xpose.msra.mxu0 0.0
    %3580 = vmatprep.subr.mxu0 0.0
    %v3581 = vand.u32 %v3322, 4294901760
    %3582 = vmatpush1.xpose.msra.mxu0 %v3581
    %3583 = vmatprep.subr.mxu0 0.0
    %3584 = vmatpush2.xpose.msra.mxu0 0.0
    %3585 = vmatprep.subr.mxu0 0.0
    %3586 = vmatpush2.xpose.msra.mxu0 0.0
    %3587 = vmatprep.subr.mxu0 0.0
    %3588 = vmatpush2.xpose.msra.mxu0 0.0
    %3589 = vmatprep.subr.mxu0 0.0
    %3590 = vmatpush2.xpose.msra.mxu0 0.0
    %3591 = vmatprep.subr.mxu0 0.0
    %3592 = vmatpush2.xpose.msra.mxu0 0.0
    %3593 = vmatprep.subr.mxu0 0.0
    %3594 = vmatpush2.xpose.msra.mxu0 0.0
    %3595 = vmatprep.subr.mxu0 0.0
    %3596 = vmatpush2.xpose.msra.mxu0 0.0
    %3597 = vmatprep.subr.mxu0 0.0
    %3598 = vmatpush2.xpose.msra.mxu0 0.0
    %3599 = vmatprep.subr.mxu0 0.0
    %3600 = vmatpush2.xpose.msra.mxu0 0.0
    %3601 = vmatprep.subr.mxu0 0.0
    %3602 = vmatpush2.xpose.msra.mxu0 0.0
    %3603 = vmatprep.subr.mxu0 0.0
    %3604 = vmatpush2.xpose.msra.mxu0 0.0
    %3605 = vmatprep.subr.mxu0 0.0
    %3606 = vmatpush2.xpose.msra.mxu0 0.0
    %3607 = vmatprep.subr.mxu0 0.0
    %3608 = vmatpush2.xpose.msra.mxu0 0.0
    %3609 = vmatprep.subr.mxu0 0.0
    %3610 = vmatpush2.xpose.msra.mxu0 0.0
    %3611 = vmatprep.subr.mxu0 0.0
    %3612 = vmatpush2.xpose.msra.mxu0 0.0
    %3613 = vmatprep.subr.mxu0 0.0
    %3614 = vmatpush2.xpose.msra.mxu0 0.0
    %3615 = vmatprep.mubr.f32.mxu0 0.0
    %v3616 = vand.u32 %v3320, 4294901760
    %v3617 = vsub.f32 %v3320, %v3616
    %v3618 = vand.u32 %v3617, 4294901760
    %3619 = vmatmul.mubr.f32.gmra.mxu0 %v3618
    %v3620 = vpop.f32.mrf.mxu0
    %v3621 = vadd.f32 %v3547, %v3620
    %v3622 = vpop.f32.mrf.mxu0
    %3623 = vdwg.mxu0
    %3624 = vmatprep.subr.mxu0 0.0
    %3625 = vmatpush1.xpose.msra.mxu0 0.0
    %3626 = vmatprep.subr.mxu0 0.0
    %3627 = vmatpush1.xpose.msra.mxu0 0.0
    %3628 = vmatprep.subr.mxu0 0.0
    %3629 = vmatpush1.xpose.msra.mxu0 0.0
    %3630 = vmatprep.subr.mxu0 0.0
    %3631 = vmatpush1.xpose.msra.mxu0 0.0
    %3632 = vmatprep.subr.mxu0 0.0
    %3633 = vmatpush1.xpose.msra.mxu0 0.0
    %3634 = vmatprep.subr.mxu0 0.0
    %3635 = vmatpush1.xpose.msra.mxu0 0.0
    %3636 = vmatprep.subr.mxu0 0.0
    %3637 = vmatpush1.xpose.msra.mxu0 0.0
    %3638 = vmatprep.subr.mxu0 0.0
    %3639 = vmatpush1.xpose.msra.mxu0 0.0
    %3640 = vmatprep.subr.mxu0 0.0
    %3641 = vmatpush1.xpose.msra.mxu0 0.0
    %3642 = vmatprep.subr.mxu0 0.0
    %3643 = vmatpush1.xpose.msra.mxu0 0.0
    %3644 = vmatprep.subr.mxu0 0.0
    %3645 = vmatpush1.xpose.msra.mxu0 0.0
    %3646 = vmatprep.subr.mxu0 0.0
    %3647 = vmatpush1.xpose.msra.mxu0 0.0
    %3648 = vmatprep.subr.mxu0 0.0
    %3649 = vmatpush1.xpose.msra.mxu0 0.0
    %3650 = vmatprep.subr.mxu0 0.0
    %3651 = vmatpush1.xpose.msra.mxu0 0.0
    %3652 = vmatprep.subr.mxu0 0.0
    %3653 = vmatpush1.xpose.msra.mxu0 0.0
    %3654 = vmatprep.subr.mxu0 0.0
    %v3655 = vand.u32 %v3322, 4294901760
    %v3656 = vsub.f32 %v3322, %v3655
    %v3657 = vand.u32 %v3656, 4294901760
    %3658 = vmatpush1.xpose.msra.mxu0 %v3657
    %3659 = vmatprep.subr.mxu0 0.0
    %3660 = vmatpush2.xpose.msra.mxu0 0.0
    %3661 = vmatprep.subr.mxu0 0.0
    %3662 = vmatpush2.xpose.msra.mxu0 0.0
    %3663 = vmatprep.subr.mxu0 0.0
    %3664 = vmatpush2.xpose.msra.mxu0 0.0
    %3665 = vmatprep.subr.mxu0 0.0
    %3666 = vmatpush2.xpose.msra.mxu0 0.0
    %3667 = vmatprep.subr.mxu0 0.0
    %3668 = vmatpush2.xpose.msra.mxu0 0.0
    %3669 = vmatprep.subr.mxu0 0.0
    %3670 = vmatpush2.xpose.msra.mxu0 0.0
    %3671 = vmatprep.subr.mxu0 0.0
    %3672 = vmatpush2.xpose.msra.mxu0 0.0
    %3673 = vmatprep.subr.mxu0 0.0
    %3674 = vmatpush2.xpose.msra.mxu0 0.0
    %3675 = vmatprep.subr.mxu0 0.0
    %3676 = vmatpush2.xpose.msra.mxu0 0.0
    %3677 = vmatprep.subr.mxu0 0.0
    %3678 = vmatpush2.xpose.msra.mxu0 0.0
    %3679 = vmatprep.subr.mxu0 0.0
    %3680 = vmatpush2.xpose.msra.mxu0 0.0
    %3681 = vmatprep.subr.mxu0 0.0
    %3682 = vmatpush2.xpose.msra.mxu0 0.0
    %3683 = vmatprep.subr.mxu0 0.0
    %3684 = vmatpush2.xpose.msra.mxu0 0.0
    %3685 = vmatprep.subr.mxu0 0.0
    %3686 = vmatpush2.xpose.msra.mxu0 0.0
    %3687 = vmatprep.subr.mxu0 0.0
    %3688 = vmatpush2.xpose.msra.mxu0 0.0
    %3689 = vmatprep.subr.mxu0 0.0
    %3690 = vmatpush2.xpose.msra.mxu0 0.0
    %3691 = vmatprep.mubr.f32.mxu0 0.0
    %v3692 = vand.u32 %v3320, 4294901760
    %3693 = vmatmul.mubr.f32.gmra.mxu0 %v3692
    %v3694 = vpop.f32.mrf.mxu0
    %v3695 = vadd.f32 %v3621, %v3694
    %v3696 = vpop.f32.mrf.mxu0
    %3697 = vdwg.mxu0
    %3698 = vmatprep.subr.mxu0 0.0
    %3699 = vmatpush1.xpose.msra.mxu0 0.0
    %3700 = vmatprep.subr.mxu0 0.0
    %3701 = vmatpush1.xpose.msra.mxu0 0.0
    %3702 = vmatprep.subr.mxu0 0.0
    %3703 = vmatpush1.xpose.msra.mxu0 0.0
    %3704 = vmatprep.subr.mxu0 0.0
    %3705 = vmatpush1.xpose.msra.mxu0 0.0
    %3706 = vmatprep.subr.mxu0 0.0
    %3707 = vmatpush1.xpose.msra.mxu0 0.0
    %3708 = vmatprep.subr.mxu0 0.0
    %3709 = vmatpush1.xpose.msra.mxu0 0.0
    %3710 = vmatprep.subr.mxu0 0.0
    %3711 = vmatpush1.xpose.msra.mxu0 0.0
    %3712 = vmatprep.subr.mxu0 0.0
    %3713 = vmatpush1.xpose.msra.mxu0 0.0
    %3714 = vmatprep.subr.mxu0 0.0
    %3715 = vmatpush1.xpose.msra.mxu0 0.0
    %3716 = vmatprep.subr.mxu0 0.0
    %3717 = vmatpush1.xpose.msra.mxu0 0.0
    %3718 = vmatprep.subr.mxu0 0.0
    %3719 = vmatpush1.xpose.msra.mxu0 0.0
    %3720 = vmatprep.subr.mxu0 0.0
    %3721 = vmatpush1.xpose.msra.mxu0 0.0
    %3722 = vmatprep.subr.mxu0 0.0
    %3723 = vmatpush1.xpose.msra.mxu0 0.0
    %3724 = vmatprep.subr.mxu0 0.0
    %3725 = vmatpush1.xpose.msra.mxu0 0.0
    %3726 = vmatprep.subr.mxu0 0.0
    %3727 = vmatpush1.xpose.msra.mxu0 0.0
    %3728 = vmatprep.subr.mxu0 0.0
    %v3729 = vand.u32 %v3322, 4294901760
    %3730 = vmatpush1.xpose.msra.mxu0 %v3729
    %3731 = vmatprep.subr.mxu0 0.0
    %3732 = vmatpush2.xpose.msra.mxu0 0.0
    %3733 = vmatprep.subr.mxu0 0.0
    %3734 = vmatpush2.xpose.msra.mxu0 0.0
    %3735 = vmatprep.subr.mxu0 0.0
    %3736 = vmatpush2.xpose.msra.mxu0 0.0
    %3737 = vmatprep.subr.mxu0 0.0
    %3738 = vmatpush2.xpose.msra.mxu0 0.0
    %3739 = vmatprep.subr.mxu0 0.0
    %3740 = vmatpush2.xpose.msra.mxu0 0.0
    %3741 = vmatprep.subr.mxu0 0.0
    %3742 = vmatpush2.xpose.msra.mxu0 0.0
    %3743 = vmatprep.subr.mxu0 0.0
    %3744 = vmatpush2.xpose.msra.mxu0 0.0
    %3745 = vmatprep.subr.mxu0 0.0
    %3746 = vmatpush2.xpose.msra.mxu0 0.0
    %3747 = vmatprep.subr.mxu0 0.0
    %3748 = vmatpush2.xpose.msra.mxu0 0.0
    %3749 = vmatprep.subr.mxu0 0.0
    %3750 = vmatpush2.xpose.msra.mxu0 0.0
    %3751 = vmatprep.subr.mxu0 0.0
    %3752 = vmatpush2.xpose.msra.mxu0 0.0
    %3753 = vmatprep.subr.mxu0 0.0
    %3754 = vmatpush2.xpose.msra.mxu0 0.0
    %3755 = vmatprep.subr.mxu0 0.0
    %3756 = vmatpush2.xpose.msra.mxu0 0.0
    %3757 = vmatprep.subr.mxu0 0.0
    %3758 = vmatpush2.xpose.msra.mxu0 0.0
    %3759 = vmatprep.subr.mxu0 0.0
    %3760 = vmatpush2.xpose.msra.mxu0 0.0
    %3761 = vmatprep.subr.mxu0 0.0
    %3762 = vmatpush2.xpose.msra.mxu0 0.0
    %3763 = vmatprep.mubr.f32.mxu0 0.0
    %v3764 = vand.u32 %v3320, 4294901760
    %3765 = vmatmul.mubr.f32.gmra.mxu0 %v3764
    %v3766 = vpop.f32.mrf.mxu0
    %v3767 = vadd.f32 %v3695, %v3766
    %v3768 = vpop.f32.mrf.mxu0
    %3769 = vdwg.mxu0
    %3770 = vrot.lane.b32.xlu0 %v604, 96
    %v3771 = vpop.permute.xlu0 %3770
    %v3772 = vsel %vm607, %v604, 0
    %v3774 = vsel %vm607, %v3771, 0
    %3776 = vmatprep.subr.mxu0 0.0
    %3777 = vmatpush1.xpose.msra.mxu0 0.0
    %3778 = vmatprep.subr.mxu0 0.0
    %3779 = vmatpush1.xpose.msra.mxu0 0.0
    %3780 = vmatprep.subr.mxu0 0.0
    %3781 = vmatpush1.xpose.msra.mxu0 0.0
    %3782 = vmatprep.subr.mxu0 0.0
    %3783 = vmatpush1.xpose.msra.mxu0 0.0
    %3784 = vmatprep.subr.mxu0 0.0
    %3785 = vmatpush1.xpose.msra.mxu0 0.0
    %3786 = vmatprep.subr.mxu0 0.0
    %3787 = vmatpush1.xpose.msra.mxu0 0.0
    %3788 = vmatprep.subr.mxu0 0.0
    %3789 = vmatpush1.xpose.msra.mxu0 0.0
    %3790 = vmatprep.subr.mxu0 0.0
    %3791 = vmatpush1.xpose.msra.mxu0 0.0
    %3792 = vmatprep.subr.mxu0 0.0
    %3793 = vmatpush1.xpose.msra.mxu0 0.0
    %3794 = vmatprep.subr.mxu0 0.0
    %3795 = vmatpush1.xpose.msra.mxu0 0.0
    %3796 = vmatprep.subr.mxu0 0.0
    %3797 = vmatpush1.xpose.msra.mxu0 0.0
    %3798 = vmatprep.subr.mxu0 0.0
    %3799 = vmatpush1.xpose.msra.mxu0 0.0
    %3800 = vmatprep.subr.mxu0 0.0
    %3801 = vmatpush1.xpose.msra.mxu0 0.0
    %3802 = vmatprep.subr.mxu0 0.0
    %3803 = vmatpush1.xpose.msra.mxu0 0.0
    %3804 = vmatprep.subr.mxu0 0.0
    %3805 = vmatpush1.xpose.msra.mxu0 0.0
    %3806 = vmatprep.subr.mxu0 0.0
    %v3807 = vand.u32 %v3774, 4294901760
    %3808 = vmatpush1.xpose.msra.mxu0 %v3807
    %3809 = vmatprep.subr.mxu0 0.0
    %3810 = vmatpush2.xpose.msra.mxu0 0.0
    %3811 = vmatprep.subr.mxu0 0.0
    %3812 = vmatpush2.xpose.msra.mxu0 0.0
    %3813 = vmatprep.subr.mxu0 0.0
    %3814 = vmatpush2.xpose.msra.mxu0 0.0
    %3815 = vmatprep.subr.mxu0 0.0
    %3816 = vmatpush2.xpose.msra.mxu0 0.0
    %3817 = vmatprep.subr.mxu0 0.0
    %3818 = vmatpush2.xpose.msra.mxu0 0.0
    %3819 = vmatprep.subr.mxu0 0.0
    %3820 = vmatpush2.xpose.msra.mxu0 0.0
    %3821 = vmatprep.subr.mxu0 0.0
    %3822 = vmatpush2.xpose.msra.mxu0 0.0
    %3823 = vmatprep.subr.mxu0 0.0
    %3824 = vmatpush2.xpose.msra.mxu0 0.0
    %3825 = vmatprep.subr.mxu0 0.0
    %3826 = vmatpush2.xpose.msra.mxu0 0.0
    %3827 = vmatprep.subr.mxu0 0.0
    %3828 = vmatpush2.xpose.msra.mxu0 0.0
    %3829 = vmatprep.subr.mxu0 0.0
    %3830 = vmatpush2.xpose.msra.mxu0 0.0
    %3831 = vmatprep.subr.mxu0 0.0
    %3832 = vmatpush2.xpose.msra.mxu0 0.0
    %3833 = vmatprep.subr.mxu0 0.0
    %3834 = vmatpush2.xpose.msra.mxu0 0.0
    %3835 = vmatprep.subr.mxu0 0.0
    %3836 = vmatpush2.xpose.msra.mxu0 0.0
    %3837 = vmatprep.subr.mxu0 0.0
    %3838 = vmatpush2.xpose.msra.mxu0 0.0
    %3839 = vmatprep.subr.mxu0 0.0
    %3840 = vmatpush2.xpose.msra.mxu0 0.0
    %3841 = vmatprep.mubr.f32.mxu0 0.0
    %v3842 = vand.u32 %v3772, 4294901760
    %v3843 = vsub.f32 %v3772, %v3842
    %v3844 = vand.u32 %v3843, 4294901760
    %v3845 = vsub.f32 %v3843, %v3844
    %v3846 = vand.u32 %v3845, 4294901760
    %3847 = vmatmul.mubr.f32.gmra.mxu0 %v3846
    %v3848 = vpop.f32.mrf.mxu0
    %v3849 = vadd.f32 0.0, %v3848
    %v3850 = vpop.f32.mrf.mxu0
    %3851 = vdwg.mxu0
    %3852 = vmatprep.subr.mxu0 0.0
    %3853 = vmatpush1.xpose.msra.mxu0 0.0
    %3854 = vmatprep.subr.mxu0 0.0
    %3855 = vmatpush1.xpose.msra.mxu0 0.0
    %3856 = vmatprep.subr.mxu0 0.0
    %3857 = vmatpush1.xpose.msra.mxu0 0.0
    %3858 = vmatprep.subr.mxu0 0.0
    %3859 = vmatpush1.xpose.msra.mxu0 0.0
    %3860 = vmatprep.subr.mxu0 0.0
    %3861 = vmatpush1.xpose.msra.mxu0 0.0
    %3862 = vmatprep.subr.mxu0 0.0
    %3863 = vmatpush1.xpose.msra.mxu0 0.0
    %3864 = vmatprep.subr.mxu0 0.0
    %3865 = vmatpush1.xpose.msra.mxu0 0.0
    %3866 = vmatprep.subr.mxu0 0.0
    %3867 = vmatpush1.xpose.msra.mxu0 0.0
    %3868 = vmatprep.subr.mxu0 0.0
    %3869 = vmatpush1.xpose.msra.mxu0 0.0
    %3870 = vmatprep.subr.mxu0 0.0
    %3871 = vmatpush1.xpose.msra.mxu0 0.0
    %3872 = vmatprep.subr.mxu0 0.0
    %3873 = vmatpush1.xpose.msra.mxu0 0.0
    %3874 = vmatprep.subr.mxu0 0.0
    %3875 = vmatpush1.xpose.msra.mxu0 0.0
    %3876 = vmatprep.subr.mxu0 0.0
    %3877 = vmatpush1.xpose.msra.mxu0 0.0
    %3878 = vmatprep.subr.mxu0 0.0
    %3879 = vmatpush1.xpose.msra.mxu0 0.0
    %3880 = vmatprep.subr.mxu0 0.0
    %3881 = vmatpush1.xpose.msra.mxu0 0.0
    %3882 = vmatprep.subr.mxu0 0.0
    %v3883 = vand.u32 %v3774, 4294901760
    %v3884 = vsub.f32 %v3774, %v3883
    %v3885 = vand.u32 %v3884, 4294901760
    %v3886 = vsub.f32 %v3884, %v3885
    %v3887 = vand.u32 %v3886, 4294901760
    %3888 = vmatpush1.xpose.msra.mxu0 %v3887
    %3889 = vmatprep.subr.mxu0 0.0
    %3890 = vmatpush2.xpose.msra.mxu0 0.0
    %3891 = vmatprep.subr.mxu0 0.0
    %3892 = vmatpush2.xpose.msra.mxu0 0.0
    %3893 = vmatprep.subr.mxu0 0.0
    %3894 = vmatpush2.xpose.msra.mxu0 0.0
    %3895 = vmatprep.subr.mxu0 0.0
    %3896 = vmatpush2.xpose.msra.mxu0 0.0
    %3897 = vmatprep.subr.mxu0 0.0
    %3898 = vmatpush2.xpose.msra.mxu0 0.0
    %3899 = vmatprep.subr.mxu0 0.0
    %3900 = vmatpush2.xpose.msra.mxu0 0.0
    %3901 = vmatprep.subr.mxu0 0.0
    %3902 = vmatpush2.xpose.msra.mxu0 0.0
    %3903 = vmatprep.subr.mxu0 0.0
    %3904 = vmatpush2.xpose.msra.mxu0 0.0
    %3905 = vmatprep.subr.mxu0 0.0
    %3906 = vmatpush2.xpose.msra.mxu0 0.0
    %3907 = vmatprep.subr.mxu0 0.0
    %3908 = vmatpush2.xpose.msra.mxu0 0.0
    %3909 = vmatprep.subr.mxu0 0.0
    %3910 = vmatpush2.xpose.msra.mxu0 0.0
    %3911 = vmatprep.subr.mxu0 0.0
    %3912 = vmatpush2.xpose.msra.mxu0 0.0
    %3913 = vmatprep.subr.mxu0 0.0
    %3914 = vmatpush2.xpose.msra.mxu0 0.0
    %3915 = vmatprep.subr.mxu0 0.0
    %3916 = vmatpush2.xpose.msra.mxu0 0.0
    %3917 = vmatprep.subr.mxu0 0.0
    %3918 = vmatpush2.xpose.msra.mxu0 0.0
    %3919 = vmatprep.subr.mxu0 0.0
    %3920 = vmatpush2.xpose.msra.mxu0 0.0
    %3921 = vmatprep.mubr.f32.mxu0 0.0
    %v3922 = vand.u32 %v3772, 4294901760
    %3923 = vmatmul.mubr.f32.gmra.mxu0 %v3922
    %v3924 = vpop.f32.mrf.mxu0
    %v3925 = vadd.f32 %v3849, %v3924
    %v3926 = vpop.f32.mrf.mxu0
    %3927 = vdwg.mxu0
    %3928 = vmatprep.subr.mxu0 0.0
    %3929 = vmatpush1.xpose.msra.mxu0 0.0
    %3930 = vmatprep.subr.mxu0 0.0
    %3931 = vmatpush1.xpose.msra.mxu0 0.0
    %3932 = vmatprep.subr.mxu0 0.0
    %3933 = vmatpush1.xpose.msra.mxu0 0.0
    %3934 = vmatprep.subr.mxu0 0.0
    %3935 = vmatpush1.xpose.msra.mxu0 0.0
    %3936 = vmatprep.subr.mxu0 0.0
    %3937 = vmatpush1.xpose.msra.mxu0 0.0
    %3938 = vmatprep.subr.mxu0 0.0
    %3939 = vmatpush1.xpose.msra.mxu0 0.0
    %3940 = vmatprep.subr.mxu0 0.0
    %3941 = vmatpush1.xpose.msra.mxu0 0.0
    %3942 = vmatprep.subr.mxu0 0.0
    %3943 = vmatpush1.xpose.msra.mxu0 0.0
    %3944 = vmatprep.subr.mxu0 0.0
    %3945 = vmatpush1.xpose.msra.mxu0 0.0
    %3946 = vmatprep.subr.mxu0 0.0
    %3947 = vmatpush1.xpose.msra.mxu0 0.0
    %3948 = vmatprep.subr.mxu0 0.0
    %3949 = vmatpush1.xpose.msra.mxu0 0.0
    %3950 = vmatprep.subr.mxu0 0.0
    %3951 = vmatpush1.xpose.msra.mxu0 0.0
    %3952 = vmatprep.subr.mxu0 0.0
    %3953 = vmatpush1.xpose.msra.mxu0 0.0
    %3954 = vmatprep.subr.mxu0 0.0
    %3955 = vmatpush1.xpose.msra.mxu0 0.0
    %3956 = vmatprep.subr.mxu0 0.0
    %3957 = vmatpush1.xpose.msra.mxu0 0.0
    %3958 = vmatprep.subr.mxu0 0.0
    %v3959 = vand.u32 %v3774, 4294901760
    %v3960 = vsub.f32 %v3774, %v3959
    %3961 = vmatpush1.xpose.msra.mxu0 %v3960
    %3962 = vmatprep.subr.mxu0 0.0
    %3963 = vmatpush2.xpose.msra.mxu0 0.0
    %3964 = vmatprep.subr.mxu0 0.0
    %3965 = vmatpush2.xpose.msra.mxu0 0.0
    %3966 = vmatprep.subr.mxu0 0.0
    %3967 = vmatpush2.xpose.msra.mxu0 0.0
    %3968 = vmatprep.subr.mxu0 0.0
    %3969 = vmatpush2.xpose.msra.mxu0 0.0
    %3970 = vmatprep.subr.mxu0 0.0
    %3971 = vmatpush2.xpose.msra.mxu0 0.0
    %3972 = vmatprep.subr.mxu0 0.0
    %3973 = vmatpush2.xpose.msra.mxu0 0.0
    %3974 = vmatprep.subr.mxu0 0.0
    %3975 = vmatpush2.xpose.msra.mxu0 0.0
    %3976 = vmatprep.subr.mxu0 0.0
    %3977 = vmatpush2.xpose.msra.mxu0 0.0
    %3978 = vmatprep.subr.mxu0 0.0
    %3979 = vmatpush2.xpose.msra.mxu0 0.0
    %3980 = vmatprep.subr.mxu0 0.0
    %3981 = vmatpush2.xpose.msra.mxu0 0.0
    %3982 = vmatprep.subr.mxu0 0.0
    %3983 = vmatpush2.xpose.msra.mxu0 0.0
    %3984 = vmatprep.subr.mxu0 0.0
    %3985 = vmatpush2.xpose.msra.mxu0 0.0
    %3986 = vmatprep.subr.mxu0 0.0
    %3987 = vmatpush2.xpose.msra.mxu0 0.0
    %3988 = vmatprep.subr.mxu0 0.0
    %3989 = vmatpush2.xpose.msra.mxu0 0.0
    %3990 = vmatprep.subr.mxu0 0.0
    %3991 = vmatpush2.xpose.msra.mxu0 0.0
    %3992 = vmatprep.subr.mxu0 0.0
    %3993 = vmatpush2.xpose.msra.mxu0 0.0
    %3994 = vmatprep.mubr.f32.mxu0 0.0
    %v3995 = vand.u32 %v3772, 4294901760
    %v3996 = vsub.f32 %v3772, %v3995
    %3997 = vmatmul.mubr.f32.gmra.mxu0 %v3996
    %v3998 = vpop.f32.mrf.mxu0
    %v3999 = vadd.f32 %v3925, %v3998
    %v4000 = vpop.f32.mrf.mxu0
    %4001 = vdwg.mxu0
    %4002 = vmatprep.subr.mxu0 0.0
    %4003 = vmatpush1.xpose.msra.mxu0 0.0
    %4004 = vmatprep.subr.mxu0 0.0
    %4005 = vmatpush1.xpose.msra.mxu0 0.0
    %4006 = vmatprep.subr.mxu0 0.0
    %4007 = vmatpush1.xpose.msra.mxu0 0.0
    %4008 = vmatprep.subr.mxu0 0.0
    %4009 = vmatpush1.xpose.msra.mxu0 0.0
    %4010 = vmatprep.subr.mxu0 0.0
    %4011 = vmatpush1.xpose.msra.mxu0 0.0
    %4012 = vmatprep.subr.mxu0 0.0
    %4013 = vmatpush1.xpose.msra.mxu0 0.0
    %4014 = vmatprep.subr.mxu0 0.0
    %4015 = vmatpush1.xpose.msra.mxu0 0.0
    %4016 = vmatprep.subr.mxu0 0.0
    %4017 = vmatpush1.xpose.msra.mxu0 0.0
    %4018 = vmatprep.subr.mxu0 0.0
    %4019 = vmatpush1.xpose.msra.mxu0 0.0
    %4020 = vmatprep.subr.mxu0 0.0
    %4021 = vmatpush1.xpose.msra.mxu0 0.0
    %4022 = vmatprep.subr.mxu0 0.0
    %4023 = vmatpush1.xpose.msra.mxu0 0.0
    %4024 = vmatprep.subr.mxu0 0.0
    %4025 = vmatpush1.xpose.msra.mxu0 0.0
    %4026 = vmatprep.subr.mxu0 0.0
    %4027 = vmatpush1.xpose.msra.mxu0 0.0
    %4028 = vmatprep.subr.mxu0 0.0
    %4029 = vmatpush1.xpose.msra.mxu0 0.0
    %4030 = vmatprep.subr.mxu0 0.0
    %4031 = vmatpush1.xpose.msra.mxu0 0.0
    %4032 = vmatprep.subr.mxu0 0.0
    %v4033 = vand.u32 %v3774, 4294901760
    %4034 = vmatpush1.xpose.msra.mxu0 %v4033
    %4035 = vmatprep.subr.mxu0 0.0
    %4036 = vmatpush2.xpose.msra.mxu0 0.0
    %4037 = vmatprep.subr.mxu0 0.0
    %4038 = vmatpush2.xpose.msra.mxu0 0.0
    %4039 = vmatprep.subr.mxu0 0.0
    %4040 = vmatpush2.xpose.msra.mxu0 0.0
    %4041 = vmatprep.subr.mxu0 0.0
    %4042 = vmatpush2.xpose.msra.mxu0 0.0
    %4043 = vmatprep.subr.mxu0 0.0
    %4044 = vmatpush2.xpose.msra.mxu0 0.0
    %4045 = vmatprep.subr.mxu0 0.0
    %4046 = vmatpush2.xpose.msra.mxu0 0.0
    %4047 = vmatprep.subr.mxu0 0.0
    %4048 = vmatpush2.xpose.msra.mxu0 0.0
    %4049 = vmatprep.subr.mxu0 0.0
    %4050 = vmatpush2.xpose.msra.mxu0 0.0
    %4051 = vmatprep.subr.mxu0 0.0
    %4052 = vmatpush2.xpose.msra.mxu0 0.0
    %4053 = vmatprep.subr.mxu0 0.0
    %4054 = vmatpush2.xpose.msra.mxu0 0.0
    %4055 = vmatprep.subr.mxu0 0.0
    %4056 = vmatpush2.xpose.msra.mxu0 0.0
    %4057 = vmatprep.subr.mxu0 0.0
    %4058 = vmatpush2.xpose.msra.mxu0 0.0
    %4059 = vmatprep.subr.mxu0 0.0
    %4060 = vmatpush2.xpose.msra.mxu0 0.0
    %4061 = vmatprep.subr.mxu0 0.0
    %4062 = vmatpush2.xpose.msra.mxu0 0.0
    %4063 = vmatprep.subr.mxu0 0.0
    %4064 = vmatpush2.xpose.msra.mxu0 0.0
    %4065 = vmatprep.subr.mxu0 0.0
    %4066 = vmatpush2.xpose.msra.mxu0 0.0
    %4067 = vmatprep.mubr.f32.mxu0 0.0
    %v4068 = vand.u32 %v3772, 4294901760
    %v4069 = vsub.f32 %v3772, %v4068
    %v4070 = vand.u32 %v4069, 4294901760
    %4071 = vmatmul.mubr.f32.gmra.mxu0 %v4070
    %v4072 = vpop.f32.mrf.mxu0
    %v4073 = vadd.f32 %v3999, %v4072
    %v4074 = vpop.f32.mrf.mxu0
    %4075 = vdwg.mxu0
    %4076 = vmatprep.subr.mxu0 0.0
    %4077 = vmatpush1.xpose.msra.mxu0 0.0
    %4078 = vmatprep.subr.mxu0 0.0
    %4079 = vmatpush1.xpose.msra.mxu0 0.0
    %4080 = vmatprep.subr.mxu0 0.0
    %4081 = vmatpush1.xpose.msra.mxu0 0.0
    %4082 = vmatprep.subr.mxu0 0.0
    %4083 = vmatpush1.xpose.msra.mxu0 0.0
    %4084 = vmatprep.subr.mxu0 0.0
    %4085 = vmatpush1.xpose.msra.mxu0 0.0
    %4086 = vmatprep.subr.mxu0 0.0
    %4087 = vmatpush1.xpose.msra.mxu0 0.0
    %4088 = vmatprep.subr.mxu0 0.0
    %4089 = vmatpush1.xpose.msra.mxu0 0.0
    %4090 = vmatprep.subr.mxu0 0.0
    %4091 = vmatpush1.xpose.msra.mxu0 0.0
    %4092 = vmatprep.subr.mxu0 0.0
    %4093 = vmatpush1.xpose.msra.mxu0 0.0
    %4094 = vmatprep.subr.mxu0 0.0
    %4095 = vmatpush1.xpose.msra.mxu0 0.0
    %4096 = vmatprep.subr.mxu0 0.0
    %4097 = vmatpush1.xpose.msra.mxu0 0.0
    %4098 = vmatprep.subr.mxu0 0.0
    %4099 = vmatpush1.xpose.msra.mxu0 0.0
    %4100 = vmatprep.subr.mxu0 0.0
    %4101 = vmatpush1.xpose.msra.mxu0 0.0
    %4102 = vmatprep.subr.mxu0 0.0
    %4103 = vmatpush1.xpose.msra.mxu0 0.0
    %4104 = vmatprep.subr.mxu0 0.0
    %4105 = vmatpush1.xpose.msra.mxu0 0.0
    %4106 = vmatprep.subr.mxu0 0.0
    %v4107 = vand.u32 %v3774, 4294901760
    %v4108 = vsub.f32 %v3774, %v4107
    %v4109 = vand.u32 %v4108, 4294901760
    %4110 = vmatpush1.xpose.msra.mxu0 %v4109
    %4111 = vmatprep.subr.mxu0 0.0
    %4112 = vmatpush2.xpose.msra.mxu0 0.0
    %4113 = vmatprep.subr.mxu0 0.0
    %4114 = vmatpush2.xpose.msra.mxu0 0.0
    %4115 = vmatprep.subr.mxu0 0.0
    %4116 = vmatpush2.xpose.msra.mxu0 0.0
    %4117 = vmatprep.subr.mxu0 0.0
    %4118 = vmatpush2.xpose.msra.mxu0 0.0
    %4119 = vmatprep.subr.mxu0 0.0
    %4120 = vmatpush2.xpose.msra.mxu0 0.0
    %4121 = vmatprep.subr.mxu0 0.0
    %4122 = vmatpush2.xpose.msra.mxu0 0.0
    %4123 = vmatprep.subr.mxu0 0.0
    %4124 = vmatpush2.xpose.msra.mxu0 0.0
    %4125 = vmatprep.subr.mxu0 0.0
    %4126 = vmatpush2.xpose.msra.mxu0 0.0
    %4127 = vmatprep.subr.mxu0 0.0
    %4128 = vmatpush2.xpose.msra.mxu0 0.0
    %4129 = vmatprep.subr.mxu0 0.0
    %4130 = vmatpush2.xpose.msra.mxu0 0.0
    %4131 = vmatprep.subr.mxu0 0.0
    %4132 = vmatpush2.xpose.msra.mxu0 0.0
    %4133 = vmatprep.subr.mxu0 0.0
    %4134 = vmatpush2.xpose.msra.mxu0 0.0
    %4135 = vmatprep.subr.mxu0 0.0
    %4136 = vmatpush2.xpose.msra.mxu0 0.0
    %4137 = vmatprep.subr.mxu0 0.0
    %4138 = vmatpush2.xpose.msra.mxu0 0.0
    %4139 = vmatprep.subr.mxu0 0.0
    %4140 = vmatpush2.xpose.msra.mxu0 0.0
    %4141 = vmatprep.subr.mxu0 0.0
    %4142 = vmatpush2.xpose.msra.mxu0 0.0
    %4143 = vmatprep.mubr.f32.mxu0 0.0
    %v4144 = vand.u32 %v3772, 4294901760
    %4145 = vmatmul.mubr.f32.gmra.mxu0 %v4144
    %v4146 = vpop.f32.mrf.mxu0
    %v4147 = vadd.f32 %v4073, %v4146
    %v4148 = vpop.f32.mrf.mxu0
    %4149 = vdwg.mxu0
    %4150 = vmatprep.subr.mxu0 0.0
    %4151 = vmatpush1.xpose.msra.mxu0 0.0
    %4152 = vmatprep.subr.mxu0 0.0
    %4153 = vmatpush1.xpose.msra.mxu0 0.0
    %4154 = vmatprep.subr.mxu0 0.0
    %4155 = vmatpush1.xpose.msra.mxu0 0.0
    %4156 = vmatprep.subr.mxu0 0.0
    %4157 = vmatpush1.xpose.msra.mxu0 0.0
    %4158 = vmatprep.subr.mxu0 0.0
    %4159 = vmatpush1.xpose.msra.mxu0 0.0
    %4160 = vmatprep.subr.mxu0 0.0
    %4161 = vmatpush1.xpose.msra.mxu0 0.0
    %4162 = vmatprep.subr.mxu0 0.0
    %4163 = vmatpush1.xpose.msra.mxu0 0.0
    %4164 = vmatprep.subr.mxu0 0.0
    %4165 = vmatpush1.xpose.msra.mxu0 0.0
    %4166 = vmatprep.subr.mxu0 0.0
    %4167 = vmatpush1.xpose.msra.mxu0 0.0
    %4168 = vmatprep.subr.mxu0 0.0
    %4169 = vmatpush1.xpose.msra.mxu0 0.0
    %4170 = vmatprep.subr.mxu0 0.0
    %4171 = vmatpush1.xpose.msra.mxu0 0.0
    %4172 = vmatprep.subr.mxu0 0.0
    %4173 = vmatpush1.xpose.msra.mxu0 0.0
    %4174 = vmatprep.subr.mxu0 0.0
    %4175 = vmatpush1.xpose.msra.mxu0 0.0
    %4176 = vmatprep.subr.mxu0 0.0
    %4177 = vmatpush1.xpose.msra.mxu0 0.0
    %4178 = vmatprep.subr.mxu0 0.0
    %4179 = vmatpush1.xpose.msra.mxu0 0.0
    %4180 = vmatprep.subr.mxu0 0.0
    %v4181 = vand.u32 %v3774, 4294901760
    %4182 = vmatpush1.xpose.msra.mxu0 %v4181
    %4183 = vmatprep.subr.mxu0 0.0
    %4184 = vmatpush2.xpose.msra.mxu0 0.0
    %4185 = vmatprep.subr.mxu0 0.0
    %4186 = vmatpush2.xpose.msra.mxu0 0.0
    %4187 = vmatprep.subr.mxu0 0.0
    %4188 = vmatpush2.xpose.msra.mxu0 0.0
    %4189 = vmatprep.subr.mxu0 0.0
    %4190 = vmatpush2.xpose.msra.mxu0 0.0
    %4191 = vmatprep.subr.mxu0 0.0
    %4192 = vmatpush2.xpose.msra.mxu0 0.0
    %4193 = vmatprep.subr.mxu0 0.0
    %4194 = vmatpush2.xpose.msra.mxu0 0.0
    %4195 = vmatprep.subr.mxu0 0.0
    %4196 = vmatpush2.xpose.msra.mxu0 0.0
    %4197 = vmatprep.subr.mxu0 0.0
    %4198 = vmatpush2.xpose.msra.mxu0 0.0
    %4199 = vmatprep.subr.mxu0 0.0
    %4200 = vmatpush2.xpose.msra.mxu0 0.0
    %4201 = vmatprep.subr.mxu0 0.0
    %4202 = vmatpush2.xpose.msra.mxu0 0.0
    %4203 = vmatprep.subr.mxu0 0.0
    %4204 = vmatpush2.xpose.msra.mxu0 0.0
    %4205 = vmatprep.subr.mxu0 0.0
    %4206 = vmatpush2.xpose.msra.mxu0 0.0
    %4207 = vmatprep.subr.mxu0 0.0
    %4208 = vmatpush2.xpose.msra.mxu0 0.0
    %4209 = vmatprep.subr.mxu0 0.0
    %4210 = vmatpush2.xpose.msra.mxu0 0.0
    %4211 = vmatprep.subr.mxu0 0.0
    %4212 = vmatpush2.xpose.msra.mxu0 0.0
    %4213 = vmatprep.subr.mxu0 0.0
    %4214 = vmatpush2.xpose.msra.mxu0 0.0
    %4215 = vmatprep.mubr.f32.mxu0 0.0
    %v4216 = vand.u32 %v3772, 4294901760
    %4217 = vmatmul.mubr.f32.gmra.mxu0 %v4216
    %v4218 = vpop.f32.mrf.mxu0
    %v4219 = vadd.f32 %v4147, %v4218
    %v4220 = vpop.f32.mrf.mxu0
    %4221 = vdwg.mxu0
    %v4222 = vsel %vm607, %v1055, -inf
    %4223 = vmax.xlane.f32.xlu0 %v4222
    %v4224 = vpop.xlane.xlu0 %4223
    %v4225 = vsel %vm607, %v1507, -inf
    %4226 = vmax.xlane.f32.xlu0 %v4225
    %v4227 = vpop.xlane.xlu0 %4226
    %v4228 = vsel %vm607, %v1959, -inf
    %4229 = vmax.xlane.f32.xlu0 %v4228
    %v4230 = vpop.xlane.xlu0 %4229
    %v4231 = vsel %vm607, %v2411, -inf
    %4232 = vmax.xlane.f32.xlu0 %v4231
    %v4233 = vpop.xlane.xlu0 %4232
    %v4234 = vsel %vm607, %v2863, -inf
    %4235 = vmax.xlane.f32.xlu0 %v4234
    %v4236 = vpop.xlane.xlu0 %4235
    %v4237 = vsel %vm607, %v3315, -inf
    %4238 = vmax.xlane.f32.xlu0 %v4237
    %v4239 = vpop.xlane.xlu0 %4238
    %v4240 = vsel %vm607, %v3767, -inf
    %4241 = vmax.xlane.f32.xlu0 %v4240
    %v4242 = vpop.xlane.xlu0 %4241
    %v4243 = vsel %vm607, %v4219, -inf
    %4244 = vmax.xlane.f32.xlu0 %v4243
    %v4245 = vpop.xlane.xlu0 %4244
    %v4246 = vsub.f32 %v1055, %v4224
    %v4247 = vsub.f32 %v1507, %v4227
    %v4248 = vsub.f32 %v1959, %v4230
    %v4249 = vsub.f32 %v2411, %v4233
    %v4250 = vsub.f32 %v2863, %v4236
    %v4251 = vsub.f32 %v3315, %v4239
    %v4252 = vsub.f32 %v3767, %v4242
    %v4253 = vsub.f32 %v4219, %v4245
    %v4254 = vmul.f32 %v4246, 1.442695
    %v4255 = vpow.pop %v4254
    %v4256 = vmul.f32 %v4247, 1.442695
    %v4257 = vpow.pop %v4256
    %v4258 = vmul.f32 %v4248, 1.442695
    %v4259 = vpow.pop %v4258
    %v4260 = vmul.f32 %v4249, 1.442695
    %v4261 = vpow.pop %v4260
    %v4262 = vmul.f32 %v4250, 1.442695
    %v4263 = vpow.pop %v4262
    %v4264 = vmul.f32 %v4251, 1.442695
    %v4265 = vpow.pop %v4264
    %v4266 = vmul.f32 %v4252, 1.442695
    %v4267 = vpow.pop %v4266
    %v4268 = vmul.f32 %v4253, 1.442695
    %v4269 = vpow.pop %v4268
    %v4270 = vsel %vm607, %v4255, 0.0
    %4271 = vadd.xlane.f32.xlu0 %v4270
    %v4272 = vpop.xlane.xlu0 %4271
    %v4273 = vsel %vm607, %v4257, 0.0
    %4274 = vadd.xlane.f32.xlu0 %v4273
    %v4275 = vpop.xlane.xlu0 %4274
    %v4276 = vsel %vm607, %v4259, 0.0
    %4277 = vadd.xlane.f32.xlu0 %v4276
    %v4278 = vpop.xlane.xlu0 %4277
    %v4279 = vsel %vm607, %v4261, 0.0
    %4280 = vadd.xlane.f32.xlu0 %v4279
    %v4281 = vpop.xlane.xlu0 %4280
    %v4282 = vsel %vm607, %v4263, 0.0
    %4283 = vadd.xlane.f32.xlu0 %v4282
    %v4284 = vpop.xlane.xlu0 %4283
    %v4285 = vsel %vm607, %v4265, 0.0
    %4286 = vadd.xlane.f32.xlu0 %v4285
    %v4287 = vpop.xlane.xlu0 %4286
    %v4288 = vsel %vm607, %v4267, 0.0
    %4289 = vadd.xlane.f32.xlu0 %v4288
    %v4290 = vpop.xlane.xlu0 %4289
    %v4291 = vsel %vm607, %v4269, 0.0
    %4292 = vadd.xlane.f32.xlu0 %v4291
    %v4293 = vpop.xlane.xlu0 %4292
    %v4294 = vrcp.pop %v4272
    %v4295 = vmul.f32 %v4255, %v4294
    %v4296 = vrcp.pop %v4275
    %v4297 = vmul.f32 %v4257, %v4296
    %v4298 = vrcp.pop %v4278
    %v4299 = vmul.f32 %v4259, %v4298
    %v4300 = vrcp.pop %v4281
    %v4301 = vmul.f32 %v4261, %v4300
    %v4302 = vrcp.pop %v4284
    %v4303 = vmul.f32 %v4263, %v4302
    %v4304 = vrcp.pop %v4287
    %v4305 = vmul.f32 %v4265, %v4304
    %v4306 = vrcp.pop %v4290
    %v4307 = vmul.f32 %v4267, %v4306
    %v4308 = vrcp.pop %v4293
    %v4309 = vmul.f32 %v4269, %v4308
    %4310 = vrot.lane.b32.xlu0 %v582, 64
    %v4311 = vpop.permute.xlu0 %4310
    %v4314 = vsel %vm607, %v4295, 0
    %4316 = vmatprep.subr.mxu0 0.0
    %4317 = vmatpush1.msra.mxu0 0.0
    %4318 = vmatprep.subr.mxu0 0.0
    %4319 = vmatpush1.msra.mxu0 0.0
    %4320 = vmatprep.subr.mxu0 0.0
    %4321 = vmatpush1.msra.mxu0 0.0
    %4322 = vmatprep.subr.mxu0 0.0
    %4323 = vmatpush1.msra.mxu0 0.0
    %4324 = vmatprep.subr.mxu0 0.0
    %4325 = vmatpush1.msra.mxu0 0.0
    %4326 = vmatprep.subr.mxu0 0.0
    %4327 = vmatpush1.msra.mxu0 0.0
    %4328 = vmatprep.subr.mxu0 0.0
    %4329 = vmatpush1.msra.mxu0 0.0
    %4330 = vmatprep.subr.mxu0 0.0
    %4331 = vmatpush1.msra.mxu0 0.0
    %4332 = vmatprep.subr.mxu0 0.0
    %4333 = vmatpush1.msra.mxu0 0.0
    %4334 = vmatprep.subr.mxu0 0.0
    %4335 = vmatpush1.msra.mxu0 0.0
    %4336 = vmatprep.subr.mxu0 0.0
    %4337 = vmatpush1.msra.mxu0 0.0
    %4338 = vmatprep.subr.mxu0 0.0
    %4339 = vmatpush1.msra.mxu0 0.0
    %4340 = vmatprep.subr.mxu0 0.0
    %4341 = vmatpush1.msra.mxu0 0.0
    %4342 = vmatprep.subr.mxu0 0.0
    %4343 = vmatpush1.msra.mxu0 0.0
    %4344 = vmatprep.subr.mxu0 0.0
    %4345 = vmatpush1.msra.mxu0 0.0
    %4346 = vmatprep.subr.mxu0 0.0
    %v4347 = vand.u32 %v4311, 4294901760
    %4348 = vmatpush1.msra.mxu0 %v4347
    %4349 = vmatprep.subr.mxu0 0.0
    %4350 = vmatpush2.msra.mxu0 0.0
    %4351 = vmatprep.subr.mxu0 0.0
    %4352 = vmatpush2.msra.mxu0 0.0
    %4353 = vmatprep.subr.mxu0 0.0
    %4354 = vmatpush2.msra.mxu0 0.0
    %4355 = vmatprep.subr.mxu0 0.0
    %4356 = vmatpush2.msra.mxu0 0.0
    %4357 = vmatprep.subr.mxu0 0.0
    %4358 = vmatpush2.msra.mxu0 0.0
    %4359 = vmatprep.subr.mxu0 0.0
    %4360 = vmatpush2.msra.mxu0 0.0
    %4361 = vmatprep.subr.mxu0 0.0
    %4362 = vmatpush2.msra.mxu0 0.0
    %4363 = vmatprep.subr.mxu0 0.0
    %4364 = vmatpush2.msra.mxu0 0.0
    %4365 = vmatprep.subr.mxu0 0.0
    %4366 = vmatpush2.msra.mxu0 0.0
    %4367 = vmatprep.subr.mxu0 0.0
    %4368 = vmatpush2.msra.mxu0 0.0
    %4369 = vmatprep.subr.mxu0 0.0
    %4370 = vmatpush2.msra.mxu0 0.0
    %4371 = vmatprep.subr.mxu0 0.0
    %4372 = vmatpush2.msra.mxu0 0.0
    %4373 = vmatprep.subr.mxu0 0.0
    %4374 = vmatpush2.msra.mxu0 0.0
    %4375 = vmatprep.subr.mxu0 0.0
    %4376 = vmatpush2.msra.mxu0 0.0
    %4377 = vmatprep.subr.mxu0 0.0
    %4378 = vmatpush2.msra.mxu0 0.0
    %4379 = vmatprep.subr.mxu0 0.0
    %4380 = vmatpush2.msra.mxu0 0.0
    %4381 = vmatprep.mubr.f32.mxu0 0.0
    %v4382 = vand.u32 %v4314, 4294901760
    %v4383 = vsub.f32 %v4314, %v4382
    %v4384 = vand.u32 %v4383, 4294901760
    %v4385 = vsub.f32 %v4383, %v4384
    %v4386 = vand.u32 %v4385, 4294901760
    %4387 = vmatmul.mubr.f32.gmra.mxu0 %v4386
    %v4388 = vpop.f32.mrf.mxu0
    %v4389 = vadd.f32 0.0, %v4388
    %v4390 = vpop.f32.mrf.mxu0
    %4391 = vdwg.mxu0
    %4392 = vmatprep.subr.mxu0 0.0
    %4393 = vmatpush1.msra.mxu0 0.0
    %4394 = vmatprep.subr.mxu0 0.0
    %4395 = vmatpush1.msra.mxu0 0.0
    %4396 = vmatprep.subr.mxu0 0.0
    %4397 = vmatpush1.msra.mxu0 0.0
    %4398 = vmatprep.subr.mxu0 0.0
    %4399 = vmatpush1.msra.mxu0 0.0
    %4400 = vmatprep.subr.mxu0 0.0
    %4401 = vmatpush1.msra.mxu0 0.0
    %4402 = vmatprep.subr.mxu0 0.0
    %4403 = vmatpush1.msra.mxu0 0.0
    %4404 = vmatprep.subr.mxu0 0.0
    %4405 = vmatpush1.msra.mxu0 0.0
    %4406 = vmatprep.subr.mxu0 0.0
    %4407 = vmatpush1.msra.mxu0 0.0
    %4408 = vmatprep.subr.mxu0 0.0
    %4409 = vmatpush1.msra.mxu0 0.0
    %4410 = vmatprep.subr.mxu0 0.0
    %4411 = vmatpush1.msra.mxu0 0.0
    %4412 = vmatprep.subr.mxu0 0.0
    %4413 = vmatpush1.msra.mxu0 0.0
    %4414 = vmatprep.subr.mxu0 0.0
    %4415 = vmatpush1.msra.mxu0 0.0
    %4416 = vmatprep.subr.mxu0 0.0
    %4417 = vmatpush1.msra.mxu0 0.0
    %4418 = vmatprep.subr.mxu0 0.0
    %4419 = vmatpush1.msra.mxu0 0.0
    %4420 = vmatprep.subr.mxu0 0.0
    %4421 = vmatpush1.msra.mxu0 0.0
    %4422 = vmatprep.subr.mxu0 0.0
    %v4423 = vand.u32 %v4311, 4294901760
    %v4424 = vsub.f32 %v4311, %v4423
    %v4425 = vand.u32 %v4424, 4294901760
    %v4426 = vsub.f32 %v4424, %v4425
    %v4427 = vand.u32 %v4426, 4294901760
    %4428 = vmatpush1.msra.mxu0 %v4427
    %4429 = vmatprep.subr.mxu0 0.0
    %4430 = vmatpush2.msra.mxu0 0.0
    %4431 = vmatprep.subr.mxu0 0.0
    %4432 = vmatpush2.msra.mxu0 0.0
    %4433 = vmatprep.subr.mxu0 0.0
    %4434 = vmatpush2.msra.mxu0 0.0
    %4435 = vmatprep.subr.mxu0 0.0
    %4436 = vmatpush2.msra.mxu0 0.0
    %4437 = vmatprep.subr.mxu0 0.0
    %4438 = vmatpush2.msra.mxu0 0.0
    %4439 = vmatprep.subr.mxu0 0.0
    %4440 = vmatpush2.msra.mxu0 0.0
    %4441 = vmatprep.subr.mxu0 0.0
    %4442 = vmatpush2.msra.mxu0 0.0
    %4443 = vmatprep.subr.mxu0 0.0
    %4444 = vmatpush2.msra.mxu0 0.0
    %4445 = vmatprep.subr.mxu0 0.0
    %4446 = vmatpush2.msra.mxu0 0.0
    %4447 = vmatprep.subr.mxu0 0.0
    %4448 = vmatpush2.msra.mxu0 0.0
    %4449 = vmatprep.subr.mxu0 0.0
    %4450 = vmatpush2.msra.mxu0 0.0
    %4451 = vmatprep.subr.mxu0 0.0
    %4452 = vmatpush2.msra.mxu0 0.0
    %4453 = vmatprep.subr.mxu0 0.0
    %4454 = vmatpush2.msra.mxu0 0.0
    %4455 = vmatprep.subr.mxu0 0.0
    %4456 = vmatpush2.msra.mxu0 0.0
    %4457 = vmatprep.subr.mxu0 0.0
    %4458 = vmatpush2.msra.mxu0 0.0
    %4459 = vmatprep.subr.mxu0 0.0
    %4460 = vmatpush2.msra.mxu0 0.0
    %4461 = vmatprep.mubr.f32.mxu0 0.0
    %v4462 = vand.u32 %v4314, 4294901760
    %4463 = vmatmul.mubr.f32.gmra.mxu0 %v4462
    %v4464 = vpop.f32.mrf.mxu0
    %v4465 = vadd.f32 %v4389, %v4464
    %v4466 = vpop.f32.mrf.mxu0
    %4467 = vdwg.mxu0
    %4468 = vmatprep.subr.mxu0 0.0
    %4469 = vmatpush1.msra.mxu0 0.0
    %4470 = vmatprep.subr.mxu0 0.0
    %4471 = vmatpush1.msra.mxu0 0.0
    %4472 = vmatprep.subr.mxu0 0.0
    %4473 = vmatpush1.msra.mxu0 0.0
    %4474 = vmatprep.subr.mxu0 0.0
    %4475 = vmatpush1.msra.mxu0 0.0
    %4476 = vmatprep.subr.mxu0 0.0
    %4477 = vmatpush1.msra.mxu0 0.0
    %4478 = vmatprep.subr.mxu0 0.0
    %4479 = vmatpush1.msra.mxu0 0.0
    %4480 = vmatprep.subr.mxu0 0.0
    %4481 = vmatpush1.msra.mxu0 0.0
    %4482 = vmatprep.subr.mxu0 0.0
    %4483 = vmatpush1.msra.mxu0 0.0
    %4484 = vmatprep.subr.mxu0 0.0
    %4485 = vmatpush1.msra.mxu0 0.0
    %4486 = vmatprep.subr.mxu0 0.0
    %4487 = vmatpush1.msra.mxu0 0.0
    %4488 = vmatprep.subr.mxu0 0.0
    %4489 = vmatpush1.msra.mxu0 0.0
    %4490 = vmatprep.subr.mxu0 0.0
    %4491 = vmatpush1.msra.mxu0 0.0
    %4492 = vmatprep.subr.mxu0 0.0
    %4493 = vmatpush1.msra.mxu0 0.0
    %4494 = vmatprep.subr.mxu0 0.0
    %4495 = vmatpush1.msra.mxu0 0.0
    %4496 = vmatprep.subr.mxu0 0.0
    %4497 = vmatpush1.msra.mxu0 0.0
    %4498 = vmatprep.subr.mxu0 0.0
    %v4499 = vand.u32 %v4311, 4294901760
    %v4500 = vsub.f32 %v4311, %v4499
    %4501 = vmatpush1.msra.mxu0 %v4500
    %4502 = vmatprep.subr.mxu0 0.0
    %4503 = vmatpush2.msra.mxu0 0.0
    %4504 = vmatprep.subr.mxu0 0.0
    %4505 = vmatpush2.msra.mxu0 0.0
    %4506 = vmatprep.subr.mxu0 0.0
    %4507 = vmatpush2.msra.mxu0 0.0
    %4508 = vmatprep.subr.mxu0 0.0
    %4509 = vmatpush2.msra.mxu0 0.0
    %4510 = vmatprep.subr.mxu0 0.0
    %4511 = vmatpush2.msra.mxu0 0.0
    %4512 = vmatprep.subr.mxu0 0.0
    %4513 = vmatpush2.msra.mxu0 0.0
    %4514 = vmatprep.subr.mxu0 0.0
    %4515 = vmatpush2.msra.mxu0 0.0
    %4516 = vmatprep.subr.mxu0 0.0
    %4517 = vmatpush2.msra.mxu0 0.0
    %4518 = vmatprep.subr.mxu0 0.0
    %4519 = vmatpush2.msra.mxu0 0.0
    %4520 = vmatprep.subr.mxu0 0.0
    %4521 = vmatpush2.msra.mxu0 0.0
    %4522 = vmatprep.subr.mxu0 0.0
    %4523 = vmatpush2.msra.mxu0 0.0
    %4524 = vmatprep.subr.mxu0 0.0
    %4525 = vmatpush2.msra.mxu0 0.0
    %4526 = vmatprep.subr.mxu0 0.0
    %4527 = vmatpush2.msra.mxu0 0.0
    %4528 = vmatprep.subr.mxu0 0.0
    %4529 = vmatpush2.msra.mxu0 0.0
    %4530 = vmatprep.subr.mxu0 0.0
    %4531 = vmatpush2.msra.mxu0 0.0
    %4532 = vmatprep.subr.mxu0 0.0
    %4533 = vmatpush2.msra.mxu0 0.0
    %4534 = vmatprep.mubr.f32.mxu0 0.0
    %v4535 = vand.u32 %v4314, 4294901760
    %v4536 = vsub.f32 %v4314, %v4535
    %4537 = vmatmul.mubr.f32.gmra.mxu0 %v4536
    %v4538 = vpop.f32.mrf.mxu0
    %v4539 = vadd.f32 %v4465, %v4538
    %v4540 = vpop.f32.mrf.mxu0
    %4541 = vdwg.mxu0
    %4542 = vmatprep.subr.mxu0 0.0
    %4543 = vmatpush1.msra.mxu0 0.0
    %4544 = vmatprep.subr.mxu0 0.0
    %4545 = vmatpush1.msra.mxu0 0.0
    %4546 = vmatprep.subr.mxu0 0.0
    %4547 = vmatpush1.msra.mxu0 0.0
    %4548 = vmatprep.subr.mxu0 0.0
    %4549 = vmatpush1.msra.mxu0 0.0
    %4550 = vmatprep.subr.mxu0 0.0
    %4551 = vmatpush1.msra.mxu0 0.0
    %4552 = vmatprep.subr.mxu0 0.0
    %4553 = vmatpush1.msra.mxu0 0.0
    %4554 = vmatprep.subr.mxu0 0.0
    %4555 = vmatpush1.msra.mxu0 0.0
    %4556 = vmatprep.subr.mxu0 0.0
    %4557 = vmatpush1.msra.mxu0 0.0
    %4558 = vmatprep.subr.mxu0 0.0
    %4559 = vmatpush1.msra.mxu0 0.0
    %4560 = vmatprep.subr.mxu0 0.0
    %4561 = vmatpush1.msra.mxu0 0.0
    %4562 = vmatprep.subr.mxu0 0.0
    %4563 = vmatpush1.msra.mxu0 0.0
    %4564 = vmatprep.subr.mxu0 0.0
    %4565 = vmatpush1.msra.mxu0 0.0
    %4566 = vmatprep.subr.mxu0 0.0
    %4567 = vmatpush1.msra.mxu0 0.0
    %4568 = vmatprep.subr.mxu0 0.0
    %4569 = vmatpush1.msra.mxu0 0.0
    %4570 = vmatprep.subr.mxu0 0.0
    %4571 = vmatpush1.msra.mxu0 0.0
    %4572 = vmatprep.subr.mxu0 0.0
    %v4573 = vand.u32 %v4311, 4294901760
    %4574 = vmatpush1.msra.mxu0 %v4573
    %4575 = vmatprep.subr.mxu0 0.0
    %4576 = vmatpush2.msra.mxu0 0.0
    %4577 = vmatprep.subr.mxu0 0.0
    %4578 = vmatpush2.msra.mxu0 0.0
    %4579 = vmatprep.subr.mxu0 0.0
    %4580 = vmatpush2.msra.mxu0 0.0
    %4581 = vmatprep.subr.mxu0 0.0
    %4582 = vmatpush2.msra.mxu0 0.0
    %4583 = vmatprep.subr.mxu0 0.0
    %4584 = vmatpush2.msra.mxu0 0.0
    %4585 = vmatprep.subr.mxu0 0.0
    %4586 = vmatpush2.msra.mxu0 0.0
    %4587 = vmatprep.subr.mxu0 0.0
    %4588 = vmatpush2.msra.mxu0 0.0
    %4589 = vmatprep.subr.mxu0 0.0
    %4590 = vmatpush2.msra.mxu0 0.0
    %4591 = vmatprep.subr.mxu0 0.0
    %4592 = vmatpush2.msra.mxu0 0.0
    %4593 = vmatprep.subr.mxu0 0.0
    %4594 = vmatpush2.msra.mxu0 0.0
    %4595 = vmatprep.subr.mxu0 0.0
    %4596 = vmatpush2.msra.mxu0 0.0
    %4597 = vmatprep.subr.mxu0 0.0
    %4598 = vmatpush2.msra.mxu0 0.0
    %4599 = vmatprep.subr.mxu0 0.0
    %4600 = vmatpush2.msra.mxu0 0.0
    %4601 = vmatprep.subr.mxu0 0.0
    %4602 = vmatpush2.msra.mxu0 0.0
    %4603 = vmatprep.subr.mxu0 0.0
    %4604 = vmatpush2.msra.mxu0 0.0
    %4605 = vmatprep.subr.mxu0 0.0
    %4606 = vmatpush2.msra.mxu0 0.0
    %4607 = vmatprep.mubr.f32.mxu0 0.0
    %v4608 = vand.u32 %v4314, 4294901760
    %v4609 = vsub.f32 %v4314, %v4608
    %v4610 = vand.u32 %v4609, 4294901760
    %4611 = vmatmul.mubr.f32.gmra.mxu0 %v4610
    %v4612 = vpop.f32.mrf.mxu0
    %v4613 = vadd.f32 %v4539, %v4612
    %v4614 = vpop.f32.mrf.mxu0
    %4615 = vdwg.mxu0
    %4616 = vmatprep.subr.mxu0 0.0
    %4617 = vmatpush1.msra.mxu0 0.0
    %4618 = vmatprep.subr.mxu0 0.0
    %4619 = vmatpush1.msra.mxu0 0.0
    %4620 = vmatprep.subr.mxu0 0.0
    %4621 = vmatpush1.msra.mxu0 0.0
    %4622 = vmatprep.subr.mxu0 0.0
    %4623 = vmatpush1.msra.mxu0 0.0
    %4624 = vmatprep.subr.mxu0 0.0
    %4625 = vmatpush1.msra.mxu0 0.0
    %4626 = vmatprep.subr.mxu0 0.0
    %4627 = vmatpush1.msra.mxu0 0.0
    %4628 = vmatprep.subr.mxu0 0.0
    %4629 = vmatpush1.msra.mxu0 0.0
    %4630 = vmatprep.subr.mxu0 0.0
    %4631 = vmatpush1.msra.mxu0 0.0
    %4632 = vmatprep.subr.mxu0 0.0
    %4633 = vmatpush1.msra.mxu0 0.0
    %4634 = vmatprep.subr.mxu0 0.0
    %4635 = vmatpush1.msra.mxu0 0.0
    %4636 = vmatprep.subr.mxu0 0.0
    %4637 = vmatpush1.msra.mxu0 0.0
    %4638 = vmatprep.subr.mxu0 0.0
    %4639 = vmatpush1.msra.mxu0 0.0
    %4640 = vmatprep.subr.mxu0 0.0
    %4641 = vmatpush1.msra.mxu0 0.0
    %4642 = vmatprep.subr.mxu0 0.0
    %4643 = vmatpush1.msra.mxu0 0.0
    %4644 = vmatprep.subr.mxu0 0.0
    %4645 = vmatpush1.msra.mxu0 0.0
    %4646 = vmatprep.subr.mxu0 0.0
    %v4647 = vand.u32 %v4311, 4294901760
    %v4648 = vsub.f32 %v4311, %v4647
    %v4649 = vand.u32 %v4648, 4294901760
    %4650 = vmatpush1.msra.mxu0 %v4649
    %4651 = vmatprep.subr.mxu0 0.0
    %4652 = vmatpush2.msra.mxu0 0.0
    %4653 = vmatprep.subr.mxu0 0.0
    %4654 = vmatpush2.msra.mxu0 0.0
    %4655 = vmatprep.subr.mxu0 0.0
    %4656 = vmatpush2.msra.mxu0 0.0
    %4657 = vmatprep.subr.mxu0 0.0
    %4658 = vmatpush2.msra.mxu0 0.0
    %4659 = vmatprep.subr.mxu0 0.0
    %4660 = vmatpush2.msra.mxu0 0.0
    %4661 = vmatprep.subr.mxu0 0.0
    %4662 = vmatpush2.msra.mxu0 0.0
    %4663 = vmatprep.subr.mxu0 0.0
    %4664 = vmatpush2.msra.mxu0 0.0
    %4665 = vmatprep.subr.mxu0 0.0
    %4666 = vmatpush2.msra.mxu0 0.0
    %4667 = vmatprep.subr.mxu0 0.0
    %4668 = vmatpush2.msra.mxu0 0.0
    %4669 = vmatprep.subr.mxu0 0.0
    %4670 = vmatpush2.msra.mxu0 0.0
    %4671 = vmatprep.subr.mxu0 0.0
    %4672 = vmatpush2.msra.mxu0 0.0
    %4673 = vmatprep.subr.mxu0 0.0
    %4674 = vmatpush2.msra.mxu0 0.0
    %4675 = vmatprep.subr.mxu0 0.0
    %4676 = vmatpush2.msra.mxu0 0.0
    %4677 = vmatprep.subr.mxu0 0.0
    %4678 = vmatpush2.msra.mxu0 0.0
    %4679 = vmatprep.subr.mxu0 0.0
    %4680 = vmatpush2.msra.mxu0 0.0
    %4681 = vmatprep.subr.mxu0 0.0
    %4682 = vmatpush2.msra.mxu0 0.0
    %4683 = vmatprep.mubr.f32.mxu0 0.0
    %v4684 = vand.u32 %v4314, 4294901760
    %4685 = vmatmul.mubr.f32.gmra.mxu0 %v4684
    %v4686 = vpop.f32.mrf.mxu0
    %v4687 = vadd.f32 %v4613, %v4686
    %v4688 = vpop.f32.mrf.mxu0
    %4689 = vdwg.mxu0
    %4690 = vmatprep.subr.mxu0 0.0
    %4691 = vmatpush1.msra.mxu0 0.0
    %4692 = vmatprep.subr.mxu0 0.0
    %4693 = vmatpush1.msra.mxu0 0.0
    %4694 = vmatprep.subr.mxu0 0.0
    %4695 = vmatpush1.msra.mxu0 0.0
    %4696 = vmatprep.subr.mxu0 0.0
    %4697 = vmatpush1.msra.mxu0 0.0
    %4698 = vmatprep.subr.mxu0 0.0
    %4699 = vmatpush1.msra.mxu0 0.0
    %4700 = vmatprep.subr.mxu0 0.0
    %4701 = vmatpush1.msra.mxu0 0.0
    %4702 = vmatprep.subr.mxu0 0.0
    %4703 = vmatpush1.msra.mxu0 0.0
    %4704 = vmatprep.subr.mxu0 0.0
    %4705 = vmatpush1.msra.mxu0 0.0
    %4706 = vmatprep.subr.mxu0 0.0
    %4707 = vmatpush1.msra.mxu0 0.0
    %4708 = vmatprep.subr.mxu0 0.0
    %4709 = vmatpush1.msra.mxu0 0.0
    %4710 = vmatprep.subr.mxu0 0.0
    %4711 = vmatpush1.msra.mxu0 0.0
    %4712 = vmatprep.subr.mxu0 0.0
    %4713 = vmatpush1.msra.mxu0 0.0
    %4714 = vmatprep.subr.mxu0 0.0
    %4715 = vmatpush1.msra.mxu0 0.0
    %4716 = vmatprep.subr.mxu0 0.0
    %4717 = vmatpush1.msra.mxu0 0.0
    %4718 = vmatprep.subr.mxu0 0.0
    %4719 = vmatpush1.msra.mxu0 0.0
    %4720 = vmatprep.subr.mxu0 0.0
    %v4721 = vand.u32 %v4311, 4294901760
    %4722 = vmatpush1.msra.mxu0 %v4721
    %4723 = vmatprep.subr.mxu0 0.0
    %4724 = vmatpush2.msra.mxu0 0.0
    %4725 = vmatprep.subr.mxu0 0.0
    %4726 = vmatpush2.msra.mxu0 0.0
    %4727 = vmatprep.subr.mxu0 0.0
    %4728 = vmatpush2.msra.mxu0 0.0
    %4729 = vmatprep.subr.mxu0 0.0
    %4730 = vmatpush2.msra.mxu0 0.0
    %4731 = vmatprep.subr.mxu0 0.0
    %4732 = vmatpush2.msra.mxu0 0.0
    %4733 = vmatprep.subr.mxu0 0.0
    %4734 = vmatpush2.msra.mxu0 0.0
    %4735 = vmatprep.subr.mxu0 0.0
    %4736 = vmatpush2.msra.mxu0 0.0
    %4737 = vmatprep.subr.mxu0 0.0
    %4738 = vmatpush2.msra.mxu0 0.0
    %4739 = vmatprep.subr.mxu0 0.0
    %4740 = vmatpush2.msra.mxu0 0.0
    %4741 = vmatprep.subr.mxu0 0.0
    %4742 = vmatpush2.msra.mxu0 0.0
    %4743 = vmatprep.subr.mxu0 0.0
    %4744 = vmatpush2.msra.mxu0 0.0
    %4745 = vmatprep.subr.mxu0 0.0
    %4746 = vmatpush2.msra.mxu0 0.0
    %4747 = vmatprep.subr.mxu0 0.0
    %4748 = vmatpush2.msra.mxu0 0.0
    %4749 = vmatprep.subr.mxu0 0.0
    %4750 = vmatpush2.msra.mxu0 0.0
    %4751 = vmatprep.subr.mxu0 0.0
    %4752 = vmatpush2.msra.mxu0 0.0
    %4753 = vmatprep.subr.mxu0 0.0
    %4754 = vmatpush2.msra.mxu0 0.0
    %4755 = vmatprep.mubr.f32.mxu0 0.0
    %v4756 = vand.u32 %v4314, 4294901760
    %4757 = vmatmul.mubr.f32.gmra.mxu0 %v4756
    %v4758 = vpop.f32.mrf.mxu0
    %v4759 = vadd.f32 %v4687, %v4758
    %v4760 = vpop.f32.mrf.mxu0
    %4761 = vdwg.mxu0
    %4762 = vrot.lane.b32.xlu0 %v593, 64
    %v4763 = vpop.permute.xlu0 %4762
    %v4766 = vsel %vm607, %v4297, 0
    %4768 = vmatprep.subr.mxu0 0.0
    %4769 = vmatpush1.msra.mxu0 0.0
    %4770 = vmatprep.subr.mxu0 0.0
    %4771 = vmatpush1.msra.mxu0 0.0
    %4772 = vmatprep.subr.mxu0 0.0
    %4773 = vmatpush1.msra.mxu0 0.0
    %4774 = vmatprep.subr.mxu0 0.0
    %4775 = vmatpush1.msra.mxu0 0.0
    %4776 = vmatprep.subr.mxu0 0.0
    %4777 = vmatpush1.msra.mxu0 0.0
    %4778 = vmatprep.subr.mxu0 0.0
    %4779 = vmatpush1.msra.mxu0 0.0
    %4780 = vmatprep.subr.mxu0 0.0
    %4781 = vmatpush1.msra.mxu0 0.0
    %4782 = vmatprep.subr.mxu0 0.0
    %4783 = vmatpush1.msra.mxu0 0.0
    %4784 = vmatprep.subr.mxu0 0.0
    %4785 = vmatpush1.msra.mxu0 0.0
    %4786 = vmatprep.subr.mxu0 0.0
    %4787 = vmatpush1.msra.mxu0 0.0
    %4788 = vmatprep.subr.mxu0 0.0
    %4789 = vmatpush1.msra.mxu0 0.0
    %4790 = vmatprep.subr.mxu0 0.0
    %4791 = vmatpush1.msra.mxu0 0.0
    %4792 = vmatprep.subr.mxu0 0.0
    %4793 = vmatpush1.msra.mxu0 0.0
    %4794 = vmatprep.subr.mxu0 0.0
    %4795 = vmatpush1.msra.mxu0 0.0
    %4796 = vmatprep.subr.mxu0 0.0
    %4797 = vmatpush1.msra.mxu0 0.0
    %4798 = vmatprep.subr.mxu0 0.0
    %v4799 = vand.u32 %v4763, 4294901760
    %4800 = vmatpush1.msra.mxu0 %v4799
    %4801 = vmatprep.subr.mxu0 0.0
    %4802 = vmatpush2.msra.mxu0 0.0
    %4803 = vmatprep.subr.mxu0 0.0
    %4804 = vmatpush2.msra.mxu0 0.0
    %4805 = vmatprep.subr.mxu0 0.0
    %4806 = vmatpush2.msra.mxu0 0.0
    %4807 = vmatprep.subr.mxu0 0.0
    %4808 = vmatpush2.msra.mxu0 0.0
    %4809 = vmatprep.subr.mxu0 0.0
    %4810 = vmatpush2.msra.mxu0 0.0
    %4811 = vmatprep.subr.mxu0 0.0
    %4812 = vmatpush2.msra.mxu0 0.0
    %4813 = vmatprep.subr.mxu0 0.0
    %4814 = vmatpush2.msra.mxu0 0.0
    %4815 = vmatprep.subr.mxu0 0.0
    %4816 = vmatpush2.msra.mxu0 0.0
    %4817 = vmatprep.subr.mxu0 0.0
    %4818 = vmatpush2.msra.mxu0 0.0
    %4819 = vmatprep.subr.mxu0 0.0
    %4820 = vmatpush2.msra.mxu0 0.0
    %4821 = vmatprep.subr.mxu0 0.0
    %4822 = vmatpush2.msra.mxu0 0.0
    %4823 = vmatprep.subr.mxu0 0.0
    %4824 = vmatpush2.msra.mxu0 0.0
    %4825 = vmatprep.subr.mxu0 0.0
    %4826 = vmatpush2.msra.mxu0 0.0
    %4827 = vmatprep.subr.mxu0 0.0
    %4828 = vmatpush2.msra.mxu0 0.0
    %4829 = vmatprep.subr.mxu0 0.0
    %4830 = vmatpush2.msra.mxu0 0.0
    %4831 = vmatprep.subr.mxu0 0.0
    %4832 = vmatpush2.msra.mxu0 0.0
    %4833 = vmatprep.mubr.f32.mxu0 0.0
    %v4834 = vand.u32 %v4766, 4294901760
    %v4835 = vsub.f32 %v4766, %v4834
    %v4836 = vand.u32 %v4835, 4294901760
    %v4837 = vsub.f32 %v4835, %v4836
    %v4838 = vand.u32 %v4837, 4294901760
    %4839 = vmatmul.mubr.f32.gmra.mxu0 %v4838
    %v4840 = vpop.f32.mrf.mxu0
    %v4841 = vadd.f32 0.0, %v4840
    %v4842 = vpop.f32.mrf.mxu0
    %4843 = vdwg.mxu0
    %4844 = vmatprep.subr.mxu0 0.0
    %4845 = vmatpush1.msra.mxu0 0.0
    %4846 = vmatprep.subr.mxu0 0.0
    %4847 = vmatpush1.msra.mxu0 0.0
    %4848 = vmatprep.subr.mxu0 0.0
    %4849 = vmatpush1.msra.mxu0 0.0
    %4850 = vmatprep.subr.mxu0 0.0
    %4851 = vmatpush1.msra.mxu0 0.0
    %4852 = vmatprep.subr.mxu0 0.0
    %4853 = vmatpush1.msra.mxu0 0.0
    %4854 = vmatprep.subr.mxu0 0.0
    %4855 = vmatpush1.msra.mxu0 0.0
    %4856 = vmatprep.subr.mxu0 0.0
    %4857 = vmatpush1.msra.mxu0 0.0
    %4858 = vmatprep.subr.mxu0 0.0
    %4859 = vmatpush1.msra.mxu0 0.0
    %4860 = vmatprep.subr.mxu0 0.0
    %4861 = vmatpush1.msra.mxu0 0.0
    %4862 = vmatprep.subr.mxu0 0.0
    %4863 = vmatpush1.msra.mxu0 0.0
    %4864 = vmatprep.subr.mxu0 0.0
    %4865 = vmatpush1.msra.mxu0 0.0
    %4866 = vmatprep.subr.mxu0 0.0
    %4867 = vmatpush1.msra.mxu0 0.0
    %4868 = vmatprep.subr.mxu0 0.0
    %4869 = vmatpush1.msra.mxu0 0.0
    %4870 = vmatprep.subr.mxu0 0.0
    %4871 = vmatpush1.msra.mxu0 0.0
    %4872 = vmatprep.subr.mxu0 0.0
    %4873 = vmatpush1.msra.mxu0 0.0
    %4874 = vmatprep.subr.mxu0 0.0
    %v4875 = vand.u32 %v4763, 4294901760
    %v4876 = vsub.f32 %v4763, %v4875
    %v4877 = vand.u32 %v4876, 4294901760
    %v4878 = vsub.f32 %v4876, %v4877
    %v4879 = vand.u32 %v4878, 4294901760
    %4880 = vmatpush1.msra.mxu0 %v4879
    %4881 = vmatprep.subr.mxu0 0.0
    %4882 = vmatpush2.msra.mxu0 0.0
    %4883 = vmatprep.subr.mxu0 0.0
    %4884 = vmatpush2.msra.mxu0 0.0
    %4885 = vmatprep.subr.mxu0 0.0
    %4886 = vmatpush2.msra.mxu0 0.0
    %4887 = vmatprep.subr.mxu0 0.0
    %4888 = vmatpush2.msra.mxu0 0.0
    %4889 = vmatprep.subr.mxu0 0.0
    %4890 = vmatpush2.msra.mxu0 0.0
    %4891 = vmatprep.subr.mxu0 0.0
    %4892 = vmatpush2.msra.mxu0 0.0
    %4893 = vmatprep.subr.mxu0 0.0
    %4894 = vmatpush2.msra.mxu0 0.0
    %4895 = vmatprep.subr.mxu0 0.0
    %4896 = vmatpush2.msra.mxu0 0.0
    %4897 = vmatprep.subr.mxu0 0.0
    %4898 = vmatpush2.msra.mxu0 0.0
    %4899 = vmatprep.subr.mxu0 0.0
    %4900 = vmatpush2.msra.mxu0 0.0
    %4901 = vmatprep.subr.mxu0 0.0
    %4902 = vmatpush2.msra.mxu0 0.0
    %4903 = vmatprep.subr.mxu0 0.0
    %4904 = vmatpush2.msra.mxu0 0.0
    %4905 = vmatprep.subr.mxu0 0.0
    %4906 = vmatpush2.msra.mxu0 0.0
    %4907 = vmatprep.subr.mxu0 0.0
    %4908 = vmatpush2.msra.mxu0 0.0
    %4909 = vmatprep.subr.mxu0 0.0
    %4910 = vmatpush2.msra.mxu0 0.0
    %4911 = vmatprep.subr.mxu0 0.0
    %4912 = vmatpush2.msra.mxu0 0.0
    %4913 = vmatprep.mubr.f32.mxu0 0.0
    %v4914 = vand.u32 %v4766, 4294901760
    %4915 = vmatmul.mubr.f32.gmra.mxu0 %v4914
    %v4916 = vpop.f32.mrf.mxu0
    %v4917 = vadd.f32 %v4841, %v4916
    %v4918 = vpop.f32.mrf.mxu0
    %4919 = vdwg.mxu0
    %4920 = vmatprep.subr.mxu0 0.0
    %4921 = vmatpush1.msra.mxu0 0.0
    %4922 = vmatprep.subr.mxu0 0.0
    %4923 = vmatpush1.msra.mxu0 0.0
    %4924 = vmatprep.subr.mxu0 0.0
    %4925 = vmatpush1.msra.mxu0 0.0
    %4926 = vmatprep.subr.mxu0 0.0
    %4927 = vmatpush1.msra.mxu0 0.0
    %4928 = vmatprep.subr.mxu0 0.0
    %4929 = vmatpush1.msra.mxu0 0.0
    %4930 = vmatprep.subr.mxu0 0.0
    %4931 = vmatpush1.msra.mxu0 0.0
    %4932 = vmatprep.subr.mxu0 0.0
    %4933 = vmatpush1.msra.mxu0 0.0
    %4934 = vmatprep.subr.mxu0 0.0
    %4935 = vmatpush1.msra.mxu0 0.0
    %4936 = vmatprep.subr.mxu0 0.0
    %4937 = vmatpush1.msra.mxu0 0.0
    %4938 = vmatprep.subr.mxu0 0.0
    %4939 = vmatpush1.msra.mxu0 0.0
    %4940 = vmatprep.subr.mxu0 0.0
    %4941 = vmatpush1.msra.mxu0 0.0
    %4942 = vmatprep.subr.mxu0 0.0
    %4943 = vmatpush1.msra.mxu0 0.0
    %4944 = vmatprep.subr.mxu0 0.0
    %4945 = vmatpush1.msra.mxu0 0.0
    %4946 = vmatprep.subr.mxu0 0.0
    %4947 = vmatpush1.msra.mxu0 0.0
    %4948 = vmatprep.subr.mxu0 0.0
    %4949 = vmatpush1.msra.mxu0 0.0
    %4950 = vmatprep.subr.mxu0 0.0
    %v4951 = vand.u32 %v4763, 4294901760
    %v4952 = vsub.f32 %v4763, %v4951
    %4953 = vmatpush1.msra.mxu0 %v4952
    %4954 = vmatprep.subr.mxu0 0.0
    %4955 = vmatpush2.msra.mxu0 0.0
    %4956 = vmatprep.subr.mxu0 0.0
    %4957 = vmatpush2.msra.mxu0 0.0
    %4958 = vmatprep.subr.mxu0 0.0
    %4959 = vmatpush2.msra.mxu0 0.0
    %4960 = vmatprep.subr.mxu0 0.0
    %4961 = vmatpush2.msra.mxu0 0.0
    %4962 = vmatprep.subr.mxu0 0.0
    %4963 = vmatpush2.msra.mxu0 0.0
    %4964 = vmatprep.subr.mxu0 0.0
    %4965 = vmatpush2.msra.mxu0 0.0
    %4966 = vmatprep.subr.mxu0 0.0
    %4967 = vmatpush2.msra.mxu0 0.0
    %4968 = vmatprep.subr.mxu0 0.0
    %4969 = vmatpush2.msra.mxu0 0.0
    %4970 = vmatprep.subr.mxu0 0.0
    %4971 = vmatpush2.msra.mxu0 0.0
    %4972 = vmatprep.subr.mxu0 0.0
    %4973 = vmatpush2.msra.mxu0 0.0
    %4974 = vmatprep.subr.mxu0 0.0
    %4975 = vmatpush2.msra.mxu0 0.0
    %4976 = vmatprep.subr.mxu0 0.0
    %4977 = vmatpush2.msra.mxu0 0.0
    %4978 = vmatprep.subr.mxu0 0.0
    %4979 = vmatpush2.msra.mxu0 0.0
    %4980 = vmatprep.subr.mxu0 0.0
    %4981 = vmatpush2.msra.mxu0 0.0
    %4982 = vmatprep.subr.mxu0 0.0
    %4983 = vmatpush2.msra.mxu0 0.0
    %4984 = vmatprep.subr.mxu0 0.0
    %4985 = vmatpush2.msra.mxu0 0.0
    %4986 = vmatprep.mubr.f32.mxu0 0.0
    %v4987 = vand.u32 %v4766, 4294901760
    %v4988 = vsub.f32 %v4766, %v4987
    %4989 = vmatmul.mubr.f32.gmra.mxu0 %v4988
    %v4990 = vpop.f32.mrf.mxu0
    %v4991 = vadd.f32 %v4917, %v4990
    %v4992 = vpop.f32.mrf.mxu0
    %4993 = vdwg.mxu0
    %4994 = vmatprep.subr.mxu0 0.0
    %4995 = vmatpush1.msra.mxu0 0.0
    %4996 = vmatprep.subr.mxu0 0.0
    %4997 = vmatpush1.msra.mxu0 0.0
    %4998 = vmatprep.subr.mxu0 0.0
    %4999 = vmatpush1.msra.mxu0 0.0
    %5000 = vmatprep.subr.mxu0 0.0
    %5001 = vmatpush1.msra.mxu0 0.0
    %5002 = vmatprep.subr.mxu0 0.0
    %5003 = vmatpush1.msra.mxu0 0.0
    %5004 = vmatprep.subr.mxu0 0.0
    %5005 = vmatpush1.msra.mxu0 0.0
    %5006 = vmatprep.subr.mxu0 0.0
    %5007 = vmatpush1.msra.mxu0 0.0
    %5008 = vmatprep.subr.mxu0 0.0
    %5009 = vmatpush1.msra.mxu0 0.0
    %5010 = vmatprep.subr.mxu0 0.0
    %5011 = vmatpush1.msra.mxu0 0.0
    %5012 = vmatprep.subr.mxu0 0.0
    %5013 = vmatpush1.msra.mxu0 0.0
    %5014 = vmatprep.subr.mxu0 0.0
    %5015 = vmatpush1.msra.mxu0 0.0
    %5016 = vmatprep.subr.mxu0 0.0
    %5017 = vmatpush1.msra.mxu0 0.0
    %5018 = vmatprep.subr.mxu0 0.0
    %5019 = vmatpush1.msra.mxu0 0.0
    %5020 = vmatprep.subr.mxu0 0.0
    %5021 = vmatpush1.msra.mxu0 0.0
    %5022 = vmatprep.subr.mxu0 0.0
    %5023 = vmatpush1.msra.mxu0 0.0
    %5024 = vmatprep.subr.mxu0 0.0
    %v5025 = vand.u32 %v4763, 4294901760
    %5026 = vmatpush1.msra.mxu0 %v5025
    %5027 = vmatprep.subr.mxu0 0.0
    %5028 = vmatpush2.msra.mxu0 0.0
    %5029 = vmatprep.subr.mxu0 0.0
    %5030 = vmatpush2.msra.mxu0 0.0
    %5031 = vmatprep.subr.mxu0 0.0
    %5032 = vmatpush2.msra.mxu0 0.0
    %5033 = vmatprep.subr.mxu0 0.0
    %5034 = vmatpush2.msra.mxu0 0.0
    %5035 = vmatprep.subr.mxu0 0.0
    %5036 = vmatpush2.msra.mxu0 0.0
    %5037 = vmatprep.subr.mxu0 0.0
    %5038 = vmatpush2.msra.mxu0 0.0
    %5039 = vmatprep.subr.mxu0 0.0
    %5040 = vmatpush2.msra.mxu0 0.0
    %5041 = vmatprep.subr.mxu0 0.0
    %5042 = vmatpush2.msra.mxu0 0.0
    %5043 = vmatprep.subr.mxu0 0.0
    %5044 = vmatpush2.msra.mxu0 0.0
    %5045 = vmatprep.subr.mxu0 0.0
    %5046 = vmatpush2.msra.mxu0 0.0
    %5047 = vmatprep.subr.mxu0 0.0
    %5048 = vmatpush2.msra.mxu0 0.0
    %5049 = vmatprep.subr.mxu0 0.0
    %5050 = vmatpush2.msra.mxu0 0.0
    %5051 = vmatprep.subr.mxu0 0.0
    %5052 = vmatpush2.msra.mxu0 0.0
    %5053 = vmatprep.subr.mxu0 0.0
    %5054 = vmatpush2.msra.mxu0 0.0
    %5055 = vmatprep.subr.mxu0 0.0
    %5056 = vmatpush2.msra.mxu0 0.0
    %5057 = vmatprep.subr.mxu0 0.0
    %5058 = vmatpush2.msra.mxu0 0.0
    %5059 = vmatprep.mubr.f32.mxu0 0.0
    %v5060 = vand.u32 %v4766, 4294901760
    %v5061 = vsub.f32 %v4766, %v5060
    %v5062 = vand.u32 %v5061, 4294901760
    %5063 = vmatmul.mubr.f32.gmra.mxu0 %v5062
    %v5064 = vpop.f32.mrf.mxu0
    %v5065 = vadd.f32 %v4991, %v5064
    %v5066 = vpop.f32.mrf.mxu0
    %5067 = vdwg.mxu0
    %5068 = vmatprep.subr.mxu0 0.0
    %5069 = vmatpush1.msra.mxu0 0.0
    %5070 = vmatprep.subr.mxu0 0.0
    %5071 = vmatpush1.msra.mxu0 0.0
    %5072 = vmatprep.subr.mxu0 0.0
    %5073 = vmatpush1.msra.mxu0 0.0
    %5074 = vmatprep.subr.mxu0 0.0
    %5075 = vmatpush1.msra.mxu0 0.0
    %5076 = vmatprep.subr.mxu0 0.0
    %5077 = vmatpush1.msra.mxu0 0.0
    %5078 = vmatprep.subr.mxu0 0.0
    %5079 = vmatpush1.msra.mxu0 0.0
    %5080 = vmatprep.subr.mxu0 0.0
    %5081 = vmatpush1.msra.mxu0 0.0
    %5082 = vmatprep.subr.mxu0 0.0
    %5083 = vmatpush1.msra.mxu0 0.0
    %5084 = vmatprep.subr.mxu0 0.0
    %5085 = vmatpush1.msra.mxu0 0.0
    %5086 = vmatprep.subr.mxu0 0.0
    %5087 = vmatpush1.msra.mxu0 0.0
    %5088 = vmatprep.subr.mxu0 0.0
    %5089 = vmatpush1.msra.mxu0 0.0
    %5090 = vmatprep.subr.mxu0 0.0
    %5091 = vmatpush1.msra.mxu0 0.0
    %5092 = vmatprep.subr.mxu0 0.0
    %5093 = vmatpush1.msra.mxu0 0.0
    %5094 = vmatprep.subr.mxu0 0.0
    %5095 = vmatpush1.msra.mxu0 0.0
    %5096 = vmatprep.subr.mxu0 0.0
    %5097 = vmatpush1.msra.mxu0 0.0
    %5098 = vmatprep.subr.mxu0 0.0
    %v5099 = vand.u32 %v4763, 4294901760
    %v5100 = vsub.f32 %v4763, %v5099
    %v5101 = vand.u32 %v5100, 4294901760
    %5102 = vmatpush1.msra.mxu0 %v5101
    %5103 = vmatprep.subr.mxu0 0.0
    %5104 = vmatpush2.msra.mxu0 0.0
    %5105 = vmatprep.subr.mxu0 0.0
    %5106 = vmatpush2.msra.mxu0 0.0
    %5107 = vmatprep.subr.mxu0 0.0
    %5108 = vmatpush2.msra.mxu0 0.0
    %5109 = vmatprep.subr.mxu0 0.0
    %5110 = vmatpush2.msra.mxu0 0.0
    %5111 = vmatprep.subr.mxu0 0.0
    %5112 = vmatpush2.msra.mxu0 0.0
    %5113 = vmatprep.subr.mxu0 0.0
    %5114 = vmatpush2.msra.mxu0 0.0
    %5115 = vmatprep.subr.mxu0 0.0
    %5116 = vmatpush2.msra.mxu0 0.0
    %5117 = vmatprep.subr.mxu0 0.0
    %5118 = vmatpush2.msra.mxu0 0.0
    %5119 = vmatprep.subr.mxu0 0.0
    %5120 = vmatpush2.msra.mxu0 0.0
    %5121 = vmatprep.subr.mxu0 0.0
    %5122 = vmatpush2.msra.mxu0 0.0
    %5123 = vmatprep.subr.mxu0 0.0
    %5124 = vmatpush2.msra.mxu0 0.0
    %5125 = vmatprep.subr.mxu0 0.0
    %5126 = vmatpush2.msra.mxu0 0.0
    %5127 = vmatprep.subr.mxu0 0.0
    %5128 = vmatpush2.msra.mxu0 0.0
    %5129 = vmatprep.subr.mxu0 0.0
    %5130 = vmatpush2.msra.mxu0 0.0
    %5131 = vmatprep.subr.mxu0 0.0
    %5132 = vmatpush2.msra.mxu0 0.0
    %5133 = vmatprep.subr.mxu0 0.0
    %5134 = vmatpush2.msra.mxu0 0.0
    %5135 = vmatprep.mubr.f32.mxu0 0.0
    %v5136 = vand.u32 %v4766, 4294901760
    %5137 = vmatmul.mubr.f32.gmra.mxu0 %v5136
    %v5138 = vpop.f32.mrf.mxu0
    %v5139 = vadd.f32 %v5065, %v5138
    %v5140 = vpop.f32.mrf.mxu0
    %5141 = vdwg.mxu0
    %5142 = vmatprep.subr.mxu0 0.0
    %5143 = vmatpush1.msra.mxu0 0.0
    %5144 = vmatprep.subr.mxu0 0.0
    %5145 = vmatpush1.msra.mxu0 0.0
    %5146 = vmatprep.subr.mxu0 0.0
    %5147 = vmatpush1.msra.mxu0 0.0
    %5148 = vmatprep.subr.mxu0 0.0
    %5149 = vmatpush1.msra.mxu0 0.0
    %5150 = vmatprep.subr.mxu0 0.0
    %5151 = vmatpush1.msra.mxu0 0.0
    %5152 = vmatprep.subr.mxu0 0.0
    %5153 = vmatpush1.msra.mxu0 0.0
    %5154 = vmatprep.subr.mxu0 0.0
    %5155 = vmatpush1.msra.mxu0 0.0
    %5156 = vmatprep.subr.mxu0 0.0
    %5157 = vmatpush1.msra.mxu0 0.0
    %5158 = vmatprep.subr.mxu0 0.0
    %5159 = vmatpush1.msra.mxu0 0.0
    %5160 = vmatprep.subr.mxu0 0.0
    %5161 = vmatpush1.msra.mxu0 0.0
    %5162 = vmatprep.subr.mxu0 0.0
    %5163 = vmatpush1.msra.mxu0 0.0
    %5164 = vmatprep.subr.mxu0 0.0
    %5165 = vmatpush1.msra.mxu0 0.0
    %5166 = vmatprep.subr.mxu0 0.0
    %5167 = vmatpush1.msra.mxu0 0.0
    %5168 = vmatprep.subr.mxu0 0.0
    %5169 = vmatpush1.msra.mxu0 0.0
    %5170 = vmatprep.subr.mxu0 0.0
    %5171 = vmatpush1.msra.mxu0 0.0
    %5172 = vmatprep.subr.mxu0 0.0
    %v5173 = vand.u32 %v4763, 4294901760
    %5174 = vmatpush1.msra.mxu0 %v5173
    %5175 = vmatprep.subr.mxu0 0.0
    %5176 = vmatpush2.msra.mxu0 0.0
    %5177 = vmatprep.subr.mxu0 0.0
    %5178 = vmatpush2.msra.mxu0 0.0
    %5179 = vmatprep.subr.mxu0 0.0
    %5180 = vmatpush2.msra.mxu0 0.0
    %5181 = vmatprep.subr.mxu0 0.0
    %5182 = vmatpush2.msra.mxu0 0.0
    %5183 = vmatprep.subr.mxu0 0.0
    %5184 = vmatpush2.msra.mxu0 0.0
    %5185 = vmatprep.subr.mxu0 0.0
    %5186 = vmatpush2.msra.mxu0 0.0
    %5187 = vmatprep.subr.mxu0 0.0
    %5188 = vmatpush2.msra.mxu0 0.0
    %5189 = vmatprep.subr.mxu0 0.0
    %5190 = vmatpush2.msra.mxu0 0.0
    %5191 = vmatprep.subr.mxu0 0.0
    %5192 = vmatpush2.msra.mxu0 0.0
    %5193 = vmatprep.subr.mxu0 0.0
    %5194 = vmatpush2.msra.mxu0 0.0
    %5195 = vmatprep.subr.mxu0 0.0
    %5196 = vmatpush2.msra.mxu0 0.0
    %5197 = vmatprep.subr.mxu0 0.0
    %5198 = vmatpush2.msra.mxu0 0.0
    %5199 = vmatprep.subr.mxu0 0.0
    %5200 = vmatpush2.msra.mxu0 0.0
    %5201 = vmatprep.subr.mxu0 0.0
    %5202 = vmatpush2.msra.mxu0 0.0
    %5203 = vmatprep.subr.mxu0 0.0
    %5204 = vmatpush2.msra.mxu0 0.0
    %5205 = vmatprep.subr.mxu0 0.0
    %5206 = vmatpush2.msra.mxu0 0.0
    %5207 = vmatprep.mubr.f32.mxu0 0.0
    %v5208 = vand.u32 %v4766, 4294901760
    %5209 = vmatmul.mubr.f32.gmra.mxu0 %v5208
    %v5210 = vpop.f32.mrf.mxu0
    %v5211 = vadd.f32 %v5139, %v5210
    %v5212 = vpop.f32.mrf.mxu0
    %5213 = vdwg.mxu0
    %5214 = vrot.lane.b32.xlu0 %v595, 64
    %v5215 = vpop.permute.xlu0 %5214
    %v5218 = vsel %vm607, %v4299, 0
    %5220 = vmatprep.subr.mxu0 0.0
    %5221 = vmatpush1.msra.mxu0 0.0
    %5222 = vmatprep.subr.mxu0 0.0
    %5223 = vmatpush1.msra.mxu0 0.0
    %5224 = vmatprep.subr.mxu0 0.0
    %5225 = vmatpush1.msra.mxu0 0.0
    %5226 = vmatprep.subr.mxu0 0.0
    %5227 = vmatpush1.msra.mxu0 0.0
    %5228 = vmatprep.subr.mxu0 0.0
    %5229 = vmatpush1.msra.mxu0 0.0
    %5230 = vmatprep.subr.mxu0 0.0
    %5231 = vmatpush1.msra.mxu0 0.0
    %5232 = vmatprep.subr.mxu0 0.0
    %5233 = vmatpush1.msra.mxu0 0.0
    %5234 = vmatprep.subr.mxu0 0.0
    %5235 = vmatpush1.msra.mxu0 0.0
    %5236 = vmatprep.subr.mxu0 0.0
    %5237 = vmatpush1.msra.mxu0 0.0
    %5238 = vmatprep.subr.mxu0 0.0
    %5239 = vmatpush1.msra.mxu0 0.0
    %5240 = vmatprep.subr.mxu0 0.0
    %5241 = vmatpush1.msra.mxu0 0.0
    %5242 = vmatprep.subr.mxu0 0.0
    %5243 = vmatpush1.msra.mxu0 0.0
    %5244 = vmatprep.subr.mxu0 0.0
    %5245 = vmatpush1.msra.mxu0 0.0
    %5246 = vmatprep.subr.mxu0 0.0
    %5247 = vmatpush1.msra.mxu0 0.0
    %5248 = vmatprep.subr.mxu0 0.0
    %5249 = vmatpush1.msra.mxu0 0.0
    %5250 = vmatprep.subr.mxu0 0.0
    %v5251 = vand.u32 %v5215, 4294901760
    %5252 = vmatpush1.msra.mxu0 %v5251
    %5253 = vmatprep.subr.mxu0 0.0
    %5254 = vmatpush2.msra.mxu0 0.0
    %5255 = vmatprep.subr.mxu0 0.0
    %5256 = vmatpush2.msra.mxu0 0.0
    %5257 = vmatprep.subr.mxu0 0.0
    %5258 = vmatpush2.msra.mxu0 0.0
    %5259 = vmatprep.subr.mxu0 0.0
    %5260 = vmatpush2.msra.mxu0 0.0
    %5261 = vmatprep.subr.mxu0 0.0
    %5262 = vmatpush2.msra.mxu0 0.0
    %5263 = vmatprep.subr.mxu0 0.0
    %5264 = vmatpush2.msra.mxu0 0.0
    %5265 = vmatprep.subr.mxu0 0.0
    %5266 = vmatpush2.msra.mxu0 0.0
    %5267 = vmatprep.subr.mxu0 0.0
    %5268 = vmatpush2.msra.mxu0 0.0
    %5269 = vmatprep.subr.mxu0 0.0
    %5270 = vmatpush2.msra.mxu0 0.0
    %5271 = vmatprep.subr.mxu0 0.0
    %5272 = vmatpush2.msra.mxu0 0.0
    %5273 = vmatprep.subr.mxu0 0.0
    %5274 = vmatpush2.msra.mxu0 0.0
    %5275 = vmatprep.subr.mxu0 0.0
    %5276 = vmatpush2.msra.mxu0 0.0
    %5277 = vmatprep.subr.mxu0 0.0
    %5278 = vmatpush2.msra.mxu0 0.0
    %5279 = vmatprep.subr.mxu0 0.0
    %5280 = vmatpush2.msra.mxu0 0.0
    %5281 = vmatprep.subr.mxu0 0.0
    %5282 = vmatpush2.msra.mxu0 0.0
    %5283 = vmatprep.subr.mxu0 0.0
    %5284 = vmatpush2.msra.mxu0 0.0
    %5285 = vmatprep.mubr.f32.mxu0 0.0
    %v5286 = vand.u32 %v5218, 4294901760
    %v5287 = vsub.f32 %v5218, %v5286
    %v5288 = vand.u32 %v5287, 4294901760
    %v5289 = vsub.f32 %v5287, %v5288
    %v5290 = vand.u32 %v5289, 4294901760
    %5291 = vmatmul.mubr.f32.gmra.mxu0 %v5290
    %v5292 = vpop.f32.mrf.mxu0
    %v5293 = vadd.f32 0.0, %v5292
    %v5294 = vpop.f32.mrf.mxu0
    %5295 = vdwg.mxu0
    %5296 = vmatprep.subr.mxu0 0.0
    %5297 = vmatpush1.msra.mxu0 0.0
    %5298 = vmatprep.subr.mxu0 0.0
    %5299 = vmatpush1.msra.mxu0 0.0
    %5300 = vmatprep.subr.mxu0 0.0
    %5301 = vmatpush1.msra.mxu0 0.0
    %5302 = vmatprep.subr.mxu0 0.0
    %5303 = vmatpush1.msra.mxu0 0.0
    %5304 = vmatprep.subr.mxu0 0.0
    %5305 = vmatpush1.msra.mxu0 0.0
    %5306 = vmatprep.subr.mxu0 0.0
    %5307 = vmatpush1.msra.mxu0 0.0
    %5308 = vmatprep.subr.mxu0 0.0
    %5309 = vmatpush1.msra.mxu0 0.0
    %5310 = vmatprep.subr.mxu0 0.0
    %5311 = vmatpush1.msra.mxu0 0.0
    %5312 = vmatprep.subr.mxu0 0.0
    %5313 = vmatpush1.msra.mxu0 0.0
    %5314 = vmatprep.subr.mxu0 0.0
    %5315 = vmatpush1.msra.mxu0 0.0
    %5316 = vmatprep.subr.mxu0 0.0
    %5317 = vmatpush1.msra.mxu0 0.0
    %5318 = vmatprep.subr.mxu0 0.0
    %5319 = vmatpush1.msra.mxu0 0.0
    %5320 = vmatprep.subr.mxu0 0.0
    %5321 = vmatpush1.msra.mxu0 0.0
    %5322 = vmatprep.subr.mxu0 0.0
    %5323 = vmatpush1.msra.mxu0 0.0
    %5324 = vmatprep.subr.mxu0 0.0
    %5325 = vmatpush1.msra.mxu0 0.0
    %5326 = vmatprep.subr.mxu0 0.0
    %v5327 = vand.u32 %v5215, 4294901760
    %v5328 = vsub.f32 %v5215, %v5327
    %v5329 = vand.u32 %v5328, 4294901760
    %v5330 = vsub.f32 %v5328, %v5329
    %v5331 = vand.u32 %v5330, 4294901760
    %5332 = vmatpush1.msra.mxu0 %v5331
    %5333 = vmatprep.subr.mxu0 0.0
    %5334 = vmatpush2.msra.mxu0 0.0
    %5335 = vmatprep.subr.mxu0 0.0
    %5336 = vmatpush2.msra.mxu0 0.0
    %5337 = vmatprep.subr.mxu0 0.0
    %5338 = vmatpush2.msra.mxu0 0.0
    %5339 = vmatprep.subr.mxu0 0.0
    %5340 = vmatpush2.msra.mxu0 0.0
    %5341 = vmatprep.subr.mxu0 0.0
    %5342 = vmatpush2.msra.mxu0 0.0
    %5343 = vmatprep.subr.mxu0 0.0
    %5344 = vmatpush2.msra.mxu0 0.0
    %5345 = vmatprep.subr.mxu0 0.0
    %5346 = vmatpush2.msra.mxu0 0.0
    %5347 = vmatprep.subr.mxu0 0.0
    %5348 = vmatpush2.msra.mxu0 0.0
    %5349 = vmatprep.subr.mxu0 0.0
    %5350 = vmatpush2.msra.mxu0 0.0
    %5351 = vmatprep.subr.mxu0 0.0
    %5352 = vmatpush2.msra.mxu0 0.0
    %5353 = vmatprep.subr.mxu0 0.0
    %5354 = vmatpush2.msra.mxu0 0.0
    %5355 = vmatprep.subr.mxu0 0.0
    %5356 = vmatpush2.msra.mxu0 0.0
    %5357 = vmatprep.subr.mxu0 0.0
    %5358 = vmatpush2.msra.mxu0 0.0
    %5359 = vmatprep.subr.mxu0 0.0
    %5360 = vmatpush2.msra.mxu0 0.0
    %5361 = vmatprep.subr.mxu0 0.0
    %5362 = vmatpush2.msra.mxu0 0.0
    %5363 = vmatprep.subr.mxu0 0.0
    %5364 = vmatpush2.msra.mxu0 0.0
    %5365 = vmatprep.mubr.f32.mxu0 0.0
    %v5366 = vand.u32 %v5218, 4294901760
    %5367 = vmatmul.mubr.f32.gmra.mxu0 %v5366
    %v5368 = vpop.f32.mrf.mxu0
    %v5369 = vadd.f32 %v5293, %v5368
    %v5370 = vpop.f32.mrf.mxu0
    %5371 = vdwg.mxu0
    %5372 = vmatprep.subr.mxu0 0.0
    %5373 = vmatpush1.msra.mxu0 0.0
    %5374 = vmatprep.subr.mxu0 0.0
    %5375 = vmatpush1.msra.mxu0 0.0
    %5376 = vmatprep.subr.mxu0 0.0
    %5377 = vmatpush1.msra.mxu0 0.0
    %5378 = vmatprep.subr.mxu0 0.0
    %5379 = vmatpush1.msra.mxu0 0.0
    %5380 = vmatprep.subr.mxu0 0.0
    %5381 = vmatpush1.msra.mxu0 0.0
    %5382 = vmatprep.subr.mxu0 0.0
    %5383 = vmatpush1.msra.mxu0 0.0
    %5384 = vmatprep.subr.mxu0 0.0
    %5385 = vmatpush1.msra.mxu0 0.0
    %5386 = vmatprep.subr.mxu0 0.0
    %5387 = vmatpush1.msra.mxu0 0.0
    %5388 = vmatprep.subr.mxu0 0.0
    %5389 = vmatpush1.msra.mxu0 0.0
    %5390 = vmatprep.subr.mxu0 0.0
    %5391 = vmatpush1.msra.mxu0 0.0
    %5392 = vmatprep.subr.mxu0 0.0
    %5393 = vmatpush1.msra.mxu0 0.0
    %5394 = vmatprep.subr.mxu0 0.0
    %5395 = vmatpush1.msra.mxu0 0.0
    %5396 = vmatprep.subr.mxu0 0.0
    %5397 = vmatpush1.msra.mxu0 0.0
    %5398 = vmatprep.subr.mxu0 0.0
    %5399 = vmatpush1.msra.mxu0 0.0
    %5400 = vmatprep.subr.mxu0 0.0
    %5401 = vmatpush1.msra.mxu0 0.0
    %5402 = vmatprep.subr.mxu0 0.0
    %v5403 = vand.u32 %v5215, 4294901760
    %v5404 = vsub.f32 %v5215, %v5403
    %5405 = vmatpush1.msra.mxu0 %v5404
    %5406 = vmatprep.subr.mxu0 0.0
    %5407 = vmatpush2.msra.mxu0 0.0
    %5408 = vmatprep.subr.mxu0 0.0
    %5409 = vmatpush2.msra.mxu0 0.0
    %5410 = vmatprep.subr.mxu0 0.0
    %5411 = vmatpush2.msra.mxu0 0.0
    %5412 = vmatprep.subr.mxu0 0.0
    %5413 = vmatpush2.msra.mxu0 0.0
    %5414 = vmatprep.subr.mxu0 0.0
    %5415 = vmatpush2.msra.mxu0 0.0
    %5416 = vmatprep.subr.mxu0 0.0
    %5417 = vmatpush2.msra.mxu0 0.0
    %5418 = vmatprep.subr.mxu0 0.0
    %5419 = vmatpush2.msra.mxu0 0.0
    %5420 = vmatprep.subr.mxu0 0.0
    %5421 = vmatpush2.msra.mxu0 0.0
    %5422 = vmatprep.subr.mxu0 0.0
    %5423 = vmatpush2.msra.mxu0 0.0
    %5424 = vmatprep.subr.mxu0 0.0
    %5425 = vmatpush2.msra.mxu0 0.0
    %5426 = vmatprep.subr.mxu0 0.0
    %5427 = vmatpush2.msra.mxu0 0.0
    %5428 = vmatprep.subr.mxu0 0.0
    %5429 = vmatpush2.msra.mxu0 0.0
    %5430 = vmatprep.subr.mxu0 0.0
    %5431 = vmatpush2.msra.mxu0 0.0
    %5432 = vmatprep.subr.mxu0 0.0
    %5433 = vmatpush2.msra.mxu0 0.0
    %5434 = vmatprep.subr.mxu0 0.0
    %5435 = vmatpush2.msra.mxu0 0.0
    %5436 = vmatprep.subr.mxu0 0.0
    %5437 = vmatpush2.msra.mxu0 0.0
    %5438 = vmatprep.mubr.f32.mxu0 0.0
    %v5439 = vand.u32 %v5218, 4294901760
    %v5440 = vsub.f32 %v5218, %v5439
    %5441 = vmatmul.mubr.f32.gmra.mxu0 %v5440
    %v5442 = vpop.f32.mrf.mxu0
    %v5443 = vadd.f32 %v5369, %v5442
    %v5444 = vpop.f32.mrf.mxu0
    %5445 = vdwg.mxu0
    %5446 = vmatprep.subr.mxu0 0.0
    %5447 = vmatpush1.msra.mxu0 0.0
    %5448 = vmatprep.subr.mxu0 0.0
    %5449 = vmatpush1.msra.mxu0 0.0
    %5450 = vmatprep.subr.mxu0 0.0
    %5451 = vmatpush1.msra.mxu0 0.0
    %5452 = vmatprep.subr.mxu0 0.0
    %5453 = vmatpush1.msra.mxu0 0.0
    %5454 = vmatprep.subr.mxu0 0.0
    %5455 = vmatpush1.msra.mxu0 0.0
    %5456 = vmatprep.subr.mxu0 0.0
    %5457 = vmatpush1.msra.mxu0 0.0
    %5458 = vmatprep.subr.mxu0 0.0
    %5459 = vmatpush1.msra.mxu0 0.0
    %5460 = vmatprep.subr.mxu0 0.0
    %5461 = vmatpush1.msra.mxu0 0.0
    %5462 = vmatprep.subr.mxu0 0.0
    %5463 = vmatpush1.msra.mxu0 0.0
    %5464 = vmatprep.subr.mxu0 0.0
    %5465 = vmatpush1.msra.mxu0 0.0
    %5466 = vmatprep.subr.mxu0 0.0
    %5467 = vmatpush1.msra.mxu0 0.0
    %5468 = vmatprep.subr.mxu0 0.0
    %5469 = vmatpush1.msra.mxu0 0.0
    %5470 = vmatprep.subr.mxu0 0.0
    %5471 = vmatpush1.msra.mxu0 0.0
    %5472 = vmatprep.subr.mxu0 0.0
    %5473 = vmatpush1.msra.mxu0 0.0
    %5474 = vmatprep.subr.mxu0 0.0
    %5475 = vmatpush1.msra.mxu0 0.0
    %5476 = vmatprep.subr.mxu0 0.0
    %v5477 = vand.u32 %v5215, 4294901760
    %5478 = vmatpush1.msra.mxu0 %v5477
    %5479 = vmatprep.subr.mxu0 0.0
    %5480 = vmatpush2.msra.mxu0 0.0
    %5481 = vmatprep.subr.mxu0 0.0
    %5482 = vmatpush2.msra.mxu0 0.0
    %5483 = vmatprep.subr.mxu0 0.0
    %5484 = vmatpush2.msra.mxu0 0.0
    %5485 = vmatprep.subr.mxu0 0.0
    %5486 = vmatpush2.msra.mxu0 0.0
    %5487 = vmatprep.subr.mxu0 0.0
    %5488 = vmatpush2.msra.mxu0 0.0
    %5489 = vmatprep.subr.mxu0 0.0
    %5490 = vmatpush2.msra.mxu0 0.0
    %5491 = vmatprep.subr.mxu0 0.0
    %5492 = vmatpush2.msra.mxu0 0.0
    %5493 = vmatprep.subr.mxu0 0.0
    %5494 = vmatpush2.msra.mxu0 0.0
    %5495 = vmatprep.subr.mxu0 0.0
    %5496 = vmatpush2.msra.mxu0 0.0
    %5497 = vmatprep.subr.mxu0 0.0
    %5498 = vmatpush2.msra.mxu0 0.0
    %5499 = vmatprep.subr.mxu0 0.0
    %5500 = vmatpush2.msra.mxu0 0.0
    %5501 = vmatprep.subr.mxu0 0.0
    %5502 = vmatpush2.msra.mxu0 0.0
    %5503 = vmatprep.subr.mxu0 0.0
    %5504 = vmatpush2.msra.mxu0 0.0
    %5505 = vmatprep.subr.mxu0 0.0
    %5506 = vmatpush2.msra.mxu0 0.0
    %5507 = vmatprep.subr.mxu0 0.0
    %5508 = vmatpush2.msra.mxu0 0.0
    %5509 = vmatprep.subr.mxu0 0.0
    %5510 = vmatpush2.msra.mxu0 0.0
    %5511 = vmatprep.mubr.f32.mxu0 0.0
    %v5512 = vand.u32 %v5218, 4294901760
    %v5513 = vsub.f32 %v5218, %v5512
    %v5514 = vand.u32 %v5513, 4294901760
    %5515 = vmatmul.mubr.f32.gmra.mxu0 %v5514
    %v5516 = vpop.f32.mrf.mxu0
    %v5517 = vadd.f32 %v5443, %v5516
    %v5518 = vpop.f32.mrf.mxu0
    %5519 = vdwg.mxu0
    %5520 = vmatprep.subr.mxu0 0.0
    %5521 = vmatpush1.msra.mxu0 0.0
    %5522 = vmatprep.subr.mxu0 0.0
    %5523 = vmatpush1.msra.mxu0 0.0
    %5524 = vmatprep.subr.mxu0 0.0
    %5525 = vmatpush1.msra.mxu0 0.0
    %5526 = vmatprep.subr.mxu0 0.0
    %5527 = vmatpush1.msra.mxu0 0.0
    %5528 = vmatprep.subr.mxu0 0.0
    %5529 = vmatpush1.msra.mxu0 0.0
    %5530 = vmatprep.subr.mxu0 0.0
    %5531 = vmatpush1.msra.mxu0 0.0
    %5532 = vmatprep.subr.mxu0 0.0
    %5533 = vmatpush1.msra.mxu0 0.0
    %5534 = vmatprep.subr.mxu0 0.0
    %5535 = vmatpush1.msra.mxu0 0.0
    %5536 = vmatprep.subr.mxu0 0.0
    %5537 = vmatpush1.msra.mxu0 0.0
    %5538 = vmatprep.subr.mxu0 0.0
    %5539 = vmatpush1.msra.mxu0 0.0
    %5540 = vmatprep.subr.mxu0 0.0
    %5541 = vmatpush1.msra.mxu0 0.0
    %5542 = vmatprep.subr.mxu0 0.0
    %5543 = vmatpush1.msra.mxu0 0.0
    %5544 = vmatprep.subr.mxu0 0.0
    %5545 = vmatpush1.msra.mxu0 0.0
    %5546 = vmatprep.subr.mxu0 0.0
    %5547 = vmatpush1.msra.mxu0 0.0
    %5548 = vmatprep.subr.mxu0 0.0
    %5549 = vmatpush1.msra.mxu0 0.0
    %5550 = vmatprep.subr.mxu0 0.0
    %v5551 = vand.u32 %v5215, 4294901760
    %v5552 = vsub.f32 %v5215, %v5551
    %v5553 = vand.u32 %v5552, 4294901760
    %5554 = vmatpush1.msra.mxu0 %v5553
    %5555 = vmatprep.subr.mxu0 0.0
    %5556 = vmatpush2.msra.mxu0 0.0
    %5557 = vmatprep.subr.mxu0 0.0
    %5558 = vmatpush2.msra.mxu0 0.0
    %5559 = vmatprep.subr.mxu0 0.0
    %5560 = vmatpush2.msra.mxu0 0.0
    %5561 = vmatprep.subr.mxu0 0.0
    %5562 = vmatpush2.msra.mxu0 0.0
    %5563 = vmatprep.subr.mxu0 0.0
    %5564 = vmatpush2.msra.mxu0 0.0
    %5565 = vmatprep.subr.mxu0 0.0
    %5566 = vmatpush2.msra.mxu0 0.0
    %5567 = vmatprep.subr.mxu0 0.0
    %5568 = vmatpush2.msra.mxu0 0.0
    %5569 = vmatprep.subr.mxu0 0.0
    %5570 = vmatpush2.msra.mxu0 0.0
    %5571 = vmatprep.subr.mxu0 0.0
    %5572 = vmatpush2.msra.mxu0 0.0
    %5573 = vmatprep.subr.mxu0 0.0
    %5574 = vmatpush2.msra.mxu0 0.0
    %5575 = vmatprep.subr.mxu0 0.0
    %5576 = vmatpush2.msra.mxu0 0.0
    %5577 = vmatprep.subr.mxu0 0.0
    %5578 = vmatpush2.msra.mxu0 0.0
    %5579 = vmatprep.subr.mxu0 0.0
    %5580 = vmatpush2.msra.mxu0 0.0
    %5581 = vmatprep.subr.mxu0 0.0
    %5582 = vmatpush2.msra.mxu0 0.0
    %5583 = vmatprep.subr.mxu0 0.0
    %5584 = vmatpush2.msra.mxu0 0.0
    %5585 = vmatprep.subr.mxu0 0.0
    %5586 = vmatpush2.msra.mxu0 0.0
    %5587 = vmatprep.mubr.f32.mxu0 0.0
    %v5588 = vand.u32 %v5218, 4294901760
    %5589 = vmatmul.mubr.f32.gmra.mxu0 %v5588
    %v5590 = vpop.f32.mrf.mxu0
    %v5591 = vadd.f32 %v5517, %v5590
    %v5592 = vpop.f32.mrf.mxu0
    %5593 = vdwg.mxu0
    %5594 = vmatprep.subr.mxu0 0.0
    %5595 = vmatpush1.msra.mxu0 0.0
    %5596 = vmatprep.subr.mxu0 0.0
    %5597 = vmatpush1.msra.mxu0 0.0
    %5598 = vmatprep.subr.mxu0 0.0
    %5599 = vmatpush1.msra.mxu0 0.0
    %5600 = vmatprep.subr.mxu0 0.0
    %5601 = vmatpush1.msra.mxu0 0.0
    %5602 = vmatprep.subr.mxu0 0.0
    %5603 = vmatpush1.msra.mxu0 0.0
    %5604 = vmatprep.subr.mxu0 0.0
    %5605 = vmatpush1.msra.mxu0 0.0
    %5606 = vmatprep.subr.mxu0 0.0
    %5607 = vmatpush1.msra.mxu0 0.0
    %5608 = vmatprep.subr.mxu0 0.0
    %5609 = vmatpush1.msra.mxu0 0.0
    %5610 = vmatprep.subr.mxu0 0.0
    %5611 = vmatpush1.msra.mxu0 0.0
    %5612 = vmatprep.subr.mxu0 0.0
    %5613 = vmatpush1.msra.mxu0 0.0
    %5614 = vmatprep.subr.mxu0 0.0
    %5615 = vmatpush1.msra.mxu0 0.0
    %5616 = vmatprep.subr.mxu0 0.0
    %5617 = vmatpush1.msra.mxu0 0.0
    %5618 = vmatprep.subr.mxu0 0.0
    %5619 = vmatpush1.msra.mxu0 0.0
    %5620 = vmatprep.subr.mxu0 0.0
    %5621 = vmatpush1.msra.mxu0 0.0
    %5622 = vmatprep.subr.mxu0 0.0
    %5623 = vmatpush1.msra.mxu0 0.0
    %5624 = vmatprep.subr.mxu0 0.0
    %v5625 = vand.u32 %v5215, 4294901760
    %5626 = vmatpush1.msra.mxu0 %v5625
    %5627 = vmatprep.subr.mxu0 0.0
    %5628 = vmatpush2.msra.mxu0 0.0
    %5629 = vmatprep.subr.mxu0 0.0
    %5630 = vmatpush2.msra.mxu0 0.0
    %5631 = vmatprep.subr.mxu0 0.0
    %5632 = vmatpush2.msra.mxu0 0.0
    %5633 = vmatprep.subr.mxu0 0.0
    %5634 = vmatpush2.msra.mxu0 0.0
    %5635 = vmatprep.subr.mxu0 0.0
    %5636 = vmatpush2.msra.mxu0 0.0
    %5637 = vmatprep.subr.mxu0 0.0
    %5638 = vmatpush2.msra.mxu0 0.0
    %5639 = vmatprep.subr.mxu0 0.0
    %5640 = vmatpush2.msra.mxu0 0.0
    %5641 = vmatprep.subr.mxu0 0.0
    %5642 = vmatpush2.msra.mxu0 0.0
    %5643 = vmatprep.subr.mxu0 0.0
    %5644 = vmatpush2.msra.mxu0 0.0
    %5645 = vmatprep.subr.mxu0 0.0
    %5646 = vmatpush2.msra.mxu0 0.0
    %5647 = vmatprep.subr.mxu0 0.0
    %5648 = vmatpush2.msra.mxu0 0.0
    %5649 = vmatprep.subr.mxu0 0.0
    %5650 = vmatpush2.msra.mxu0 0.0
    %5651 = vmatprep.subr.mxu0 0.0
    %5652 = vmatpush2.msra.mxu0 0.0
    %5653 = vmatprep.subr.mxu0 0.0
    %5654 = vmatpush2.msra.mxu0 0.0
    %5655 = vmatprep.subr.mxu0 0.0
    %5656 = vmatpush2.msra.mxu0 0.0
    %5657 = vmatprep.subr.mxu0 0.0
    %5658 = vmatpush2.msra.mxu0 0.0
    %5659 = vmatprep.mubr.f32.mxu0 0.0
    %v5660 = vand.u32 %v5218, 4294901760
    %5661 = vmatmul.mubr.f32.gmra.mxu0 %v5660
    %v5662 = vpop.f32.mrf.mxu0
    %v5663 = vadd.f32 %v5591, %v5662
    %v5664 = vpop.f32.mrf.mxu0
    %5665 = vdwg.mxu0
    %5666 = vrot.lane.b32.xlu0 %v597, 64
    %v5667 = vpop.permute.xlu0 %5666
    %v5670 = vsel %vm607, %v4301, 0
    %5672 = vmatprep.subr.mxu0 0.0
    %5673 = vmatpush1.msra.mxu0 0.0
    %5674 = vmatprep.subr.mxu0 0.0
    %5675 = vmatpush1.msra.mxu0 0.0
    %5676 = vmatprep.subr.mxu0 0.0
    %5677 = vmatpush1.msra.mxu0 0.0
    %5678 = vmatprep.subr.mxu0 0.0
    %5679 = vmatpush1.msra.mxu0 0.0
    %5680 = vmatprep.subr.mxu0 0.0
    %5681 = vmatpush1.msra.mxu0 0.0
    %5682 = vmatprep.subr.mxu0 0.0
    %5683 = vmatpush1.msra.mxu0 0.0
    %5684 = vmatprep.subr.mxu0 0.0
    %5685 = vmatpush1.msra.mxu0 0.0
    %5686 = vmatprep.subr.mxu0 0.0
    %5687 = vmatpush1.msra.mxu0 0.0
    %5688 = vmatprep.subr.mxu0 0.0
    %5689 = vmatpush1.msra.mxu0 0.0
    %5690 = vmatprep.subr.mxu0 0.0
    %5691 = vmatpush1.msra.mxu0 0.0
    %5692 = vmatprep.subr.mxu0 0.0
    %5693 = vmatpush1.msra.mxu0 0.0
    %5694 = vmatprep.subr.mxu0 0.0
    %5695 = vmatpush1.msra.mxu0 0.0
    %5696 = vmatprep.subr.mxu0 0.0
    %5697 = vmatpush1.msra.mxu0 0.0
    %5698 = vmatprep.subr.mxu0 0.0
    %5699 = vmatpush1.msra.mxu0 0.0
    %5700 = vmatprep.subr.mxu0 0.0
    %5701 = vmatpush1.msra.mxu0 0.0
    %5702 = vmatprep.subr.mxu0 0.0
    %v5703 = vand.u32 %v5667, 4294901760
    %5704 = vmatpush1.msra.mxu0 %v5703
    %5705 = vmatprep.subr.mxu0 0.0
    %5706 = vmatpush2.msra.mxu0 0.0
    %5707 = vmatprep.subr.mxu0 0.0
    %5708 = vmatpush2.msra.mxu0 0.0
    %5709 = vmatprep.subr.mxu0 0.0
    %5710 = vmatpush2.msra.mxu0 0.0
    %5711 = vmatprep.subr.mxu0 0.0
    %5712 = vmatpush2.msra.mxu0 0.0
    %5713 = vmatprep.subr.mxu0 0.0
    %5714 = vmatpush2.msra.mxu0 0.0
    %5715 = vmatprep.subr.mxu0 0.0
    %5716 = vmatpush2.msra.mxu0 0.0
    %5717 = vmatprep.subr.mxu0 0.0
    %5718 = vmatpush2.msra.mxu0 0.0
    %5719 = vmatprep.subr.mxu0 0.0
    %5720 = vmatpush2.msra.mxu0 0.0
    %5721 = vmatprep.subr.mxu0 0.0
    %5722 = vmatpush2.msra.mxu0 0.0
    %5723 = vmatprep.subr.mxu0 0.0
    %5724 = vmatpush2.msra.mxu0 0.0
    %5725 = vmatprep.subr.mxu0 0.0
    %5726 = vmatpush2.msra.mxu0 0.0
    %5727 = vmatprep.subr.mxu0 0.0
    %5728 = vmatpush2.msra.mxu0 0.0
    %5729 = vmatprep.subr.mxu0 0.0
    %5730 = vmatpush2.msra.mxu0 0.0
    %5731 = vmatprep.subr.mxu0 0.0
    %5732 = vmatpush2.msra.mxu0 0.0
    %5733 = vmatprep.subr.mxu0 0.0
    %5734 = vmatpush2.msra.mxu0 0.0
    %5735 = vmatprep.subr.mxu0 0.0
    %5736 = vmatpush2.msra.mxu0 0.0
    %5737 = vmatprep.mubr.f32.mxu0 0.0
    %v5738 = vand.u32 %v5670, 4294901760
    %v5739 = vsub.f32 %v5670, %v5738
    %v5740 = vand.u32 %v5739, 4294901760
    %v5741 = vsub.f32 %v5739, %v5740
    %v5742 = vand.u32 %v5741, 4294901760
    %5743 = vmatmul.mubr.f32.gmra.mxu0 %v5742
    %v5744 = vpop.f32.mrf.mxu0
    %v5745 = vadd.f32 0.0, %v5744
    %v5746 = vpop.f32.mrf.mxu0
    %5747 = vdwg.mxu0
    %5748 = vmatprep.subr.mxu0 0.0
    %5749 = vmatpush1.msra.mxu0 0.0
    %5750 = vmatprep.subr.mxu0 0.0
    %5751 = vmatpush1.msra.mxu0 0.0
    %5752 = vmatprep.subr.mxu0 0.0
    %5753 = vmatpush1.msra.mxu0 0.0
    %5754 = vmatprep.subr.mxu0 0.0
    %5755 = vmatpush1.msra.mxu0 0.0
    %5756 = vmatprep.subr.mxu0 0.0
    %5757 = vmatpush1.msra.mxu0 0.0
    %5758 = vmatprep.subr.mxu0 0.0
    %5759 = vmatpush1.msra.mxu0 0.0
    %5760 = vmatprep.subr.mxu0 0.0
    %5761 = vmatpush1.msra.mxu0 0.0
    %5762 = vmatprep.subr.mxu0 0.0
    %5763 = vmatpush1.msra.mxu0 0.0
    %5764 = vmatprep.subr.mxu0 0.0
    %5765 = vmatpush1.msra.mxu0 0.0
    %5766 = vmatprep.subr.mxu0 0.0
    %5767 = vmatpush1.msra.mxu0 0.0
    %5768 = vmatprep.subr.mxu0 0.0
    %5769 = vmatpush1.msra.mxu0 0.0
    %5770 = vmatprep.subr.mxu0 0.0
    %5771 = vmatpush1.msra.mxu0 0.0
    %5772 = vmatprep.subr.mxu0 0.0
    %5773 = vmatpush1.msra.mxu0 0.0
    %5774 = vmatprep.subr.mxu0 0.0
    %5775 = vmatpush1.msra.mxu0 0.0
    %5776 = vmatprep.subr.mxu0 0.0
    %5777 = vmatpush1.msra.mxu0 0.0
    %5778 = vmatprep.subr.mxu0 0.0
    %v5779 = vand.u32 %v5667, 4294901760
    %v5780 = vsub.f32 %v5667, %v5779
    %v5781 = vand.u32 %v5780, 4294901760
    %v5782 = vsub.f32 %v5780, %v5781
    %v5783 = vand.u32 %v5782, 4294901760
    %5784 = vmatpush1.msra.mxu0 %v5783
    %5785 = vmatprep.subr.mxu0 0.0
    %5786 = vmatpush2.msra.mxu0 0.0
    %5787 = vmatprep.subr.mxu0 0.0
    %5788 = vmatpush2.msra.mxu0 0.0
    %5789 = vmatprep.subr.mxu0 0.0
    %5790 = vmatpush2.msra.mxu0 0.0
    %5791 = vmatprep.subr.mxu0 0.0
    %5792 = vmatpush2.msra.mxu0 0.0
    %5793 = vmatprep.subr.mxu0 0.0
    %5794 = vmatpush2.msra.mxu0 0.0
    %5795 = vmatprep.subr.mxu0 0.0
    %5796 = vmatpush2.msra.mxu0 0.0
    %5797 = vmatprep.subr.mxu0 0.0
    %5798 = vmatpush2.msra.mxu0 0.0
    %5799 = vmatprep.subr.mxu0 0.0
    %5800 = vmatpush2.msra.mxu0 0.0
    %5801 = vmatprep.subr.mxu0 0.0
    %5802 = vmatpush2.msra.mxu0 0.0
    %5803 = vmatprep.subr.mxu0 0.0
    %5804 = vmatpush2.msra.mxu0 0.0
    %5805 = vmatprep.subr.mxu0 0.0
    %5806 = vmatpush2.msra.mxu0 0.0
    %5807 = vmatprep.subr.mxu0 0.0
    %5808 = vmatpush2.msra.mxu0 0.0
    %5809 = vmatprep.subr.mxu0 0.0
    %5810 = vmatpush2.msra.mxu0 0.0
    %5811 = vmatprep.subr.mxu0 0.0
    %5812 = vmatpush2.msra.mxu0 0.0
    %5813 = vmatprep.subr.mxu0 0.0
    %5814 = vmatpush2.msra.mxu0 0.0
    %5815 = vmatprep.subr.mxu0 0.0
    %5816 = vmatpush2.msra.mxu0 0.0
    %5817 = vmatprep.mubr.f32.mxu0 0.0
    %v5818 = vand.u32 %v5670, 4294901760
    %5819 = vmatmul.mubr.f32.gmra.mxu0 %v5818
    %v5820 = vpop.f32.mrf.mxu0
    %v5821 = vadd.f32 %v5745, %v5820
    %v5822 = vpop.f32.mrf.mxu0
    %5823 = vdwg.mxu0
    %5824 = vmatprep.subr.mxu0 0.0
    %5825 = vmatpush1.msra.mxu0 0.0
    %5826 = vmatprep.subr.mxu0 0.0
    %5827 = vmatpush1.msra.mxu0 0.0
    %5828 = vmatprep.subr.mxu0 0.0
    %5829 = vmatpush1.msra.mxu0 0.0
    %5830 = vmatprep.subr.mxu0 0.0
    %5831 = vmatpush1.msra.mxu0 0.0
    %5832 = vmatprep.subr.mxu0 0.0
    %5833 = vmatpush1.msra.mxu0 0.0
    %5834 = vmatprep.subr.mxu0 0.0
    %5835 = vmatpush1.msra.mxu0 0.0
    %5836 = vmatprep.subr.mxu0 0.0
    %5837 = vmatpush1.msra.mxu0 0.0
    %5838 = vmatprep.subr.mxu0 0.0
    %5839 = vmatpush1.msra.mxu0 0.0
    %5840 = vmatprep.subr.mxu0 0.0
    %5841 = vmatpush1.msra.mxu0 0.0
    %5842 = vmatprep.subr.mxu0 0.0
    %5843 = vmatpush1.msra.mxu0 0.0
    %5844 = vmatprep.subr.mxu0 0.0
    %5845 = vmatpush1.msra.mxu0 0.0
    %5846 = vmatprep.subr.mxu0 0.0
    %5847 = vmatpush1.msra.mxu0 0.0
    %5848 = vmatprep.subr.mxu0 0.0
    %5849 = vmatpush1.msra.mxu0 0.0
    %5850 = vmatprep.subr.mxu0 0.0
    %5851 = vmatpush1.msra.mxu0 0.0
    %5852 = vmatprep.subr.mxu0 0.0
    %5853 = vmatpush1.msra.mxu0 0.0
    %5854 = vmatprep.subr.mxu0 0.0
    %v5855 = vand.u32 %v5667, 4294901760
    %v5856 = vsub.f32 %v5667, %v5855
    %5857 = vmatpush1.msra.mxu0 %v5856
    %5858 = vmatprep.subr.mxu0 0.0
    %5859 = vmatpush2.msra.mxu0 0.0
    %5860 = vmatprep.subr.mxu0 0.0
    %5861 = vmatpush2.msra.mxu0 0.0
    %5862 = vmatprep.subr.mxu0 0.0
    %5863 = vmatpush2.msra.mxu0 0.0
    %5864 = vmatprep.subr.mxu0 0.0
    %5865 = vmatpush2.msra.mxu0 0.0
    %5866 = vmatprep.subr.mxu0 0.0
    %5867 = vmatpush2.msra.mxu0 0.0
    %5868 = vmatprep.subr.mxu0 0.0
    %5869 = vmatpush2.msra.mxu0 0.0
    %5870 = vmatprep.subr.mxu0 0.0
    %5871 = vmatpush2.msra.mxu0 0.0
    %5872 = vmatprep.subr.mxu0 0.0
    %5873 = vmatpush2.msra.mxu0 0.0
    %5874 = vmatprep.subr.mxu0 0.0
    %5875 = vmatpush2.msra.mxu0 0.0
    %5876 = vmatprep.subr.mxu0 0.0
    %5877 = vmatpush2.msra.mxu0 0.0
    %5878 = vmatprep.subr.mxu0 0.0
    %5879 = vmatpush2.msra.mxu0 0.0
    %5880 = vmatprep.subr.mxu0 0.0
    %5881 = vmatpush2.msra.mxu0 0.0
    %5882 = vmatprep.subr.mxu0 0.0
    %5883 = vmatpush2.msra.mxu0 0.0
    %5884 = vmatprep.subr.mxu0 0.0
    %5885 = vmatpush2.msra.mxu0 0.0
    %5886 = vmatprep.subr.mxu0 0.0
    %5887 = vmatpush2.msra.mxu0 0.0
    %5888 = vmatprep.subr.mxu0 0.0
    %5889 = vmatpush2.msra.mxu0 0.0
    %5890 = vmatprep.mubr.f32.mxu0 0.0
    %v5891 = vand.u32 %v5670, 4294901760
    %v5892 = vsub.f32 %v5670, %v5891
    %5893 = vmatmul.mubr.f32.gmra.mxu0 %v5892
    %v5894 = vpop.f32.mrf.mxu0
    %v5895 = vadd.f32 %v5821, %v5894
    %v5896 = vpop.f32.mrf.mxu0
    %5897 = vdwg.mxu0
    %5898 = vmatprep.subr.mxu0 0.0
    %5899 = vmatpush1.msra.mxu0 0.0
    %5900 = vmatprep.subr.mxu0 0.0
    %5901 = vmatpush1.msra.mxu0 0.0
    %5902 = vmatprep.subr.mxu0 0.0
    %5903 = vmatpush1.msra.mxu0 0.0
    %5904 = vmatprep.subr.mxu0 0.0
    %5905 = vmatpush1.msra.mxu0 0.0
    %5906 = vmatprep.subr.mxu0 0.0
    %5907 = vmatpush1.msra.mxu0 0.0
    %5908 = vmatprep.subr.mxu0 0.0
    %5909 = vmatpush1.msra.mxu0 0.0
    %5910 = vmatprep.subr.mxu0 0.0
    %5911 = vmatpush1.msra.mxu0 0.0
    %5912 = vmatprep.subr.mxu0 0.0
    %5913 = vmatpush1.msra.mxu0 0.0
    %5914 = vmatprep.subr.mxu0 0.0
    %5915 = vmatpush1.msra.mxu0 0.0
    %5916 = vmatprep.subr.mxu0 0.0
    %5917 = vmatpush1.msra.mxu0 0.0
    %5918 = vmatprep.subr.mxu0 0.0
    %5919 = vmatpush1.msra.mxu0 0.0
    %5920 = vmatprep.subr.mxu0 0.0
    %5921 = vmatpush1.msra.mxu0 0.0
    %5922 = vmatprep.subr.mxu0 0.0
    %5923 = vmatpush1.msra.mxu0 0.0
    %5924 = vmatprep.subr.mxu0 0.0
    %5925 = vmatpush1.msra.mxu0 0.0
    %5926 = vmatprep.subr.mxu0 0.0
    %5927 = vmatpush1.msra.mxu0 0.0
    %5928 = vmatprep.subr.mxu0 0.0
    %v5929 = vand.u32 %v5667, 4294901760
    %5930 = vmatpush1.msra.mxu0 %v5929
    %5931 = vmatprep.subr.mxu0 0.0
    %5932 = vmatpush2.msra.mxu0 0.0
    %5933 = vmatprep.subr.mxu0 0.0
    %5934 = vmatpush2.msra.mxu0 0.0
    %5935 = vmatprep.subr.mxu0 0.0
    %5936 = vmatpush2.msra.mxu0 0.0
    %5937 = vmatprep.subr.mxu0 0.0
    %5938 = vmatpush2.msra.mxu0 0.0
    %5939 = vmatprep.subr.mxu0 0.0
    %5940 = vmatpush2.msra.mxu0 0.0
    %5941 = vmatprep.subr.mxu0 0.0
    %5942 = vmatpush2.msra.mxu0 0.0
    %5943 = vmatprep.subr.mxu0 0.0
    %5944 = vmatpush2.msra.mxu0 0.0
    %5945 = vmatprep.subr.mxu0 0.0
    %5946 = vmatpush2.msra.mxu0 0.0
    %5947 = vmatprep.subr.mxu0 0.0
    %5948 = vmatpush2.msra.mxu0 0.0
    %5949 = vmatprep.subr.mxu0 0.0
    %5950 = vmatpush2.msra.mxu0 0.0
    %5951 = vmatprep.subr.mxu0 0.0
    %5952 = vmatpush2.msra.mxu0 0.0
    %5953 = vmatprep.subr.mxu0 0.0
    %5954 = vmatpush2.msra.mxu0 0.0
    %5955 = vmatprep.subr.mxu0 0.0
    %5956 = vmatpush2.msra.mxu0 0.0
    %5957 = vmatprep.subr.mxu0 0.0
    %5958 = vmatpush2.msra.mxu0 0.0
    %5959 = vmatprep.subr.mxu0 0.0
    %5960 = vmatpush2.msra.mxu0 0.0
    %5961 = vmatprep.subr.mxu0 0.0
    %5962 = vmatpush2.msra.mxu0 0.0
    %5963 = vmatprep.mubr.f32.mxu0 0.0
    %v5964 = vand.u32 %v5670, 4294901760
    %v5965 = vsub.f32 %v5670, %v5964
    %v5966 = vand.u32 %v5965, 4294901760
    %5967 = vmatmul.mubr.f32.gmra.mxu0 %v5966
    %v5968 = vpop.f32.mrf.mxu0
    %v5969 = vadd.f32 %v5895, %v5968
    %v5970 = vpop.f32.mrf.mxu0
    %5971 = vdwg.mxu0
    %5972 = vmatprep.subr.mxu0 0.0
    %5973 = vmatpush1.msra.mxu0 0.0
    %5974 = vmatprep.subr.mxu0 0.0
    %5975 = vmatpush1.msra.mxu0 0.0
    %5976 = vmatprep.subr.mxu0 0.0
    %5977 = vmatpush1.msra.mxu0 0.0
    %5978 = vmatprep.subr.mxu0 0.0
    %5979 = vmatpush1.msra.mxu0 0.0
    %5980 = vmatprep.subr.mxu0 0.0
    %5981 = vmatpush1.msra.mxu0 0.0
    %5982 = vmatprep.subr.mxu0 0.0
    %5983 = vmatpush1.msra.mxu0 0.0
    %5984 = vmatprep.subr.mxu0 0.0
    %5985 = vmatpush1.msra.mxu0 0.0
    %5986 = vmatprep.subr.mxu0 0.0
    %5987 = vmatpush1.msra.mxu0 0.0
    %5988 = vmatprep.subr.mxu0 0.0
    %5989 = vmatpush1.msra.mxu0 0.0
    %5990 = vmatprep.subr.mxu0 0.0
    %5991 = vmatpush1.msra.mxu0 0.0
    %5992 = vmatprep.subr.mxu0 0.0
    %5993 = vmatpush1.msra.mxu0 0.0
    %5994 = vmatprep.subr.mxu0 0.0
    %5995 = vmatpush1.msra.mxu0 0.0
    %5996 = vmatprep.subr.mxu0 0.0
    %5997 = vmatpush1.msra.mxu0 0.0
    %5998 = vmatprep.subr.mxu0 0.0
    %5999 = vmatpush1.msra.mxu0 0.0
    %6000 = vmatprep.subr.mxu0 0.0
    %6001 = vmatpush1.msra.mxu0 0.0
    %6002 = vmatprep.subr.mxu0 0.0
    %v6003 = vand.u32 %v5667, 4294901760
    %v6004 = vsub.f32 %v5667, %v6003
    %v6005 = vand.u32 %v6004, 4294901760
    %6006 = vmatpush1.msra.mxu0 %v6005
    %6007 = vmatprep.subr.mxu0 0.0
    %6008 = vmatpush2.msra.mxu0 0.0
    %6009 = vmatprep.subr.mxu0 0.0
    %6010 = vmatpush2.msra.mxu0 0.0
    %6011 = vmatprep.subr.mxu0 0.0
    %6012 = vmatpush2.msra.mxu0 0.0
    %6013 = vmatprep.subr.mxu0 0.0
    %6014 = vmatpush2.msra.mxu0 0.0
    %6015 = vmatprep.subr.mxu0 0.0
    %6016 = vmatpush2.msra.mxu0 0.0
    %6017 = vmatprep.subr.mxu0 0.0
    %6018 = vmatpush2.msra.mxu0 0.0
    %6019 = vmatprep.subr.mxu0 0.0
    %6020 = vmatpush2.msra.mxu0 0.0
    %6021 = vmatprep.subr.mxu0 0.0
    %6022 = vmatpush2.msra.mxu0 0.0
    %6023 = vmatprep.subr.mxu0 0.0
    %6024 = vmatpush2.msra.mxu0 0.0
    %6025 = vmatprep.subr.mxu0 0.0
    %6026 = vmatpush2.msra.mxu0 0.0
    %6027 = vmatprep.subr.mxu0 0.0
    %6028 = vmatpush2.msra.mxu0 0.0
    %6029 = vmatprep.subr.mxu0 0.0
    %6030 = vmatpush2.msra.mxu0 0.0
    %6031 = vmatprep.subr.mxu0 0.0
    %6032 = vmatpush2.msra.mxu0 0.0
    %6033 = vmatprep.subr.mxu0 0.0
    %6034 = vmatpush2.msra.mxu0 0.0
    %6035 = vmatprep.subr.mxu0 0.0
    %6036 = vmatpush2.msra.mxu0 0.0
    %6037 = vmatprep.subr.mxu0 0.0
    %6038 = vmatpush2.msra.mxu0 0.0
    %6039 = vmatprep.mubr.f32.mxu0 0.0
    %v6040 = vand.u32 %v5670, 4294901760
    %6041 = vmatmul.mubr.f32.gmra.mxu0 %v6040
    %v6042 = vpop.f32.mrf.mxu0
    %v6043 = vadd.f32 %v5969, %v6042
    %v6044 = vpop.f32.mrf.mxu0
    %6045 = vdwg.mxu0
    %6046 = vmatprep.subr.mxu0 0.0
    %6047 = vmatpush1.msra.mxu0 0.0
    %6048 = vmatprep.subr.mxu0 0.0
    %6049 = vmatpush1.msra.mxu0 0.0
    %6050 = vmatprep.subr.mxu0 0.0
    %6051 = vmatpush1.msra.mxu0 0.0
    %6052 = vmatprep.subr.mxu0 0.0
    %6053 = vmatpush1.msra.mxu0 0.0
    %6054 = vmatprep.subr.mxu0 0.0
    %6055 = vmatpush1.msra.mxu0 0.0
    %6056 = vmatprep.subr.mxu0 0.0
    %6057 = vmatpush1.msra.mxu0 0.0
    %6058 = vmatprep.subr.mxu0 0.0
    %6059 = vmatpush1.msra.mxu0 0.0
    %6060 = vmatprep.subr.mxu0 0.0
    %6061 = vmatpush1.msra.mxu0 0.0
    %6062 = vmatprep.subr.mxu0 0.0
    %6063 = vmatpush1.msra.mxu0 0.0
    %6064 = vmatprep.subr.mxu0 0.0
    %6065 = vmatpush1.msra.mxu0 0.0
    %6066 = vmatprep.subr.mxu0 0.0
    %6067 = vmatpush1.msra.mxu0 0.0
    %6068 = vmatprep.subr.mxu0 0.0
    %6069 = vmatpush1.msra.mxu0 0.0
    %6070 = vmatprep.subr.mxu0 0.0
    %6071 = vmatpush1.msra.mxu0 0.0
    %6072 = vmatprep.subr.mxu0 0.0
    %6073 = vmatpush1.msra.mxu0 0.0
    %6074 = vmatprep.subr.mxu0 0.0
    %6075 = vmatpush1.msra.mxu0 0.0
    %6076 = vmatprep.subr.mxu0 0.0
    %v6077 = vand.u32 %v5667, 4294901760
    %6078 = vmatpush1.msra.mxu0 %v6077
    %6079 = vmatprep.subr.mxu0 0.0
    %6080 = vmatpush2.msra.mxu0 0.0
    %6081 = vmatprep.subr.mxu0 0.0
    %6082 = vmatpush2.msra.mxu0 0.0
    %6083 = vmatprep.subr.mxu0 0.0
    %6084 = vmatpush2.msra.mxu0 0.0
    %6085 = vmatprep.subr.mxu0 0.0
    %6086 = vmatpush2.msra.mxu0 0.0
    %6087 = vmatprep.subr.mxu0 0.0
    %6088 = vmatpush2.msra.mxu0 0.0
    %6089 = vmatprep.subr.mxu0 0.0
    %6090 = vmatpush2.msra.mxu0 0.0
    %6091 = vmatprep.subr.mxu0 0.0
    %6092 = vmatpush2.msra.mxu0 0.0
    %6093 = vmatprep.subr.mxu0 0.0
    %6094 = vmatpush2.msra.mxu0 0.0
    %6095 = vmatprep.subr.mxu0 0.0
    %6096 = vmatpush2.msra.mxu0 0.0
    %6097 = vmatprep.subr.mxu0 0.0
    %6098 = vmatpush2.msra.mxu0 0.0
    %6099 = vmatprep.subr.mxu0 0.0
    %6100 = vmatpush2.msra.mxu0 0.0
    %6101 = vmatprep.subr.mxu0 0.0
    %6102 = vmatpush2.msra.mxu0 0.0
    %6103 = vmatprep.subr.mxu0 0.0
    %6104 = vmatpush2.msra.mxu0 0.0
    %6105 = vmatprep.subr.mxu0 0.0
    %6106 = vmatpush2.msra.mxu0 0.0
    %6107 = vmatprep.subr.mxu0 0.0
    %6108 = vmatpush2.msra.mxu0 0.0
    %6109 = vmatprep.subr.mxu0 0.0
    %6110 = vmatpush2.msra.mxu0 0.0
    %6111 = vmatprep.mubr.f32.mxu0 0.0
    %v6112 = vand.u32 %v5670, 4294901760
    %6113 = vmatmul.mubr.f32.gmra.mxu0 %v6112
    %v6114 = vpop.f32.mrf.mxu0
    %v6115 = vadd.f32 %v6043, %v6114
    %v6116 = vpop.f32.mrf.mxu0
    %6117 = vdwg.mxu0
    %6118 = vrot.lane.b32.xlu0 %v588, 64
    %v6119 = vpop.permute.xlu0 %6118
    %v6122 = vsel %vm607, %v4303, 0
    %6124 = vmatprep.subr.mxu0 0.0
    %6125 = vmatpush1.msra.mxu0 0.0
    %6126 = vmatprep.subr.mxu0 0.0
    %6127 = vmatpush1.msra.mxu0 0.0
    %6128 = vmatprep.subr.mxu0 0.0
    %6129 = vmatpush1.msra.mxu0 0.0
    %6130 = vmatprep.subr.mxu0 0.0
    %6131 = vmatpush1.msra.mxu0 0.0
    %6132 = vmatprep.subr.mxu0 0.0
    %6133 = vmatpush1.msra.mxu0 0.0
    %6134 = vmatprep.subr.mxu0 0.0
    %6135 = vmatpush1.msra.mxu0 0.0
    %6136 = vmatprep.subr.mxu0 0.0
    %6137 = vmatpush1.msra.mxu0 0.0
    %6138 = vmatprep.subr.mxu0 0.0
    %6139 = vmatpush1.msra.mxu0 0.0
    %6140 = vmatprep.subr.mxu0 0.0
    %6141 = vmatpush1.msra.mxu0 0.0
    %6142 = vmatprep.subr.mxu0 0.0
    %6143 = vmatpush1.msra.mxu0 0.0
    %6144 = vmatprep.subr.mxu0 0.0
    %6145 = vmatpush1.msra.mxu0 0.0
    %6146 = vmatprep.subr.mxu0 0.0
    %6147 = vmatpush1.msra.mxu0 0.0
    %6148 = vmatprep.subr.mxu0 0.0
    %6149 = vmatpush1.msra.mxu0 0.0
    %6150 = vmatprep.subr.mxu0 0.0
    %6151 = vmatpush1.msra.mxu0 0.0
    %6152 = vmatprep.subr.mxu0 0.0
    %6153 = vmatpush1.msra.mxu0 0.0
    %6154 = vmatprep.subr.mxu0 0.0
    %v6155 = vand.u32 %v6119, 4294901760
    %6156 = vmatpush1.msra.mxu0 %v6155
    %6157 = vmatprep.subr.mxu0 0.0
    %6158 = vmatpush2.msra.mxu0 0.0
    %6159 = vmatprep.subr.mxu0 0.0
    %6160 = vmatpush2.msra.mxu0 0.0
    %6161 = vmatprep.subr.mxu0 0.0
    %6162 = vmatpush2.msra.mxu0 0.0
    %6163 = vmatprep.subr.mxu0 0.0
    %6164 = vmatpush2.msra.mxu0 0.0
    %6165 = vmatprep.subr.mxu0 0.0
    %6166 = vmatpush2.msra.mxu0 0.0
    %6167 = vmatprep.subr.mxu0 0.0
    %6168 = vmatpush2.msra.mxu0 0.0
    %6169 = vmatprep.subr.mxu0 0.0
    %6170 = vmatpush2.msra.mxu0 0.0
    %6171 = vmatprep.subr.mxu0 0.0
    %6172 = vmatpush2.msra.mxu0 0.0
    %6173 = vmatprep.subr.mxu0 0.0
    %6174 = vmatpush2.msra.mxu0 0.0
    %6175 = vmatprep.subr.mxu0 0.0
    %6176 = vmatpush2.msra.mxu0 0.0
    %6177 = vmatprep.subr.mxu0 0.0
    %6178 = vmatpush2.msra.mxu0 0.0
    %6179 = vmatprep.subr.mxu0 0.0
    %6180 = vmatpush2.msra.mxu0 0.0
    %6181 = vmatprep.subr.mxu0 0.0
    %6182 = vmatpush2.msra.mxu0 0.0
    %6183 = vmatprep.subr.mxu0 0.0
    %6184 = vmatpush2.msra.mxu0 0.0
    %6185 = vmatprep.subr.mxu0 0.0
    %6186 = vmatpush2.msra.mxu0 0.0
    %6187 = vmatprep.subr.mxu0 0.0
    %6188 = vmatpush2.msra.mxu0 0.0
    %6189 = vmatprep.mubr.f32.mxu0 0.0
    %v6190 = vand.u32 %v6122, 4294901760
    %v6191 = vsub.f32 %v6122, %v6190
    %v6192 = vand.u32 %v6191, 4294901760
    %v6193 = vsub.f32 %v6191, %v6192
    %v6194 = vand.u32 %v6193, 4294901760
    %6195 = vmatmul.mubr.f32.gmra.mxu0 %v6194
    %v6196 = vpop.f32.mrf.mxu0
    %v6197 = vadd.f32 0.0, %v6196
    %v6198 = vpop.f32.mrf.mxu0
    %6199 = vdwg.mxu0
    %6200 = vmatprep.subr.mxu0 0.0
    %6201 = vmatpush1.msra.mxu0 0.0
    %6202 = vmatprep.subr.mxu0 0.0
    %6203 = vmatpush1.msra.mxu0 0.0
    %6204 = vmatprep.subr.mxu0 0.0
    %6205 = vmatpush1.msra.mxu0 0.0
    %6206 = vmatprep.subr.mxu0 0.0
    %6207 = vmatpush1.msra.mxu0 0.0
    %6208 = vmatprep.subr.mxu0 0.0
    %6209 = vmatpush1.msra.mxu0 0.0
    %6210 = vmatprep.subr.mxu0 0.0
    %6211 = vmatpush1.msra.mxu0 0.0
    %6212 = vmatprep.subr.mxu0 0.0
    %6213 = vmatpush1.msra.mxu0 0.0
    %6214 = vmatprep.subr.mxu0 0.0
    %6215 = vmatpush1.msra.mxu0 0.0
    %6216 = vmatprep.subr.mxu0 0.0
    %6217 = vmatpush1.msra.mxu0 0.0
    %6218 = vmatprep.subr.mxu0 0.0
    %6219 = vmatpush1.msra.mxu0 0.0
    %6220 = vmatprep.subr.mxu0 0.0
    %6221 = vmatpush1.msra.mxu0 0.0
    %6222 = vmatprep.subr.mxu0 0.0
    %6223 = vmatpush1.msra.mxu0 0.0
    %6224 = vmatprep.subr.mxu0 0.0
    %6225 = vmatpush1.msra.mxu0 0.0
    %6226 = vmatprep.subr.mxu0 0.0
    %6227 = vmatpush1.msra.mxu0 0.0
    %6228 = vmatprep.subr.mxu0 0.0
    %6229 = vmatpush1.msra.mxu0 0.0
    %6230 = vmatprep.subr.mxu0 0.0
    %v6231 = vand.u32 %v6119, 4294901760
    %v6232 = vsub.f32 %v6119, %v6231
    %v6233 = vand.u32 %v6232, 4294901760
    %v6234 = vsub.f32 %v6232, %v6233
    %v6235 = vand.u32 %v6234, 4294901760
    %6236 = vmatpush1.msra.mxu0 %v6235
    %6237 = vmatprep.subr.mxu0 0.0
    %6238 = vmatpush2.msra.mxu0 0.0
    %6239 = vmatprep.subr.mxu0 0.0
    %6240 = vmatpush2.msra.mxu0 0.0
    %6241 = vmatprep.subr.mxu0 0.0
    %6242 = vmatpush2.msra.mxu0 0.0
    %6243 = vmatprep.subr.mxu0 0.0
    %6244 = vmatpush2.msra.mxu0 0.0
    %6245 = vmatprep.subr.mxu0 0.0
    %6246 = vmatpush2.msra.mxu0 0.0
    %6247 = vmatprep.subr.mxu0 0.0
    %6248 = vmatpush2.msra.mxu0 0.0
    %6249 = vmatprep.subr.mxu0 0.0
    %6250 = vmatpush2.msra.mxu0 0.0
    %6251 = vmatprep.subr.mxu0 0.0
    %6252 = vmatpush2.msra.mxu0 0.0
    %6253 = vmatprep.subr.mxu0 0.0
    %6254 = vmatpush2.msra.mxu0 0.0
    %6255 = vmatprep.subr.mxu0 0.0
    %6256 = vmatpush2.msra.mxu0 0.0
    %6257 = vmatprep.subr.mxu0 0.0
    %6258 = vmatpush2.msra.mxu0 0.0
    %6259 = vmatprep.subr.mxu0 0.0
    %6260 = vmatpush2.msra.mxu0 0.0
    %6261 = vmatprep.subr.mxu0 0.0
    %6262 = vmatpush2.msra.mxu0 0.0
    %6263 = vmatprep.subr.mxu0 0.0
    %6264 = vmatpush2.msra.mxu0 0.0
    %6265 = vmatprep.subr.mxu0 0.0
    %6266 = vmatpush2.msra.mxu0 0.0
    %6267 = vmatprep.subr.mxu0 0.0
    %6268 = vmatpush2.msra.mxu0 0.0
    %6269 = vmatprep.mubr.f32.mxu0 0.0
    %v6270 = vand.u32 %v6122, 4294901760
    %6271 = vmatmul.mubr.f32.gmra.mxu0 %v6270
    %v6272 = vpop.f32.mrf.mxu0
    %v6273 = vadd.f32 %v6197, %v6272
    %v6274 = vpop.f32.mrf.mxu0
    %6275 = vdwg.mxu0
    %6276 = vmatprep.subr.mxu0 0.0
    %6277 = vmatpush1.msra.mxu0 0.0
    %6278 = vmatprep.subr.mxu0 0.0
    %6279 = vmatpush1.msra.mxu0 0.0
    %6280 = vmatprep.subr.mxu0 0.0
    %6281 = vmatpush1.msra.mxu0 0.0
    %6282 = vmatprep.subr.mxu0 0.0
    %6283 = vmatpush1.msra.mxu0 0.0
    %6284 = vmatprep.subr.mxu0 0.0
    %6285 = vmatpush1.msra.mxu0 0.0
    %6286 = vmatprep.subr.mxu0 0.0
    %6287 = vmatpush1.msra.mxu0 0.0
    %6288 = vmatprep.subr.mxu0 0.0
    %6289 = vmatpush1.msra.mxu0 0.0
    %6290 = vmatprep.subr.mxu0 0.0
    %6291 = vmatpush1.msra.mxu0 0.0
    %6292 = vmatprep.subr.mxu0 0.0
    %6293 = vmatpush1.msra.mxu0 0.0
    %6294 = vmatprep.subr.mxu0 0.0
    %6295 = vmatpush1.msra.mxu0 0.0
    %6296 = vmatprep.subr.mxu0 0.0
    %6297 = vmatpush1.msra.mxu0 0.0
    %6298 = vmatprep.subr.mxu0 0.0
    %6299 = vmatpush1.msra.mxu0 0.0
    %6300 = vmatprep.subr.mxu0 0.0
    %6301 = vmatpush1.msra.mxu0 0.0
    %6302 = vmatprep.subr.mxu0 0.0
    %6303 = vmatpush1.msra.mxu0 0.0
    %6304 = vmatprep.subr.mxu0 0.0
    %6305 = vmatpush1.msra.mxu0 0.0
    %6306 = vmatprep.subr.mxu0 0.0
    %v6307 = vand.u32 %v6119, 4294901760
    %v6308 = vsub.f32 %v6119, %v6307
    %6309 = vmatpush1.msra.mxu0 %v6308
    %6310 = vmatprep.subr.mxu0 0.0
    %6311 = vmatpush2.msra.mxu0 0.0
    %6312 = vmatprep.subr.mxu0 0.0
    %6313 = vmatpush2.msra.mxu0 0.0
    %6314 = vmatprep.subr.mxu0 0.0
    %6315 = vmatpush2.msra.mxu0 0.0
    %6316 = vmatprep.subr.mxu0 0.0
    %6317 = vmatpush2.msra.mxu0 0.0
    %6318 = vmatprep.subr.mxu0 0.0
    %6319 = vmatpush2.msra.mxu0 0.0
    %6320 = vmatprep.subr.mxu0 0.0
    %6321 = vmatpush2.msra.mxu0 0.0
    %6322 = vmatprep.subr.mxu0 0.0
    %6323 = vmatpush2.msra.mxu0 0.0
    %6324 = vmatprep.subr.mxu0 0.0
    %6325 = vmatpush2.msra.mxu0 0.0
    %6326 = vmatprep.subr.mxu0 0.0
    %6327 = vmatpush2.msra.mxu0 0.0
    %6328 = vmatprep.subr.mxu0 0.0
    %6329 = vmatpush2.msra.mxu0 0.0
    %6330 = vmatprep.subr.mxu0 0.0
    %6331 = vmatpush2.msra.mxu0 0.0
    %6332 = vmatprep.subr.mxu0 0.0
    %6333 = vmatpush2.msra.mxu0 0.0
    %6334 = vmatprep.subr.mxu0 0.0
    %6335 = vmatpush2.msra.mxu0 0.0
    %6336 = vmatprep.subr.mxu0 0.0
    %6337 = vmatpush2.msra.mxu0 0.0
    %6338 = vmatprep.subr.mxu0 0.0
    %6339 = vmatpush2.msra.mxu0 0.0
    %6340 = vmatprep.subr.mxu0 0.0
    %6341 = vmatpush2.msra.mxu0 0.0
    %6342 = vmatprep.mubr.f32.mxu0 0.0
    %v6343 = vand.u32 %v6122, 4294901760
    %v6344 = vsub.f32 %v6122, %v6343
    %6345 = vmatmul.mubr.f32.gmra.mxu0 %v6344
    %v6346 = vpop.f32.mrf.mxu0
    %v6347 = vadd.f32 %v6273, %v6346
    %v6348 = vpop.f32.mrf.mxu0
    %6349 = vdwg.mxu0
    %6350 = vmatprep.subr.mxu0 0.0
    %6351 = vmatpush1.msra.mxu0 0.0
    %6352 = vmatprep.subr.mxu0 0.0
    %6353 = vmatpush1.msra.mxu0 0.0
    %6354 = vmatprep.subr.mxu0 0.0
    %6355 = vmatpush1.msra.mxu0 0.0
    %6356 = vmatprep.subr.mxu0 0.0
    %6357 = vmatpush1.msra.mxu0 0.0
    %6358 = vmatprep.subr.mxu0 0.0
    %6359 = vmatpush1.msra.mxu0 0.0
    %6360 = vmatprep.subr.mxu0 0.0
    %6361 = vmatpush1.msra.mxu0 0.0
    %6362 = vmatprep.subr.mxu0 0.0
    %6363 = vmatpush1.msra.mxu0 0.0
    %6364 = vmatprep.subr.mxu0 0.0
    %6365 = vmatpush1.msra.mxu0 0.0
    %6366 = vmatprep.subr.mxu0 0.0
    %6367 = vmatpush1.msra.mxu0 0.0
    %6368 = vmatprep.subr.mxu0 0.0
    %6369 = vmatpush1.msra.mxu0 0.0
    %6370 = vmatprep.subr.mxu0 0.0
    %6371 = vmatpush1.msra.mxu0 0.0
    %6372 = vmatprep.subr.mxu0 0.0
    %6373 = vmatpush1.msra.mxu0 0.0
    %6374 = vmatprep.subr.mxu0 0.0
    %6375 = vmatpush1.msra.mxu0 0.0
    %6376 = vmatprep.subr.mxu0 0.0
    %6377 = vmatpush1.msra.mxu0 0.0
    %6378 = vmatprep.subr.mxu0 0.0
    %6379 = vmatpush1.msra.mxu0 0.0
    %6380 = vmatprep.subr.mxu0 0.0
    %v6381 = vand.u32 %v6119, 4294901760
    %6382 = vmatpush1.msra.mxu0 %v6381
    %6383 = vmatprep.subr.mxu0 0.0
    %6384 = vmatpush2.msra.mxu0 0.0
    %6385 = vmatprep.subr.mxu0 0.0
    %6386 = vmatpush2.msra.mxu0 0.0
    %6387 = vmatprep.subr.mxu0 0.0
    %6388 = vmatpush2.msra.mxu0 0.0
    %6389 = vmatprep.subr.mxu0 0.0
    %6390 = vmatpush2.msra.mxu0 0.0
    %6391 = vmatprep.subr.mxu0 0.0
    %6392 = vmatpush2.msra.mxu0 0.0
    %6393 = vmatprep.subr.mxu0 0.0
    %6394 = vmatpush2.msra.mxu0 0.0
    %6395 = vmatprep.subr.mxu0 0.0
    %6396 = vmatpush2.msra.mxu0 0.0
    %6397 = vmatprep.subr.mxu0 0.0
    %6398 = vmatpush2.msra.mxu0 0.0
    %6399 = vmatprep.subr.mxu0 0.0
    %6400 = vmatpush2.msra.mxu0 0.0
    %6401 = vmatprep.subr.mxu0 0.0
    %6402 = vmatpush2.msra.mxu0 0.0
    %6403 = vmatprep.subr.mxu0 0.0
    %6404 = vmatpush2.msra.mxu0 0.0
    %6405 = vmatprep.subr.mxu0 0.0
    %6406 = vmatpush2.msra.mxu0 0.0
    %6407 = vmatprep.subr.mxu0 0.0
    %6408 = vmatpush2.msra.mxu0 0.0
    %6409 = vmatprep.subr.mxu0 0.0
    %6410 = vmatpush2.msra.mxu0 0.0
    %6411 = vmatprep.subr.mxu0 0.0
    %6412 = vmatpush2.msra.mxu0 0.0
    %6413 = vmatprep.subr.mxu0 0.0
    %6414 = vmatpush2.msra.mxu0 0.0
    %6415 = vmatprep.mubr.f32.mxu0 0.0
    %v6416 = vand.u32 %v6122, 4294901760
    %v6417 = vsub.f32 %v6122, %v6416
    %v6418 = vand.u32 %v6417, 4294901760
    %6419 = vmatmul.mubr.f32.gmra.mxu0 %v6418
    %v6420 = vpop.f32.mrf.mxu0
    %v6421 = vadd.f32 %v6347, %v6420
    %v6422 = vpop.f32.mrf.mxu0
    %6423 = vdwg.mxu0
    %6424 = vmatprep.subr.mxu0 0.0
    %6425 = vmatpush1.msra.mxu0 0.0
    %6426 = vmatprep.subr.mxu0 0.0
    %6427 = vmatpush1.msra.mxu0 0.0
    %6428 = vmatprep.subr.mxu0 0.0
    %6429 = vmatpush1.msra.mxu0 0.0
    %6430 = vmatprep.subr.mxu0 0.0
    %6431 = vmatpush1.msra.mxu0 0.0
    %6432 = vmatprep.subr.mxu0 0.0
    %6433 = vmatpush1.msra.mxu0 0.0
    %6434 = vmatprep.subr.mxu0 0.0
    %6435 = vmatpush1.msra.mxu0 0.0
    %6436 = vmatprep.subr.mxu0 0.0
    %6437 = vmatpush1.msra.mxu0 0.0
    %6438 = vmatprep.subr.mxu0 0.0
    %6439 = vmatpush1.msra.mxu0 0.0
    %6440 = vmatprep.subr.mxu0 0.0
    %6441 = vmatpush1.msra.mxu0 0.0
    %6442 = vmatprep.subr.mxu0 0.0
    %6443 = vmatpush1.msra.mxu0 0.0
    %6444 = vmatprep.subr.mxu0 0.0
    %6445 = vmatpush1.msra.mxu0 0.0
    %6446 = vmatprep.subr.mxu0 0.0
    %6447 = vmatpush1.msra.mxu0 0.0
    %6448 = vmatprep.subr.mxu0 0.0
    %6449 = vmatpush1.msra.mxu0 0.0
    %6450 = vmatprep.subr.mxu0 0.0
    %6451 = vmatpush1.msra.mxu0 0.0
    %6452 = vmatprep.subr.mxu0 0.0
    %6453 = vmatpush1.msra.mxu0 0.0
    %6454 = vmatprep.subr.mxu0 0.0
    %v6455 = vand.u32 %v6119, 4294901760
    %v6456 = vsub.f32 %v6119, %v6455
    %v6457 = vand.u32 %v6456, 4294901760
    %6458 = vmatpush1.msra.mxu0 %v6457
    %6459 = vmatprep.subr.mxu0 0.0
    %6460 = vmatpush2.msra.mxu0 0.0
    %6461 = vmatprep.subr.mxu0 0.0
    %6462 = vmatpush2.msra.mxu0 0.0
    %6463 = vmatprep.subr.mxu0 0.0
    %6464 = vmatpush2.msra.mxu0 0.0
    %6465 = vmatprep.subr.mxu0 0.0
    %6466 = vmatpush2.msra.mxu0 0.0
    %6467 = vmatprep.subr.mxu0 0.0
    %6468 = vmatpush2.msra.mxu0 0.0
    %6469 = vmatprep.subr.mxu0 0.0
    %6470 = vmatpush2.msra.mxu0 0.0
    %6471 = vmatprep.subr.mxu0 0.0
    %6472 = vmatpush2.msra.mxu0 0.0
    %6473 = vmatprep.subr.mxu0 0.0
    %6474 = vmatpush2.msra.mxu0 0.0
    %6475 = vmatprep.subr.mxu0 0.0
    %6476 = vmatpush2.msra.mxu0 0.0
    %6477 = vmatprep.subr.mxu0 0.0
    %6478 = vmatpush2.msra.mxu0 0.0
    %6479 = vmatprep.subr.mxu0 0.0
    %6480 = vmatpush2.msra.mxu0 0.0
    %6481 = vmatprep.subr.mxu0 0.0
    %6482 = vmatpush2.msra.mxu0 0.0
    %6483 = vmatprep.subr.mxu0 0.0
    %6484 = vmatpush2.msra.mxu0 0.0
    %6485 = vmatprep.subr.mxu0 0.0
    %6486 = vmatpush2.msra.mxu0 0.0
    %6487 = vmatprep.subr.mxu0 0.0
    %6488 = vmatpush2.msra.mxu0 0.0
    %6489 = vmatprep.subr.mxu0 0.0
    %6490 = vmatpush2.msra.mxu0 0.0
    %6491 = vmatprep.mubr.f32.mxu0 0.0
    %v6492 = vand.u32 %v6122, 4294901760
    %6493 = vmatmul.mubr.f32.gmra.mxu0 %v6492
    %v6494 = vpop.f32.mrf.mxu0
    %v6495 = vadd.f32 %v6421, %v6494
    %v6496 = vpop.f32.mrf.mxu0
    %6497 = vdwg.mxu0
    %6498 = vmatprep.subr.mxu0 0.0
    %6499 = vmatpush1.msra.mxu0 0.0
    %6500 = vmatprep.subr.mxu0 0.0
    %6501 = vmatpush1.msra.mxu0 0.0
    %6502 = vmatprep.subr.mxu0 0.0
    %6503 = vmatpush1.msra.mxu0 0.0
    %6504 = vmatprep.subr.mxu0 0.0
    %6505 = vmatpush1.msra.mxu0 0.0
    %6506 = vmatprep.subr.mxu0 0.0
    %6507 = vmatpush1.msra.mxu0 0.0
    %6508 = vmatprep.subr.mxu0 0.0
    %6509 = vmatpush1.msra.mxu0 0.0
    %6510 = vmatprep.subr.mxu0 0.0
    %6511 = vmatpush1.msra.mxu0 0.0
    %6512 = vmatprep.subr.mxu0 0.0
    %6513 = vmatpush1.msra.mxu0 0.0
    %6514 = vmatprep.subr.mxu0 0.0
    %6515 = vmatpush1.msra.mxu0 0.0
    %6516 = vmatprep.subr.mxu0 0.0
    %6517 = vmatpush1.msra.mxu0 0.0
    %6518 = vmatprep.subr.mxu0 0.0
    %6519 = vmatpush1.msra.mxu0 0.0
    %6520 = vmatprep.subr.mxu0 0.0
    %6521 = vmatpush1.msra.mxu0 0.0
    %6522 = vmatprep.subr.mxu0 0.0
    %6523 = vmatpush1.msra.mxu0 0.0
    %6524 = vmatprep.subr.mxu0 0.0
    %6525 = vmatpush1.msra.mxu0 0.0
    %6526 = vmatprep.subr.mxu0 0.0
    %6527 = vmatpush1.msra.mxu0 0.0
    %6528 = vmatprep.subr.mxu0 0.0
    %v6529 = vand.u32 %v6119, 4294901760
    %6530 = vmatpush1.msra.mxu0 %v6529
    %6531 = vmatprep.subr.mxu0 0.0
    %6532 = vmatpush2.msra.mxu0 0.0
    %6533 = vmatprep.subr.mxu0 0.0
    %6534 = vmatpush2.msra.mxu0 0.0
    %6535 = vmatprep.subr.mxu0 0.0
    %6536 = vmatpush2.msra.mxu0 0.0
    %6537 = vmatprep.subr.mxu0 0.0
    %6538 = vmatpush2.msra.mxu0 0.0
    %6539 = vmatprep.subr.mxu0 0.0
    %6540 = vmatpush2.msra.mxu0 0.0
    %6541 = vmatprep.subr.mxu0 0.0
    %6542 = vmatpush2.msra.mxu0 0.0
    %6543 = vmatprep.subr.mxu0 0.0
    %6544 = vmatpush2.msra.mxu0 0.0
    %6545 = vmatprep.subr.mxu0 0.0
    %6546 = vmatpush2.msra.mxu0 0.0
    %6547 = vmatprep.subr.mxu0 0.0
    %6548 = vmatpush2.msra.mxu0 0.0
    %6549 = vmatprep.subr.mxu0 0.0
    %6550 = vmatpush2.msra.mxu0 0.0
    %6551 = vmatprep.subr.mxu0 0.0
    %6552 = vmatpush2.msra.mxu0 0.0
    %6553 = vmatprep.subr.mxu0 0.0
    %6554 = vmatpush2.msra.mxu0 0.0
    %6555 = vmatprep.subr.mxu0 0.0
    %6556 = vmatpush2.msra.mxu0 0.0
    %6557 = vmatprep.subr.mxu0 0.0
    %6558 = vmatpush2.msra.mxu0 0.0
    %6559 = vmatprep.subr.mxu0 0.0
    %6560 = vmatpush2.msra.mxu0 0.0
    %6561 = vmatprep.subr.mxu0 0.0
    %6562 = vmatpush2.msra.mxu0 0.0
    %6563 = vmatprep.mubr.f32.mxu0 0.0
    %v6564 = vand.u32 %v6122, 4294901760
    %6565 = vmatmul.mubr.f32.gmra.mxu0 %v6564
    %v6566 = vpop.f32.mrf.mxu0
    %v6567 = vadd.f32 %v6495, %v6566
    %v6568 = vpop.f32.mrf.mxu0
    %6569 = vdwg.mxu0
    %6570 = vrot.lane.b32.xlu0 %v600, 64
    %v6571 = vpop.permute.xlu0 %6570
    %v6574 = vsel %vm607, %v4305, 0
    %6576 = vmatprep.subr.mxu0 0.0
    %6577 = vmatpush1.msra.mxu0 0.0
    %6578 = vmatprep.subr.mxu0 0.0
    %6579 = vmatpush1.msra.mxu0 0.0
    %6580 = vmatprep.subr.mxu0 0.0
    %6581 = vmatpush1.msra.mxu0 0.0
    %6582 = vmatprep.subr.mxu0 0.0
    %6583 = vmatpush1.msra.mxu0 0.0
    %6584 = vmatprep.subr.mxu0 0.0
    %6585 = vmatpush1.msra.mxu0 0.0
    %6586 = vmatprep.subr.mxu0 0.0
    %6587 = vmatpush1.msra.mxu0 0.0
    %6588 = vmatprep.subr.mxu0 0.0
    %6589 = vmatpush1.msra.mxu0 0.0
    %6590 = vmatprep.subr.mxu0 0.0
    %6591 = vmatpush1.msra.mxu0 0.0
    %6592 = vmatprep.subr.mxu0 0.0
    %6593 = vmatpush1.msra.mxu0 0.0
    %6594 = vmatprep.subr.mxu0 0.0
    %6595 = vmatpush1.msra.mxu0 0.0
    %6596 = vmatprep.subr.mxu0 0.0
    %6597 = vmatpush1.msra.mxu0 0.0
    %6598 = vmatprep.subr.mxu0 0.0
    %6599 = vmatpush1.msra.mxu0 0.0
    %6600 = vmatprep.subr.mxu0 0.0
    %6601 = vmatpush1.msra.mxu0 0.0
    %6602 = vmatprep.subr.mxu0 0.0
    %6603 = vmatpush1.msra.mxu0 0.0
    %6604 = vmatprep.subr.mxu0 0.0
    %6605 = vmatpush1.msra.mxu0 0.0
    %6606 = vmatprep.subr.mxu0 0.0
    %v6607 = vand.u32 %v6571, 4294901760
    %6608 = vmatpush1.msra.mxu0 %v6607
    %6609 = vmatprep.subr.mxu0 0.0
    %6610 = vmatpush2.msra.mxu0 0.0
    %6611 = vmatprep.subr.mxu0 0.0
    %6612 = vmatpush2.msra.mxu0 0.0
    %6613 = vmatprep.subr.mxu0 0.0
    %6614 = vmatpush2.msra.mxu0 0.0
    %6615 = vmatprep.subr.mxu0 0.0
    %6616 = vmatpush2.msra.mxu0 0.0
    %6617 = vmatprep.subr.mxu0 0.0
    %6618 = vmatpush2.msra.mxu0 0.0
    %6619 = vmatprep.subr.mxu0 0.0
    %6620 = vmatpush2.msra.mxu0 0.0
    %6621 = vmatprep.subr.mxu0 0.0
    %6622 = vmatpush2.msra.mxu0 0.0
    %6623 = vmatprep.subr.mxu0 0.0
    %6624 = vmatpush2.msra.mxu0 0.0
    %6625 = vmatprep.subr.mxu0 0.0
    %6626 = vmatpush2.msra.mxu0 0.0
    %6627 = vmatprep.subr.mxu0 0.0
    %6628 = vmatpush2.msra.mxu0 0.0
    %6629 = vmatprep.subr.mxu0 0.0
    %6630 = vmatpush2.msra.mxu0 0.0
    %6631 = vmatprep.subr.mxu0 0.0
    %6632 = vmatpush2.msra.mxu0 0.0
    %6633 = vmatprep.subr.mxu0 0.0
    %6634 = vmatpush2.msra.mxu0 0.0
    %6635 = vmatprep.subr.mxu0 0.0
    %6636 = vmatpush2.msra.mxu0 0.0
    %6637 = vmatprep.subr.mxu0 0.0
    %6638 = vmatpush2.msra.mxu0 0.0
    %6639 = vmatprep.subr.mxu0 0.0
    %6640 = vmatpush2.msra.mxu0 0.0
    %6641 = vmatprep.mubr.f32.mxu0 0.0
    %v6642 = vand.u32 %v6574, 4294901760
    %v6643 = vsub.f32 %v6574, %v6642
    %v6644 = vand.u32 %v6643, 4294901760
    %v6645 = vsub.f32 %v6643, %v6644
    %v6646 = vand.u32 %v6645, 4294901760
    %6647 = vmatmul.mubr.f32.gmra.mxu0 %v6646
    %v6648 = vpop.f32.mrf.mxu0
    %v6649 = vadd.f32 0.0, %v6648
    %v6650 = vpop.f32.mrf.mxu0
    %6651 = vdwg.mxu0
    %6652 = vmatprep.subr.mxu0 0.0
    %6653 = vmatpush1.msra.mxu0 0.0
    %6654 = vmatprep.subr.mxu0 0.0
    %6655 = vmatpush1.msra.mxu0 0.0
    %6656 = vmatprep.subr.mxu0 0.0
    %6657 = vmatpush1.msra.mxu0 0.0
    %6658 = vmatprep.subr.mxu0 0.0
    %6659 = vmatpush1.msra.mxu0 0.0
    %6660 = vmatprep.subr.mxu0 0.0
    %6661 = vmatpush1.msra.mxu0 0.0
    %6662 = vmatprep.subr.mxu0 0.0
    %6663 = vmatpush1.msra.mxu0 0.0
    %6664 = vmatprep.subr.mxu0 0.0
    %6665 = vmatpush1.msra.mxu0 0.0
    %6666 = vmatprep.subr.mxu0 0.0
    %6667 = vmatpush1.msra.mxu0 0.0
    %6668 = vmatprep.subr.mxu0 0.0
    %6669 = vmatpush1.msra.mxu0 0.0
    %6670 = vmatprep.subr.mxu0 0.0
    %6671 = vmatpush1.msra.mxu0 0.0
    %6672 = vmatprep.subr.mxu0 0.0
    %6673 = vmatpush1.msra.mxu0 0.0
    %6674 = vmatprep.subr.mxu0 0.0
    %6675 = vmatpush1.msra.mxu0 0.0
    %6676 = vmatprep.subr.mxu0 0.0
    %6677 = vmatpush1.msra.mxu0 0.0
    %6678 = vmatprep.subr.mxu0 0.0
    %6679 = vmatpush1.msra.mxu0 0.0
    %6680 = vmatprep.subr.mxu0 0.0
    %6681 = vmatpush1.msra.mxu0 0.0
    %6682 = vmatprep.subr.mxu0 0.0
    %v6683 = vand.u32 %v6571, 4294901760
    %v6684 = vsub.f32 %v6571, %v6683
    %v6685 = vand.u32 %v6684, 4294901760
    %v6686 = vsub.f32 %v6684, %v6685
    %v6687 = vand.u32 %v6686, 4294901760
    %6688 = vmatpush1.msra.mxu0 %v6687
    %6689 = vmatprep.subr.mxu0 0.0
    %6690 = vmatpush2.msra.mxu0 0.0
    %6691 = vmatprep.subr.mxu0 0.0
    %6692 = vmatpush2.msra.mxu0 0.0
    %6693 = vmatprep.subr.mxu0 0.0
    %6694 = vmatpush2.msra.mxu0 0.0
    %6695 = vmatprep.subr.mxu0 0.0
    %6696 = vmatpush2.msra.mxu0 0.0
    %6697 = vmatprep.subr.mxu0 0.0
    %6698 = vmatpush2.msra.mxu0 0.0
    %6699 = vmatprep.subr.mxu0 0.0
    %6700 = vmatpush2.msra.mxu0 0.0
    %6701 = vmatprep.subr.mxu0 0.0
    %6702 = vmatpush2.msra.mxu0 0.0
    %6703 = vmatprep.subr.mxu0 0.0
    %6704 = vmatpush2.msra.mxu0 0.0
    %6705 = vmatprep.subr.mxu0 0.0
    %6706 = vmatpush2.msra.mxu0 0.0
    %6707 = vmatprep.subr.mxu0 0.0
    %6708 = vmatpush2.msra.mxu0 0.0
    %6709 = vmatprep.subr.mxu0 0.0
    %6710 = vmatpush2.msra.mxu0 0.0
    %6711 = vmatprep.subr.mxu0 0.0
    %6712 = vmatpush2.msra.mxu0 0.0
    %6713 = vmatprep.subr.mxu0 0.0
    %6714 = vmatpush2.msra.mxu0 0.0
    %6715 = vmatprep.subr.mxu0 0.0
    %6716 = vmatpush2.msra.mxu0 0.0
    %6717 = vmatprep.subr.mxu0 0.0
    %6718 = vmatpush2.msra.mxu0 0.0
    %6719 = vmatprep.subr.mxu0 0.0
    %6720 = vmatpush2.msra.mxu0 0.0
    %6721 = vmatprep.mubr.f32.mxu0 0.0
    %v6722 = vand.u32 %v6574, 4294901760
    %6723 = vmatmul.mubr.f32.gmra.mxu0 %v6722
    %v6724 = vpop.f32.mrf.mxu0
    %v6725 = vadd.f32 %v6649, %v6724
    %v6726 = vpop.f32.mrf.mxu0
    %6727 = vdwg.mxu0
    %6728 = vmatprep.subr.mxu0 0.0
    %6729 = vmatpush1.msra.mxu0 0.0
    %6730 = vmatprep.subr.mxu0 0.0
    %6731 = vmatpush1.msra.mxu0 0.0
    %6732 = vmatprep.subr.mxu0 0.0
    %6733 = vmatpush1.msra.mxu0 0.0
    %6734 = vmatprep.subr.mxu0 0.0
    %6735 = vmatpush1.msra.mxu0 0.0
    %6736 = vmatprep.subr.mxu0 0.0
    %6737 = vmatpush1.msra.mxu0 0.0
    %6738 = vmatprep.subr.mxu0 0.0
    %6739 = vmatpush1.msra.mxu0 0.0
    %6740 = vmatprep.subr.mxu0 0.0
    %6741 = vmatpush1.msra.mxu0 0.0
    %6742 = vmatprep.subr.mxu0 0.0
    %6743 = vmatpush1.msra.mxu0 0.0
    %6744 = vmatprep.subr.mxu0 0.0
    %6745 = vmatpush1.msra.mxu0 0.0
    %6746 = vmatprep.subr.mxu0 0.0
    %6747 = vmatpush1.msra.mxu0 0.0
    %6748 = vmatprep.subr.mxu0 0.0
    %6749 = vmatpush1.msra.mxu0 0.0
    %6750 = vmatprep.subr.mxu0 0.0
    %6751 = vmatpush1.msra.mxu0 0.0
    %6752 = vmatprep.subr.mxu0 0.0
    %6753 = vmatpush1.msra.mxu0 0.0
    %6754 = vmatprep.subr.mxu0 0.0
    %6755 = vmatpush1.msra.mxu0 0.0
    %6756 = vmatprep.subr.mxu0 0.0
    %6757 = vmatpush1.msra.mxu0 0.0
    %6758 = vmatprep.subr.mxu0 0.0
    %v6759 = vand.u32 %v6571, 4294901760
    %v6760 = vsub.f32 %v6571, %v6759
    %6761 = vmatpush1.msra.mxu0 %v6760
    %6762 = vmatprep.subr.mxu0 0.0
    %6763 = vmatpush2.msra.mxu0 0.0
    %6764 = vmatprep.subr.mxu0 0.0
    %6765 = vmatpush2.msra.mxu0 0.0
    %6766 = vmatprep.subr.mxu0 0.0
    %6767 = vmatpush2.msra.mxu0 0.0
    %6768 = vmatprep.subr.mxu0 0.0
    %6769 = vmatpush2.msra.mxu0 0.0
    %6770 = vmatprep.subr.mxu0 0.0
    %6771 = vmatpush2.msra.mxu0 0.0
    %6772 = vmatprep.subr.mxu0 0.0
    %6773 = vmatpush2.msra.mxu0 0.0
    %6774 = vmatprep.subr.mxu0 0.0
    %6775 = vmatpush2.msra.mxu0 0.0
    %6776 = vmatprep.subr.mxu0 0.0
    %6777 = vmatpush2.msra.mxu0 0.0
    %6778 = vmatprep.subr.mxu0 0.0
    %6779 = vmatpush2.msra.mxu0 0.0
    %6780 = vmatprep.subr.mxu0 0.0
    %6781 = vmatpush2.msra.mxu0 0.0
    %6782 = vmatprep.subr.mxu0 0.0
    %6783 = vmatpush2.msra.mxu0 0.0
    %6784 = vmatprep.subr.mxu0 0.0
    %6785 = vmatpush2.msra.mxu0 0.0
    %6786 = vmatprep.subr.mxu0 0.0
    %6787 = vmatpush2.msra.mxu0 0.0
    %6788 = vmatprep.subr.mxu0 0.0
    %6789 = vmatpush2.msra.mxu0 0.0
    %6790 = vmatprep.subr.mxu0 0.0
    %6791 = vmatpush2.msra.mxu0 0.0
    %6792 = vmatprep.subr.mxu0 0.0
    %6793 = vmatpush2.msra.mxu0 0.0
    %6794 = vmatprep.mubr.f32.mxu0 0.0
    %v6795 = vand.u32 %v6574, 4294901760
    %v6796 = vsub.f32 %v6574, %v6795
    %6797 = vmatmul.mubr.f32.gmra.mxu0 %v6796
    %v6798 = vpop.f32.mrf.mxu0
    %v6799 = vadd.f32 %v6725, %v6798
    %v6800 = vpop.f32.mrf.mxu0
    %6801 = vdwg.mxu0
    %6802 = vmatprep.subr.mxu0 0.0
    %6803 = vmatpush1.msra.mxu0 0.0
    %6804 = vmatprep.subr.mxu0 0.0
    %6805 = vmatpush1.msra.mxu0 0.0
    %6806 = vmatprep.subr.mxu0 0.0
    %6807 = vmatpush1.msra.mxu0 0.0
    %6808 = vmatprep.subr.mxu0 0.0
    %6809 = vmatpush1.msra.mxu0 0.0
    %6810 = vmatprep.subr.mxu0 0.0
    %6811 = vmatpush1.msra.mxu0 0.0
    %6812 = vmatprep.subr.mxu0 0.0
    %6813 = vmatpush1.msra.mxu0 0.0
    %6814 = vmatprep.subr.mxu0 0.0
    %6815 = vmatpush1.msra.mxu0 0.0
    %6816 = vmatprep.subr.mxu0 0.0
    %6817 = vmatpush1.msra.mxu0 0.0
    %6818 = vmatprep.subr.mxu0 0.0
    %6819 = vmatpush1.msra.mxu0 0.0
    %6820 = vmatprep.subr.mxu0 0.0
    %6821 = vmatpush1.msra.mxu0 0.0
    %6822 = vmatprep.subr.mxu0 0.0
    %6823 = vmatpush1.msra.mxu0 0.0
    %6824 = vmatprep.subr.mxu0 0.0
    %6825 = vmatpush1.msra.mxu0 0.0
    %6826 = vmatprep.subr.mxu0 0.0
    %6827 = vmatpush1.msra.mxu0 0.0
    %6828 = vmatprep.subr.mxu0 0.0
    %6829 = vmatpush1.msra.mxu0 0.0
    %6830 = vmatprep.subr.mxu0 0.0
    %6831 = vmatpush1.msra.mxu0 0.0
    %6832 = vmatprep.subr.mxu0 0.0
    %v6833 = vand.u32 %v6571, 4294901760
    %6834 = vmatpush1.msra.mxu0 %v6833
    %6835 = vmatprep.subr.mxu0 0.0
    %6836 = vmatpush2.msra.mxu0 0.0
    %6837 = vmatprep.subr.mxu0 0.0
    %6838 = vmatpush2.msra.mxu0 0.0
    %6839 = vmatprep.subr.mxu0 0.0
    %6840 = vmatpush2.msra.mxu0 0.0
    %6841 = vmatprep.subr.mxu0 0.0
    %6842 = vmatpush2.msra.mxu0 0.0
    %6843 = vmatprep.subr.mxu0 0.0
    %6844 = vmatpush2.msra.mxu0 0.0
    %6845 = vmatprep.subr.mxu0 0.0
    %6846 = vmatpush2.msra.mxu0 0.0
    %6847 = vmatprep.subr.mxu0 0.0
    %6848 = vmatpush2.msra.mxu0 0.0
    %6849 = vmatprep.subr.mxu0 0.0
    %6850 = vmatpush2.msra.mxu0 0.0
    %6851 = vmatprep.subr.mxu0 0.0
    %6852 = vmatpush2.msra.mxu0 0.0
    %6853 = vmatprep.subr.mxu0 0.0
    %6854 = vmatpush2.msra.mxu0 0.0
    %6855 = vmatprep.subr.mxu0 0.0
    %6856 = vmatpush2.msra.mxu0 0.0
    %6857 = vmatprep.subr.mxu0 0.0
    %6858 = vmatpush2.msra.mxu0 0.0
    %6859 = vmatprep.subr.mxu0 0.0
    %6860 = vmatpush2.msra.mxu0 0.0
    %6861 = vmatprep.subr.mxu0 0.0
    %6862 = vmatpush2.msra.mxu0 0.0
    %6863 = vmatprep.subr.mxu0 0.0
    %6864 = vmatpush2.msra.mxu0 0.0
    %6865 = vmatprep.subr.mxu0 0.0
    %6866 = vmatpush2.msra.mxu0 0.0
    %6867 = vmatprep.mubr.f32.mxu0 0.0
    %v6868 = vand.u32 %v6574, 4294901760
    %v6869 = vsub.f32 %v6574, %v6868
    %v6870 = vand.u32 %v6869, 4294901760
    %6871 = vmatmul.mubr.f32.gmra.mxu0 %v6870
    %v6872 = vpop.f32.mrf.mxu0
    %v6873 = vadd.f32 %v6799, %v6872
    %v6874 = vpop.f32.mrf.mxu0
    %6875 = vdwg.mxu0
    %6876 = vmatprep.subr.mxu0 0.0
    %6877 = vmatpush1.msra.mxu0 0.0
    %6878 = vmatprep.subr.mxu0 0.0
    %6879 = vmatpush1.msra.mxu0 0.0
    %6880 = vmatprep.subr.mxu0 0.0
    %6881 = vmatpush1.msra.mxu0 0.0
    %6882 = vmatprep.subr.mxu0 0.0
    %6883 = vmatpush1.msra.mxu0 0.0
    %6884 = vmatprep.subr.mxu0 0.0
    %6885 = vmatpush1.msra.mxu0 0.0
    %6886 = vmatprep.subr.mxu0 0.0
    %6887 = vmatpush1.msra.mxu0 0.0
    %6888 = vmatprep.subr.mxu0 0.0
    %6889 = vmatpush1.msra.mxu0 0.0
    %6890 = vmatprep.subr.mxu0 0.0
    %6891 = vmatpush1.msra.mxu0 0.0
    %6892 = vmatprep.subr.mxu0 0.0
    %6893 = vmatpush1.msra.mxu0 0.0
    %6894 = vmatprep.subr.mxu0 0.0
    %6895 = vmatpush1.msra.mxu0 0.0
    %6896 = vmatprep.subr.mxu0 0.0
    %6897 = vmatpush1.msra.mxu0 0.0
    %6898 = vmatprep.subr.mxu0 0.0
    %6899 = vmatpush1.msra.mxu0 0.0
    %6900 = vmatprep.subr.mxu0 0.0
    %6901 = vmatpush1.msra.mxu0 0.0
    %6902 = vmatprep.subr.mxu0 0.0
    %6903 = vmatpush1.msra.mxu0 0.0
    %6904 = vmatprep.subr.mxu0 0.0
    %6905 = vmatpush1.msra.mxu0 0.0
    %6906 = vmatprep.subr.mxu0 0.0
    %v6907 = vand.u32 %v6571, 4294901760
    %v6908 = vsub.f32 %v6571, %v6907
    %v6909 = vand.u32 %v6908, 4294901760
    %6910 = vmatpush1.msra.mxu0 %v6909
    %6911 = vmatprep.subr.mxu0 0.0
    %6912 = vmatpush2.msra.mxu0 0.0
    %6913 = vmatprep.subr.mxu0 0.0
    %6914 = vmatpush2.msra.mxu0 0.0
    %6915 = vmatprep.subr.mxu0 0.0
    %6916 = vmatpush2.msra.mxu0 0.0
    %6917 = vmatprep.subr.mxu0 0.0
    %6918 = vmatpush2.msra.mxu0 0.0
    %6919 = vmatprep.subr.mxu0 0.0
    %6920 = vmatpush2.msra.mxu0 0.0
    %6921 = vmatprep.subr.mxu0 0.0
    %6922 = vmatpush2.msra.mxu0 0.0
    %6923 = vmatprep.subr.mxu0 0.0
    %6924 = vmatpush2.msra.mxu0 0.0
    %6925 = vmatprep.subr.mxu0 0.0
    %6926 = vmatpush2.msra.mxu0 0.0
    %6927 = vmatprep.subr.mxu0 0.0
    %6928 = vmatpush2.msra.mxu0 0.0
    %6929 = vmatprep.subr.mxu0 0.0
    %6930 = vmatpush2.msra.mxu0 0.0
    %6931 = vmatprep.subr.mxu0 0.0
    %6932 = vmatpush2.msra.mxu0 0.0
    %6933 = vmatprep.subr.mxu0 0.0
    %6934 = vmatpush2.msra.mxu0 0.0
    %6935 = vmatprep.subr.mxu0 0.0
    %6936 = vmatpush2.msra.mxu0 0.0
    %6937 = vmatprep.subr.mxu0 0.0
    %6938 = vmatpush2.msra.mxu0 0.0
    %6939 = vmatprep.subr.mxu0 0.0
    %6940 = vmatpush2.msra.mxu0 0.0
    %6941 = vmatprep.subr.mxu0 0.0
    %6942 = vmatpush2.msra.mxu0 0.0
    %6943 = vmatprep.mubr.f32.mxu0 0.0
    %v6944 = vand.u32 %v6574, 4294901760
    %6945 = vmatmul.mubr.f32.gmra.mxu0 %v6944
    %v6946 = vpop.f32.mrf.mxu0
    %v6947 = vadd.f32 %v6873, %v6946
    %v6948 = vpop.f32.mrf.mxu0
    %6949 = vdwg.mxu0
    %6950 = vmatprep.subr.mxu0 0.0
    %6951 = vmatpush1.msra.mxu0 0.0
    %6952 = vmatprep.subr.mxu0 0.0
    %6953 = vmatpush1.msra.mxu0 0.0
    %6954 = vmatprep.subr.mxu0 0.0
    %6955 = vmatpush1.msra.mxu0 0.0
    %6956 = vmatprep.subr.mxu0 0.0
    %6957 = vmatpush1.msra.mxu0 0.0
    %6958 = vmatprep.subr.mxu0 0.0
    %6959 = vmatpush1.msra.mxu0 0.0
    %6960 = vmatprep.subr.mxu0 0.0
    %6961 = vmatpush1.msra.mxu0 0.0
    %6962 = vmatprep.subr.mxu0 0.0
    %6963 = vmatpush1.msra.mxu0 0.0
    %6964 = vmatprep.subr.mxu0 0.0
    %6965 = vmatpush1.msra.mxu0 0.0
    %6966 = vmatprep.subr.mxu0 0.0
    %6967 = vmatpush1.msra.mxu0 0.0
    %6968 = vmatprep.subr.mxu0 0.0
    %6969 = vmatpush1.msra.mxu0 0.0
    %6970 = vmatprep.subr.mxu0 0.0
    %6971 = vmatpush1.msra.mxu0 0.0
    %6972 = vmatprep.subr.mxu0 0.0
    %6973 = vmatpush1.msra.mxu0 0.0
    %6974 = vmatprep.subr.mxu0 0.0
    %6975 = vmatpush1.msra.mxu0 0.0
    %6976 = vmatprep.subr.mxu0 0.0
    %6977 = vmatpush1.msra.mxu0 0.0
    %6978 = vmatprep.subr.mxu0 0.0
    %6979 = vmatpush1.msra.mxu0 0.0
    %6980 = vmatprep.subr.mxu0 0.0
    %v6981 = vand.u32 %v6571, 4294901760
    %6982 = vmatpush1.msra.mxu0 %v6981
    %6983 = vmatprep.subr.mxu0 0.0
    %6984 = vmatpush2.msra.mxu0 0.0
    %6985 = vmatprep.subr.mxu0 0.0
    %6986 = vmatpush2.msra.mxu0 0.0
    %6987 = vmatprep.subr.mxu0 0.0
    %6988 = vmatpush2.msra.mxu0 0.0
    %6989 = vmatprep.subr.mxu0 0.0
    %6990 = vmatpush2.msra.mxu0 0.0
    %6991 = vmatprep.subr.mxu0 0.0
    %6992 = vmatpush2.msra.mxu0 0.0
    %6993 = vmatprep.subr.mxu0 0.0
    %6994 = vmatpush2.msra.mxu0 0.0
    %6995 = vmatprep.subr.mxu0 0.0
    %6996 = vmatpush2.msra.mxu0 0.0
    %6997 = vmatprep.subr.mxu0 0.0
    %6998 = vmatpush2.msra.mxu0 0.0
    %6999 = vmatprep.subr.mxu0 0.0
    %7000 = vmatpush2.msra.mxu0 0.0
    %7001 = vmatprep.subr.mxu0 0.0
    %7002 = vmatpush2.msra.mxu0 0.0
    %7003 = vmatprep.subr.mxu0 0.0
    %7004 = vmatpush2.msra.mxu0 0.0
    %7005 = vmatprep.subr.mxu0 0.0
    %7006 = vmatpush2.msra.mxu0 0.0
    %7007 = vmatprep.subr.mxu0 0.0
    %7008 = vmatpush2.msra.mxu0 0.0
    %7009 = vmatprep.subr.mxu0 0.0
    %7010 = vmatpush2.msra.mxu0 0.0
    %7011 = vmatprep.subr.mxu0 0.0
    %7012 = vmatpush2.msra.mxu0 0.0
    %7013 = vmatprep.subr.mxu0 0.0
    %7014 = vmatpush2.msra.mxu0 0.0
    %7015 = vmatprep.mubr.f32.mxu0 0.0
    %v7016 = vand.u32 %v6574, 4294901760
    %7017 = vmatmul.mubr.f32.gmra.mxu0 %v7016
    %v7018 = vpop.f32.mrf.mxu0
    %v7019 = vadd.f32 %v6947, %v7018
    %v7020 = vpop.f32.mrf.mxu0
    %7021 = vdwg.mxu0
    %7022 = vrot.lane.b32.xlu0 %v602, 64
    %v7023 = vpop.permute.xlu0 %7022
    %v7026 = vsel %vm607, %v4307, 0
    %7028 = vmatprep.subr.mxu0 0.0
    %7029 = vmatpush1.msra.mxu0 0.0
    %7030 = vmatprep.subr.mxu0 0.0
    %7031 = vmatpush1.msra.mxu0 0.0
    %7032 = vmatprep.subr.mxu0 0.0
    %7033 = vmatpush1.msra.mxu0 0.0
    %7034 = vmatprep.subr.mxu0 0.0
    %7035 = vmatpush1.msra.mxu0 0.0
    %7036 = vmatprep.subr.mxu0 0.0
    %7037 = vmatpush1.msra.mxu0 0.0
    %7038 = vmatprep.subr.mxu0 0.0
    %7039 = vmatpush1.msra.mxu0 0.0
    %7040 = vmatprep.subr.mxu0 0.0
    %7041 = vmatpush1.msra.mxu0 0.0
    %7042 = vmatprep.subr.mxu0 0.0
    %7043 = vmatpush1.msra.mxu0 0.0
    %7044 = vmatprep.subr.mxu0 0.0
    %7045 = vmatpush1.msra.mxu0 0.0
    %7046 = vmatprep.subr.mxu0 0.0
    %7047 = vmatpush1.msra.mxu0 0.0
    %7048 = vmatprep.subr.mxu0 0.0
    %7049 = vmatpush1.msra.mxu0 0.0
    %7050 = vmatprep.subr.mxu0 0.0
    %7051 = vmatpush1.msra.mxu0 0.0
    %7052 = vmatprep.subr.mxu0 0.0
    %7053 = vmatpush1.msra.mxu0 0.0
    %7054 = vmatprep.subr.mxu0 0.0
    %7055 = vmatpush1.msra.mxu0 0.0
    %7056 = vmatprep.subr.mxu0 0.0
    %7057 = vmatpush1.msra.mxu0 0.0
    %7058 = vmatprep.subr.mxu0 0.0
    %v7059 = vand.u32 %v7023, 4294901760
    %7060 = vmatpush1.msra.mxu0 %v7059
    %7061 = vmatprep.subr.mxu0 0.0
    %7062 = vmatpush2.msra.mxu0 0.0
    %7063 = vmatprep.subr.mxu0 0.0
    %7064 = vmatpush2.msra.mxu0 0.0
    %7065 = vmatprep.subr.mxu0 0.0
    %7066 = vmatpush2.msra.mxu0 0.0
    %7067 = vmatprep.subr.mxu0 0.0
    %7068 = vmatpush2.msra.mxu0 0.0
    %7069 = vmatprep.subr.mxu0 0.0
    %7070 = vmatpush2.msra.mxu0 0.0
    %7071 = vmatprep.subr.mxu0 0.0
    %7072 = vmatpush2.msra.mxu0 0.0
    %7073 = vmatprep.subr.mxu0 0.0
    %7074 = vmatpush2.msra.mxu0 0.0
    %7075 = vmatprep.subr.mxu0 0.0
    %7076 = vmatpush2.msra.mxu0 0.0
    %7077 = vmatprep.subr.mxu0 0.0
    %7078 = vmatpush2.msra.mxu0 0.0
    %7079 = vmatprep.subr.mxu0 0.0
    %7080 = vmatpush2.msra.mxu0 0.0
    %7081 = vmatprep.subr.mxu0 0.0
    %7082 = vmatpush2.msra.mxu0 0.0
    %7083 = vmatprep.subr.mxu0 0.0
    %7084 = vmatpush2.msra.mxu0 0.0
    %7085 = vmatprep.subr.mxu0 0.0
    %7086 = vmatpush2.msra.mxu0 0.0
    %7087 = vmatprep.subr.mxu0 0.0
    %7088 = vmatpush2.msra.mxu0 0.0
    %7089 = vmatprep.subr.mxu0 0.0
    %7090 = vmatpush2.msra.mxu0 0.0
    %7091 = vmatprep.subr.mxu0 0.0
    %7092 = vmatpush2.msra.mxu0 0.0
    %7093 = vmatprep.mubr.f32.mxu0 0.0
    %v7094 = vand.u32 %v7026, 4294901760
    %v7095 = vsub.f32 %v7026, %v7094
    %v7096 = vand.u32 %v7095, 4294901760
    %v7097 = vsub.f32 %v7095, %v7096
    %v7098 = vand.u32 %v7097, 4294901760
    %7099 = vmatmul.mubr.f32.gmra.mxu0 %v7098
    %v7100 = vpop.f32.mrf.mxu0
    %v7101 = vadd.f32 0.0, %v7100
    %v7102 = vpop.f32.mrf.mxu0
    %7103 = vdwg.mxu0
    %7104 = vmatprep.subr.mxu0 0.0
    %7105 = vmatpush1.msra.mxu0 0.0
    %7106 = vmatprep.subr.mxu0 0.0
    %7107 = vmatpush1.msra.mxu0 0.0
    %7108 = vmatprep.subr.mxu0 0.0
    %7109 = vmatpush1.msra.mxu0 0.0
    %7110 = vmatprep.subr.mxu0 0.0
    %7111 = vmatpush1.msra.mxu0 0.0
    %7112 = vmatprep.subr.mxu0 0.0
    %7113 = vmatpush1.msra.mxu0 0.0
    %7114 = vmatprep.subr.mxu0 0.0
    %7115 = vmatpush1.msra.mxu0 0.0
    %7116 = vmatprep.subr.mxu0 0.0
    %7117 = vmatpush1.msra.mxu0 0.0
    %7118 = vmatprep.subr.mxu0 0.0
    %7119 = vmatpush1.msra.mxu0 0.0
    %7120 = vmatprep.subr.mxu0 0.0
    %7121 = vmatpush1.msra.mxu0 0.0
    %7122 = vmatprep.subr.mxu0 0.0
    %7123 = vmatpush1.msra.mxu0 0.0
    %7124 = vmatprep.subr.mxu0 0.0
    %7125 = vmatpush1.msra.mxu0 0.0
    %7126 = vmatprep.subr.mxu0 0.0
    %7127 = vmatpush1.msra.mxu0 0.0
    %7128 = vmatprep.subr.mxu0 0.0
    %7129 = vmatpush1.msra.mxu0 0.0
    %7130 = vmatprep.subr.mxu0 0.0
    %7131 = vmatpush1.msra.mxu0 0.0
    %7132 = vmatprep.subr.mxu0 0.0
    %7133 = vmatpush1.msra.mxu0 0.0
    %7134 = vmatprep.subr.mxu0 0.0
    %v7135 = vand.u32 %v7023, 4294901760
    %v7136 = vsub.f32 %v7023, %v7135
    %v7137 = vand.u32 %v7136, 4294901760
    %v7138 = vsub.f32 %v7136, %v7137
    %v7139 = vand.u32 %v7138, 4294901760
    %7140 = vmatpush1.msra.mxu0 %v7139
    %7141 = vmatprep.subr.mxu0 0.0
    %7142 = vmatpush2.msra.mxu0 0.0
    %7143 = vmatprep.subr.mxu0 0.0
    %7144 = vmatpush2.msra.mxu0 0.0
    %7145 = vmatprep.subr.mxu0 0.0
    %7146 = vmatpush2.msra.mxu0 0.0
    %7147 = vmatprep.subr.mxu0 0.0
    %7148 = vmatpush2.msra.mxu0 0.0
    %7149 = vmatprep.subr.mxu0 0.0
    %7150 = vmatpush2.msra.mxu0 0.0
    %7151 = vmatprep.subr.mxu0 0.0
    %7152 = vmatpush2.msra.mxu0 0.0
    %7153 = vmatprep.subr.mxu0 0.0
    %7154 = vmatpush2.msra.mxu0 0.0
    %7155 = vmatprep.subr.mxu0 0.0
    %7156 = vmatpush2.msra.mxu0 0.0
    %7157 = vmatprep.subr.mxu0 0.0
    %7158 = vmatpush2.msra.mxu0 0.0
    %7159 = vmatprep.subr.mxu0 0.0
    %7160 = vmatpush2.msra.mxu0 0.0
    %7161 = vmatprep.subr.mxu0 0.0
    %7162 = vmatpush2.msra.mxu0 0.0
    %7163 = vmatprep.subr.mxu0 0.0
    %7164 = vmatpush2.msra.mxu0 0.0
    %7165 = vmatprep.subr.mxu0 0.0
    %7166 = vmatpush2.msra.mxu0 0.0
    %7167 = vmatprep.subr.mxu0 0.0
    %7168 = vmatpush2.msra.mxu0 0.0
    %7169 = vmatprep.subr.mxu0 0.0
    %7170 = vmatpush2.msra.mxu0 0.0
    %7171 = vmatprep.subr.mxu0 0.0
    %7172 = vmatpush2.msra.mxu0 0.0
    %7173 = vmatprep.mubr.f32.mxu0 0.0
    %v7174 = vand.u32 %v7026, 4294901760
    %7175 = vmatmul.mubr.f32.gmra.mxu0 %v7174
    %v7176 = vpop.f32.mrf.mxu0
    %v7177 = vadd.f32 %v7101, %v7176
    %v7178 = vpop.f32.mrf.mxu0
    %7179 = vdwg.mxu0
    %7180 = vmatprep.subr.mxu0 0.0
    %7181 = vmatpush1.msra.mxu0 0.0
    %7182 = vmatprep.subr.mxu0 0.0
    %7183 = vmatpush1.msra.mxu0 0.0
    %7184 = vmatprep.subr.mxu0 0.0
    %7185 = vmatpush1.msra.mxu0 0.0
    %7186 = vmatprep.subr.mxu0 0.0
    %7187 = vmatpush1.msra.mxu0 0.0
    %7188 = vmatprep.subr.mxu0 0.0
    %7189 = vmatpush1.msra.mxu0 0.0
    %7190 = vmatprep.subr.mxu0 0.0
    %7191 = vmatpush1.msra.mxu0 0.0
    %7192 = vmatprep.subr.mxu0 0.0
    %7193 = vmatpush1.msra.mxu0 0.0
    %7194 = vmatprep.subr.mxu0 0.0
    %7195 = vmatpush1.msra.mxu0 0.0
    %7196 = vmatprep.subr.mxu0 0.0
    %7197 = vmatpush1.msra.mxu0 0.0
    %7198 = vmatprep.subr.mxu0 0.0
    %7199 = vmatpush1.msra.mxu0 0.0
    %7200 = vmatprep.subr.mxu0 0.0
    %7201 = vmatpush1.msra.mxu0 0.0
    %7202 = vmatprep.subr.mxu0 0.0
    %7203 = vmatpush1.msra.mxu0 0.0
    %7204 = vmatprep.subr.mxu0 0.0
    %7205 = vmatpush1.msra.mxu0 0.0
    %7206 = vmatprep.subr.mxu0 0.0
    %7207 = vmatpush1.msra.mxu0 0.0
    %7208 = vmatprep.subr.mxu0 0.0
    %7209 = vmatpush1.msra.mxu0 0.0
    %7210 = vmatprep.subr.mxu0 0.0
    %v7211 = vand.u32 %v7023, 4294901760
    %v7212 = vsub.f32 %v7023, %v7211
    %7213 = vmatpush1.msra.mxu0 %v7212
    %7214 = vmatprep.subr.mxu0 0.0
    %7215 = vmatpush2.msra.mxu0 0.0
    %7216 = vmatprep.subr.mxu0 0.0
    %7217 = vmatpush2.msra.mxu0 0.0
    %7218 = vmatprep.subr.mxu0 0.0
    %7219 = vmatpush2.msra.mxu0 0.0
    %7220 = vmatprep.subr.mxu0 0.0
    %7221 = vmatpush2.msra.mxu0 0.0
    %7222 = vmatprep.subr.mxu0 0.0
    %7223 = vmatpush2.msra.mxu0 0.0
    %7224 = vmatprep.subr.mxu0 0.0
    %7225 = vmatpush2.msra.mxu0 0.0
    %7226 = vmatprep.subr.mxu0 0.0
    %7227 = vmatpush2.msra.mxu0 0.0
    %7228 = vmatprep.subr.mxu0 0.0
    %7229 = vmatpush2.msra.mxu0 0.0
    %7230 = vmatprep.subr.mxu0 0.0
    %7231 = vmatpush2.msra.mxu0 0.0
    %7232 = vmatprep.subr.mxu0 0.0
    %7233 = vmatpush2.msra.mxu0 0.0
    %7234 = vmatprep.subr.mxu0 0.0
    %7235 = vmatpush2.msra.mxu0 0.0
    %7236 = vmatprep.subr.mxu0 0.0
    %7237 = vmatpush2.msra.mxu0 0.0
    %7238 = vmatprep.subr.mxu0 0.0
    %7239 = vmatpush2.msra.mxu0 0.0
    %7240 = vmatprep.subr.mxu0 0.0
    %7241 = vmatpush2.msra.mxu0 0.0
    %7242 = vmatprep.subr.mxu0 0.0
    %7243 = vmatpush2.msra.mxu0 0.0
    %7244 = vmatprep.subr.mxu0 0.0
    %7245 = vmatpush2.msra.mxu0 0.0
    %7246 = vmatprep.mubr.f32.mxu0 0.0
    %v7247 = vand.u32 %v7026, 4294901760
    %v7248 = vsub.f32 %v7026, %v7247
    %7249 = vmatmul.mubr.f32.gmra.mxu0 %v7248
    %v7250 = vpop.f32.mrf.mxu0
    %v7251 = vadd.f32 %v7177, %v7250
    %v7252 = vpop.f32.mrf.mxu0
    %7253 = vdwg.mxu0
    %7254 = vmatprep.subr.mxu0 0.0
    %7255 = vmatpush1.msra.mxu0 0.0
    %7256 = vmatprep.subr.mxu0 0.0
    %7257 = vmatpush1.msra.mxu0 0.0
    %7258 = vmatprep.subr.mxu0 0.0
    %7259 = vmatpush1.msra.mxu0 0.0
    %7260 = vmatprep.subr.mxu0 0.0
    %7261 = vmatpush1.msra.mxu0 0.0
    %7262 = vmatprep.subr.mxu0 0.0
    %7263 = vmatpush1.msra.mxu0 0.0
    %7264 = vmatprep.subr.mxu0 0.0
    %7265 = vmatpush1.msra.mxu0 0.0
    %7266 = vmatprep.subr.mxu0 0.0
    %7267 = vmatpush1.msra.mxu0 0.0
    %7268 = vmatprep.subr.mxu0 0.0
    %7269 = vmatpush1.msra.mxu0 0.0
    %7270 = vmatprep.subr.mxu0 0.0
    %7271 = vmatpush1.msra.mxu0 0.0
    %7272 = vmatprep.subr.mxu0 0.0
    %7273 = vmatpush1.msra.mxu0 0.0
    %7274 = vmatprep.subr.mxu0 0.0
    %7275 = vmatpush1.msra.mxu0 0.0
    %7276 = vmatprep.subr.mxu0 0.0
    %7277 = vmatpush1.msra.mxu0 0.0
    %7278 = vmatprep.subr.mxu0 0.0
    %7279 = vmatpush1.msra.mxu0 0.0
    %7280 = vmatprep.subr.mxu0 0.0
    %7281 = vmatpush1.msra.mxu0 0.0
    %7282 = vmatprep.subr.mxu0 0.0
    %7283 = vmatpush1.msra.mxu0 0.0
    %7284 = vmatprep.subr.mxu0 0.0
    %v7285 = vand.u32 %v7023, 4294901760
    %7286 = vmatpush1.msra.mxu0 %v7285
    %7287 = vmatprep.subr.mxu0 0.0
    %7288 = vmatpush2.msra.mxu0 0.0
    %7289 = vmatprep.subr.mxu0 0.0
    %7290 = vmatpush2.msra.mxu0 0.0
    %7291 = vmatprep.subr.mxu0 0.0
    %7292 = vmatpush2.msra.mxu0 0.0
    %7293 = vmatprep.subr.mxu0 0.0
    %7294 = vmatpush2.msra.mxu0 0.0
    %7295 = vmatprep.subr.mxu0 0.0
    %7296 = vmatpush2.msra.mxu0 0.0
    %7297 = vmatprep.subr.mxu0 0.0
    %7298 = vmatpush2.msra.mxu0 0.0
    %7299 = vmatprep.subr.mxu0 0.0
    %7300 = vmatpush2.msra.mxu0 0.0
    %7301 = vmatprep.subr.mxu0 0.0
    %7302 = vmatpush2.msra.mxu0 0.0
    %7303 = vmatprep.subr.mxu0 0.0
    %7304 = vmatpush2.msra.mxu0 0.0
    %7305 = vmatprep.subr.mxu0 0.0
    %7306 = vmatpush2.msra.mxu0 0.0
    %7307 = vmatprep.subr.mxu0 0.0
    %7308 = vmatpush2.msra.mxu0 0.0
    %7309 = vmatprep.subr.mxu0 0.0
    %7310 = vmatpush2.msra.mxu0 0.0
    %7311 = vmatprep.subr.mxu0 0.0
    %7312 = vmatpush2.msra.mxu0 0.0
    %7313 = vmatprep.subr.mxu0 0.0
    %7314 = vmatpush2.msra.mxu0 0.0
    %7315 = vmatprep.subr.mxu0 0.0
    %7316 = vmatpush2.msra.mxu0 0.0
    %7317 = vmatprep.subr.mxu0 0.0
    %7318 = vmatpush2.msra.mxu0 0.0
    %7319 = vmatprep.mubr.f32.mxu0 0.0
    %v7320 = vand.u32 %v7026, 4294901760
    %v7321 = vsub.f32 %v7026, %v7320
    %v7322 = vand.u32 %v7321, 4294901760
    %7323 = vmatmul.mubr.f32.gmra.mxu0 %v7322
    %v7324 = vpop.f32.mrf.mxu0
    %v7325 = vadd.f32 %v7251, %v7324
    %v7326 = vpop.f32.mrf.mxu0
    %7327 = vdwg.mxu0
    %7328 = vmatprep.subr.mxu0 0.0
    %7329 = vmatpush1.msra.mxu0 0.0
    %7330 = vmatprep.subr.mxu0 0.0
    %7331 = vmatpush1.msra.mxu0 0.0
    %7332 = vmatprep.subr.mxu0 0.0
    %7333 = vmatpush1.msra.mxu0 0.0
    %7334 = vmatprep.subr.mxu0 0.0
    %7335 = vmatpush1.msra.mxu0 0.0
    %7336 = vmatprep.subr.mxu0 0.0
    %7337 = vmatpush1.msra.mxu0 0.0
    %7338 = vmatprep.subr.mxu0 0.0
    %7339 = vmatpush1.msra.mxu0 0.0
    %7340 = vmatprep.subr.mxu0 0.0
    %7341 = vmatpush1.msra.mxu0 0.0
    %7342 = vmatprep.subr.mxu0 0.0
    %7343 = vmatpush1.msra.mxu0 0.0
    %7344 = vmatprep.subr.mxu0 0.0
    %7345 = vmatpush1.msra.mxu0 0.0
    %7346 = vmatprep.subr.mxu0 0.0
    %7347 = vmatpush1.msra.mxu0 0.0
    %7348 = vmatprep.subr.mxu0 0.0
    %7349 = vmatpush1.msra.mxu0 0.0
    %7350 = vmatprep.subr.mxu0 0.0
    %7351 = vmatpush1.msra.mxu0 0.0
    %7352 = vmatprep.subr.mxu0 0.0
    %7353 = vmatpush1.msra.mxu0 0.0
    %7354 = vmatprep.subr.mxu0 0.0
    %7355 = vmatpush1.msra.mxu0 0.0
    %7356 = vmatprep.subr.mxu0 0.0
    %7357 = vmatpush1.msra.mxu0 0.0
    %7358 = vmatprep.subr.mxu0 0.0
    %v7359 = vand.u32 %v7023, 4294901760
    %v7360 = vsub.f32 %v7023, %v7359
    %v7361 = vand.u32 %v7360, 4294901760
    %7362 = vmatpush1.msra.mxu0 %v7361
    %7363 = vmatprep.subr.mxu0 0.0
    %7364 = vmatpush2.msra.mxu0 0.0
    %7365 = vmatprep.subr.mxu0 0.0
    %7366 = vmatpush2.msra.mxu0 0.0
    %7367 = vmatprep.subr.mxu0 0.0
    %7368 = vmatpush2.msra.mxu0 0.0
    %7369 = vmatprep.subr.mxu0 0.0
    %7370 = vmatpush2.msra.mxu0 0.0
    %7371 = vmatprep.subr.mxu0 0.0
    %7372 = vmatpush2.msra.mxu0 0.0
    %7373 = vmatprep.subr.mxu0 0.0
    %7374 = vmatpush2.msra.mxu0 0.0
    %7375 = vmatprep.subr.mxu0 0.0
    %7376 = vmatpush2.msra.mxu0 0.0
    %7377 = vmatprep.subr.mxu0 0.0
    %7378 = vmatpush2.msra.mxu0 0.0
    %7379 = vmatprep.subr.mxu0 0.0
    %7380 = vmatpush2.msra.mxu0 0.0
    %7381 = vmatprep.subr.mxu0 0.0
    %7382 = vmatpush2.msra.mxu0 0.0
    %7383 = vmatprep.subr.mxu0 0.0
    %7384 = vmatpush2.msra.mxu0 0.0
    %7385 = vmatprep.subr.mxu0 0.0
    %7386 = vmatpush2.msra.mxu0 0.0
    %7387 = vmatprep.subr.mxu0 0.0
    %7388 = vmatpush2.msra.mxu0 0.0
    %7389 = vmatprep.subr.mxu0 0.0
    %7390 = vmatpush2.msra.mxu0 0.0
    %7391 = vmatprep.subr.mxu0 0.0
    %7392 = vmatpush2.msra.mxu0 0.0
    %7393 = vmatprep.subr.mxu0 0.0
    %7394 = vmatpush2.msra.mxu0 0.0
    %7395 = vmatprep.mubr.f32.mxu0 0.0
    %v7396 = vand.u32 %v7026, 4294901760
    %7397 = vmatmul.mubr.f32.gmra.mxu0 %v7396
    %v7398 = vpop.f32.mrf.mxu0
    %v7399 = vadd.f32 %v7325, %v7398
    %v7400 = vpop.f32.mrf.mxu0
    %7401 = vdwg.mxu0
    %7402 = vmatprep.subr.mxu0 0.0
    %7403 = vmatpush1.msra.mxu0 0.0
    %7404 = vmatprep.subr.mxu0 0.0
    %7405 = vmatpush1.msra.mxu0 0.0
    %7406 = vmatprep.subr.mxu0 0.0
    %7407 = vmatpush1.msra.mxu0 0.0
    %7408 = vmatprep.subr.mxu0 0.0
    %7409 = vmatpush1.msra.mxu0 0.0
    %7410 = vmatprep.subr.mxu0 0.0
    %7411 = vmatpush1.msra.mxu0 0.0
    %7412 = vmatprep.subr.mxu0 0.0
    %7413 = vmatpush1.msra.mxu0 0.0
    %7414 = vmatprep.subr.mxu0 0.0
    %7415 = vmatpush1.msra.mxu0 0.0
    %7416 = vmatprep.subr.mxu0 0.0
    %7417 = vmatpush1.msra.mxu0 0.0
    %7418 = vmatprep.subr.mxu0 0.0
    %7419 = vmatpush1.msra.mxu0 0.0
    %7420 = vmatprep.subr.mxu0 0.0
    %7421 = vmatpush1.msra.mxu0 0.0
    %7422 = vmatprep.subr.mxu0 0.0
    %7423 = vmatpush1.msra.mxu0 0.0
    %7424 = vmatprep.subr.mxu0 0.0
    %7425 = vmatpush1.msra.mxu0 0.0
    %7426 = vmatprep.subr.mxu0 0.0
    %7427 = vmatpush1.msra.mxu0 0.0
    %7428 = vmatprep.subr.mxu0 0.0
    %7429 = vmatpush1.msra.mxu0 0.0
    %7430 = vmatprep.subr.mxu0 0.0
    %7431 = vmatpush1.msra.mxu0 0.0
    %7432 = vmatprep.subr.mxu0 0.0
    %v7433 = vand.u32 %v7023, 4294901760
    %7434 = vmatpush1.msra.mxu0 %v7433
    %7435 = vmatprep.subr.mxu0 0.0
    %7436 = vmatpush2.msra.mxu0 0.0
    %7437 = vmatprep.subr.mxu0 0.0
    %7438 = vmatpush2.msra.mxu0 0.0
    %7439 = vmatprep.subr.mxu0 0.0
    %7440 = vmatpush2.msra.mxu0 0.0
    %7441 = vmatprep.subr.mxu0 0.0
    %7442 = vmatpush2.msra.mxu0 0.0
    %7443 = vmatprep.subr.mxu0 0.0
    %7444 = vmatpush2.msra.mxu0 0.0
    %7445 = vmatprep.subr.mxu0 0.0
    %7446 = vmatpush2.msra.mxu0 0.0
    %7447 = vmatprep.subr.mxu0 0.0
    %7448 = vmatpush2.msra.mxu0 0.0
    %7449 = vmatprep.subr.mxu0 0.0
    %7450 = vmatpush2.msra.mxu0 0.0
    %7451 = vmatprep.subr.mxu0 0.0
    %7452 = vmatpush2.msra.mxu0 0.0
    %7453 = vmatprep.subr.mxu0 0.0
    %7454 = vmatpush2.msra.mxu0 0.0
    %7455 = vmatprep.subr.mxu0 0.0
    %7456 = vmatpush2.msra.mxu0 0.0
    %7457 = vmatprep.subr.mxu0 0.0
    %7458 = vmatpush2.msra.mxu0 0.0
    %7459 = vmatprep.subr.mxu0 0.0
    %7460 = vmatpush2.msra.mxu0 0.0
    %7461 = vmatprep.subr.mxu0 0.0
    %7462 = vmatpush2.msra.mxu0 0.0
    %7463 = vmatprep.subr.mxu0 0.0
    %7464 = vmatpush2.msra.mxu0 0.0
    %7465 = vmatprep.subr.mxu0 0.0
    %7466 = vmatpush2.msra.mxu0 0.0
    %7467 = vmatprep.mubr.f32.mxu0 0.0
    %v7468 = vand.u32 %v7026, 4294901760
    %7469 = vmatmul.mubr.f32.gmra.mxu0 %v7468
    %v7470 = vpop.f32.mrf.mxu0
    %v7471 = vadd.f32 %v7399, %v7470
    %v7472 = vpop.f32.mrf.mxu0
    %7473 = vdwg.mxu0
    %7474 = vrot.lane.b32.xlu0 %v604, 64
    %v7475 = vpop.permute.xlu0 %7474
    %v7478 = vsel %vm607, %v4309, 0
    %7480 = vmatprep.subr.mxu0 0.0
    %7481 = vmatpush1.msra.mxu0 0.0
    %7482 = vmatprep.subr.mxu0 0.0
    %7483 = vmatpush1.msra.mxu0 0.0
    %7484 = vmatprep.subr.mxu0 0.0
    %7485 = vmatpush1.msra.mxu0 0.0
    %7486 = vmatprep.subr.mxu0 0.0
    %7487 = vmatpush1.msra.mxu0 0.0
    %7488 = vmatprep.subr.mxu0 0.0
    %7489 = vmatpush1.msra.mxu0 0.0
    %7490 = vmatprep.subr.mxu0 0.0
    %7491 = vmatpush1.msra.mxu0 0.0
    %7492 = vmatprep.subr.mxu0 0.0
    %7493 = vmatpush1.msra.mxu0 0.0
    %7494 = vmatprep.subr.mxu0 0.0
    %7495 = vmatpush1.msra.mxu0 0.0
    %7496 = vmatprep.subr.mxu0 0.0
    %7497 = vmatpush1.msra.mxu0 0.0
    %7498 = vmatprep.subr.mxu0 0.0
    %7499 = vmatpush1.msra.mxu0 0.0
    %7500 = vmatprep.subr.mxu0 0.0
    %7501 = vmatpush1.msra.mxu0 0.0
    %7502 = vmatprep.subr.mxu0 0.0
    %7503 = vmatpush1.msra.mxu0 0.0
    %7504 = vmatprep.subr.mxu0 0.0
    %7505 = vmatpush1.msra.mxu0 0.0
    %7506 = vmatprep.subr.mxu0 0.0
    %7507 = vmatpush1.msra.mxu0 0.0
    %7508 = vmatprep.subr.mxu0 0.0
    %7509 = vmatpush1.msra.mxu0 0.0
    %7510 = vmatprep.subr.mxu0 0.0
    %v7511 = vand.u32 %v7475, 4294901760
    %7512 = vmatpush1.msra.mxu0 %v7511
    %7513 = vmatprep.subr.mxu0 0.0
    %7514 = vmatpush2.msra.mxu0 0.0
    %7515 = vmatprep.subr.mxu0 0.0
    %7516 = vmatpush2.msra.mxu0 0.0
    %7517 = vmatprep.subr.mxu0 0.0
    %7518 = vmatpush2.msra.mxu0 0.0
    %7519 = vmatprep.subr.mxu0 0.0
    %7520 = vmatpush2.msra.mxu0 0.0
    %7521 = vmatprep.subr.mxu0 0.0
    %7522 = vmatpush2.msra.mxu0 0.0
    %7523 = vmatprep.subr.mxu0 0.0
    %7524 = vmatpush2.msra.mxu0 0.0
    %7525 = vmatprep.subr.mxu0 0.0
    %7526 = vmatpush2.msra.mxu0 0.0
    %7527 = vmatprep.subr.mxu0 0.0
    %7528 = vmatpush2.msra.mxu0 0.0
    %7529 = vmatprep.subr.mxu0 0.0
    %7530 = vmatpush2.msra.mxu0 0.0
    %7531 = vmatprep.subr.mxu0 0.0
    %7532 = vmatpush2.msra.mxu0 0.0
    %7533 = vmatprep.subr.mxu0 0.0
    %7534 = vmatpush2.msra.mxu0 0.0
    %7535 = vmatprep.subr.mxu0 0.0
    %7536 = vmatpush2.msra.mxu0 0.0
    %7537 = vmatprep.subr.mxu0 0.0
    %7538 = vmatpush2.msra.mxu0 0.0
    %7539 = vmatprep.subr.mxu0 0.0
    %7540 = vmatpush2.msra.mxu0 0.0
    %7541 = vmatprep.subr.mxu0 0.0
    %7542 = vmatpush2.msra.mxu0 0.0
    %7543 = vmatprep.subr.mxu0 0.0
    %7544 = vmatpush2.msra.mxu0 0.0
    %7545 = vmatprep.mubr.f32.mxu0 0.0
    %v7546 = vand.u32 %v7478, 4294901760
    %v7547 = vsub.f32 %v7478, %v7546
    %v7548 = vand.u32 %v7547, 4294901760
    %v7549 = vsub.f32 %v7547, %v7548
    %v7550 = vand.u32 %v7549, 4294901760
    %7551 = vmatmul.mubr.f32.gmra.mxu0 %v7550
    %v7552 = vpop.f32.mrf.mxu0
    %v7553 = vadd.f32 0.0, %v7552
    %v7554 = vpop.f32.mrf.mxu0
    %7555 = vdwg.mxu0
    %7556 = vmatprep.subr.mxu0 0.0
    %7557 = vmatpush1.msra.mxu0 0.0
    %7558 = vmatprep.subr.mxu0 0.0
    %7559 = vmatpush1.msra.mxu0 0.0
    %7560 = vmatprep.subr.mxu0 0.0
    %7561 = vmatpush1.msra.mxu0 0.0
    %7562 = vmatprep.subr.mxu0 0.0
    %7563 = vmatpush1.msra.mxu0 0.0
    %7564 = vmatprep.subr.mxu0 0.0
    %7565 = vmatpush1.msra.mxu0 0.0
    %7566 = vmatprep.subr.mxu0 0.0
    %7567 = vmatpush1.msra.mxu0 0.0
    %7568 = vmatprep.subr.mxu0 0.0
    %7569 = vmatpush1.msra.mxu0 0.0
    %7570 = vmatprep.subr.mxu0 0.0
    %7571 = vmatpush1.msra.mxu0 0.0
    %7572 = vmatprep.subr.mxu0 0.0
    %7573 = vmatpush1.msra.mxu0 0.0
    %7574 = vmatprep.subr.mxu0 0.0
    %7575 = vmatpush1.msra.mxu0 0.0
    %7576 = vmatprep.subr.mxu0 0.0
    %7577 = vmatpush1.msra.mxu0 0.0
    %7578 = vmatprep.subr.mxu0 0.0
    %7579 = vmatpush1.msra.mxu0 0.0
    %7580 = vmatprep.subr.mxu0 0.0
    %7581 = vmatpush1.msra.mxu0 0.0
    %7582 = vmatprep.subr.mxu0 0.0
    %7583 = vmatpush1.msra.mxu0 0.0
    %7584 = vmatprep.subr.mxu0 0.0
    %7585 = vmatpush1.msra.mxu0 0.0
    %7586 = vmatprep.subr.mxu0 0.0
    %v7587 = vand.u32 %v7475, 4294901760
    %v7588 = vsub.f32 %v7475, %v7587
    %v7589 = vand.u32 %v7588, 4294901760
    %v7590 = vsub.f32 %v7588, %v7589
    %v7591 = vand.u32 %v7590, 4294901760
    %7592 = vmatpush1.msra.mxu0 %v7591
    %7593 = vmatprep.subr.mxu0 0.0
    %7594 = vmatpush2.msra.mxu0 0.0
    %7595 = vmatprep.subr.mxu0 0.0
    %7596 = vmatpush2.msra.mxu0 0.0
    %7597 = vmatprep.subr.mxu0 0.0
    %7598 = vmatpush2.msra.mxu0 0.0
    %7599 = vmatprep.subr.mxu0 0.0
    %7600 = vmatpush2.msra.mxu0 0.0
    %7601 = vmatprep.subr.mxu0 0.0
    %7602 = vmatpush2.msra.mxu0 0.0
    %7603 = vmatprep.subr.mxu0 0.0
    %7604 = vmatpush2.msra.mxu0 0.0
    %7605 = vmatprep.subr.mxu0 0.0
    %7606 = vmatpush2.msra.mxu0 0.0
    %7607 = vmatprep.subr.mxu0 0.0
    %7608 = vmatpush2.msra.mxu0 0.0
    %7609 = vmatprep.subr.mxu0 0.0
    %7610 = vmatpush2.msra.mxu0 0.0
    %7611 = vmatprep.subr.mxu0 0.0
    %7612 = vmatpush2.msra.mxu0 0.0
    %7613 = vmatprep.subr.mxu0 0.0
    %7614 = vmatpush2.msra.mxu0 0.0
    %7615 = vmatprep.subr.mxu0 0.0
    %7616 = vmatpush2.msra.mxu0 0.0
    %7617 = vmatprep.subr.mxu0 0.0
    %7618 = vmatpush2.msra.mxu0 0.0
    %7619 = vmatprep.subr.mxu0 0.0
    %7620 = vmatpush2.msra.mxu0 0.0
    %7621 = vmatprep.subr.mxu0 0.0
    %7622 = vmatpush2.msra.mxu0 0.0
    %7623 = vmatprep.subr.mxu0 0.0
    %7624 = vmatpush2.msra.mxu0 0.0
    %7625 = vmatprep.mubr.f32.mxu0 0.0
    %v7626 = vand.u32 %v7478, 4294901760
    %7627 = vmatmul.mubr.f32.gmra.mxu0 %v7626
    %v7628 = vpop.f32.mrf.mxu0
    %v7629 = vadd.f32 %v7553, %v7628
    %v7630 = vpop.f32.mrf.mxu0
    %7631 = vdwg.mxu0
    %7632 = vmatprep.subr.mxu0 0.0
    %7633 = vmatpush1.msra.mxu0 0.0
    %7634 = vmatprep.subr.mxu0 0.0
    %7635 = vmatpush1.msra.mxu0 0.0
    %7636 = vmatprep.subr.mxu0 0.0
    %7637 = vmatpush1.msra.mxu0 0.0
    %7638 = vmatprep.subr.mxu0 0.0
    %7639 = vmatpush1.msra.mxu0 0.0
    %7640 = vmatprep.subr.mxu0 0.0
    %7641 = vmatpush1.msra.mxu0 0.0
    %7642 = vmatprep.subr.mxu0 0.0
    %7643 = vmatpush1.msra.mxu0 0.0
    %7644 = vmatprep.subr.mxu0 0.0
    %7645 = vmatpush1.msra.mxu0 0.0
    %7646 = vmatprep.subr.mxu0 0.0
    %7647 = vmatpush1.msra.mxu0 0.0
    %7648 = vmatprep.subr.mxu0 0.0
    %7649 = vmatpush1.msra.mxu0 0.0
    %7650 = vmatprep.subr.mxu0 0.0
    %7651 = vmatpush1.msra.mxu0 0.0
    %7652 = vmatprep.subr.mxu0 0.0
    %7653 = vmatpush1.msra.mxu0 0.0
    %7654 = vmatprep.subr.mxu0 0.0
    %7655 = vmatpush1.msra.mxu0 0.0
    %7656 = vmatprep.subr.mxu0 0.0
    %7657 = vmatpush1.msra.mxu0 0.0
    %7658 = vmatprep.subr.mxu0 0.0
    %7659 = vmatpush1.msra.mxu0 0.0
    %7660 = vmatprep.subr.mxu0 0.0
    %7661 = vmatpush1.msra.mxu0 0.0
    %7662 = vmatprep.subr.mxu0 0.0
    %v7663 = vand.u32 %v7475, 4294901760
    %v7664 = vsub.f32 %v7475, %v7663
    %7665 = vmatpush1.msra.mxu0 %v7664
    %7666 = vmatprep.subr.mxu0 0.0
    %7667 = vmatpush2.msra.mxu0 0.0
    %7668 = vmatprep.subr.mxu0 0.0
    %7669 = vmatpush2.msra.mxu0 0.0
    %7670 = vmatprep.subr.mxu0 0.0
    %7671 = vmatpush2.msra.mxu0 0.0
    %7672 = vmatprep.subr.mxu0 0.0
    %7673 = vmatpush2.msra.mxu0 0.0
    %7674 = vmatprep.subr.mxu0 0.0
    %7675 = vmatpush2.msra.mxu0 0.0
    %7676 = vmatprep.subr.mxu0 0.0
    %7677 = vmatpush2.msra.mxu0 0.0
    %7678 = vmatprep.subr.mxu0 0.0
    %7679 = vmatpush2.msra.mxu0 0.0
    %7680 = vmatprep.subr.mxu0 0.0
    %7681 = vmatpush2.msra.mxu0 0.0
    %7682 = vmatprep.subr.mxu0 0.0
    %7683 = vmatpush2.msra.mxu0 0.0
    %7684 = vmatprep.subr.mxu0 0.0
    %7685 = vmatpush2.msra.mxu0 0.0
    %7686 = vmatprep.subr.mxu0 0.0
    %7687 = vmatpush2.msra.mxu0 0.0
    %7688 = vmatprep.subr.mxu0 0.0
    %7689 = vmatpush2.msra.mxu0 0.0
    %7690 = vmatprep.subr.mxu0 0.0
    %7691 = vmatpush2.msra.mxu0 0.0
    %7692 = vmatprep.subr.mxu0 0.0
    %7693 = vmatpush2.msra.mxu0 0.0
    %7694 = vmatprep.subr.mxu0 0.0
    %7695 = vmatpush2.msra.mxu0 0.0
    %7696 = vmatprep.subr.mxu0 0.0
    %7697 = vmatpush2.msra.mxu0 0.0
    %7698 = vmatprep.mubr.f32.mxu0 0.0
    %v7699 = vand.u32 %v7478, 4294901760
    %v7700 = vsub.f32 %v7478, %v7699
    %7701 = vmatmul.mubr.f32.gmra.mxu0 %v7700
    %v7702 = vpop.f32.mrf.mxu0
    %v7703 = vadd.f32 %v7629, %v7702
    %v7704 = vpop.f32.mrf.mxu0
    %7705 = vdwg.mxu0
    %7706 = vmatprep.subr.mxu0 0.0
    %7707 = vmatpush1.msra.mxu0 0.0
    %7708 = vmatprep.subr.mxu0 0.0
    %7709 = vmatpush1.msra.mxu0 0.0
    %7710 = vmatprep.subr.mxu0 0.0
    %7711 = vmatpush1.msra.mxu0 0.0
    %7712 = vmatprep.subr.mxu0 0.0
    %7713 = vmatpush1.msra.mxu0 0.0
    %7714 = vmatprep.subr.mxu0 0.0
    %7715 = vmatpush1.msra.mxu0 0.0
    %7716 = vmatprep.subr.mxu0 0.0
    %7717 = vmatpush1.msra.mxu0 0.0
    %7718 = vmatprep.subr.mxu0 0.0
    %7719 = vmatpush1.msra.mxu0 0.0
    %7720 = vmatprep.subr.mxu0 0.0
    %7721 = vmatpush1.msra.mxu0 0.0
    %7722 = vmatprep.subr.mxu0 0.0
    %7723 = vmatpush1.msra.mxu0 0.0
    %7724 = vmatprep.subr.mxu0 0.0
    %7725 = vmatpush1.msra.mxu0 0.0
    %7726 = vmatprep.subr.mxu0 0.0
    %7727 = vmatpush1.msra.mxu0 0.0
    %7728 = vmatprep.subr.mxu0 0.0
    %7729 = vmatpush1.msra.mxu0 0.0
    %7730 = vmatprep.subr.mxu0 0.0
    %7731 = vmatpush1.msra.mxu0 0.0
    %7732 = vmatprep.subr.mxu0 0.0
    %7733 = vmatpush1.msra.mxu0 0.0
    %7734 = vmatprep.subr.mxu0 0.0
    %7735 = vmatpush1.msra.mxu0 0.0
    %7736 = vmatprep.subr.mxu0 0.0
    %v7737 = vand.u32 %v7475, 4294901760
    %7738 = vmatpush1.msra.mxu0 %v7737
    %7739 = vmatprep.subr.mxu0 0.0
    %7740 = vmatpush2.msra.mxu0 0.0
    %7741 = vmatprep.subr.mxu0 0.0
    %7742 = vmatpush2.msra.mxu0 0.0
    %7743 = vmatprep.subr.mxu0 0.0
    %7744 = vmatpush2.msra.mxu0 0.0
    %7745 = vmatprep.subr.mxu0 0.0
    %7746 = vmatpush2.msra.mxu0 0.0
    %7747 = vmatprep.subr.mxu0 0.0
    %7748 = vmatpush2.msra.mxu0 0.0
    %7749 = vmatprep.subr.mxu0 0.0
    %7750 = vmatpush2.msra.mxu0 0.0
    %7751 = vmatprep.subr.mxu0 0.0
    %7752 = vmatpush2.msra.mxu0 0.0
    %7753 = vmatprep.subr.mxu0 0.0
    %7754 = vmatpush2.msra.mxu0 0.0
    %7755 = vmatprep.subr.mxu0 0.0
    %7756 = vmatpush2.msra.mxu0 0.0
    %7757 = vmatprep.subr.mxu0 0.0
    %7758 = vmatpush2.msra.mxu0 0.0
    %7759 = vmatprep.subr.mxu0 0.0
    %7760 = vmatpush2.msra.mxu0 0.0
    %7761 = vmatprep.subr.mxu0 0.0
    %7762 = vmatpush2.msra.mxu0 0.0
    %7763 = vmatprep.subr.mxu0 0.0
    %7764 = vmatpush2.msra.mxu0 0.0
    %7765 = vmatprep.subr.mxu0 0.0
    %7766 = vmatpush2.msra.mxu0 0.0
    %7767 = vmatprep.subr.mxu0 0.0
    %7768 = vmatpush2.msra.mxu0 0.0
    %7769 = vmatprep.subr.mxu0 0.0
    %7770 = vmatpush2.msra.mxu0 0.0
    %7771 = vmatprep.mubr.f32.mxu0 0.0
    %v7772 = vand.u32 %v7478, 4294901760
    %v7773 = vsub.f32 %v7478, %v7772
    %v7774 = vand.u32 %v7773, 4294901760
    %7775 = vmatmul.mubr.f32.gmra.mxu0 %v7774
    %v7776 = vpop.f32.mrf.mxu0
    %v7777 = vadd.f32 %v7703, %v7776
    %v7778 = vpop.f32.mrf.mxu0
    %7779 = vdwg.mxu0
    %7780 = vmatprep.subr.mxu0 0.0
    %7781 = vmatpush1.msra.mxu0 0.0
    %7782 = vmatprep.subr.mxu0 0.0
    %7783 = vmatpush1.msra.mxu0 0.0
    %7784 = vmatprep.subr.mxu0 0.0
    %7785 = vmatpush1.msra.mxu0 0.0
    %7786 = vmatprep.subr.mxu0 0.0
    %7787 = vmatpush1.msra.mxu0 0.0
    %7788 = vmatprep.subr.mxu0 0.0
    %7789 = vmatpush1.msra.mxu0 0.0
    %7790 = vmatprep.subr.mxu0 0.0
    %7791 = vmatpush1.msra.mxu0 0.0
    %7792 = vmatprep.subr.mxu0 0.0
    %7793 = vmatpush1.msra.mxu0 0.0
    %7794 = vmatprep.subr.mxu0 0.0
    %7795 = vmatpush1.msra.mxu0 0.0
    %7796 = vmatprep.subr.mxu0 0.0
    %7797 = vmatpush1.msra.mxu0 0.0
    %7798 = vmatprep.subr.mxu0 0.0
    %7799 = vmatpush1.msra.mxu0 0.0
    %7800 = vmatprep.subr.mxu0 0.0
    %7801 = vmatpush1.msra.mxu0 0.0
    %7802 = vmatprep.subr.mxu0 0.0
    %7803 = vmatpush1.msra.mxu0 0.0
    %7804 = vmatprep.subr.mxu0 0.0
    %7805 = vmatpush1.msra.mxu0 0.0
    %7806 = vmatprep.subr.mxu0 0.0
    %7807 = vmatpush1.msra.mxu0 0.0
    %7808 = vmatprep.subr.mxu0 0.0
    %7809 = vmatpush1.msra.mxu0 0.0
    %7810 = vmatprep.subr.mxu0 0.0
    %v7811 = vand.u32 %v7475, 4294901760
    %v7812 = vsub.f32 %v7475, %v7811
    %v7813 = vand.u32 %v7812, 4294901760
    %7814 = vmatpush1.msra.mxu0 %v7813
    %7815 = vmatprep.subr.mxu0 0.0
    %7816 = vmatpush2.msra.mxu0 0.0
    %7817 = vmatprep.subr.mxu0 0.0
    %7818 = vmatpush2.msra.mxu0 0.0
    %7819 = vmatprep.subr.mxu0 0.0
    %7820 = vmatpush2.msra.mxu0 0.0
    %7821 = vmatprep.subr.mxu0 0.0
    %7822 = vmatpush2.msra.mxu0 0.0
    %7823 = vmatprep.subr.mxu0 0.0
    %7824 = vmatpush2.msra.mxu0 0.0
    %7825 = vmatprep.subr.mxu0 0.0
    %7826 = vmatpush2.msra.mxu0 0.0
    %7827 = vmatprep.subr.mxu0 0.0
    %7828 = vmatpush2.msra.mxu0 0.0
    %7829 = vmatprep.subr.mxu0 0.0
    %7830 = vmatpush2.msra.mxu0 0.0
    %7831 = vmatprep.subr.mxu0 0.0
    %7832 = vmatpush2.msra.mxu0 0.0
    %7833 = vmatprep.subr.mxu0 0.0
    %7834 = vmatpush2.msra.mxu0 0.0
    %7835 = vmatprep.subr.mxu0 0.0
    %7836 = vmatpush2.msra.mxu0 0.0
    %7837 = vmatprep.subr.mxu0 0.0
    %7838 = vmatpush2.msra.mxu0 0.0
    %7839 = vmatprep.subr.mxu0 0.0
    %7840 = vmatpush2.msra.mxu0 0.0
    %7841 = vmatprep.subr.mxu0 0.0
    %7842 = vmatpush2.msra.mxu0 0.0
    %7843 = vmatprep.subr.mxu0 0.0
    %7844 = vmatpush2.msra.mxu0 0.0
    %7845 = vmatprep.subr.mxu0 0.0
    %7846 = vmatpush2.msra.mxu0 0.0
    %7847 = vmatprep.mubr.f32.mxu0 0.0
    %v7848 = vand.u32 %v7478, 4294901760
    %7849 = vmatmul.mubr.f32.gmra.mxu0 %v7848
    %v7850 = vpop.f32.mrf.mxu0
    %v7851 = vadd.f32 %v7777, %v7850
    %v7852 = vpop.f32.mrf.mxu0
    %7853 = vdwg.mxu0
    %7854 = vmatprep.subr.mxu0 0.0
    %7855 = vmatpush1.msra.mxu0 0.0
    %7856 = vmatprep.subr.mxu0 0.0
    %7857 = vmatpush1.msra.mxu0 0.0
    %7858 = vmatprep.subr.mxu0 0.0
    %7859 = vmatpush1.msra.mxu0 0.0
    %7860 = vmatprep.subr.mxu0 0.0
    %7861 = vmatpush1.msra.mxu0 0.0
    %7862 = vmatprep.subr.mxu0 0.0
    %7863 = vmatpush1.msra.mxu0 0.0
    %7864 = vmatprep.subr.mxu0 0.0
    %7865 = vmatpush1.msra.mxu0 0.0
    %7866 = vmatprep.subr.mxu0 0.0
    %7867 = vmatpush1.msra.mxu0 0.0
    %7868 = vmatprep.subr.mxu0 0.0
    %7869 = vmatpush1.msra.mxu0 0.0
    %7870 = vmatprep.subr.mxu0 0.0
    %7871 = vmatpush1.msra.mxu0 0.0
    %7872 = vmatprep.subr.mxu0 0.0
    %7873 = vmatpush1.msra.mxu0 0.0
    %7874 = vmatprep.subr.mxu0 0.0
    %7875 = vmatpush1.msra.mxu0 0.0
    %7876 = vmatprep.subr.mxu0 0.0
    %7877 = vmatpush1.msra.mxu0 0.0
    %7878 = vmatprep.subr.mxu0 0.0
    %7879 = vmatpush1.msra.mxu0 0.0
    %7880 = vmatprep.subr.mxu0 0.0
    %7881 = vmatpush1.msra.mxu0 0.0
    %7882 = vmatprep.subr.mxu0 0.0
    %7883 = vmatpush1.msra.mxu0 0.0
    %7884 = vmatprep.subr.mxu0 0.0
    %v7885 = vand.u32 %v7475, 4294901760
    %7886 = vmatpush1.msra.mxu0 %v7885
    %7887 = vmatprep.subr.mxu0 0.0
    %7888 = vmatpush2.msra.mxu0 0.0
    %7889 = vmatprep.subr.mxu0 0.0
    %7890 = vmatpush2.msra.mxu0 0.0
    %7891 = vmatprep.subr.mxu0 0.0
    %7892 = vmatpush2.msra.mxu0 0.0
    %7893 = vmatprep.subr.mxu0 0.0
    %7894 = vmatpush2.msra.mxu0 0.0
    %7895 = vmatprep.subr.mxu0 0.0
    %7896 = vmatpush2.msra.mxu0 0.0
    %7897 = vmatprep.subr.mxu0 0.0
    %7898 = vmatpush2.msra.mxu0 0.0
    %7899 = vmatprep.subr.mxu0 0.0
    %7900 = vmatpush2.msra.mxu0 0.0
    %7901 = vmatprep.subr.mxu0 0.0
    %7902 = vmatpush2.msra.mxu0 0.0
    %7903 = vmatprep.subr.mxu0 0.0
    %7904 = vmatpush2.msra.mxu0 0.0
    %7905 = vmatprep.subr.mxu0 0.0
    %7906 = vmatpush2.msra.mxu0 0.0
    %7907 = vmatprep.subr.mxu0 0.0
    %7908 = vmatpush2.msra.mxu0 0.0
    %7909 = vmatprep.subr.mxu0 0.0
    %7910 = vmatpush2.msra.mxu0 0.0
    %7911 = vmatprep.subr.mxu0 0.0
    %7912 = vmatpush2.msra.mxu0 0.0
    %7913 = vmatprep.subr.mxu0 0.0
    %7914 = vmatpush2.msra.mxu0 0.0
    %7915 = vmatprep.subr.mxu0 0.0
    %7916 = vmatpush2.msra.mxu0 0.0
    %7917 = vmatprep.subr.mxu0 0.0
    %7918 = vmatpush2.msra.mxu0 0.0
    %7919 = vmatprep.mubr.f32.mxu0 0.0
    %v7920 = vand.u32 %v7478, 4294901760
    %7921 = vmatmul.mubr.f32.gmra.mxu0 %v7920
    %v7922 = vpop.f32.mrf.mxu0
    %v7923 = vadd.f32 %v7851, %v7922
    %v7924 = vpop.f32.mrf.mxu0
    %7925 = vdwg.mxu0
    %7927 = vrot.lane.b32.xlu0 %v5211, 8
    %v7928 = vpop.permute.xlu0 %7927
    %7931 = vrot.lane.b32.xlu0 %v5663, 16
    %v7932 = vpop.permute.xlu0 %7931
    %7935 = vrot.lane.b32.xlu0 %v6115, 24
    %v7936 = vpop.permute.xlu0 %7935
    %v7938 = vsel %vm607, %v4759, %v7928
    %vm7939 = vcmask 130048
    %v7940 = vsel %vm7939, %v7938, %v7932
    %vm7941 = vcmask 195584
    %v7942 = vsel %vm7941, %v7940, %v7936
    %7944 = vrot.lane.b32.xlu0 %v7019, 8
    %v7945 = vpop.permute.xlu0 %7944
    %7948 = vrot.lane.b32.xlu0 %v7471, 16
    %v7949 = vpop.permute.xlu0 %7948
    %7952 = vrot.lane.b32.xlu0 %v7923, 24
    %v7953 = vpop.permute.xlu0 %7952
    %v7955 = vsel %vm607, %v6567, %v7945
    %v7956 = vsel %vm7939, %v7955, %v7949
    %v7957 = vsel %vm7941, %v7956, %v7953
    %7958 = vst.msk [vmem:[#allocation7] sm:$0xff] %vm56, %v7942
    %7959 = vst.msk [vmem:[#allocation7 + $0x8] sm:$0xff] %vm56, %v7957
    // Predicated region
    $region22: #{bert_self_attention.1} parent=1 // pred_check
      _
    $region23: #{bert_self_attention.1} parent=1 // pred_check_branch
      %7961 = sbr.rel (0) target = $region25
    $region24: #{bert_self_attention.1} parent=1 // pred_region
      %s7963 = ssub.s32 256, 256
      %7964 = vsyncadd [#allocation4], %s7963
      %s7965 = sshll.u32 [#allocation7], 4
      %s7966 = int_to_ptr.vmem [resolvable:$true] %s7965
      %7971 = dma.vmem_to_hbm [thread:$0]  %s7966, 256, %s3, [#allocation4], 128, 128, 8
    $region25: #{bert_self_attention.1} parent=1 // pred_fallthru
      _
    // Predicated region
    $region26: #{bert_self_attention.1} parent=1 // pred_check
      _
    $region27: #{bert_self_attention.1} parent=1 // pred_check_branch
      %7973 = sbr.rel (0) target = $region29
    $region28: #{bert_self_attention.1} parent=1 // pred_region
      %7974 = dma.done [#allocation4], 256
    $region29: #{bert_self_attention.1} parent=1 // pred_fallthru
      _
    %7975 = vsyncpa [#allocation3], 1
    %7976 = vsyncpa [#allocation6], 1
    %7977 = vsyncpa [#allocation4], 1

</llo_original>
